<compile_context>
chip_gen: v6e
topology: v6e:2x2x1
jax: 0.10.0
libtpu: 0.0.40
codegen_flags: <defaults>
</compile_context>

<pallas_src>
import functools

import jax
import jax.numpy as jnp
from jax import lax
from jax.experimental import pallas as pl
from jax.experimental.pallas import tpu as pltpu


# ----------------------------------------------------------------------------
# Fused Conv-4 Pallas kernel (B_TILE images per grid step, all 4 blocks fused)
# ----------------------------------------------------------------------------
def _make_fused_conv4_kernel(sizes, C, neg_slope, B):
    """Fused Conv-4 forward, B images per grid step.

    sizes     : per-block input spatial sizes, e.g. (16, 8, 4, 2)
    C         : channel width (input channels are zero-padded up to C)
    neg_slope : 0.0 for ReLU, 0.01 for LeakyReLU
    B         : batch tile (images per grid step)

    Flattened padded layout: an SxS activation with a 1-pixel zero border is
    stored as ((S+2)*(S+2) + 2, C); row p*(S+2)+q holds padded pixel (p, q);
    the 2 trailing rows are zero slack so every 3x3 tap window is a contiguous
    row range.  Conv rows whose column index j >= S are "wrap garbage" and are
    never read by the pooling step.
    """
    depth = len(sizes)

    def kernel(x_ref, w_ref, b_ref, o_ref, *scratch):
        pads = scratch[:depth - 1]     # padded activations feeding blocks 1..depth-1
        y_ref = scratch[depth - 1]     # conv + activation staging, (B*M0, C)

        # Zero the padded inter-block buffers.  Interior rows are fully
        # rewritten below; we still clear every step (not @pl.when(step==0))
        # so the kernel stays correct if the "parallel" grid axis is split
        # across TensorCores (each core has private scratch and may never see
        # step 0).  Cost is negligible next to the matmuls.
        for p_ref in pads:
            p_ref[...] = jnp.zeros_like(p_ref)

        for d, S in enumerate(sizes):
            P = S + 2                  # padded spatial extent
            M = S * P                  # conv rows per image in the flat layout
            Wo = S // 2                # pooled spatial extent
            src = x_ref if d == 0 else pads[d - 1]   # (B, F_d, C) f32

            # --- 3x3 conv: 9 tap matmuls with the batch folded into M.
            #     BN scale is folded into the (bf16) weights; the folded bias
            #     seeds the f32 accumulator. ---
            acc = jnp.broadcast_to(b_ref[d], (B * M, C))
            for t in range(9):
                dy, dx = divmod(t, 3)
                off = dy * P + dx
                slab = src[:, off:off + M, :].reshape(B * M, C)   # (B*M, C) f32
                acc = acc + jnp.dot(slab.astype(jnp.bfloat16), w_ref[d, t],
                                    preferred_element_type=jnp.float32)

            # --- (Leaky)ReLU in f32 ---
            if neg_slope == 0.0:
                y = jnp.maximum(acc, 0.0)
            else:
                y = jnp.where(acc >= 0.0, acc, neg_slope * acc)
            y_ref[0:B * M, :] = y

            # --- 2x2 max-pool: per output row, 4 stride-2 row gathers (the
            #     four 2x2 window corners) + elementwise max; the pooled run
            #     is written straight into the next block's padded buffer
            #     (interior rows) or into the output block. ---
            for b in range(B):
                for po in range(Wo):
                    base = b * M + 2 * po * P
                    if Wo == 1:
                        r00 = y_ref[base:base + 1, :]
                        r01 = y_ref[base + 1:base + 2, :]
                        r10 = y_ref[base + P:base + P + 1, :]
                        r11 = y_ref[base + P + 1:base + P + 2, :]
                    else:
                        r00 = y_ref[pl.ds(base, Wo, stride=2), :]
                        r01 = y_ref[pl.ds(base + 1, Wo, stride=2), :]
                        r10 = y_ref[pl.ds(base + P, Wo, stride=2), :]
                        r11 = y_ref[pl.ds(base + P + 1, Wo, stride=2), :]
                    row = jnp.maximum(jnp.maximum(r00, r01),
                                      jnp.maximum(r10, r11))
                    if d + 1 < depth:
                        nP = Wo + 2
                        dst = (po + 1) * nP + 1
                        pads[d][b, dst:dst + Wo, :] = row
                    else:
                        o0 = b * Wo * Wo + po * Wo
                        o_ref[0, o0:o0 + Wo, :] = row

    return kernel


def conv4_forward(x_nhwc, w_stack, b_stack, *, sizes, C, neg_slope,
                  batch_tile=16):
    """Run the fused Conv-4 backbone.  Returns (N, s_out*s_out, C) features."""
    N, S0, _, cin = x_nhwc.shape
    assert S0 == sizes[0] and cin <= C
    depth = len(sizes)
    s_out = sizes[-1] // 2
    P0 = S0 + 2
    F0 = P0 * P0 + 2

    B = max(1, min(batch_tile, N))          # images per grid step
    num_tiles = pl.cdiv(N, B)
    N_pad = num_tiles * B

    # Channel-pad to C, zero-pad spatially by 1 (only wrapper-side pad),
    # flatten the padded grid, add 2 slack rows for the tap windows.
    xp = jnp.pad(x_nhwc.astype(jnp.float32),
                 ((0, N_pad - N), (1, 1), (1, 1), (0, C - cin)))
    x_flat = jnp.pad(xp.reshape(N_pad, P0 * P0, C), ((0, 0), (0, 2), (0, 0)))

    kernel = _make_fused_conv4_kernel(tuple(sizes), C, neg_slope, B)

    scratch = [pltpu.VMEM((B, (S + 2) * (S + 2) + 2, C), jnp.float32)
               for S in sizes[1:]]                                   # padded acts
    scratch.append(pltpu.VMEM((B * sizes[0] * (sizes[0] + 2), C),
                              jnp.float32))                          # y staging

    out = pl.pallas_call(
        kernel,
        out_shape=jax.ShapeDtypeStruct((num_tiles, B * s_out * s_out, C),
                                       jnp.float32),
        grid_spec=pltpu.PrefetchScalarGridSpec(
            num_scalar_prefetch=0,
            grid=(num_tiles,),
            in_specs=[
                pl.BlockSpec((B, F0, C), lambda n: (n, 0, 0)),
                pl.BlockSpec((depth, 9, C, C), lambda n: (0, 0, 0, 0)),
                pl.BlockSpec((depth, 1, C), lambda n: (0, 0, 0)),
            ],
            out_specs=pl.BlockSpec((1, B * s_out * s_out, C),
                                   lambda n: (n, 0, 0)),
            scratch_shapes=scratch,
        ),
        compiler_params=pltpu.CompilerParams(
            dimension_semantics=("parallel",),
            vmem_limit_bytes=32 * 1024 * 1024),
    )(x_flat, w_stack, b_stack)

    return out.reshape(N_pad, s_out * s_out, C)[:N]


# ----------------------------------------------------------------------------
# Conv-4 backbone ("model_func") with deterministic, in-script parameters.
# ----------------------------------------------------------------------------
class Conv4Feature:
    def __init__(self, flatten=True, leakyrelu=False, in_ch=3, hidden=16,
                 depth=4, spatial=16, seed=0):
        assert spatial % (2 ** depth) == 0 and spatial // (2 ** depth) >= 1
        self.flatten = flatten
        self.neg_slope = 0.01 if leakyrelu else 0.0   # PyTorch LeakyReLU default slope
        self.C = hidden
        self.sizes = tuple(spatial // (2 ** d) for d in range(depth))
        self.batch_tile = 16
        eps = 1e-5

        key = jax.random.PRNGKey(seed)
        self.blocks = []       # (folded bf16-rounded weight, folded bias) for the reference
        w_stack, b_stack = [], []
        cin = in_ch
        for _ in range(depth):
            key, kw, kb, kg, kbt = jax.random.split(key, 5)
            fan_in = 3 * 3 * cin
            w = jax.random.normal(kw, (3, 3, cin, hidden), jnp.float32) * jnp.sqrt(2.0 / fan_in)
            conv_b = 0.01 * jax.random.normal(kb, (hidden,), jnp.float32)
            gamma = 1.0 + 0.1 * jax.random.normal(kg, (hidden,), jnp.float32)
            beta = 0.1 * jax.random.normal(kbt, (hidden,), jnp.float32)
            run_mean = jnp.zeros((hidden,), jnp.float32)   # BN in eval mode
            run_var = jnp.ones((hidden,), jnp.float32)
            scale = gamma / jnp.sqrt(run_var + eps)
            bias = beta + (conv_b - run_mean) * scale
            w_folded = w * scale[None, None, None, :]      # BN scale folded into conv
            # Reference sees the same bf16-rounded folded weights the MXU uses.
            self.blocks.append((w_folded.astype(jnp.bfloat16).astype(jnp.float32), bias))
            # Fused-kernel params: channel-pad Cin->hidden, flatten the 3x3
            # taps (tap-major), cast to bf16.
            w_pad = jnp.pad(w_folded, ((0, 0), (0, 0), (0, hidden - cin), (0, 0)))
            w_stack.append(w_pad.reshape(9, hidden, hidden).astype(jnp.bfloat16))
            b_stack.append(bias.reshape(1, hidden))
            cin = hidden
        self.w_stack = jnp.stack(w_stack)   # (depth, 9, C, C) bf16
        self.b_stack = jnp.stack(b_stack)   # (depth, 1, C)    f32

        out_spatial = spatial // (2 ** depth)
        self._out_spatial = out_spatial
        if flatten:
            self.final_feat_dim = hidden * out_spatial * out_spatial
        else:
            self.final_feat_dim = [hidden, out_spatial, out_spatial]

    def __call__(self, x_nhwc):
        z = conv4_forward(x_nhwc, self.w_stack, self.b_stack,
                          sizes=self.sizes, C=self.C, neg_slope=self.neg_slope,
                          batch_tile=self.batch_tile)
        n = z.shape[0]
        if self.flatten:
            return z.reshape(n, -1)
        # Non-flat output is NHWC (PyTorch would be NCHW); identical when the
        # final spatial size is 1x1, as in the canonical Conv-4 config here.
        return z.reshape(n, self._out_spatial, self._out_spatial, self.C)

    forward = __call__


# ----------------------------------------------------------------------------
# MetaTemplate (forward pass / parse_feature semantics)
# ----------------------------------------------------------------------------
class MetaTemplate:
    def __init__(self, model_func, n_way, n_support, flatten=True,
                 leakyrelu=False, tf_path=None, change_way=True):
        self.n_way = n_way
        self.n_support = n_support
        self.n_query = -1
        self.feature = model_func(flatten=flatten, leakyrelu=leakyrelu)
        self.feat_dim = self.feature.final_feat_dim
        self.change_way = change_way
        self.tf_writer = None  # TODO(synk): SummaryWriter logging has no Pallas/JAX equivalent.

    def forward(self, x_nchw):
        # PyTorch passes NCHW; kernels want NHWC.
        x = jnp.transpose(jnp.asarray(x_nchw, jnp.float32), (0, 2, 3, 1))
        return self.feature(x)

    def parse_feature(self, x, is_feature=False, params=None):
        if is_feature:
            z_all = jnp.asarray(x)
        else:
            n_data = self.n_way * (self.n_support + self.n_query)
            x = jnp.asarray(x).reshape((n_data,) + tuple(x.shape[2:]))
            z_all = self.forward(x)
            z_all = z_all.reshape(self.n_way, self.n_support + self.n_query, -1)
        z_support = z_all[:, :self.n_support]
        z_query = z_all[:, self.n_support:]
        return z_support, z_query

    # TODO(synk): set_forward / set_forward_loss are abstract; correct() /
    # train_loop / test_loop are optimizer + dataloader orchestration with no
    # kernel content.


# ----------------------------------------------------------------------------
# Pure-JAX reference (numerical verification of the fused Pallas kernel)
# ----------------------------------------------------------------------------
def reference_forward(x_nhwc, blocks, neg_slope):
    z = x_nhwc.astype(jnp.float32)
    for (w_folded, bias) in blocks:
        # Mirror the kernel's bf16 operand rounding (weights already rounded).
        zb = z.astype(jnp.bfloat16).astype(jnp.float32)
        z = lax.conv_general_dilated(
            zb, w_folded, window_strides=(1, 1), padding=((1, 1), (1, 1)),
            dimension_numbers=("NHWC", "HWIO", "NHWC"),
            precision=lax.Precision.HIGHEST)
        z = z + bias
        z = jnp.where(z >= 0, z, neg_slope * z)
        z = lax.reduce_window(z, -jnp.inf, lax.max,
                              (1, 2, 2, 1), (1, 2, 2, 1), "VALID")
    return z.reshape(z.shape[0], -1)


if __name__ == "__main__":
    key = jax.random.PRNGKey(0)
    # Small PyTorch-style input: batch=2, channels=3, spatial=16x16 (NCHW).
    x = jax.random.normal(key, (2, 3, 16, 16), jnp.float32)

    model_func = functools.partial(Conv4Feature, in_ch=3, hidden=16,
                                   depth=4, spatial=16, seed=0)
    model = MetaTemplate(model_func, n_way=2, n_support=1)

    out = jax.block_until_ready(model.forward(x))
    assert out.shape == (2, model.feat_dim), (out.shape, model.feat_dim)

    # Verify the fused Pallas kernel against a pure-JAX reference that uses the
    # same bf16-rounded folded weights / activations (only accumulation order
    # differs, so the tolerance below is very comfortable).
    x_nhwc = jnp.transpose(x, (0, 2, 3, 1))
    ref = jax.block_until_ready(
        reference_forward(x_nhwc, model.feature.blocks, model.feature.neg_slope))
    max_err = float(jnp.max(jnp.abs(out - ref)))
    assert jnp.allclose(out, ref, rtol=2e-2, atol=2e-2), f"max abs err {max_err}"

    print("KERNEL_OK")
</pallas_src>

<mosaic_0001>
module attributes {stable_mosaic.version = 11 : i64} {
  func.func @kernel(%arg0: i32, %arg1: memref<2x326x16xf32, #tpu.memory_space<vmem>>, %arg2: memref<4x9x16x16xbf16, #tpu.memory_space<vmem>>, %arg3: memref<4x1x16xf32, #tpu.memory_space<vmem>>, %arg4: memref<1x2x16xf32, #tpu.memory_space<vmem>>, %arg5: memref<2x102x16xf32, #tpu.memory_space<vmem>>, %arg6: memref<2x38x16xf32, #tpu.memory_space<vmem>>, %arg7: memref<2x18x16xf32, #tpu.memory_space<vmem>>, %arg8: memref<576x16xf32, #tpu.memory_space<vmem>>) attributes {dimension_semantics = [#tpu.dimension_semantics<parallel>], iteration_bounds = array<i64: 1>, scalar_prefetch = 0 : i64, scratch_operands = 4 : i64, tpu.core_type = #tpu.core_type<tc>, window_params = [{transform_indices = @transform_0, window_bounds = array<i64: 2, 326, 16>}, {pipeline_mode = #tpu.pipeline_mode<synchronous>, transform_indices = @transform_1, window_bounds = array<i64: 4, 9, 16, 16>}, {pipeline_mode = #tpu.pipeline_mode<synchronous>, transform_indices = @transform_2, window_bounds = array<i64: 4, 1, 16>}, {transform_indices = @transform_3, window_bounds = array<i64: 1, 2, 16>}]} {
    %cst = arith.constant 0.000000e+00 : f32
    %0 = vector.broadcast %cst : f32 to vector<2x102x16xf32>
    %c0 = arith.constant 0 : index
    %c0_0 = arith.constant 0 : index
    %c0_1 = arith.constant 0 : index
    %1 = vector.load %arg5[%c0, %c0_0, %c0_1] : memref<2x102x16xf32, #tpu.memory_space<vmem>>, vector<2x102x16xf32>
    tpu.vector_store %arg5[%c0, %c0_0, %c0_1], %0 {strides = array<i32>} : memref<2x102x16xf32, #tpu.memory_space<vmem>>, vector<2x102x16xf32>,
    %cst_2 = arith.constant 0.000000e+00 : f32
    %2 = vector.broadcast %cst_2 : f32 to vector<2x38x16xf32>
    %c0_3 = arith.constant 0 : index
    %c0_4 = arith.constant 0 : index
    %c0_5 = arith.constant 0 : index
    %3 = vector.load %arg6[%c0_3, %c0_4, %c0_5] : memref<2x38x16xf32, #tpu.memory_space<vmem>>, vector<2x38x16xf32>
    tpu.vector_store %arg6[%c0_3, %c0_4, %c0_5], %2 {strides = array<i32>} : memref<2x38x16xf32, #tpu.memory_space<vmem>>, vector<2x38x16xf32>,
    %cst_6 = arith.constant 0.000000e+00 : f32
    %4 = vector.broadcast %cst_6 : f32 to vector<2x18x16xf32>
    %c0_7 = arith.constant 0 : index
    %c0_8 = arith.constant 0 : index
    %c0_9 = arith.constant 0 : index
    %5 = vector.load %arg7[%c0_7, %c0_8, %c0_9] : memref<2x18x16xf32, #tpu.memory_space<vmem>>, vector<2x18x16xf32>
    tpu.vector_store %arg7[%c0_7, %c0_8, %c0_9], %4 {strides = array<i32>} : memref<2x18x16xf32, #tpu.memory_space<vmem>>, vector<2x18x16xf32>,
    %c0_10 = arith.constant 0 : index
    %c0_11 = arith.constant 0 : index
    %c0_12 = arith.constant 0 : index
    %6 = vector.load %arg3[%c0_10, %c0_11, %c0_12] : memref<4x1x16xf32, #tpu.memory_space<vmem>>, vector<1x1x16xf32>
    %7 = vector.shape_cast %6 : vector<1x1x16xf32> to vector<1x16xf32>
    %8 = vector.shape_cast %7 : vector<1x16xf32> to vector<1x16xf32>
    %9 = vector.broadcast %8 : vector<1x16xf32> to vector<576x16xf32>
    %c0_13 = arith.constant 0 : index
    %c0_14 = arith.constant 0 : index
    %c0_15 = arith.constant 0 : index
    %10 = vector.load %arg1[%c0_13, %c0_14, %c0_15] : memref<2x326x16xf32, #tpu.memory_space<vmem>>, vector<2x288x16xf32>
    %11 = vector.shape_cast %10 : vector<2x288x16xf32> to vector<576x16xf32>
    %12 = arith.truncf %11 : vector<576x16xf32> to vector<576x16xbf16>
    %c0_16 = arith.constant 0 : index
    %c0_17 = arith.constant 0 : index
    %c0_18 = arith.constant 0 : index
    %c0_19 = arith.constant 0 : index
    %13 = vector.load %arg2[%c0_16, %c0_17, %c0_18, %c0_19] : memref<4x9x16x16xbf16, #tpu.memory_space<vmem>>, vector<1x1x16x16xbf16>
    %14 = vector.shape_cast %13 : vector<1x1x16x16xbf16> to vector<16x16xbf16>
    %cst_20 = arith.constant dense<0.000000e+00> : vector<576x16xf32>
    %15 = tpu.matmul %12, %14, %cst_20 {dimension_numbers = #tpu.dot_dimension_numbers<[1], [0], [0], [1], [0, 0, 1, 1], [], []>} : vector<576x16xbf16>, vector<16x16xbf16>, vector<576x16xf32> -> vector<576x16xf32>
    %16 = arith.addf %9, %15 : vector<576x16xf32>
    %c0_21 = arith.constant 0 : index
    %c1 = arith.constant 1 : index
    %c0_22 = arith.constant 0 : index
    %17 = vector.load %arg1[%c0_21, %c1, %c0_22] : memref<2x326x16xf32, #tpu.memory_space<vmem>>, vector<2x288x16xf32>
    %18 = vector.shape_cast %17 : vector<2x288x16xf32> to vector<576x16xf32>
    %19 = arith.truncf %18 : vector<576x16xf32> to vector<576x16xbf16>
    %c0_23 = arith.constant 0 : index
    %c1_24 = arith.constant 1 : index
    %c0_25 = arith.constant 0 : index
    %c0_26 = arith.constant 0 : index
    %20 = vector.load %arg2[%c0_23, %c1_24, %c0_25, %c0_26] : memref<4x9x16x16xbf16, #tpu.memory_space<vmem>>, vector<1x1x16x16xbf16>
    %21 = vector.shape_cast %20 : vector<1x1x16x16xbf16> to vector<16x16xbf16>
    %cst_27 = arith.constant dense<0.000000e+00> : vector<576x16xf32>
    %22 = tpu.matmul %19, %21, %cst_27 {dimension_numbers = #tpu.dot_dimension_numbers<[1], [0], [0], [1], [0, 0, 1, 1], [], []>} : vector<576x16xbf16>, vector<16x16xbf16>, vector<576x16xf32> -> vector<576x16xf32>
    %23 = arith.addf %16, %22 : vector<576x16xf32>
    %c0_28 = arith.constant 0 : index
    %c2 = arith.constant 2 : index
    %c0_29 = arith.constant 0 : index
    %24 = vector.load %arg1[%c0_28, %c2, %c0_29] : memref<2x326x16xf32, #tpu.memory_space<vmem>>, vector<2x288x16xf32>
    %25 = vector.shape_cast %24 : vector<2x288x16xf32> to vector<576x16xf32>
    %26 = arith.truncf %25 : vector<576x16xf32> to vector<576x16xbf16>
    %c0_30 = arith.constant 0 : index
    %c2_31 = arith.constant 2 : index
    %c0_32 = arith.constant 0 : index
    %c0_33 = arith.constant 0 : index
    %27 = vector.load %arg2[%c0_30, %c2_31, %c0_32, %c0_33] : memref<4x9x16x16xbf16, #tpu.memory_space<vmem>>, vector<1x1x16x16xbf16>
    %28 = vector.shape_cast %27 : vector<1x1x16x16xbf16> to vector<16x16xbf16>
    %cst_34 = arith.constant dense<0.000000e+00> : vector<576x16xf32>
    %29 = tpu.matmul %26, %28, %cst_34 {dimension_numbers = #tpu.dot_dimension_numbers<[1], [0], [0], [1], [0, 0, 1, 1], [], []>} : vector<576x16xbf16>, vector<16x16xbf16>, vector<576x16xf32> -> vector<576x16xf32>
    %30 = arith.addf %23, %29 : vector<576x16xf32>
    %c0_35 = arith.constant 0 : index
    %c18 = arith.constant 18 : index
    %c0_36 = arith.constant 0 : index
    %31 = vector.load %arg1[%c0_35, %c18, %c0_36] : memref<2x326x16xf32, #tpu.memory_space<vmem>>, vector<2x288x16xf32>
    %32 = vector.shape_cast %31 : vector<2x288x16xf32> to vector<576x16xf32>
    %33 = arith.truncf %32 : vector<576x16xf32> to vector<576x16xbf16>
    %c0_37 = arith.constant 0 : index
    %c3 = arith.constant 3 : index
    %c0_38 = arith.constant 0 : index
    %c0_39 = arith.constant 0 : index
    %34 = vector.load %arg2[%c0_37, %c3, %c0_38, %c0_39] : memref<4x9x16x16xbf16, #tpu.memory_space<vmem>>, vector<1x1x16x16xbf16>
    %35 = vector.shape_cast %34 : vector<1x1x16x16xbf16> to vector<16x16xbf16>
    %cst_40 = arith.constant dense<0.000000e+00> : vector<576x16xf32>
    %36 = tpu.matmul %33, %35, %cst_40 {dimension_numbers = #tpu.dot_dimension_numbers<[1], [0], [0], [1], [0, 0, 1, 1], [], []>} : vector<576x16xbf16>, vector<16x16xbf16>, vector<576x16xf32> -> vector<576x16xf32>
    %37 = arith.addf %30, %36 : vector<576x16xf32>
    %c0_41 = arith.constant 0 : index
    %c19 = arith.constant 19 : index
    %c0_42 = arith.constant 0 : index
    %38 = vector.load %arg1[%c0_41, %c19, %c0_42] : memref<2x326x16xf32, #tpu.memory_space<vmem>>, vector<2x288x16xf32>
    %39 = vector.shape_cast %38 : vector<2x288x16xf32> to vector<576x16xf32>
    %40 = arith.truncf %39 : vector<576x16xf32> to vector<576x16xbf16>
    %c0_43 = arith.constant 0 : index
    %c4 = arith.constant 4 : index
    %c0_44 = arith.constant 0 : index
    %c0_45 = arith.constant 0 : index
    %41 = vector.load %arg2[%c0_43, %c4, %c0_44, %c0_45] : memref<4x9x16x16xbf16, #tpu.memory_space<vmem>>, vector<1x1x16x16xbf16>
    %42 = vector.shape_cast %41 : vector<1x1x16x16xbf16> to vector<16x16xbf16>
    %cst_46 = arith.constant dense<0.000000e+00> : vector<576x16xf32>
    %43 = tpu.matmul %40, %42, %cst_46 {dimension_numbers = #tpu.dot_dimension_numbers<[1], [0], [0], [1], [0, 0, 1, 1], [], []>} : vector<576x16xbf16>, vector<16x16xbf16>, vector<576x16xf32> -> vector<576x16xf32>
    %44 = arith.addf %37, %43 : vector<576x16xf32>
    %c0_47 = arith.constant 0 : index
    %c20 = arith.constant 20 : index
    %c0_48 = arith.constant 0 : index
    %45 = vector.load %arg1[%c0_47, %c20, %c0_48] : memref<2x326x16xf32, #tpu.memory_space<vmem>>, vector<2x288x16xf32>
    %46 = vector.shape_cast %45 : vector<2x288x16xf32> to vector<576x16xf32>
    %47 = arith.truncf %46 : vector<576x16xf32> to vector<576x16xbf16>
    %c0_49 = arith.constant 0 : index
    %c5 = arith.constant 5 : index
    %c0_50 = arith.constant 0 : index
    %c0_51 = arith.constant 0 : index
    %48 = vector.load %arg2[%c0_49, %c5, %c0_50, %c0_51] : memref<4x9x16x16xbf16, #tpu.memory_space<vmem>>, vector<1x1x16x16xbf16>
    %49 = vector.shape_cast %48 : vector<1x1x16x16xbf16> to vector<16x16xbf16>
    %cst_52 = arith.constant dense<0.000000e+00> : vector<576x16xf32>
    %50 = tpu.matmul %47, %49, %cst_52 {dimension_numbers = #tpu.dot_dimension_numbers<[1], [0], [0], [1], [0, 0, 1, 1], [], []>} : vector<576x16xbf16>, vector<16x16xbf16>, vector<576x16xf32> -> vector<576x16xf32>
    %51 = arith.addf %44, %50 : vector<576x16xf32>
    %c0_53 = arith.constant 0 : index
    %c36 = arith.constant 36 : index
    %c0_54 = arith.constant 0 : index
    %52 = vector.load %arg1[%c0_53, %c36, %c0_54] : memref<2x326x16xf32, #tpu.memory_space<vmem>>, vector<2x288x16xf32>
    %53 = vector.shape_cast %52 : vector<2x288x16xf32> to vector<576x16xf32>
    %54 = arith.truncf %53 : vector<576x16xf32> to vector<576x16xbf16>
    %c0_55 = arith.constant 0 : index
    %c6 = arith.constant 6 : index
    %c0_56 = arith.constant 0 : index
    %c0_57 = arith.constant 0 : index
    %55 = vector.load %arg2[%c0_55, %c6, %c0_56, %c0_57] : memref<4x9x16x16xbf16, #tpu.memory_space<vmem>>, vector<1x1x16x16xbf16>
    %56 = vector.shape_cast %55 : vector<1x1x16x16xbf16> to vector<16x16xbf16>
    %cst_58 = arith.constant dense<0.000000e+00> : vector<576x16xf32>
    %57 = tpu.matmul %54, %56, %cst_58 {dimension_numbers = #tpu.dot_dimension_numbers<[1], [0], [0], [1], [0, 0, 1, 1], [], []>} : vector<576x16xbf16>, vector<16x16xbf16>, vector<576x16xf32> -> vector<576x16xf32>
    %58 = arith.addf %51, %57 : vector<576x16xf32>
    %c0_59 = arith.constant 0 : index
    %c37 = arith.constant 37 : index
    %c0_60 = arith.constant 0 : index
    %59 = vector.load %arg1[%c0_59, %c37, %c0_60] : memref<2x326x16xf32, #tpu.memory_space<vmem>>, vector<2x288x16xf32>
    %60 = vector.shape_cast %59 : vector<2x288x16xf32> to vector<576x16xf32>
    %61 = arith.truncf %60 : vector<576x16xf32> to vector<576x16xbf16>
    %c0_61 = arith.constant 0 : index
    %c7 = arith.constant 7 : index
    %c0_62 = arith.constant 0 : index
    %c0_63 = arith.constant 0 : index
    %62 = vector.load %arg2[%c0_61, %c7, %c0_62, %c0_63] : memref<4x9x16x16xbf16, #tpu.memory_space<vmem>>, vector<1x1x16x16xbf16>
    %63 = vector.shape_cast %62 : vector<1x1x16x16xbf16> to vector<16x16xbf16>
    %cst_64 = arith.constant dense<0.000000e+00> : vector<576x16xf32>
    %64 = tpu.matmul %61, %63, %cst_64 {dimension_numbers = #tpu.dot_dimension_numbers<[1], [0], [0], [1], [0, 0, 1, 1], [], []>} : vector<576x16xbf16>, vector<16x16xbf16>, vector<576x16xf32> -> vector<576x16xf32>
    %65 = arith.addf %58, %64 : vector<576x16xf32>
    %c0_65 = arith.constant 0 : index
    %c38 = arith.constant 38 : index
    %c0_66 = arith.constant 0 : index
    %66 = vector.load %arg1[%c0_65, %c38, %c0_66] : memref<2x326x16xf32, #tpu.memory_space<vmem>>, vector<2x288x16xf32>
    %67 = vector.shape_cast %66 : vector<2x288x16xf32> to vector<576x16xf32>
    %68 = arith.truncf %67 : vector<576x16xf32> to vector<576x16xbf16>
    %c0_67 = arith.constant 0 : index
    %c8 = arith.constant 8 : index
    %c0_68 = arith.constant 0 : index
    %c0_69 = arith.constant 0 : index
    %69 = vector.load %arg2[%c0_67, %c8, %c0_68, %c0_69] : memref<4x9x16x16xbf16, #tpu.memory_space<vmem>>, vector<1x1x16x16xbf16>
    %70 = vector.shape_cast %69 : vector<1x1x16x16xbf16> to vector<16x16xbf16>
    %cst_70 = arith.constant dense<0.000000e+00> : vector<576x16xf32>
    %71 = tpu.matmul %68, %70, %cst_70 {dimension_numbers = #tpu.dot_dimension_numbers<[1], [0], [0], [1], [0, 0, 1, 1], [], []>} : vector<576x16xbf16>, vector<16x16xbf16>, vector<576x16xf32> -> vector<576x16xf32>
    %72 = arith.addf %65, %71 : vector<576x16xf32>
    %cst_71 = arith.constant 0.000000e+00 : f32
    %73 = vector.broadcast %cst_71 : f32 to vector<576x16xf32>
    %74 = arith.maximumf %72, %73 : vector<576x16xf32>
    %c0_72 = arith.constant 0 : index
    %c0_73 = arith.constant 0 : index
    %75 = vector.load %arg8[%c0_72, %c0_73] : memref<576x16xf32, #tpu.memory_space<vmem>>, vector<576x16xf32>
    tpu.vector_store %arg8[%c0_72, %c0_73], %74 {strides = array<i32>} : memref<576x16xf32, #tpu.memory_space<vmem>>, vector<576x16xf32>,
    %c0_74 = arith.constant 0 : index
    %c0_75 = arith.constant 0 : index
    %76 = tpu.strided_load %arg8[%c0_74, %c0_75] {strides = array<i32: 2, 1>} : memref<576x16xf32, #tpu.memory_space<vmem>>, vector<8x16xf32>
    %c1_76 = arith.constant 1 : index
    %c0_77 = arith.constant 0 : index
    %77 = tpu.strided_load %arg8[%c1_76, %c0_77] {strides = array<i32: 2, 1>} : memref<576x16xf32, #tpu.memory_space<vmem>>, vector<8x16xf32>
    %c18_78 = arith.constant 18 : index
    %c0_79 = arith.constant 0 : index
    %78 = tpu.strided_load %arg8[%c18_78, %c0_79] {strides = array<i32: 2, 1>} : memref<576x16xf32, #tpu.memory_space<vmem>>, vector<8x16xf32>
    %c19_80 = arith.constant 19 : index
    %c0_81 = arith.constant 0 : index
    %79 = tpu.strided_load %arg8[%c19_80, %c0_81] {strides = array<i32: 2, 1>} : memref<576x16xf32, #tpu.memory_space<vmem>>, vector<8x16xf32>
    %80 = arith.maximumf %76, %77 : vector<8x16xf32>
    %81 = arith.maximumf %78, %79 : vector<8x16xf32>
    %82 = arith.maximumf %80, %81 : vector<8x16xf32>
    %c0_82 = arith.constant 0 : index
    %c11 = arith.constant 11 : index
    %c0_83 = arith.constant 0 : index
    %83 = vector.load %arg5[%c0_82, %c11, %c0_83] : memref<2x102x16xf32, #tpu.memory_space<vmem>>, vector<1x8x16xf32>
    %84 = vector.shape_cast %83 : vector<1x8x16xf32> to vector<8x16xf32>
    %85 = vector.shape_cast %82 : vector<8x16xf32> to vector<1x8x16xf32>
    tpu.vector_store %arg5[%c0_82, %c11, %c0_83], %85 {strides = array<i32>} : memref<2x102x16xf32, #tpu.memory_space<vmem>>, vector<1x8x16xf32>,
    %c36_84 = arith.constant 36 : index
    %c0_85 = arith.constant 0 : index
    %86 = tpu.strided_load %arg8[%c36_84, %c0_85] {strides = array<i32: 2, 1>} : memref<576x16xf32, #tpu.memory_space<vmem>>, vector<8x16xf32>
    %c37_86 = arith.constant 37 : index
    %c0_87 = arith.constant 0 : index
    %87 = tpu.strided_load %arg8[%c37_86, %c0_87] {strides = array<i32: 2, 1>} : memref<576x16xf32, #tpu.memory_space<vmem>>, vector<8x16xf32>
    %c54 = arith.constant 54 : index
    %c0_88 = arith.constant 0 : index
    %88 = tpu.strided_load %arg8[%c54, %c0_88] {strides = array<i32: 2, 1>} : memref<576x16xf32, #tpu.memory_space<vmem>>, vector<8x16xf32>
    %c55 = arith.constant 55 : index
    %c0_89 = arith.constant 0 : index
    %89 = tpu.strided_load %arg8[%c55, %c0_89] {strides = array<i32: 2, 1>} : memref<576x16xf32, #tpu.memory_space<vmem>>, vector<8x16xf32>
    %90 = arith.maximumf %86, %87 : vector<8x16xf32>
    %91 = arith.maximumf %88, %89 : vector<8x16xf32>
    %92 = arith.maximumf %90, %91 : vector<8x16xf32>
    %c0_90 = arith.constant 0 : index
    %c21 = arith.constant 21 : index
    %c0_91 = arith.constant 0 : index
    %93 = vector.load %arg5[%c0_90, %c21, %c0_91] : memref<2x102x16xf32, #tpu.memory_space<vmem>>, vector<1x8x16xf32>
    %94 = vector.shape_cast %93 : vector<1x8x16xf32> to vector<8x16xf32>
    %95 = vector.shape_cast %92 : vector<8x16xf32> to vector<1x8x16xf32>
    tpu.vector_store %arg5[%c0_90, %c21, %c0_91], %95 {strides = array<i32>} : memref<2x102x16xf32, #tpu.memory_space<vmem>>, vector<1x8x16xf32>,
    %c72 = arith.constant 72 : index
    %c0_92 = arith.constant 0 : index
    %96 = tpu.strided_load %arg8[%c72, %c0_92] {strides = array<i32: 2, 1>} : memref<576x16xf32, #tpu.memory_space<vmem>>, vector<8x16xf32>
    %c73 = arith.constant 73 : index
    %c0_93 = arith.constant 0 : index
    %97 = tpu.strided_load %arg8[%c73, %c0_93] {strides = array<i32: 2, 1>} : memref<576x16xf32, #tpu.memory_space<vmem>>, vector<8x16xf32>
    %c90 = arith.constant 90 : index
    %c0_94 = arith.constant 0 : index
    %98 = tpu.strided_load %arg8[%c90, %c0_94] {strides = array<i32: 2, 1>} : memref<576x16xf32, #tpu.memory_space<vmem>>, vector<8x16xf32>
    %c91 = arith.constant 91 : index
    %c0_95 = arith.constant 0 : index
    %99 = tpu.strided_load %arg8[%c91, %c0_95] {strides = array<i32: 2, 1>} : memref<576x16xf32, #tpu.memory_space<vmem>>, vector<8x16xf32>
    %100 = arith.maximumf %96, %97 : vector<8x16xf32>
    %101 = arith.maximumf %98, %99 : vector<8x16xf32>
    %102 = arith.maximumf %100, %101 : vector<8x16xf32>
    %c0_96 = arith.constant 0 : index
    %c31 = arith.constant 31 : index
    %c0_97 = arith.constant 0 : index
    %103 = vector.load %arg5[%c0_96, %c31, %c0_97] : memref<2x102x16xf32, #tpu.memory_space<vmem>>, vector<1x8x16xf32>
    %104 = vector.shape_cast %103 : vector<1x8x16xf32> to vector<8x16xf32>
    %105 = vector.shape_cast %102 : vector<8x16xf32> to vector<1x8x16xf32>
    tpu.vector_store %arg5[%c0_96, %c31, %c0_97], %105 {strides = array<i32>} : memref<2x102x16xf32, #tpu.memory_space<vmem>>, vector<1x8x16xf32>,
    %c108 = arith.constant 108 : index
    %c0_98 = arith.constant 0 : index
    %106 = tpu.strided_load %arg8[%c108, %c0_98] {strides = array<i32: 2, 1>} : memref<576x16xf32, #tpu.memory_space<vmem>>, vector<8x16xf32>
    %c109 = arith.constant 109 : index
    %c0_99 = arith.constant 0 : index
    %107 = tpu.strided_load %arg8[%c109, %c0_99] {strides = array<i32: 2, 1>} : memref<576x16xf32, #tpu.memory_space<vmem>>, vector<8x16xf32>
    %c126 = arith.constant 126 : index
    %c0_100 = arith.constant 0 : index
    %108 = tpu.strided_load %arg8[%c126, %c0_100] {strides = array<i32: 2, 1>} : memref<576x16xf32, #tpu.memory_space<vmem>>, vector<8x16xf32>
    %c127 = arith.constant 127 : index
    %c0_101 = arith.constant 0 : index
    %109 = tpu.strided_load %arg8[%c127, %c0_101] {strides = array<i32: 2, 1>} : memref<576x16xf32, #tpu.memory_space<vmem>>, vector<8x16xf32>
    %110 = arith.maximumf %106, %107 : vector<8x16xf32>
    %111 = arith.maximumf %108, %109 : vector<8x16xf32>
    %112 = arith.maximumf %110, %111 : vector<8x16xf32>
    %c0_102 = arith.constant 0 : index
    %c41 = arith.constant 41 : index
    %c0_103 = arith.constant 0 : index
    %113 = vector.load %arg5[%c0_102, %c41, %c0_103] : memref<2x102x16xf32, #tpu.memory_space<vmem>>, vector<1x8x16xf32>
    %114 = vector.shape_cast %113 : vector<1x8x16xf32> to vector<8x16xf32>
    %115 = vector.shape_cast %112 : vector<8x16xf32> to vector<1x8x16xf32>
    tpu.vector_store %arg5[%c0_102, %c41, %c0_103], %115 {strides = array<i32>} : memref<2x102x16xf32, #tpu.memory_space<vmem>>, vector<1x8x16xf32>,
    %c144 = arith.constant 144 : index
    %c0_104 = arith.constant 0 : index
    %116 = tpu.strided_load %arg8[%c144, %c0_104] {strides = array<i32: 2, 1>} : memref<576x16xf32, #tpu.memory_space<vmem>>, vector<8x16xf32>
    %c145 = arith.constant 145 : index
    %c0_105 = arith.constant 0 : index
    %117 = tpu.strided_load %arg8[%c145, %c0_105] {strides = array<i32: 2, 1>} : memref<576x16xf32, #tpu.memory_space<vmem>>, vector<8x16xf32>
    %c162 = arith.constant 162 : index
    %c0_106 = arith.constant 0 : index
    %118 = tpu.strided_load %arg8[%c162, %c0_106] {strides = array<i32: 2, 1>} : memref<576x16xf32, #tpu.memory_space<vmem>>, vector<8x16xf32>
    %c163 = arith.constant 163 : index
    %c0_107 = arith.constant 0 : index
    %119 = tpu.strided_load %arg8[%c163, %c0_107] {strides = array<i32: 2, 1>} : memref<576x16xf32, #tpu.memory_space<vmem>>, vector<8x16xf32>
    %120 = arith.maximumf %116, %117 : vector<8x16xf32>
    %121 = arith.maximumf %118, %119 : vector<8x16xf32>
    %122 = arith.maximumf %120, %121 : vector<8x16xf32>
    %c0_108 = arith.constant 0 : index
    %c51 = arith.constant 51 : index
    %c0_109 = arith.constant 0 : index
    %123 = vector.load %arg5[%c0_108, %c51, %c0_109] : memref<2x102x16xf32, #tpu.memory_space<vmem>>, vector<1x8x16xf32>
    %124 = vector.shape_cast %123 : vector<1x8x16xf32> to vector<8x16xf32>
    %125 = vector.shape_cast %122 : vector<8x16xf32> to vector<1x8x16xf32>
    tpu.vector_store %arg5[%c0_108, %c51, %c0_109], %125 {strides = array<i32>} : memref<2x102x16xf32, #tpu.memory_space<vmem>>, vector<1x8x16xf32>,
    %c180 = arith.constant 180 : index
    %c0_110 = arith.constant 0 : index
    %126 = tpu.strided_load %arg8[%c180, %c0_110] {strides = array<i32: 2, 1>} : memref<576x16xf32, #tpu.memory_space<vmem>>, vector<8x16xf32>
    %c181 = arith.constant 181 : index
    %c0_111 = arith.constant 0 : index
    %127 = tpu.strided_load %arg8[%c181, %c0_111] {strides = array<i32: 2, 1>} : memref<576x16xf32, #tpu.memory_space<vmem>>, vector<8x16xf32>
    %c198 = arith.constant 198 : index
    %c0_112 = arith.constant 0 : index
    %128 = tpu.strided_load %arg8[%c198, %c0_112] {strides = array<i32: 2, 1>} : memref<576x16xf32, #tpu.memory_space<vmem>>, vector<8x16xf32>
    %c199 = arith.constant 199 : index
    %c0_113 = arith.constant 0 : index
    %129 = tpu.strided_load %arg8[%c199, %c0_113] {strides = array<i32: 2, 1>} : memref<576x16xf32, #tpu.memory_space<vmem>>, vector<8x16xf32>
    %130 = arith.maximumf %126, %127 : vector<8x16xf32>
    %131 = arith.maximumf %128, %129 : vector<8x16xf32>
    %132 = arith.maximumf %130, %131 : vector<8x16xf32>
    %c0_114 = arith.constant 0 : index
    %c61 = arith.constant 61 : index
    %c0_115 = arith.constant 0 : index
    %133 = vector.load %arg5[%c0_114, %c61, %c0_115] : memref<2x102x16xf32, #tpu.memory_space<vmem>>, vector<1x8x16xf32>
    %134 = vector.shape_cast %133 : vector<1x8x16xf32> to vector<8x16xf32>
    %135 = vector.shape_cast %132 : vector<8x16xf32> to vector<1x8x16xf32>
    tpu.vector_store %arg5[%c0_114, %c61, %c0_115], %135 {strides = array<i32>} : memref<2x102x16xf32, #tpu.memory_space<vmem>>, vector<1x8x16xf32>,
    %c216 = arith.constant 216 : index
    %c0_116 = arith.constant 0 : index
    %136 = tpu.strided_load %arg8[%c216, %c0_116] {strides = array<i32: 2, 1>} : memref<576x16xf32, #tpu.memory_space<vmem>>, vector<8x16xf32>
    %c217 = arith.constant 217 : index
    %c0_117 = arith.constant 0 : index
    %137 = tpu.strided_load %arg8[%c217, %c0_117] {strides = array<i32: 2, 1>} : memref<576x16xf32, #tpu.memory_space<vmem>>, vector<8x16xf32>
    %c234 = arith.constant 234 : index
    %c0_118 = arith.constant 0 : index
    %138 = tpu.strided_load %arg8[%c234, %c0_118] {strides = array<i32: 2, 1>} : memref<576x16xf32, #tpu.memory_space<vmem>>, vector<8x16xf32>
    %c235 = arith.constant 235 : index
    %c0_119 = arith.constant 0 : index
    %139 = tpu.strided_load %arg8[%c235, %c0_119] {strides = array<i32: 2, 1>} : memref<576x16xf32, #tpu.memory_space<vmem>>, vector<8x16xf32>
    %140 = arith.maximumf %136, %137 : vector<8x16xf32>
    %141 = arith.maximumf %138, %139 : vector<8x16xf32>
    %142 = arith.maximumf %140, %141 : vector<8x16xf32>
    %c0_120 = arith.constant 0 : index
    %c71 = arith.constant 71 : index
    %c0_121 = arith.constant 0 : index
    %143 = vector.load %arg5[%c0_120, %c71, %c0_121] : memref<2x102x16xf32, #tpu.memory_space<vmem>>, vector<1x8x16xf32>
    %144 = vector.shape_cast %143 : vector<1x8x16xf32> to vector<8x16xf32>
    %145 = vector.shape_cast %142 : vector<8x16xf32> to vector<1x8x16xf32>
    tpu.vector_store %arg5[%c0_120, %c71, %c0_121], %145 {strides = array<i32>} : memref<2x102x16xf32, #tpu.memory_space<vmem>>, vector<1x8x16xf32>,
    %c252 = arith.constant 252 : index
    %c0_122 = arith.constant 0 : index
    %146 = tpu.strided_load %arg8[%c252, %c0_122] {strides = array<i32: 2, 1>} : memref<576x16xf32, #tpu.memory_space<vmem>>, vector<8x16xf32>
    %c253 = arith.constant 253 : index
    %c0_123 = arith.constant 0 : index
    %147 = tpu.strided_load %arg8[%c253, %c0_123] {strides = array<i32: 2, 1>} : memref<576x16xf32, #tpu.memory_space<vmem>>, vector<8x16xf32>
    %c270 = arith.constant 270 : index
    %c0_124 = arith.constant 0 : index
    %148 = tpu.strided_load %arg8[%c270, %c0_124] {strides = array<i32: 2, 1>} : memref<576x16xf32, #tpu.memory_space<vmem>>, vector<8x16xf32>
    %c271 = arith.constant 271 : index
    %c0_125 = arith.constant 0 : index
    %149 = tpu.strided_load %arg8[%c271, %c0_125] {strides = array<i32: 2, 1>} : memref<576x16xf32, #tpu.memory_space<vmem>>, vector<8x16xf32>
    %150 = arith.maximumf %146, %147 : vector<8x16xf32>
    %151 = arith.maximumf %148, %149 : vector<8x16xf32>
    %152 = arith.maximumf %150, %151 : vector<8x16xf32>
    %c0_126 = arith.constant 0 : index
    %c81 = arith.constant 81 : index
    %c0_127 = arith.constant 0 : index
    %153 = vector.load %arg5[%c0_126, %c81, %c0_127] : memref<2x102x16xf32, #tpu.memory_space<vmem>>, vector<1x8x16xf32>
    %154 = vector.shape_cast %153 : vector<1x8x16xf32> to vector<8x16xf32>
    %155 = vector.shape_cast %152 : vector<8x16xf32> to vector<1x8x16xf32>
    tpu.vector_store %arg5[%c0_126, %c81, %c0_127], %155 {strides = array<i32>} : memref<2x102x16xf32, #tpu.memory_space<vmem>>, vector<1x8x16xf32>,
    %c288 = arith.constant 288 : index
    %c0_128 = arith.constant 0 : index
    %156 = tpu.strided_load %arg8[%c288, %c0_128] {strides = array<i32: 2, 1>} : memref<576x16xf32, #tpu.memory_space<vmem>>, vector<8x16xf32>
    %c289 = arith.constant 289 : index
    %c0_129 = arith.constant 0 : index
    %157 = tpu.strided_load %arg8[%c289, %c0_129] {strides = array<i32: 2, 1>} : memref<576x16xf32, #tpu.memory_space<vmem>>, vector<8x16xf32>
    %c306 = arith.constant 306 : index
    %c0_130 = arith.constant 0 : index
    %158 = tpu.strided_load %arg8[%c306, %c0_130] {strides = array<i32: 2, 1>} : memref<576x16xf32, #tpu.memory_space<vmem>>, vector<8x16xf32>
    %c307 = arith.constant 307 : index
    %c0_131 = arith.constant 0 : index
    %159 = tpu.strided_load %arg8[%c307, %c0_131] {strides = array<i32: 2, 1>} : memref<576x16xf32, #tpu.memory_space<vmem>>, vector<8x16xf32>
    %160 = arith.maximumf %156, %157 : vector<8x16xf32>
    %161 = arith.maximumf %158, %159 : vector<8x16xf32>
    %162 = arith.maximumf %160, %161 : vector<8x16xf32>
    %c1_132 = arith.constant 1 : index
    %c11_133 = arith.constant 11 : index
    %c0_134 = arith.constant 0 : index
    %163 = vector.load %arg5[%c1_132, %c11_133, %c0_134] : memref<2x102x16xf32, #tpu.memory_space<vmem>>, vector<1x8x16xf32>
    %164 = vector.shape_cast %163 : vector<1x8x16xf32> to vector<8x16xf32>
    %165 = vector.shape_cast %162 : vector<8x16xf32> to vector<1x8x16xf32>
    tpu.vector_store %arg5[%c1_132, %c11_133, %c0_134], %165 {strides = array<i32>} : memref<2x102x16xf32, #tpu.memory_space<vmem>>, vector<1x8x16xf32>,
    %c324 = arith.constant 324 : index
    %c0_135 = arith.constant 0 : index
    %166 = tpu.strided_load %arg8[%c324, %c0_135] {strides = array<i32: 2, 1>} : memref<576x16xf32, #tpu.memory_space<vmem>>, vector<8x16xf32>
    %c325 = arith.constant 325 : index
    %c0_136 = arith.constant 0 : index
    %167 = tpu.strided_load %arg8[%c325, %c0_136] {strides = array<i32: 2, 1>} : memref<576x16xf32, #tpu.memory_space<vmem>>, vector<8x16xf32>
    %c342 = arith.constant 342 : index
    %c0_137 = arith.constant 0 : index
    %168 = tpu.strided_load %arg8[%c342, %c0_137] {strides = array<i32: 2, 1>} : memref<576x16xf32, #tpu.memory_space<vmem>>, vector<8x16xf32>
    %c343 = arith.constant 343 : index
    %c0_138 = arith.constant 0 : index
    %169 = tpu.strided_load %arg8[%c343, %c0_138] {strides = array<i32: 2, 1>} : memref<576x16xf32, #tpu.memory_space<vmem>>, vector<8x16xf32>
    %170 = arith.maximumf %166, %167 : vector<8x16xf32>
    %171 = arith.maximumf %168, %169 : vector<8x16xf32>
    %172 = arith.maximumf %170, %171 : vector<8x16xf32>
    %c1_139 = arith.constant 1 : index
    %c21_140 = arith.constant 21 : index
    %c0_141 = arith.constant 0 : index
    %173 = vector.load %arg5[%c1_139, %c21_140, %c0_141] : memref<2x102x16xf32, #tpu.memory_space<vmem>>, vector<1x8x16xf32>
    %174 = vector.shape_cast %173 : vector<1x8x16xf32> to vector<8x16xf32>
    %175 = vector.shape_cast %172 : vector<8x16xf32> to vector<1x8x16xf32>
    tpu.vector_store %arg5[%c1_139, %c21_140, %c0_141], %175 {strides = array<i32>} : memref<2x102x16xf32, #tpu.memory_space<vmem>>, vector<1x8x16xf32>,
    %c360 = arith.constant 360 : index
    %c0_142 = arith.constant 0 : index
    %176 = tpu.strided_load %arg8[%c360, %c0_142] {strides = array<i32: 2, 1>} : memref<576x16xf32, #tpu.memory_space<vmem>>, vector<8x16xf32>
    %c361 = arith.constant 361 : index
    %c0_143 = arith.constant 0 : index
    %177 = tpu.strided_load %arg8[%c361, %c0_143] {strides = array<i32: 2, 1>} : memref<576x16xf32, #tpu.memory_space<vmem>>, vector<8x16xf32>
    %c378 = arith.constant 378 : index
    %c0_144 = arith.constant 0 : index
    %178 = tpu.strided_load %arg8[%c378, %c0_144] {strides = array<i32: 2, 1>} : memref<576x16xf32, #tpu.memory_space<vmem>>, vector<8x16xf32>
    %c379 = arith.constant 379 : index
    %c0_145 = arith.constant 0 : index
    %179 = tpu.strided_load %arg8[%c379, %c0_145] {strides = array<i32: 2, 1>} : memref<576x16xf32, #tpu.memory_space<vmem>>, vector<8x16xf32>
    %180 = arith.maximumf %176, %177 : vector<8x16xf32>
    %181 = arith.maximumf %178, %179 : vector<8x16xf32>
    %182 = arith.maximumf %180, %181 : vector<8x16xf32>
    %c1_146 = arith.constant 1 : index
    %c31_147 = arith.constant 31 : index
    %c0_148 = arith.constant 0 : index
    %183 = vector.load %arg5[%c1_146, %c31_147, %c0_148] : memref<2x102x16xf32, #tpu.memory_space<vmem>>, vector<1x8x16xf32>
    %184 = vector.shape_cast %183 : vector<1x8x16xf32> to vector<8x16xf32>
    %185 = vector.shape_cast %182 : vector<8x16xf32> to vector<1x8x16xf32>
    tpu.vector_store %arg5[%c1_146, %c31_147, %c0_148], %185 {strides = array<i32>} : memref<2x102x16xf32, #tpu.memory_space<vmem>>, vector<1x8x16xf32>,
    %c396 = arith.constant 396 : index
    %c0_149 = arith.constant 0 : index
    %186 = tpu.strided_load %arg8[%c396, %c0_149] {strides = array<i32: 2, 1>} : memref<576x16xf32, #tpu.memory_space<vmem>>, vector<8x16xf32>
    %c397 = arith.constant 397 : index
    %c0_150 = arith.constant 0 : index
    %187 = tpu.strided_load %arg8[%c397, %c0_150] {strides = array<i32: 2, 1>} : memref<576x16xf32, #tpu.memory_space<vmem>>, vector<8x16xf32>
    %c414 = arith.constant 414 : index
    %c0_151 = arith.constant 0 : index
    %188 = tpu.strided_load %arg8[%c414, %c0_151] {strides = array<i32: 2, 1>} : memref<576x16xf32, #tpu.memory_space<vmem>>, vector<8x16xf32>
    %c415 = arith.constant 415 : index
    %c0_152 = arith.constant 0 : index
    %189 = tpu.strided_load %arg8[%c415, %c0_152] {strides = array<i32: 2, 1>} : memref<576x16xf32, #tpu.memory_space<vmem>>, vector<8x16xf32>
    %190 = arith.maximumf %186, %187 : vector<8x16xf32>
    %191 = arith.maximumf %188, %189 : vector<8x16xf32>
    %192 = arith.maximumf %190, %191 : vector<8x16xf32>
    %c1_153 = arith.constant 1 : index
    %c41_154 = arith.constant 41 : index
    %c0_155 = arith.constant 0 : index
    %193 = vector.load %arg5[%c1_153, %c41_154, %c0_155] : memref<2x102x16xf32, #tpu.memory_space<vmem>>, vector<1x8x16xf32>
    %194 = vector.shape_cast %193 : vector<1x8x16xf32> to vector<8x16xf32>
    %195 = vector.shape_cast %192 : vector<8x16xf32> to vector<1x8x16xf32>
    tpu.vector_store %arg5[%c1_153, %c41_154, %c0_155], %195 {strides = array<i32>} : memref<2x102x16xf32, #tpu.memory_space<vmem>>, vector<1x8x16xf32>,
    %c432 = arith.constant 432 : index
    %c0_156 = arith.constant 0 : index
    %196 = tpu.strided_load %arg8[%c432, %c0_156] {strides = array<i32: 2, 1>} : memref<576x16xf32, #tpu.memory_space<vmem>>, vector<8x16xf32>
    %c433 = arith.constant 433 : index
    %c0_157 = arith.constant 0 : index
    %197 = tpu.strided_load %arg8[%c433, %c0_157] {strides = array<i32: 2, 1>} : memref<576x16xf32, #tpu.memory_space<vmem>>, vector<8x16xf32>
    %c450 = arith.constant 450 : index
    %c0_158 = arith.constant 0 : index
    %198 = tpu.strided_load %arg8[%c450, %c0_158] {strides = array<i32: 2, 1>} : memref<576x16xf32, #tpu.memory_space<vmem>>, vector<8x16xf32>
    %c451 = arith.constant 451 : index
    %c0_159 = arith.constant 0 : index
    %199 = tpu.strided_load %arg8[%c451, %c0_159] {strides = array<i32: 2, 1>} : memref<576x16xf32, #tpu.memory_space<vmem>>, vector<8x16xf32>
    %200 = arith.maximumf %196, %197 : vector<8x16xf32>
    %201 = arith.maximumf %198, %199 : vector<8x16xf32>
    %202 = arith.maximumf %200, %201 : vector<8x16xf32>
    %c1_160 = arith.constant 1 : index
    %c51_161 = arith.constant 51 : index
    %c0_162 = arith.constant 0 : index
    %203 = vector.load %arg5[%c1_160, %c51_161, %c0_162] : memref<2x102x16xf32, #tpu.memory_space<vmem>>, vector<1x8x16xf32>
    %204 = vector.shape_cast %203 : vector<1x8x16xf32> to vector<8x16xf32>
    %205 = vector.shape_cast %202 : vector<8x16xf32> to vector<1x8x16xf32>
    tpu.vector_store %arg5[%c1_160, %c51_161, %c0_162], %205 {strides = array<i32>} : memref<2x102x16xf32, #tpu.memory_space<vmem>>, vector<1x8x16xf32>,
    %c468 = arith.constant 468 : index
    %c0_163 = arith.constant 0 : index
    %206 = tpu.strided_load %arg8[%c468, %c0_163] {strides = array<i32: 2, 1>} : memref<576x16xf32, #tpu.memory_space<vmem>>, vector<8x16xf32>
    %c469 = arith.constant 469 : index
    %c0_164 = arith.constant 0 : index
    %207 = tpu.strided_load %arg8[%c469, %c0_164] {strides = array<i32: 2, 1>} : memref<576x16xf32, #tpu.memory_space<vmem>>, vector<8x16xf32>
    %c486 = arith.constant 486 : index
    %c0_165 = arith.constant 0 : index
    %208 = tpu.strided_load %arg8[%c486, %c0_165] {strides = array<i32: 2, 1>} : memref<576x16xf32, #tpu.memory_space<vmem>>, vector<8x16xf32>
    %c487 = arith.constant 487 : index
    %c0_166 = arith.constant 0 : index
    %209 = tpu.strided_load %arg8[%c487, %c0_166] {strides = array<i32: 2, 1>} : memref<576x16xf32, #tpu.memory_space<vmem>>, vector<8x16xf32>
    %210 = arith.maximumf %206, %207 : vector<8x16xf32>
    %211 = arith.maximumf %208, %209 : vector<8x16xf32>
    %212 = arith.maximumf %210, %211 : vector<8x16xf32>
    %c1_167 = arith.constant 1 : index
    %c61_168 = arith.constant 61 : index
    %c0_169 = arith.constant 0 : index
    %213 = vector.load %arg5[%c1_167, %c61_168, %c0_169] : memref<2x102x16xf32, #tpu.memory_space<vmem>>, vector<1x8x16xf32>
    %214 = vector.shape_cast %213 : vector<1x8x16xf32> to vector<8x16xf32>
    %215 = vector.shape_cast %212 : vector<8x16xf32> to vector<1x8x16xf32>
    tpu.vector_store %arg5[%c1_167, %c61_168, %c0_169], %215 {strides = array<i32>} : memref<2x102x16xf32, #tpu.memory_space<vmem>>, vector<1x8x16xf32>,
    %c504 = arith.constant 504 : index
    %c0_170 = arith.constant 0 : index
    %216 = tpu.strided_load %arg8[%c504, %c0_170] {strides = array<i32: 2, 1>} : memref<576x16xf32, #tpu.memory_space<vmem>>, vector<8x16xf32>
    %c505 = arith.constant 505 : index
    %c0_171 = arith.constant 0 : index
    %217 = tpu.strided_load %arg8[%c505, %c0_171] {strides = array<i32: 2, 1>} : memref<576x16xf32, #tpu.memory_space<vmem>>, vector<8x16xf32>
    %c522 = arith.constant 522 : index
    %c0_172 = arith.constant 0 : index
    %218 = tpu.strided_load %arg8[%c522, %c0_172] {strides = array<i32: 2, 1>} : memref<576x16xf32, #tpu.memory_space<vmem>>, vector<8x16xf32>
    %c523 = arith.constant 523 : index
    %c0_173 = arith.constant 0 : index
    %219 = tpu.strided_load %arg8[%c523, %c0_173] {strides = array<i32: 2, 1>} : memref<576x16xf32, #tpu.memory_space<vmem>>, vector<8x16xf32>
    %220 = arith.maximumf %216, %217 : vector<8x16xf32>
    %221 = arith.maximumf %218, %219 : vector<8x16xf32>
    %222 = arith.maximumf %220, %221 : vector<8x16xf32>
    %c1_174 = arith.constant 1 : index
    %c71_175 = arith.constant 71 : index
    %c0_176 = arith.constant 0 : index
    %223 = vector.load %arg5[%c1_174, %c71_175, %c0_176] : memref<2x102x16xf32, #tpu.memory_space<vmem>>, vector<1x8x16xf32>
    %224 = vector.shape_cast %223 : vector<1x8x16xf32> to vector<8x16xf32>
    %225 = vector.shape_cast %222 : vector<8x16xf32> to vector<1x8x16xf32>
    tpu.vector_store %arg5[%c1_174, %c71_175, %c0_176], %225 {strides = array<i32>} : memref<2x102x16xf32, #tpu.memory_space<vmem>>, vector<1x8x16xf32>,
    %c540 = arith.constant 540 : index
    %c0_177 = arith.constant 0 : index
    %226 = tpu.strided_load %arg8[%c540, %c0_177] {strides = array<i32: 2, 1>} : memref<576x16xf32, #tpu.memory_space<vmem>>, vector<8x16xf32>
    %c541 = arith.constant 541 : index
    %c0_178 = arith.constant 0 : index
    %227 = tpu.strided_load %arg8[%c541, %c0_178] {strides = array<i32: 2, 1>} : memref<576x16xf32, #tpu.memory_space<vmem>>, vector<8x16xf32>
    %c558 = arith.constant 558 : index
    %c0_179 = arith.constant 0 : index
    %228 = tpu.strided_load %arg8[%c558, %c0_179] {strides = array<i32: 2, 1>} : memref<576x16xf32, #tpu.memory_space<vmem>>, vector<8x16xf32>
    %c559 = arith.constant 559 : index
    %c0_180 = arith.constant 0 : index
    %229 = tpu.strided_load %arg8[%c559, %c0_180] {strides = array<i32: 2, 1>} : memref<576x16xf32, #tpu.memory_space<vmem>>, vector<8x16xf32>
    %230 = arith.maximumf %226, %227 : vector<8x16xf32>
    %231 = arith.maximumf %228, %229 : vector<8x16xf32>
    %232 = arith.maximumf %230, %231 : vector<8x16xf32>
    %c1_181 = arith.constant 1 : index
    %c81_182 = arith.constant 81 : index
    %c0_183 = arith.constant 0 : index
    %233 = vector.load %arg5[%c1_181, %c81_182, %c0_183] : memref<2x102x16xf32, #tpu.memory_space<vmem>>, vector<1x8x16xf32>
    %234 = vector.shape_cast %233 : vector<1x8x16xf32> to vector<8x16xf32>
    %235 = vector.shape_cast %232 : vector<8x16xf32> to vector<1x8x16xf32>
    tpu.vector_store %arg5[%c1_181, %c81_182, %c0_183], %235 {strides = array<i32>} : memref<2x102x16xf32, #tpu.memory_space<vmem>>, vector<1x8x16xf32>,
    %c1_184 = arith.constant 1 : index
    %c0_185 = arith.constant 0 : index
    %c0_186 = arith.constant 0 : index
    %236 = vector.load %arg3[%c1_184, %c0_185, %c0_186] : memref<4x1x16xf32, #tpu.memory_space<vmem>>, vector<1x1x16xf32>
    %237 = vector.shape_cast %236 : vector<1x1x16xf32> to vector<1x16xf32>
    %238 = vector.shape_cast %237 : vector<1x16xf32> to vector<1x16xf32>
    %239 = vector.broadcast %238 : vector<1x16xf32> to vector<160x16xf32>
    %c0_187 = arith.constant 0 : index
    %c0_188 = arith.constant 0 : index
    %c0_189 = arith.constant 0 : index
    %240 = vector.load %arg5[%c0_187, %c0_188, %c0_189] : memref<2x102x16xf32, #tpu.memory_space<vmem>>, vector<2x80x16xf32>
    %241 = vector.shape_cast %240 : vector<2x80x16xf32> to vector<160x16xf32>
    %242 = arith.truncf %241 : vector<160x16xf32> to vector<160x16xbf16>
    %c1_190 = arith.constant 1 : index
    %c0_191 = arith.constant 0 : index
    %c0_192 = arith.constant 0 : index
    %c0_193 = arith.constant 0 : index
    %243 = vector.load %arg2[%c1_190, %c0_191, %c0_192, %c0_193] : memref<4x9x16x16xbf16, #tpu.memory_space<vmem>>, vector<1x1x16x16xbf16>
    %244 = vector.shape_cast %243 : vector<1x1x16x16xbf16> to vector<16x16xbf16>
    %cst_194 = arith.constant dense<0.000000e+00> : vector<160x16xf32>
    %245 = tpu.matmul %242, %244, %cst_194 {dimension_numbers = #tpu.dot_dimension_numbers<[1], [0], [0], [1], [0, 0, 1, 1], [], []>} : vector<160x16xbf16>, vector<16x16xbf16>, vector<160x16xf32> -> vector<160x16xf32>
    %246 = arith.addf %239, %245 : vector<160x16xf32>
    %c0_195 = arith.constant 0 : index
    %c1_196 = arith.constant 1 : index
    %c0_197 = arith.constant 0 : index
    %247 = vector.load %arg5[%c0_195, %c1_196, %c0_197] : memref<2x102x16xf32, #tpu.memory_space<vmem>>, vector<2x80x16xf32>
    %248 = vector.shape_cast %247 : vector<2x80x16xf32> to vector<160x16xf32>
    %249 = arith.truncf %248 : vector<160x16xf32> to vector<160x16xbf16>
    %c1_198 = arith.constant 1 : index
    %c1_199 = arith.constant 1 : index
    %c0_200 = arith.constant 0 : index
    %c0_201 = arith.constant 0 : index
    %250 = vector.load %arg2[%c1_198, %c1_199, %c0_200, %c0_201] : memref<4x9x16x16xbf16, #tpu.memory_space<vmem>>, vector<1x1x16x16xbf16>
    %251 = vector.shape_cast %250 : vector<1x1x16x16xbf16> to vector<16x16xbf16>
    %cst_202 = arith.constant dense<0.000000e+00> : vector<160x16xf32>
    %252 = tpu.matmul %249, %251, %cst_202 {dimension_numbers = #tpu.dot_dimension_numbers<[1], [0], [0], [1], [0, 0, 1, 1], [], []>} : vector<160x16xbf16>, vector<16x16xbf16>, vector<160x16xf32> -> vector<160x16xf32>
    %253 = arith.addf %246, %252 : vector<160x16xf32>
    %c0_203 = arith.constant 0 : index
    %c2_204 = arith.constant 2 : index
    %c0_205 = arith.constant 0 : index
    %254 = vector.load %arg5[%c0_203, %c2_204, %c0_205] : memref<2x102x16xf32, #tpu.memory_space<vmem>>, vector<2x80x16xf32>
    %255 = vector.shape_cast %254 : vector<2x80x16xf32> to vector<160x16xf32>
    %256 = arith.truncf %255 : vector<160x16xf32> to vector<160x16xbf16>
    %c1_206 = arith.constant 1 : index
    %c2_207 = arith.constant 2 : index
    %c0_208 = arith.constant 0 : index
    %c0_209 = arith.constant 0 : index
    %257 = vector.load %arg2[%c1_206, %c2_207, %c0_208, %c0_209] : memref<4x9x16x16xbf16, #tpu.memory_space<vmem>>, vector<1x1x16x16xbf16>
    %258 = vector.shape_cast %257 : vector<1x1x16x16xbf16> to vector<16x16xbf16>
    %cst_210 = arith.constant dense<0.000000e+00> : vector<160x16xf32>
    %259 = tpu.matmul %256, %258, %cst_210 {dimension_numbers = #tpu.dot_dimension_numbers<[1], [0], [0], [1], [0, 0, 1, 1], [], []>} : vector<160x16xbf16>, vector<16x16xbf16>, vector<160x16xf32> -> vector<160x16xf32>
    %260 = arith.addf %253, %259 : vector<160x16xf32>
    %c0_211 = arith.constant 0 : index
    %c10 = arith.constant 10 : index
    %c0_212 = arith.constant 0 : index
    %261 = vector.load %arg5[%c0_211, %c10, %c0_212] : memref<2x102x16xf32, #tpu.memory_space<vmem>>, vector<2x80x16xf32>
    %262 = vector.shape_cast %261 : vector<2x80x16xf32> to vector<160x16xf32>
    %263 = arith.truncf %262 : vector<160x16xf32> to vector<160x16xbf16>
    %c1_213 = arith.constant 1 : index
    %c3_214 = arith.constant 3 : index
    %c0_215 = arith.constant 0 : index
    %c0_216 = arith.constant 0 : index
    %264 = vector.load %arg2[%c1_213, %c3_214, %c0_215, %c0_216] : memref<4x9x16x16xbf16, #tpu.memory_space<vmem>>, vector<1x1x16x16xbf16>
    %265 = vector.shape_cast %264 : vector<1x1x16x16xbf16> to vector<16x16xbf16>
    %cst_217 = arith.constant dense<0.000000e+00> : vector<160x16xf32>
    %266 = tpu.matmul %263, %265, %cst_217 {dimension_numbers = #tpu.dot_dimension_numbers<[1], [0], [0], [1], [0, 0, 1, 1], [], []>} : vector<160x16xbf16>, vector<16x16xbf16>, vector<160x16xf32> -> vector<160x16xf32>
    %267 = arith.addf %260, %266 : vector<160x16xf32>
    %c0_218 = arith.constant 0 : index
    %c11_219 = arith.constant 11 : index
    %c0_220 = arith.constant 0 : index
    %268 = vector.load %arg5[%c0_218, %c11_219, %c0_220] : memref<2x102x16xf32, #tpu.memory_space<vmem>>, vector<2x80x16xf32>
    %269 = vector.shape_cast %268 : vector<2x80x16xf32> to vector<160x16xf32>
    %270 = arith.truncf %269 : vector<160x16xf32> to vector<160x16xbf16>
    %c1_221 = arith.constant 1 : index
    %c4_222 = arith.constant 4 : index
    %c0_223 = arith.constant 0 : index
    %c0_224 = arith.constant 0 : index
    %271 = vector.load %arg2[%c1_221, %c4_222, %c0_223, %c0_224] : memref<4x9x16x16xbf16, #tpu.memory_space<vmem>>, vector<1x1x16x16xbf16>
    %272 = vector.shape_cast %271 : vector<1x1x16x16xbf16> to vector<16x16xbf16>
    %cst_225 = arith.constant dense<0.000000e+00> : vector<160x16xf32>
    %273 = tpu.matmul %270, %272, %cst_225 {dimension_numbers = #tpu.dot_dimension_numbers<[1], [0], [0], [1], [0, 0, 1, 1], [], []>} : vector<160x16xbf16>, vector<16x16xbf16>, vector<160x16xf32> -> vector<160x16xf32>
    %274 = arith.addf %267, %273 : vector<160x16xf32>
    %c0_226 = arith.constant 0 : index
    %c12 = arith.constant 12 : index
    %c0_227 = arith.constant 0 : index
    %275 = vector.load %arg5[%c0_226, %c12, %c0_227] : memref<2x102x16xf32, #tpu.memory_space<vmem>>, vector<2x80x16xf32>
    %276 = vector.shape_cast %275 : vector<2x80x16xf32> to vector<160x16xf32>
    %277 = arith.truncf %276 : vector<160x16xf32> to vector<160x16xbf16>
    %c1_228 = arith.constant 1 : index
    %c5_229 = arith.constant 5 : index
    %c0_230 = arith.constant 0 : index
    %c0_231 = arith.constant 0 : index
    %278 = vector.load %arg2[%c1_228, %c5_229, %c0_230, %c0_231] : memref<4x9x16x16xbf16, #tpu.memory_space<vmem>>, vector<1x1x16x16xbf16>
    %279 = vector.shape_cast %278 : vector<1x1x16x16xbf16> to vector<16x16xbf16>
    %cst_232 = arith.constant dense<0.000000e+00> : vector<160x16xf32>
    %280 = tpu.matmul %277, %279, %cst_232 {dimension_numbers = #tpu.dot_dimension_numbers<[1], [0], [0], [1], [0, 0, 1, 1], [], []>} : vector<160x16xbf16>, vector<16x16xbf16>, vector<160x16xf32> -> vector<160x16xf32>
    %281 = arith.addf %274, %280 : vector<160x16xf32>
    %c0_233 = arith.constant 0 : index
    %c20_234 = arith.constant 20 : index
    %c0_235 = arith.constant 0 : index
    %282 = vector.load %arg5[%c0_233, %c20_234, %c0_235] : memref<2x102x16xf32, #tpu.memory_space<vmem>>, vector<2x80x16xf32>
    %283 = vector.shape_cast %282 : vector<2x80x16xf32> to vector<160x16xf32>
    %284 = arith.truncf %283 : vector<160x16xf32> to vector<160x16xbf16>
    %c1_236 = arith.constant 1 : index
    %c6_237 = arith.constant 6 : index
    %c0_238 = arith.constant 0 : index
    %c0_239 = arith.constant 0 : index
    %285 = vector.load %arg2[%c1_236, %c6_237, %c0_238, %c0_239] : memref<4x9x16x16xbf16, #tpu.memory_space<vmem>>, vector<1x1x16x16xbf16>
    %286 = vector.shape_cast %285 : vector<1x1x16x16xbf16> to vector<16x16xbf16>
    %cst_240 = arith.constant dense<0.000000e+00> : vector<160x16xf32>
    %287 = tpu.matmul %284, %286, %cst_240 {dimension_numbers = #tpu.dot_dimension_numbers<[1], [0], [0], [1], [0, 0, 1, 1], [], []>} : vector<160x16xbf16>, vector<16x16xbf16>, vector<160x16xf32> -> vector<160x16xf32>
    %288 = arith.addf %281, %287 : vector<160x16xf32>
    %c0_241 = arith.constant 0 : index
    %c21_242 = arith.constant 21 : index
    %c0_243 = arith.constant 0 : index
    %289 = vector.load %arg5[%c0_241, %c21_242, %c0_243] : memref<2x102x16xf32, #tpu.memory_space<vmem>>, vector<2x80x16xf32>
    %290 = vector.shape_cast %289 : vector<2x80x16xf32> to vector<160x16xf32>
    %291 = arith.truncf %290 : vector<160x16xf32> to vector<160x16xbf16>
    %c1_244 = arith.constant 1 : index
    %c7_245 = arith.constant 7 : index
    %c0_246 = arith.constant 0 : index
    %c0_247 = arith.constant 0 : index
    %292 = vector.load %arg2[%c1_244, %c7_245, %c0_246, %c0_247] : memref<4x9x16x16xbf16, #tpu.memory_space<vmem>>, vector<1x1x16x16xbf16>
    %293 = vector.shape_cast %292 : vector<1x1x16x16xbf16> to vector<16x16xbf16>
    %cst_248 = arith.constant dense<0.000000e+00> : vector<160x16xf32>
    %294 = tpu.matmul %291, %293, %cst_248 {dimension_numbers = #tpu.dot_dimension_numbers<[1], [0], [0], [1], [0, 0, 1, 1], [], []>} : vector<160x16xbf16>, vector<16x16xbf16>, vector<160x16xf32> -> vector<160x16xf32>
    %295 = arith.addf %288, %294 : vector<160x16xf32>
    %c0_249 = arith.constant 0 : index
    %c22 = arith.constant 22 : index
    %c0_250 = arith.constant 0 : index
    %296 = vector.load %arg5[%c0_249, %c22, %c0_250] : memref<2x102x16xf32, #tpu.memory_space<vmem>>, vector<2x80x16xf32>
    %297 = vector.shape_cast %296 : vector<2x80x16xf32> to vector<160x16xf32>
    %298 = arith.truncf %297 : vector<160x16xf32> to vector<160x16xbf16>
    %c1_251 = arith.constant 1 : index
    %c8_252 = arith.constant 8 : index
    %c0_253 = arith.constant 0 : index
    %c0_254 = arith.constant 0 : index
    %299 = vector.load %arg2[%c1_251, %c8_252, %c0_253, %c0_254] : memref<4x9x16x16xbf16, #tpu.memory_space<vmem>>, vector<1x1x16x16xbf16>
    %300 = vector.shape_cast %299 : vector<1x1x16x16xbf16> to vector<16x16xbf16>
    %cst_255 = arith.constant dense<0.000000e+00> : vector<160x16xf32>
    %301 = tpu.matmul %298, %300, %cst_255 {dimension_numbers = #tpu.dot_dimension_numbers<[1], [0], [0], [1], [0, 0, 1, 1], [], []>} : vector<160x16xbf16>, vector<16x16xbf16>, vector<160x16xf32> -> vector<160x16xf32>
    %302 = arith.addf %295, %301 : vector<160x16xf32>
    %cst_256 = arith.constant 0.000000e+00 : f32
    %303 = vector.broadcast %cst_256 : f32 to vector<160x16xf32>
    %304 = arith.maximumf %302, %303 : vector<160x16xf32>
    %c0_257 = arith.constant 0 : index
    %c0_258 = arith.constant 0 : index
    %305 = vector.load %arg8[%c0_257, %c0_258] : memref<576x16xf32, #tpu.memory_space<vmem>>, vector<160x16xf32>
    tpu.vector_store %arg8[%c0_257, %c0_258], %304 {strides = array<i32>} : memref<576x16xf32, #tpu.memory_space<vmem>>, vector<160x16xf32>,
    %c0_259 = arith.constant 0 : index
    %c0_260 = arith.constant 0 : index
    %306 = tpu.strided_load %arg8[%c0_259, %c0_260] {strides = array<i32: 2, 1>} : memref<576x16xf32, #tpu.memory_space<vmem>>, vector<4x16xf32>
    %c1_261 = arith.constant 1 : index
    %c0_262 = arith.constant 0 : index
    %307 = tpu.strided_load %arg8[%c1_261, %c0_262] {strides = array<i32: 2, 1>} : memref<576x16xf32, #tpu.memory_space<vmem>>, vector<4x16xf32>
    %c10_263 = arith.constant 10 : index
    %c0_264 = arith.constant 0 : index
    %308 = tpu.strided_load %arg8[%c10_263, %c0_264] {strides = array<i32: 2, 1>} : memref<576x16xf32, #tpu.memory_space<vmem>>, vector<4x16xf32>
    %c11_265 = arith.constant 11 : index
    %c0_266 = arith.constant 0 : index
    %309 = tpu.strided_load %arg8[%c11_265, %c0_266] {strides = array<i32: 2, 1>} : memref<576x16xf32, #tpu.memory_space<vmem>>, vector<4x16xf32>
    %310 = arith.maximumf %306, %307 : vector<4x16xf32>
    %311 = arith.maximumf %308, %309 : vector<4x16xf32>
    %312 = arith.maximumf %310, %311 : vector<4x16xf32>
    %c0_267 = arith.constant 0 : index
    %c7_268 = arith.constant 7 : index
    %c0_269 = arith.constant 0 : index
    %313 = vector.load %arg6[%c0_267, %c7_268, %c0_269] : memref<2x38x16xf32, #tpu.memory_space<vmem>>, vector<1x4x16xf32>
    %314 = vector.shape_cast %313 : vector<1x4x16xf32> to vector<4x16xf32>
    %315 = vector.shape_cast %312 : vector<4x16xf32> to vector<1x4x16xf32>
    tpu.vector_store %arg6[%c0_267, %c7_268, %c0_269], %315 {strides = array<i32>} : memref<2x38x16xf32, #tpu.memory_space<vmem>>, vector<1x4x16xf32>,
    %c20_270 = arith.constant 20 : index
    %c0_271 = arith.constant 0 : index
    %316 = tpu.strided_load %arg8[%c20_270, %c0_271] {strides = array<i32: 2, 1>} : memref<576x16xf32, #tpu.memory_space<vmem>>, vector<4x16xf32>
    %c21_272 = arith.constant 21 : index
    %c0_273 = arith.constant 0 : index
    %317 = tpu.strided_load %arg8[%c21_272, %c0_273] {strides = array<i32: 2, 1>} : memref<576x16xf32, #tpu.memory_space<vmem>>, vector<4x16xf32>
    %c30 = arith.constant 30 : index
    %c0_274 = arith.constant 0 : index
    %318 = tpu.strided_load %arg8[%c30, %c0_274] {strides = array<i32: 2, 1>} : memref<576x16xf32, #tpu.memory_space<vmem>>, vector<4x16xf32>
    %c31_275 = arith.constant 31 : index
    %c0_276 = arith.constant 0 : index
    %319 = tpu.strided_load %arg8[%c31_275, %c0_276] {strides = array<i32: 2, 1>} : memref<576x16xf32, #tpu.memory_space<vmem>>, vector<4x16xf32>
    %320 = arith.maximumf %316, %317 : vector<4x16xf32>
    %321 = arith.maximumf %318, %319 : vector<4x16xf32>
    %322 = arith.maximumf %320, %321 : vector<4x16xf32>
    %c0_277 = arith.constant 0 : index
    %c13 = arith.constant 13 : index
    %c0_278 = arith.constant 0 : index
    %323 = vector.load %arg6[%c0_277, %c13, %c0_278] : memref<2x38x16xf32, #tpu.memory_space<vmem>>, vector<1x4x16xf32>
    %324 = vector.shape_cast %323 : vector<1x4x16xf32> to vector<4x16xf32>
    %325 = vector.shape_cast %322 : vector<4x16xf32> to vector<1x4x16xf32>
    tpu.vector_store %arg6[%c0_277, %c13, %c0_278], %325 {strides = array<i32>} : memref<2x38x16xf32, #tpu.memory_space<vmem>>, vector<1x4x16xf32>,
    %c40 = arith.constant 40 : index
    %c0_279 = arith.constant 0 : index
    %326 = tpu.strided_load %arg8[%c40, %c0_279] {strides = array<i32: 2, 1>} : memref<576x16xf32, #tpu.memory_space<vmem>>, vector<4x16xf32>
    %c41_280 = arith.constant 41 : index
    %c0_281 = arith.constant 0 : index
    %327 = tpu.strided_load %arg8[%c41_280, %c0_281] {strides = array<i32: 2, 1>} : memref<576x16xf32, #tpu.memory_space<vmem>>, vector<4x16xf32>
    %c50 = arith.constant 50 : index
    %c0_282 = arith.constant 0 : index
    %328 = tpu.strided_load %arg8[%c50, %c0_282] {strides = array<i32: 2, 1>} : memref<576x16xf32, #tpu.memory_space<vmem>>, vector<4x16xf32>
    %c51_283 = arith.constant 51 : index
    %c0_284 = arith.constant 0 : index
    %329 = tpu.strided_load %arg8[%c51_283, %c0_284] {strides = array<i32: 2, 1>} : memref<576x16xf32, #tpu.memory_space<vmem>>, vector<4x16xf32>
    %330 = arith.maximumf %326, %327 : vector<4x16xf32>
    %331 = arith.maximumf %328, %329 : vector<4x16xf32>
    %332 = arith.maximumf %330, %331 : vector<4x16xf32>
    %c0_285 = arith.constant 0 : index
    %c19_286 = arith.constant 19 : index
    %c0_287 = arith.constant 0 : index
    %333 = vector.load %arg6[%c0_285, %c19_286, %c0_287] : memref<2x38x16xf32, #tpu.memory_space<vmem>>, vector<1x4x16xf32>
    %334 = vector.shape_cast %333 : vector<1x4x16xf32> to vector<4x16xf32>
    %335 = vector.shape_cast %332 : vector<4x16xf32> to vector<1x4x16xf32>
    tpu.vector_store %arg6[%c0_285, %c19_286, %c0_287], %335 {strides = array<i32>} : memref<2x38x16xf32, #tpu.memory_space<vmem>>, vector<1x4x16xf32>,
    %c60 = arith.constant 60 : index
    %c0_288 = arith.constant 0 : index
    %336 = tpu.strided_load %arg8[%c60, %c0_288] {strides = array<i32: 2, 1>} : memref<576x16xf32, #tpu.memory_space<vmem>>, vector<4x16xf32>
    %c61_289 = arith.constant 61 : index
    %c0_290 = arith.constant 0 : index
    %337 = tpu.strided_load %arg8[%c61_289, %c0_290] {strides = array<i32: 2, 1>} : memref<576x16xf32, #tpu.memory_space<vmem>>, vector<4x16xf32>
    %c70 = arith.constant 70 : index
    %c0_291 = arith.constant 0 : index
    %338 = tpu.strided_load %arg8[%c70, %c0_291] {strides = array<i32: 2, 1>} : memref<576x16xf32, #tpu.memory_space<vmem>>, vector<4x16xf32>
    %c71_292 = arith.constant 71 : index
    %c0_293 = arith.constant 0 : index
    %339 = tpu.strided_load %arg8[%c71_292, %c0_293] {strides = array<i32: 2, 1>} : memref<576x16xf32, #tpu.memory_space<vmem>>, vector<4x16xf32>
    %340 = arith.maximumf %336, %337 : vector<4x16xf32>
    %341 = arith.maximumf %338, %339 : vector<4x16xf32>
    %342 = arith.maximumf %340, %341 : vector<4x16xf32>
    %c0_294 = arith.constant 0 : index
    %c25 = arith.constant 25 : index
    %c0_295 = arith.constant 0 : index
    %343 = vector.load %arg6[%c0_294, %c25, %c0_295] : memref<2x38x16xf32, #tpu.memory_space<vmem>>, vector<1x4x16xf32>
    %344 = vector.shape_cast %343 : vector<1x4x16xf32> to vector<4x16xf32>
    %345 = vector.shape_cast %342 : vector<4x16xf32> to vector<1x4x16xf32>
    tpu.vector_store %arg6[%c0_294, %c25, %c0_295], %345 {strides = array<i32>} : memref<2x38x16xf32, #tpu.memory_space<vmem>>, vector<1x4x16xf32>,
    %c80 = arith.constant 80 : index
    %c0_296 = arith.constant 0 : index
    %346 = tpu.strided_load %arg8[%c80, %c0_296] {strides = array<i32: 2, 1>} : memref<576x16xf32, #tpu.memory_space<vmem>>, vector<4x16xf32>
    %c81_297 = arith.constant 81 : index
    %c0_298 = arith.constant 0 : index
    %347 = tpu.strided_load %arg8[%c81_297, %c0_298] {strides = array<i32: 2, 1>} : memref<576x16xf32, #tpu.memory_space<vmem>>, vector<4x16xf32>
    %c90_299 = arith.constant 90 : index
    %c0_300 = arith.constant 0 : index
    %348 = tpu.strided_load %arg8[%c90_299, %c0_300] {strides = array<i32: 2, 1>} : memref<576x16xf32, #tpu.memory_space<vmem>>, vector<4x16xf32>
    %c91_301 = arith.constant 91 : index
    %c0_302 = arith.constant 0 : index
    %349 = tpu.strided_load %arg8[%c91_301, %c0_302] {strides = array<i32: 2, 1>} : memref<576x16xf32, #tpu.memory_space<vmem>>, vector<4x16xf32>
    %350 = arith.maximumf %346, %347 : vector<4x16xf32>
    %351 = arith.maximumf %348, %349 : vector<4x16xf32>
    %352 = arith.maximumf %350, %351 : vector<4x16xf32>
    %c1_303 = arith.constant 1 : index
    %c7_304 = arith.constant 7 : index
    %c0_305 = arith.constant 0 : index
    %353 = vector.load %arg6[%c1_303, %c7_304, %c0_305] : memref<2x38x16xf32, #tpu.memory_space<vmem>>, vector<1x4x16xf32>
    %354 = vector.shape_cast %353 : vector<1x4x16xf32> to vector<4x16xf32>
    %355 = vector.shape_cast %352 : vector<4x16xf32> to vector<1x4x16xf32>
    tpu.vector_store %arg6[%c1_303, %c7_304, %c0_305], %355 {strides = array<i32>} : memref<2x38x16xf32, #tpu.memory_space<vmem>>, vector<1x4x16xf32>,
    %c100 = arith.constant 100 : index
    %c0_306 = arith.constant 0 : index
    %356 = tpu.strided_load %arg8[%c100, %c0_306] {strides = array<i32: 2, 1>} : memref<576x16xf32, #tpu.memory_space<vmem>>, vector<4x16xf32>
    %c101 = arith.constant 101 : index
    %c0_307 = arith.constant 0 : index
    %357 = tpu.strided_load %arg8[%c101, %c0_307] {strides = array<i32: 2, 1>} : memref<576x16xf32, #tpu.memory_space<vmem>>, vector<4x16xf32>
    %c110 = arith.constant 110 : index
    %c0_308 = arith.constant 0 : index
    %358 = tpu.strided_load %arg8[%c110, %c0_308] {strides = array<i32: 2, 1>} : memref<576x16xf32, #tpu.memory_space<vmem>>, vector<4x16xf32>
    %c111 = arith.constant 111 : index
    %c0_309 = arith.constant 0 : index
    %359 = tpu.strided_load %arg8[%c111, %c0_309] {strides = array<i32: 2, 1>} : memref<576x16xf32, #tpu.memory_space<vmem>>, vector<4x16xf32>
    %360 = arith.maximumf %356, %357 : vector<4x16xf32>
    %361 = arith.maximumf %358, %359 : vector<4x16xf32>
    %362 = arith.maximumf %360, %361 : vector<4x16xf32>
    %c1_310 = arith.constant 1 : index
    %c13_311 = arith.constant 13 : index
    %c0_312 = arith.constant 0 : index
    %363 = vector.load %arg6[%c1_310, %c13_311, %c0_312] : memref<2x38x16xf32, #tpu.memory_space<vmem>>, vector<1x4x16xf32>
    %364 = vector.shape_cast %363 : vector<1x4x16xf32> to vector<4x16xf32>
    %365 = vector.shape_cast %362 : vector<4x16xf32> to vector<1x4x16xf32>
    tpu.vector_store %arg6[%c1_310, %c13_311, %c0_312], %365 {strides = array<i32>} : memref<2x38x16xf32, #tpu.memory_space<vmem>>, vector<1x4x16xf32>,
    %c120 = arith.constant 120 : index
    %c0_313 = arith.constant 0 : index
    %366 = tpu.strided_load %arg8[%c120, %c0_313] {strides = array<i32: 2, 1>} : memref<576x16xf32, #tpu.memory_space<vmem>>, vector<4x16xf32>
    %c121 = arith.constant 121 : index
    %c0_314 = arith.constant 0 : index
    %367 = tpu.strided_load %arg8[%c121, %c0_314] {strides = array<i32: 2, 1>} : memref<576x16xf32, #tpu.memory_space<vmem>>, vector<4x16xf32>
    %c130 = arith.constant 130 : index
    %c0_315 = arith.constant 0 : index
    %368 = tpu.strided_load %arg8[%c130, %c0_315] {strides = array<i32: 2, 1>} : memref<576x16xf32, #tpu.memory_space<vmem>>, vector<4x16xf32>
    %c131 = arith.constant 131 : index
    %c0_316 = arith.constant 0 : index
    %369 = tpu.strided_load %arg8[%c131, %c0_316] {strides = array<i32: 2, 1>} : memref<576x16xf32, #tpu.memory_space<vmem>>, vector<4x16xf32>
    %370 = arith.maximumf %366, %367 : vector<4x16xf32>
    %371 = arith.maximumf %368, %369 : vector<4x16xf32>
    %372 = arith.maximumf %370, %371 : vector<4x16xf32>
    %c1_317 = arith.constant 1 : index
    %c19_318 = arith.constant 19 : index
    %c0_319 = arith.constant 0 : index
    %373 = vector.load %arg6[%c1_317, %c19_318, %c0_319] : memref<2x38x16xf32, #tpu.memory_space<vmem>>, vector<1x4x16xf32>
    %374 = vector.shape_cast %373 : vector<1x4x16xf32> to vector<4x16xf32>
    %375 = vector.shape_cast %372 : vector<4x16xf32> to vector<1x4x16xf32>
    tpu.vector_store %arg6[%c1_317, %c19_318, %c0_319], %375 {strides = array<i32>} : memref<2x38x16xf32, #tpu.memory_space<vmem>>, vector<1x4x16xf32>,
    %c140 = arith.constant 140 : index
    %c0_320 = arith.constant 0 : index
    %376 = tpu.strided_load %arg8[%c140, %c0_320] {strides = array<i32: 2, 1>} : memref<576x16xf32, #tpu.memory_space<vmem>>, vector<4x16xf32>
    %c141 = arith.constant 141 : index
    %c0_321 = arith.constant 0 : index
    %377 = tpu.strided_load %arg8[%c141, %c0_321] {strides = array<i32: 2, 1>} : memref<576x16xf32, #tpu.memory_space<vmem>>, vector<4x16xf32>
    %c150 = arith.constant 150 : index
    %c0_322 = arith.constant 0 : index
    %378 = tpu.strided_load %arg8[%c150, %c0_322] {strides = array<i32: 2, 1>} : memref<576x16xf32, #tpu.memory_space<vmem>>, vector<4x16xf32>
    %c151 = arith.constant 151 : index
    %c0_323 = arith.constant 0 : index
    %379 = tpu.strided_load %arg8[%c151, %c0_323] {strides = array<i32: 2, 1>} : memref<576x16xf32, #tpu.memory_space<vmem>>, vector<4x16xf32>
    %380 = arith.maximumf %376, %377 : vector<4x16xf32>
    %381 = arith.maximumf %378, %379 : vector<4x16xf32>
    %382 = arith.maximumf %380, %381 : vector<4x16xf32>
    %c1_324 = arith.constant 1 : index
    %c25_325 = arith.constant 25 : index
    %c0_326 = arith.constant 0 : index
    %383 = vector.load %arg6[%c1_324, %c25_325, %c0_326] : memref<2x38x16xf32, #tpu.memory_space<vmem>>, vector<1x4x16xf32>
    %384 = vector.shape_cast %383 : vector<1x4x16xf32> to vector<4x16xf32>
    %385 = vector.shape_cast %382 : vector<4x16xf32> to vector<1x4x16xf32>
    tpu.vector_store %arg6[%c1_324, %c25_325, %c0_326], %385 {strides = array<i32>} : memref<2x38x16xf32, #tpu.memory_space<vmem>>, vector<1x4x16xf32>,
    %c2_327 = arith.constant 2 : index
    %c0_328 = arith.constant 0 : index
    %c0_329 = arith.constant 0 : index
    %386 = vector.load %arg3[%c2_327, %c0_328, %c0_329] : memref<4x1x16xf32, #tpu.memory_space<vmem>>, vector<1x1x16xf32>
    %387 = vector.shape_cast %386 : vector<1x1x16xf32> to vector<1x16xf32>
    %388 = vector.shape_cast %387 : vector<1x16xf32> to vector<1x16xf32>
    %389 = vector.broadcast %388 : vector<1x16xf32> to vector<48x16xf32>
    %c0_330 = arith.constant 0 : index
    %c0_331 = arith.constant 0 : index
    %c0_332 = arith.constant 0 : index
    %390 = vector.load %arg6[%c0_330, %c0_331, %c0_332] : memref<2x38x16xf32, #tpu.memory_space<vmem>>, vector<2x24x16xf32>
    %391 = vector.shape_cast %390 : vector<2x24x16xf32> to vector<48x16xf32>
    %392 = arith.truncf %391 : vector<48x16xf32> to vector<48x16xbf16>
    %c2_333 = arith.constant 2 : index
    %c0_334 = arith.constant 0 : index
    %c0_335 = arith.constant 0 : index
    %c0_336 = arith.constant 0 : index
    %393 = vector.load %arg2[%c2_333, %c0_334, %c0_335, %c0_336] : memref<4x9x16x16xbf16, #tpu.memory_space<vmem>>, vector<1x1x16x16xbf16>
    %394 = vector.shape_cast %393 : vector<1x1x16x16xbf16> to vector<16x16xbf16>
    %cst_337 = arith.constant dense<0.000000e+00> : vector<48x16xf32>
    %395 = tpu.matmul %392, %394, %cst_337 {dimension_numbers = #tpu.dot_dimension_numbers<[1], [0], [0], [1], [0, 0, 1, 1], [], []>} : vector<48x16xbf16>, vector<16x16xbf16>, vector<48x16xf32> -> vector<48x16xf32>
    %396 = arith.addf %389, %395 : vector<48x16xf32>
    %c0_338 = arith.constant 0 : index
    %c1_339 = arith.constant 1 : index
    %c0_340 = arith.constant 0 : index
    %397 = vector.load %arg6[%c0_338, %c1_339, %c0_340] : memref<2x38x16xf32, #tpu.memory_space<vmem>>, vector<2x24x16xf32>
    %398 = vector.shape_cast %397 : vector<2x24x16xf32> to vector<48x16xf32>
    %399 = arith.truncf %398 : vector<48x16xf32> to vector<48x16xbf16>
    %c2_341 = arith.constant 2 : index
    %c1_342 = arith.constant 1 : index
    %c0_343 = arith.constant 0 : index
    %c0_344 = arith.constant 0 : index
    %400 = vector.load %arg2[%c2_341, %c1_342, %c0_343, %c0_344] : memref<4x9x16x16xbf16, #tpu.memory_space<vmem>>, vector<1x1x16x16xbf16>
    %401 = vector.shape_cast %400 : vector<1x1x16x16xbf16> to vector<16x16xbf16>
    %cst_345 = arith.constant dense<0.000000e+00> : vector<48x16xf32>
    %402 = tpu.matmul %399, %401, %cst_345 {dimension_numbers = #tpu.dot_dimension_numbers<[1], [0], [0], [1], [0, 0, 1, 1], [], []>} : vector<48x16xbf16>, vector<16x16xbf16>, vector<48x16xf32> -> vector<48x16xf32>
    %403 = arith.addf %396, %402 : vector<48x16xf32>
    %c0_346 = arith.constant 0 : index
    %c2_347 = arith.constant 2 : index
    %c0_348 = arith.constant 0 : index
    %404 = vector.load %arg6[%c0_346, %c2_347, %c0_348] : memref<2x38x16xf32, #tpu.memory_space<vmem>>, vector<2x24x16xf32>
    %405 = vector.shape_cast %404 : vector<2x24x16xf32> to vector<48x16xf32>
    %406 = arith.truncf %405 : vector<48x16xf32> to vector<48x16xbf16>
    %c2_349 = arith.constant 2 : index
    %c2_350 = arith.constant 2 : index
    %c0_351 = arith.constant 0 : index
    %c0_352 = arith.constant 0 : index
    %407 = vector.load %arg2[%c2_349, %c2_350, %c0_351, %c0_352] : memref<4x9x16x16xbf16, #tpu.memory_space<vmem>>, vector<1x1x16x16xbf16>
    %408 = vector.shape_cast %407 : vector<1x1x16x16xbf16> to vector<16x16xbf16>
    %cst_353 = arith.constant dense<0.000000e+00> : vector<48x16xf32>
    %409 = tpu.matmul %406, %408, %cst_353 {dimension_numbers = #tpu.dot_dimension_numbers<[1], [0], [0], [1], [0, 0, 1, 1], [], []>} : vector<48x16xbf16>, vector<16x16xbf16>, vector<48x16xf32> -> vector<48x16xf32>
    %410 = arith.addf %403, %409 : vector<48x16xf32>
    %c0_354 = arith.constant 0 : index
    %c6_355 = arith.constant 6 : index
    %c0_356 = arith.constant 0 : index
    %411 = vector.load %arg6[%c0_354, %c6_355, %c0_356] : memref<2x38x16xf32, #tpu.memory_space<vmem>>, vector<2x24x16xf32>
    %412 = vector.shape_cast %411 : vector<2x24x16xf32> to vector<48x16xf32>
    %413 = arith.truncf %412 : vector<48x16xf32> to vector<48x16xbf16>
    %c2_357 = arith.constant 2 : index
    %c3_358 = arith.constant 3 : index
    %c0_359 = arith.constant 0 : index
    %c0_360 = arith.constant 0 : index
    %414 = vector.load %arg2[%c2_357, %c3_358, %c0_359, %c0_360] : memref<4x9x16x16xbf16, #tpu.memory_space<vmem>>, vector<1x1x16x16xbf16>
    %415 = vector.shape_cast %414 : vector<1x1x16x16xbf16> to vector<16x16xbf16>
    %cst_361 = arith.constant dense<0.000000e+00> : vector<48x16xf32>
    %416 = tpu.matmul %413, %415, %cst_361 {dimension_numbers = #tpu.dot_dimension_numbers<[1], [0], [0], [1], [0, 0, 1, 1], [], []>} : vector<48x16xbf16>, vector<16x16xbf16>, vector<48x16xf32> -> vector<48x16xf32>
    %417 = arith.addf %410, %416 : vector<48x16xf32>
    %c0_362 = arith.constant 0 : index
    %c7_363 = arith.constant 7 : index
    %c0_364 = arith.constant 0 : index
    %418 = vector.load %arg6[%c0_362, %c7_363, %c0_364] : memref<2x38x16xf32, #tpu.memory_space<vmem>>, vector<2x24x16xf32>
    %419 = vector.shape_cast %418 : vector<2x24x16xf32> to vector<48x16xf32>
    %420 = arith.truncf %419 : vector<48x16xf32> to vector<48x16xbf16>
    %c2_365 = arith.constant 2 : index
    %c4_366 = arith.constant 4 : index
    %c0_367 = arith.constant 0 : index
    %c0_368 = arith.constant 0 : index
    %421 = vector.load %arg2[%c2_365, %c4_366, %c0_367, %c0_368] : memref<4x9x16x16xbf16, #tpu.memory_space<vmem>>, vector<1x1x16x16xbf16>
    %422 = vector.shape_cast %421 : vector<1x1x16x16xbf16> to vector<16x16xbf16>
    %cst_369 = arith.constant dense<0.000000e+00> : vector<48x16xf32>
    %423 = tpu.matmul %420, %422, %cst_369 {dimension_numbers = #tpu.dot_dimension_numbers<[1], [0], [0], [1], [0, 0, 1, 1], [], []>} : vector<48x16xbf16>, vector<16x16xbf16>, vector<48x16xf32> -> vector<48x16xf32>
    %424 = arith.addf %417, %423 : vector<48x16xf32>
    %c0_370 = arith.constant 0 : index
    %c8_371 = arith.constant 8 : index
    %c0_372 = arith.constant 0 : index
    %425 = vector.load %arg6[%c0_370, %c8_371, %c0_372] : memref<2x38x16xf32, #tpu.memory_space<vmem>>, vector<2x24x16xf32>
    %426 = vector.shape_cast %425 : vector<2x24x16xf32> to vector<48x16xf32>
    %427 = arith.truncf %426 : vector<48x16xf32> to vector<48x16xbf16>
    %c2_373 = arith.constant 2 : index
    %c5_374 = arith.constant 5 : index
    %c0_375 = arith.constant 0 : index
    %c0_376 = arith.constant 0 : index
    %428 = vector.load %arg2[%c2_373, %c5_374, %c0_375, %c0_376] : memref<4x9x16x16xbf16, #tpu.memory_space<vmem>>, vector<1x1x16x16xbf16>
    %429 = vector.shape_cast %428 : vector<1x1x16x16xbf16> to vector<16x16xbf16>
    %cst_377 = arith.constant dense<0.000000e+00> : vector<48x16xf32>
    %430 = tpu.matmul %427, %429, %cst_377 {dimension_numbers = #tpu.dot_dimension_numbers<[1], [0], [0], [1], [0, 0, 1, 1], [], []>} : vector<48x16xbf16>, vector<16x16xbf16>, vector<48x16xf32> -> vector<48x16xf32>
    %431 = arith.addf %424, %430 : vector<48x16xf32>
    %c0_378 = arith.constant 0 : index
    %c12_379 = arith.constant 12 : index
    %c0_380 = arith.constant 0 : index
    %432 = vector.load %arg6[%c0_378, %c12_379, %c0_380] : memref<2x38x16xf32, #tpu.memory_space<vmem>>, vector<2x24x16xf32>
    %433 = vector.shape_cast %432 : vector<2x24x16xf32> to vector<48x16xf32>
    %434 = arith.truncf %433 : vector<48x16xf32> to vector<48x16xbf16>
    %c2_381 = arith.constant 2 : index
    %c6_382 = arith.constant 6 : index
    %c0_383 = arith.constant 0 : index
    %c0_384 = arith.constant 0 : index
    %435 = vector.load %arg2[%c2_381, %c6_382, %c0_383, %c0_384] : memref<4x9x16x16xbf16, #tpu.memory_space<vmem>>, vector<1x1x16x16xbf16>
    %436 = vector.shape_cast %435 : vector<1x1x16x16xbf16> to vector<16x16xbf16>
    %cst_385 = arith.constant dense<0.000000e+00> : vector<48x16xf32>
    %437 = tpu.matmul %434, %436, %cst_385 {dimension_numbers = #tpu.dot_dimension_numbers<[1], [0], [0], [1], [0, 0, 1, 1], [], []>} : vector<48x16xbf16>, vector<16x16xbf16>, vector<48x16xf32> -> vector<48x16xf32>
    %438 = arith.addf %431, %437 : vector<48x16xf32>
    %c0_386 = arith.constant 0 : index
    %c13_387 = arith.constant 13 : index
    %c0_388 = arith.constant 0 : index
    %439 = vector.load %arg6[%c0_386, %c13_387, %c0_388] : memref<2x38x16xf32, #tpu.memory_space<vmem>>, vector<2x24x16xf32>
    %440 = vector.shape_cast %439 : vector<2x24x16xf32> to vector<48x16xf32>
    %441 = arith.truncf %440 : vector<48x16xf32> to vector<48x16xbf16>
    %c2_389 = arith.constant 2 : index
    %c7_390 = arith.constant 7 : index
    %c0_391 = arith.constant 0 : index
    %c0_392 = arith.constant 0 : index
    %442 = vector.load %arg2[%c2_389, %c7_390, %c0_391, %c0_392] : memref<4x9x16x16xbf16, #tpu.memory_space<vmem>>, vector<1x1x16x16xbf16>
    %443 = vector.shape_cast %442 : vector<1x1x16x16xbf16> to vector<16x16xbf16>
    %cst_393 = arith.constant dense<0.000000e+00> : vector<48x16xf32>
    %444 = tpu.matmul %441, %443, %cst_393 {dimension_numbers = #tpu.dot_dimension_numbers<[1], [0], [0], [1], [0, 0, 1, 1], [], []>} : vector<48x16xbf16>, vector<16x16xbf16>, vector<48x16xf32> -> vector<48x16xf32>
    %445 = arith.addf %438, %444 : vector<48x16xf32>
    %c0_394 = arith.constant 0 : index
    %c14 = arith.constant 14 : index
    %c0_395 = arith.constant 0 : index
    %446 = vector.load %arg6[%c0_394, %c14, %c0_395] : memref<2x38x16xf32, #tpu.memory_space<vmem>>, vector<2x24x16xf32>
    %447 = vector.shape_cast %446 : vector<2x24x16xf32> to vector<48x16xf32>
    %448 = arith.truncf %447 : vector<48x16xf32> to vector<48x16xbf16>
    %c2_396 = arith.constant 2 : index
    %c8_397 = arith.constant 8 : index
    %c0_398 = arith.constant 0 : index
    %c0_399 = arith.constant 0 : index
    %449 = vector.load %arg2[%c2_396, %c8_397, %c0_398, %c0_399] : memref<4x9x16x16xbf16, #tpu.memory_space<vmem>>, vector<1x1x16x16xbf16>
    %450 = vector.shape_cast %449 : vector<1x1x16x16xbf16> to vector<16x16xbf16>
    %cst_400 = arith.constant dense<0.000000e+00> : vector<48x16xf32>
    %451 = tpu.matmul %448, %450, %cst_400 {dimension_numbers = #tpu.dot_dimension_numbers<[1], [0], [0], [1], [0, 0, 1, 1], [], []>} : vector<48x16xbf16>, vector<16x16xbf16>, vector<48x16xf32> -> vector<48x16xf32>
    %452 = arith.addf %445, %451 : vector<48x16xf32>
    %cst_401 = arith.constant 0.000000e+00 : f32
    %453 = vector.broadcast %cst_401 : f32 to vector<48x16xf32>
    %454 = arith.maximumf %452, %453 : vector<48x16xf32>
    %c0_402 = arith.constant 0 : index
    %c0_403 = arith.constant 0 : index
    %455 = vector.load %arg8[%c0_402, %c0_403] : memref<576x16xf32, #tpu.memory_space<vmem>>, vector<48x16xf32>
    tpu.vector_store %arg8[%c0_402, %c0_403], %454 {strides = array<i32>} : memref<576x16xf32, #tpu.memory_space<vmem>>, vector<48x16xf32>,
    %c0_404 = arith.constant 0 : index
    %c0_405 = arith.constant 0 : index
    %456 = tpu.strided_load %arg8[%c0_404, %c0_405] {strides = array<i32: 2, 1>} : memref<576x16xf32, #tpu.memory_space<vmem>>, vector<2x16xf32>
    %c1_406 = arith.constant 1 : index
    %c0_407 = arith.constant 0 : index
    %457 = tpu.strided_load %arg8[%c1_406, %c0_407] {strides = array<i32: 2, 1>} : memref<576x16xf32, #tpu.memory_space<vmem>>, vector<2x16xf32>
    %c6_408 = arith.constant 6 : index
    %c0_409 = arith.constant 0 : index
    %458 = tpu.strided_load %arg8[%c6_408, %c0_409] {strides = array<i32: 2, 1>} : memref<576x16xf32, #tpu.memory_space<vmem>>, vector<2x16xf32>
    %c7_410 = arith.constant 7 : index
    %c0_411 = arith.constant 0 : index
    %459 = tpu.strided_load %arg8[%c7_410, %c0_411] {strides = array<i32: 2, 1>} : memref<576x16xf32, #tpu.memory_space<vmem>>, vector<2x16xf32>
    %460 = arith.maximumf %456, %457 : vector<2x16xf32>
    %461 = arith.maximumf %458, %459 : vector<2x16xf32>
    %462 = arith.maximumf %460, %461 : vector<2x16xf32>
    %c0_412 = arith.constant 0 : index
    %c5_413 = arith.constant 5 : index
    %c0_414 = arith.constant 0 : index
    %463 = vector.load %arg7[%c0_412, %c5_413, %c0_414] : memref<2x18x16xf32, #tpu.memory_space<vmem>>, vector<1x2x16xf32>
    %464 = vector.shape_cast %463 : vector<1x2x16xf32> to vector<2x16xf32>
    %465 = vector.shape_cast %462 : vector<2x16xf32> to vector<1x2x16xf32>
    tpu.vector_store %arg7[%c0_412, %c5_413, %c0_414], %465 {strides = array<i32>} : memref<2x18x16xf32, #tpu.memory_space<vmem>>, vector<1x2x16xf32>,
    %c12_415 = arith.constant 12 : index
    %c0_416 = arith.constant 0 : index
    %466 = tpu.strided_load %arg8[%c12_415, %c0_416] {strides = array<i32: 2, 1>} : memref<576x16xf32, #tpu.memory_space<vmem>>, vector<2x16xf32>
    %c13_417 = arith.constant 13 : index
    %c0_418 = arith.constant 0 : index
    %467 = tpu.strided_load %arg8[%c13_417, %c0_418] {strides = array<i32: 2, 1>} : memref<576x16xf32, #tpu.memory_space<vmem>>, vector<2x16xf32>
    %c18_419 = arith.constant 18 : index
    %c0_420 = arith.constant 0 : index
    %468 = tpu.strided_load %arg8[%c18_419, %c0_420] {strides = array<i32: 2, 1>} : memref<576x16xf32, #tpu.memory_space<vmem>>, vector<2x16xf32>
    %c19_421 = arith.constant 19 : index
    %c0_422 = arith.constant 0 : index
    %469 = tpu.strided_load %arg8[%c19_421, %c0_422] {strides = array<i32: 2, 1>} : memref<576x16xf32, #tpu.memory_space<vmem>>, vector<2x16xf32>
    %470 = arith.maximumf %466, %467 : vector<2x16xf32>
    %471 = arith.maximumf %468, %469 : vector<2x16xf32>
    %472 = arith.maximumf %470, %471 : vector<2x16xf32>
    %c0_423 = arith.constant 0 : index
    %c9 = arith.constant 9 : index
    %c0_424 = arith.constant 0 : index
    %473 = vector.load %arg7[%c0_423, %c9, %c0_424] : memref<2x18x16xf32, #tpu.memory_space<vmem>>, vector<1x2x16xf32>
    %474 = vector.shape_cast %473 : vector<1x2x16xf32> to vector<2x16xf32>
    %475 = vector.shape_cast %472 : vector<2x16xf32> to vector<1x2x16xf32>
    tpu.vector_store %arg7[%c0_423, %c9, %c0_424], %475 {strides = array<i32>} : memref<2x18x16xf32, #tpu.memory_space<vmem>>, vector<1x2x16xf32>,
    %c24 = arith.constant 24 : index
    %c0_425 = arith.constant 0 : index
    %476 = tpu.strided_load %arg8[%c24, %c0_425] {strides = array<i32: 2, 1>} : memref<576x16xf32, #tpu.memory_space<vmem>>, vector<2x16xf32>
    %c25_426 = arith.constant 25 : index
    %c0_427 = arith.constant 0 : index
    %477 = tpu.strided_load %arg8[%c25_426, %c0_427] {strides = array<i32: 2, 1>} : memref<576x16xf32, #tpu.memory_space<vmem>>, vector<2x16xf32>
    %c30_428 = arith.constant 30 : index
    %c0_429 = arith.constant 0 : index
    %478 = tpu.strided_load %arg8[%c30_428, %c0_429] {strides = array<i32: 2, 1>} : memref<576x16xf32, #tpu.memory_space<vmem>>, vector<2x16xf32>
    %c31_430 = arith.constant 31 : index
    %c0_431 = arith.constant 0 : index
    %479 = tpu.strided_load %arg8[%c31_430, %c0_431] {strides = array<i32: 2, 1>} : memref<576x16xf32, #tpu.memory_space<vmem>>, vector<2x16xf32>
    %480 = arith.maximumf %476, %477 : vector<2x16xf32>
    %481 = arith.maximumf %478, %479 : vector<2x16xf32>
    %482 = arith.maximumf %480, %481 : vector<2x16xf32>
    %c1_432 = arith.constant 1 : index
    %c5_433 = arith.constant 5 : index
    %c0_434 = arith.constant 0 : index
    %483 = vector.load %arg7[%c1_432, %c5_433, %c0_434] : memref<2x18x16xf32, #tpu.memory_space<vmem>>, vector<1x2x16xf32>
    %484 = vector.shape_cast %483 : vector<1x2x16xf32> to vector<2x16xf32>
    %485 = vector.shape_cast %482 : vector<2x16xf32> to vector<1x2x16xf32>
    tpu.vector_store %arg7[%c1_432, %c5_433, %c0_434], %485 {strides = array<i32>} : memref<2x18x16xf32, #tpu.memory_space<vmem>>, vector<1x2x16xf32>,
    %c36_435 = arith.constant 36 : index
    %c0_436 = arith.constant 0 : index
    %486 = tpu.strided_load %arg8[%c36_435, %c0_436] {strides = array<i32: 2, 1>} : memref<576x16xf32, #tpu.memory_space<vmem>>, vector<2x16xf32>
    %c37_437 = arith.constant 37 : index
    %c0_438 = arith.constant 0 : index
    %487 = tpu.strided_load %arg8[%c37_437, %c0_438] {strides = array<i32: 2, 1>} : memref<576x16xf32, #tpu.memory_space<vmem>>, vector<2x16xf32>
    %c42 = arith.constant 42 : index
    %c0_439 = arith.constant 0 : index
    %488 = tpu.strided_load %arg8[%c42, %c0_439] {strides = array<i32: 2, 1>} : memref<576x16xf32, #tpu.memory_space<vmem>>, vector<2x16xf32>
    %c43 = arith.constant 43 : index
    %c0_440 = arith.constant 0 : index
    %489 = tpu.strided_load %arg8[%c43, %c0_440] {strides = array<i32: 2, 1>} : memref<576x16xf32, #tpu.memory_space<vmem>>, vector<2x16xf32>
    %490 = arith.maximumf %486, %487 : vector<2x16xf32>
    %491 = arith.maximumf %488, %489 : vector<2x16xf32>
    %492 = arith.maximumf %490, %491 : vector<2x16xf32>
    %c1_441 = arith.constant 1 : index
    %c9_442 = arith.constant 9 : index
    %c0_443 = arith.constant 0 : index
    %493 = vector.load %arg7[%c1_441, %c9_442, %c0_443] : memref<2x18x16xf32, #tpu.memory_space<vmem>>, vector<1x2x16xf32>
    %494 = vector.shape_cast %493 : vector<1x2x16xf32> to vector<2x16xf32>
    %495 = vector.shape_cast %492 : vector<2x16xf32> to vector<1x2x16xf32>
    tpu.vector_store %arg7[%c1_441, %c9_442, %c0_443], %495 {strides = array<i32>} : memref<2x18x16xf32, #tpu.memory_space<vmem>>, vector<1x2x16xf32>,
    %c3_444 = arith.constant 3 : index
    %c0_445 = arith.constant 0 : index
    %c0_446 = arith.constant 0 : index
    %496 = vector.load %arg3[%c3_444, %c0_445, %c0_446] : memref<4x1x16xf32, #tpu.memory_space<vmem>>, vector<1x1x16xf32>
    %497 = vector.shape_cast %496 : vector<1x1x16xf32> to vector<1x16xf32>
    %498 = vector.shape_cast %497 : vector<1x16xf32> to vector<1x16xf32>
    %499 = vector.broadcast %498 : vector<1x16xf32> to vector<16x16xf32>
    %c0_447 = arith.constant 0 : index
    %c0_448 = arith.constant 0 : index
    %c0_449 = arith.constant 0 : index
    %500 = vector.load %arg7[%c0_447, %c0_448, %c0_449] : memref<2x18x16xf32, #tpu.memory_space<vmem>>, vector<2x8x16xf32>
    %501 = vector.shape_cast %500 : vector<2x8x16xf32> to vector<16x16xf32>
    %502 = arith.truncf %501 : vector<16x16xf32> to vector<16x16xbf16>
    %c3_450 = arith.constant 3 : index
    %c0_451 = arith.constant 0 : index
    %c0_452 = arith.constant 0 : index
    %c0_453 = arith.constant 0 : index
    %503 = vector.load %arg2[%c3_450, %c0_451, %c0_452, %c0_453] : memref<4x9x16x16xbf16, #tpu.memory_space<vmem>>, vector<1x1x16x16xbf16>
    %504 = vector.shape_cast %503 : vector<1x1x16x16xbf16> to vector<16x16xbf16>
    %cst_454 = arith.constant dense<0.000000e+00> : vector<16x16xf32>
    %505 = tpu.matmul %502, %504, %cst_454 {dimension_numbers = #tpu.dot_dimension_numbers<[1], [0], [0], [1], [0, 0, 1, 1], [], []>} : vector<16x16xbf16>, vector<16x16xbf16>, vector<16x16xf32> -> vector<16x16xf32>
    %506 = arith.addf %499, %505 : vector<16x16xf32>
    %c0_455 = arith.constant 0 : index
    %c1_456 = arith.constant 1 : index
    %c0_457 = arith.constant 0 : index
    %507 = vector.load %arg7[%c0_455, %c1_456, %c0_457] : memref<2x18x16xf32, #tpu.memory_space<vmem>>, vector<2x8x16xf32>
    %508 = vector.shape_cast %507 : vector<2x8x16xf32> to vector<16x16xf32>
    %509 = arith.truncf %508 : vector<16x16xf32> to vector<16x16xbf16>
    %c3_458 = arith.constant 3 : index
    %c1_459 = arith.constant 1 : index
    %c0_460 = arith.constant 0 : index
    %c0_461 = arith.constant 0 : index
    %510 = vector.load %arg2[%c3_458, %c1_459, %c0_460, %c0_461] : memref<4x9x16x16xbf16, #tpu.memory_space<vmem>>, vector<1x1x16x16xbf16>
    %511 = vector.shape_cast %510 : vector<1x1x16x16xbf16> to vector<16x16xbf16>
    %cst_462 = arith.constant dense<0.000000e+00> : vector<16x16xf32>
    %512 = tpu.matmul %509, %511, %cst_462 {dimension_numbers = #tpu.dot_dimension_numbers<[1], [0], [0], [1], [0, 0, 1, 1], [], []>} : vector<16x16xbf16>, vector<16x16xbf16>, vector<16x16xf32> -> vector<16x16xf32>
    %513 = arith.addf %506, %512 : vector<16x16xf32>
    %c0_463 = arith.constant 0 : index
    %c2_464 = arith.constant 2 : index
    %c0_465 = arith.constant 0 : index
    %514 = vector.load %arg7[%c0_463, %c2_464, %c0_465] : memref<2x18x16xf32, #tpu.memory_space<vmem>>, vector<2x8x16xf32>
    %515 = vector.shape_cast %514 : vector<2x8x16xf32> to vector<16x16xf32>
    %516 = arith.truncf %515 : vector<16x16xf32> to vector<16x16xbf16>
    %c3_466 = arith.constant 3 : index
    %c2_467 = arith.constant 2 : index
    %c0_468 = arith.constant 0 : index
    %c0_469 = arith.constant 0 : index
    %517 = vector.load %arg2[%c3_466, %c2_467, %c0_468, %c0_469] : memref<4x9x16x16xbf16, #tpu.memory_space<vmem>>, vector<1x1x16x16xbf16>
    %518 = vector.shape_cast %517 : vector<1x1x16x16xbf16> to vector<16x16xbf16>
    %cst_470 = arith.constant dense<0.000000e+00> : vector<16x16xf32>
    %519 = tpu.matmul %516, %518, %cst_470 {dimension_numbers = #tpu.dot_dimension_numbers<[1], [0], [0], [1], [0, 0, 1, 1], [], []>} : vector<16x16xbf16>, vector<16x16xbf16>, vector<16x16xf32> -> vector<16x16xf32>
    %520 = arith.addf %513, %519 : vector<16x16xf32>
    %c0_471 = arith.constant 0 : index
    %c4_472 = arith.constant 4 : index
    %c0_473 = arith.constant 0 : index
    %521 = vector.load %arg7[%c0_471, %c4_472, %c0_473] : memref<2x18x16xf32, #tpu.memory_space<vmem>>, vector<2x8x16xf32>
    %522 = vector.shape_cast %521 : vector<2x8x16xf32> to vector<16x16xf32>
    %523 = arith.truncf %522 : vector<16x16xf32> to vector<16x16xbf16>
    %c3_474 = arith.constant 3 : index
    %c3_475 = arith.constant 3 : index
    %c0_476 = arith.constant 0 : index
    %c0_477 = arith.constant 0 : index
    %524 = vector.load %arg2[%c3_474, %c3_475, %c0_476, %c0_477] : memref<4x9x16x16xbf16, #tpu.memory_space<vmem>>, vector<1x1x16x16xbf16>
    %525 = vector.shape_cast %524 : vector<1x1x16x16xbf16> to vector<16x16xbf16>
    %cst_478 = arith.constant dense<0.000000e+00> : vector<16x16xf32>
    %526 = tpu.matmul %523, %525, %cst_478 {dimension_numbers = #tpu.dot_dimension_numbers<[1], [0], [0], [1], [0, 0, 1, 1], [], []>} : vector<16x16xbf16>, vector<16x16xbf16>, vector<16x16xf32> -> vector<16x16xf32>
    %527 = arith.addf %520, %526 : vector<16x16xf32>
    %c0_479 = arith.constant 0 : index
    %c5_480 = arith.constant 5 : index
    %c0_481 = arith.constant 0 : index
    %528 = vector.load %arg7[%c0_479, %c5_480, %c0_481] : memref<2x18x16xf32, #tpu.memory_space<vmem>>, vector<2x8x16xf32>
    %529 = vector.shape_cast %528 : vector<2x8x16xf32> to vector<16x16xf32>
    %530 = arith.truncf %529 : vector<16x16xf32> to vector<16x16xbf16>
    %c3_482 = arith.constant 3 : index
    %c4_483 = arith.constant 4 : index
    %c0_484 = arith.constant 0 : index
    %c0_485 = arith.constant 0 : index
    %531 = vector.load %arg2[%c3_482, %c4_483, %c0_484, %c0_485] : memref<4x9x16x16xbf16, #tpu.memory_space<vmem>>, vector<1x1x16x16xbf16>
    %532 = vector.shape_cast %531 : vector<1x1x16x16xbf16> to vector<16x16xbf16>
    %cst_486 = arith.constant dense<0.000000e+00> : vector<16x16xf32>
    %533 = tpu.matmul %530, %532, %cst_486 {dimension_numbers = #tpu.dot_dimension_numbers<[1], [0], [0], [1], [0, 0, 1, 1], [], []>} : vector<16x16xbf16>, vector<16x16xbf16>, vector<16x16xf32> -> vector<16x16xf32>
    %534 = arith.addf %527, %533 : vector<16x16xf32>
    %c0_487 = arith.constant 0 : index
    %c6_488 = arith.constant 6 : index
    %c0_489 = arith.constant 0 : index
    %535 = vector.load %arg7[%c0_487, %c6_488, %c0_489] : memref<2x18x16xf32, #tpu.memory_space<vmem>>, vector<2x8x16xf32>
    %536 = vector.shape_cast %535 : vector<2x8x16xf32> to vector<16x16xf32>
    %537 = arith.truncf %536 : vector<16x16xf32> to vector<16x16xbf16>
    %c3_490 = arith.constant 3 : index
    %c5_491 = arith.constant 5 : index
    %c0_492 = arith.constant 0 : index
    %c0_493 = arith.constant 0 : index
    %538 = vector.load %arg2[%c3_490, %c5_491, %c0_492, %c0_493] : memref<4x9x16x16xbf16, #tpu.memory_space<vmem>>, vector<1x1x16x16xbf16>
    %539 = vector.shape_cast %538 : vector<1x1x16x16xbf16> to vector<16x16xbf16>
    %cst_494 = arith.constant dense<0.000000e+00> : vector<16x16xf32>
    %540 = tpu.matmul %537, %539, %cst_494 {dimension_numbers = #tpu.dot_dimension_numbers<[1], [0], [0], [1], [0, 0, 1, 1], [], []>} : vector<16x16xbf16>, vector<16x16xbf16>, vector<16x16xf32> -> vector<16x16xf32>
    %541 = arith.addf %534, %540 : vector<16x16xf32>
    %c0_495 = arith.constant 0 : index
    %c8_496 = arith.constant 8 : index
    %c0_497 = arith.constant 0 : index
    %542 = vector.load %arg7[%c0_495, %c8_496, %c0_497] : memref<2x18x16xf32, #tpu.memory_space<vmem>>, vector<2x8x16xf32>
    %543 = vector.shape_cast %542 : vector<2x8x16xf32> to vector<16x16xf32>
    %544 = arith.truncf %543 : vector<16x16xf32> to vector<16x16xbf16>
    %c3_498 = arith.constant 3 : index
    %c6_499 = arith.constant 6 : index
    %c0_500 = arith.constant 0 : index
    %c0_501 = arith.constant 0 : index
    %545 = vector.load %arg2[%c3_498, %c6_499, %c0_500, %c0_501] : memref<4x9x16x16xbf16, #tpu.memory_space<vmem>>, vector<1x1x16x16xbf16>
    %546 = vector.shape_cast %545 : vector<1x1x16x16xbf16> to vector<16x16xbf16>
    %cst_502 = arith.constant dense<0.000000e+00> : vector<16x16xf32>
    %547 = tpu.matmul %544, %546, %cst_502 {dimension_numbers = #tpu.dot_dimension_numbers<[1], [0], [0], [1], [0, 0, 1, 1], [], []>} : vector<16x16xbf16>, vector<16x16xbf16>, vector<16x16xf32> -> vector<16x16xf32>
    %548 = arith.addf %541, %547 : vector<16x16xf32>
    %c0_503 = arith.constant 0 : index
    %c9_504 = arith.constant 9 : index
    %c0_505 = arith.constant 0 : index
    %549 = vector.load %arg7[%c0_503, %c9_504, %c0_505] : memref<2x18x16xf32, #tpu.memory_space<vmem>>, vector<2x8x16xf32>
    %550 = vector.shape_cast %549 : vector<2x8x16xf32> to vector<16x16xf32>
    %551 = arith.truncf %550 : vector<16x16xf32> to vector<16x16xbf16>
    %c3_506 = arith.constant 3 : index
    %c7_507 = arith.constant 7 : index
    %c0_508 = arith.constant 0 : index
    %c0_509 = arith.constant 0 : index
    %552 = vector.load %arg2[%c3_506, %c7_507, %c0_508, %c0_509] : memref<4x9x16x16xbf16, #tpu.memory_space<vmem>>, vector<1x1x16x16xbf16>
    %553 = vector.shape_cast %552 : vector<1x1x16x16xbf16> to vector<16x16xbf16>
    %cst_510 = arith.constant dense<0.000000e+00> : vector<16x16xf32>
    %554 = tpu.matmul %551, %553, %cst_510 {dimension_numbers = #tpu.dot_dimension_numbers<[1], [0], [0], [1], [0, 0, 1, 1], [], []>} : vector<16x16xbf16>, vector<16x16xbf16>, vector<16x16xf32> -> vector<16x16xf32>
    %555 = arith.addf %548, %554 : vector<16x16xf32>
    %c0_511 = arith.constant 0 : index
    %c10_512 = arith.constant 10 : index
    %c0_513 = arith.constant 0 : index
    %556 = vector.load %arg7[%c0_511, %c10_512, %c0_513] : memref<2x18x16xf32, #tpu.memory_space<vmem>>, vector<2x8x16xf32>
    %557 = vector.shape_cast %556 : vector<2x8x16xf32> to vector<16x16xf32>
    %558 = arith.truncf %557 : vector<16x16xf32> to vector<16x16xbf16>
    %c3_514 = arith.constant 3 : index
    %c8_515 = arith.constant 8 : index
    %c0_516 = arith.constant 0 : index
    %c0_517 = arith.constant 0 : index
    %559 = vector.load %arg2[%c3_514, %c8_515, %c0_516, %c0_517] : memref<4x9x16x16xbf16, #tpu.memory_space<vmem>>, vector<1x1x16x16xbf16>
    %560 = vector.shape_cast %559 : vector<1x1x16x16xbf16> to vector<16x16xbf16>
    %cst_518 = arith.constant dense<0.000000e+00> : vector<16x16xf32>
    %561 = tpu.matmul %558, %560, %cst_518 {dimension_numbers = #tpu.dot_dimension_numbers<[1], [0], [0], [1], [0, 0, 1, 1], [], []>} : vector<16x16xbf16>, vector<16x16xbf16>, vector<16x16xf32> -> vector<16x16xf32>
    %562 = arith.addf %555, %561 : vector<16x16xf32>
    %cst_519 = arith.constant 0.000000e+00 : f32
    %563 = vector.broadcast %cst_519 : f32 to vector<16x16xf32>
    %564 = arith.maximumf %562, %563 : vector<16x16xf32>
    %c0_520 = arith.constant 0 : index
    %c0_521 = arith.constant 0 : index
    %565 = vector.load %arg8[%c0_520, %c0_521] : memref<576x16xf32, #tpu.memory_space<vmem>>, vector<16x16xf32>
    tpu.vector_store %arg8[%c0_520, %c0_521], %564 {strides = array<i32>} : memref<576x16xf32, #tpu.memory_space<vmem>>, vector<16x16xf32>,
    %c0_522 = arith.constant 0 : index
    %c0_523 = arith.constant 0 : index
    %566 = vector.load %arg8[%c0_522, %c0_523] : memref<576x16xf32, #tpu.memory_space<vmem>>, vector<1x16xf32>
    %c1_524 = arith.constant 1 : index
    %c0_525 = arith.constant 0 : index
    %567 = vector.load %arg8[%c1_524, %c0_525] : memref<576x16xf32, #tpu.memory_space<vmem>>, vector<1x16xf32>
    %c4_526 = arith.constant 4 : index
    %c0_527 = arith.constant 0 : index
    %568 = vector.load %arg8[%c4_526, %c0_527] : memref<576x16xf32, #tpu.memory_space<vmem>>, vector<1x16xf32>
    %c5_528 = arith.constant 5 : index
    %c0_529 = arith.constant 0 : index
    %569 = vector.load %arg8[%c5_528, %c0_529] : memref<576x16xf32, #tpu.memory_space<vmem>>, vector<1x16xf32>
    %570 = arith.maximumf %566, %567 : vector<1x16xf32>
    %571 = arith.maximumf %568, %569 : vector<1x16xf32>
    %572 = arith.maximumf %570, %571 : vector<1x16xf32>
    %c0_530 = arith.constant 0 : index
    %c0_531 = arith.constant 0 : index
    %c0_532 = arith.constant 0 : index
    %573 = vector.load %arg4[%c0_530, %c0_531, %c0_532] : memref<1x2x16xf32, #tpu.memory_space<vmem>>, vector<1x1x16xf32>
    %574 = vector.shape_cast %573 : vector<1x1x16xf32> to vector<1x16xf32>
    %575 = vector.shape_cast %572 : vector<1x16xf32> to vector<1x1x16xf32>
    tpu.vector_store %arg4[%c0_530, %c0_531, %c0_532], %575 {strides = array<i32>} : memref<1x2x16xf32, #tpu.memory_space<vmem>>, vector<1x1x16xf32>,
    %c8_533 = arith.constant 8 : index
    %c0_534 = arith.constant 0 : index
    %576 = vector.load %arg8[%c8_533, %c0_534] : memref<576x16xf32, #tpu.memory_space<vmem>>, vector<1x16xf32>
    %c9_535 = arith.constant 9 : index
    %c0_536 = arith.constant 0 : index
    %577 = vector.load %arg8[%c9_535, %c0_536] : memref<576x16xf32, #tpu.memory_space<vmem>>, vector<1x16xf32>
    %c12_537 = arith.constant 12 : index
    %c0_538 = arith.constant 0 : index
    %578 = vector.load %arg8[%c12_537, %c0_538] : memref<576x16xf32, #tpu.memory_space<vmem>>, vector<1x16xf32>
    %c13_539 = arith.constant 13 : index
    %c0_540 = arith.constant 0 : index
    %579 = vector.load %arg8[%c13_539, %c0_540] : memref<576x16xf32, #tpu.memory_space<vmem>>, vector<1x16xf32>
    %580 = arith.maximumf %576, %577 : vector<1x16xf32>
    %581 = arith.maximumf %578, %579 : vector<1x16xf32>
    %582 = arith.maximumf %580, %581 : vector<1x16xf32>
    %c0_541 = arith.constant 0 : index
    %c1_542 = arith.constant 1 : index
    %c0_543 = arith.constant 0 : index
    %583 = vector.load %arg4[%c0_541, %c1_542, %c0_543] : memref<1x2x16xf32, #tpu.memory_space<vmem>>, vector<1x1x16xf32>
    %584 = vector.shape_cast %583 : vector<1x1x16xf32> to vector<1x16xf32>
    %585 = vector.shape_cast %582 : vector<1x16xf32> to vector<1x1x16xf32>
    tpu.vector_store %arg4[%c0_541, %c1_542, %c0_543], %585 {strides = array<i32>} : memref<1x2x16xf32, #tpu.memory_space<vmem>>, vector<1x1x16xf32>,
    return
  }
  func.func @transform_0(%arg0: i32) -> (i32, i32, i32) {
    %c0_i32 = arith.constant 0 : i32
    %c0_i32_0 = arith.constant 0 : i32
    %c0_i32_1 = arith.constant 0 : i32
    return %arg0, %c0_i32, %c0_i32_0 : i32, i32, i32
  }
  func.func @transform_1(%arg0: i32) -> (i32, i32, i32, i32) {
    %c0_i32 = arith.constant 0 : i32
    %c0_i32_0 = arith.constant 0 : i32
    %c0_i32_1 = arith.constant 0 : i32
    %c0_i32_2 = arith.constant 0 : i32
    %c0_i32_3 = arith.constant 0 : i32
    return %c0_i32, %c0_i32_0, %c0_i32_1, %c0_i32_2 : i32, i32, i32, i32
  }
  func.func @transform_2(%arg0: i32) -> (i32, i32, i32) {
    %c0_i32 = arith.constant 0 : i32
    %c0_i32_0 = arith.constant 0 : i32
    %c0_i32_1 = arith.constant 0 : i32
    %c0_i32_2 = arith.constant 0 : i32
    return %c0_i32, %c0_i32_0, %c0_i32_1 : i32, i32, i32
  }
  func.func @transform_3(%arg0: i32) -> (i32, i32, i32) {
    %c0_i32 = arith.constant 0 : i32
    %c0_i32_0 = arith.constant 0 : i32
    %c0_i32_1 = arith.constant 0 : i32
    return %arg0, %c0_i32, %c0_i32_0 : i32, i32, i32
  }
}

</mosaic_0001>

<llo_original>
// kernel: tpu_custom_call.1
$region0: #{tpu_custom_call.1}
  #allocation0 [shape = 'u32[]', space=smem, size = 0x4, offset = 0x4, fixed_abs, tag = 'smem constant byte address 0x4 - core index']
  #allocation1 [shape = 'u32[144,128]{1,0:T(1,128)}', space=vmem, size = 0x12000, scoped, tag = 'internal scratch']
  #allocation2 [shape = 'f32[2,102,16]{2,1,0:T(8,128)}', space=vmem, size = 0x1a000, scoped, tag = 'scratch operand']
  #allocation3 [shape = 'f32[2,38,16]{2,1,0:T(8,128)}', space=vmem, size = 0xa000, scoped, tag = 'scratch operand']
  #allocation4 [shape = 'f32[2,18,16]{2,1,0:T(8,128)}', space=vmem, size = 0x6000, scoped, tag = 'scratch operand']
  #allocation5 [shape = 'f32[576,16]{1,0:T(8,128)}', space=vmem, size = 0x48000, scoped, tag = 'scratch operand']
  %s0 = inlined_call_operand.vmem [shape: f32[2,326,16], index: 0, kind: input, shape index: {}]
  %s1 = inlined_call_operand.vmem [shape: bf16[4,9,16,16], index: 1, kind: input, shape index: {}]
  %s2 = inlined_call_operand.vmem [shape: f32[4,1,16], index: 2, kind: input, shape index: {}]
  %s3 = inlined_call_operand.hbm [shape: f32[1,2,16], index: 3, kind: output, shape index: {}]
  %s4 = sld [smem:[#allocation0]]
  $region22: #{tpu_custom_call.1} parent=0
    _
  %s6 = ssub.s32 1, %s4
  %s7 = scalar_select 0, %s6, %s4
  $region1: #{tpu_custom_call.1} parent=0
    #allocation6 [shape = 'u8[1024]{0}', space=vmem, size = 0x400, scoped, tag = 'output window, operand 0, single buffered']
    #allocation7 [shape = 's32[1]{0}', space=sflag, size = 0x4, scoped, tag = 'scoped memory for tpu_custom_call.1']
    %8 = vsyncpa [#allocation7], 0
    // Predicated region
    $region2: #{tpu_custom_call.1} parent=1 // pred_check
      _
    $region3: #{tpu_custom_call.1} parent=1 // pred_check_branch
      %10 = sbr.rel (0) target = $region5
    $region4: #{tpu_custom_call.1} parent=1 // pred_region
      _
    $region5: #{tpu_custom_call.1} parent=1 // pred_fallthru
      _
    // Predicated region
    $region6: #{tpu_custom_call.1} parent=1 // pred_check
      _
    $region7: #{tpu_custom_call.1} parent=1 // pred_check_branch
      %12 = sbr.rel (0) target = $region9
    $region8: #{tpu_custom_call.1} parent=1 // pred_region
      _
    $region9: #{tpu_custom_call.1} parent=1 // pred_fallthru
      _
    // Predicated region
    $region10: #{tpu_custom_call.1} parent=1 // pred_check
      _
    $region11: #{tpu_custom_call.1} parent=1 // pred_check_branch
      %14 = sbr.rel (0) target = $region13
    $region12: #{tpu_custom_call.1} parent=1 // pred_region
      _
    $region13: #{tpu_custom_call.1} parent=1 // pred_fallthru
      _
    %vm16 = vcmask 130048
    %17 = vst.msk [vmem:[#allocation2] sm:$0xff] %vm16, 0.0
    %18 = vst.msk [vmem:[#allocation2 + $0x8] sm:$0xff] %vm16, 0.0
    %19 = vst.msk [vmem:[#allocation2 + $0x10] sm:$0xff] %vm16, 0.0
    %20 = vst.msk [vmem:[#allocation2 + $0x18] sm:$0xff] %vm16, 0.0
    %21 = vst.msk [vmem:[#allocation2 + $0x20] sm:$0xff] %vm16, 0.0
    %22 = vst.msk [vmem:[#allocation2 + $0x28] sm:$0xff] %vm16, 0.0
    %23 = vst.msk [vmem:[#allocation2 + $0x30] sm:$0xff] %vm16, 0.0
    %24 = vst.msk [vmem:[#allocation2 + $0x38] sm:$0xff] %vm16, 0.0
    %25 = vst.msk [vmem:[#allocation2 + $0x40] sm:$0xff] %vm16, 0.0
    %26 = vst.msk [vmem:[#allocation2 + $0x48] sm:$0xff] %vm16, 0.0
    %27 = vst.msk [vmem:[#allocation2 + $0x50] sm:$0xff] %vm16, 0.0
    %28 = vst.msk [vmem:[#allocation2 + $0x58] sm:$0xff] %vm16, 0.0
    %vm29 = vcmask 128000
    %30 = vst.msk [vmem:[#allocation2 + $0x60] sm:$0x3f] %vm29, 0.0
    %31 = vst.msk [vmem:[#allocation2 + $0x68] sm:$0xff] %vm16, 0.0
    %32 = vst.msk [vmem:[#allocation2 + $0x70] sm:$0xff] %vm16, 0.0
    %33 = vst.msk [vmem:[#allocation2 + $0x78] sm:$0xff] %vm16, 0.0
    %34 = vst.msk [vmem:[#allocation2 + $0x80] sm:$0xff] %vm16, 0.0
    %35 = vst.msk [vmem:[#allocation2 + $0x88] sm:$0xff] %vm16, 0.0
    %36 = vst.msk [vmem:[#allocation2 + $0x90] sm:$0xff] %vm16, 0.0
    %37 = vst.msk [vmem:[#allocation2 + $0x98] sm:$0xff] %vm16, 0.0
    %38 = vst.msk [vmem:[#allocation2 + $0xa0] sm:$0xff] %vm16, 0.0
    %39 = vst.msk [vmem:[#allocation2 + $0xa8] sm:$0xff] %vm16, 0.0
    %40 = vst.msk [vmem:[#allocation2 + $0xb0] sm:$0xff] %vm16, 0.0
    %41 = vst.msk [vmem:[#allocation2 + $0xb8] sm:$0xff] %vm16, 0.0
    %42 = vst.msk [vmem:[#allocation2 + $0xc0] sm:$0xff] %vm16, 0.0
    %43 = vst.msk [vmem:[#allocation2 + $0xc8] sm:$0x3f] %vm29, 0.0
    %44 = vst.msk [vmem:[#allocation3] sm:$0xff] %vm16, 0.0
    %45 = vst.msk [vmem:[#allocation3 + $0x8] sm:$0xff] %vm16, 0.0
    %46 = vst.msk [vmem:[#allocation3 + $0x10] sm:$0xff] %vm16, 0.0
    %47 = vst.msk [vmem:[#allocation3 + $0x18] sm:$0xff] %vm16, 0.0
    %48 = vst.msk [vmem:[#allocation3 + $0x20] sm:$0x3f] %vm29, 0.0
    %49 = vst.msk [vmem:[#allocation3 + $0x28] sm:$0xff] %vm16, 0.0
    %50 = vst.msk [vmem:[#allocation3 + $0x30] sm:$0xff] %vm16, 0.0
    %51 = vst.msk [vmem:[#allocation3 + $0x38] sm:$0xff] %vm16, 0.0
    %52 = vst.msk [vmem:[#allocation3 + $0x40] sm:$0xff] %vm16, 0.0
    %53 = vst.msk [vmem:[#allocation3 + $0x48] sm:$0x3f] %vm29, 0.0
    %54 = vst.msk [vmem:[#allocation4] sm:$0xff] %vm16, 0.0
    %55 = vst.msk [vmem:[#allocation4 + $0x8] sm:$0xff] %vm16, 0.0
    %vm56 = vcmask 123904
    %57 = vst.msk [vmem:[#allocation4 + $0x10] sm:$0x3] %vm56, 0.0
    %58 = vst.msk [vmem:[#allocation4 + $0x18] sm:$0xff] %vm16, 0.0
    %59 = vst.msk [vmem:[#allocation4 + $0x20] sm:$0xff] %vm16, 0.0
    %60 = vst.msk [vmem:[#allocation4 + $0x28] sm:$0x3] %vm56, 0.0
    %v61 = vld [vmem:[%s2] sm:$0x1]
    %v63 = vlaneseq
    %v64 = vshrl.u32 %v63, 7
    %v65 = vsub.s32 0, %v64
    %v66 = vrot.slane %v61, %v65
    %v68 = vld [vmem:[%s0] sm:$0xff]
    %v69 = vld [vmem:[%s0 + $0x8] sm:$0xff]
    %v70 = vld [vmem:[%s0 + $0x10] sm:$0xff]
    %v71 = vld [vmem:[%s0 + $0x18] sm:$0xff]
    %v72 = vld [vmem:[%s0 + $0x20] sm:$0xff]
    %v73 = vld [vmem:[%s0 + $0x28] sm:$0xff]
    %v74 = vld [vmem:[%s0 + $0x30] sm:$0xff]
    %v75 = vld [vmem:[%s0 + $0x38] sm:$0xff]
    %v76 = vld [vmem:[%s0 + $0x40] sm:$0xff]
    %v77 = vld [vmem:[%s0 + $0x48] sm:$0xff]
    %v78 = vld [vmem:[%s0 + $0x50] sm:$0xff]
    %v79 = vld [vmem:[%s0 + $0x58] sm:$0xff]
    %v80 = vld [vmem:[%s0 + $0x60] sm:$0xff]
    %v81 = vld [vmem:[%s0 + $0x68] sm:$0xff]
    %v82 = vld [vmem:[%s0 + $0x70] sm:$0xff]
    %v83 = vld [vmem:[%s0 + $0x78] sm:$0xff]
    %v84 = vld [vmem:[%s0 + $0x80] sm:$0xff]
    %v85 = vld [vmem:[%s0 + $0x88] sm:$0xff]
    %v86 = vld [vmem:[%s0 + $0x90] sm:$0xff]
    %v87 = vld [vmem:[%s0 + $0x98] sm:$0xff]
    %v88 = vld [vmem:[%s0 + $0xa0] sm:$0xff]
    %v89 = vld [vmem:[%s0 + $0xa8] sm:$0xff]
    %v90 = vld [vmem:[%s0 + $0xb0] sm:$0xff]
    %v91 = vld [vmem:[%s0 + $0xb8] sm:$0xff]
    %v92 = vld [vmem:[%s0 + $0xc0] sm:$0xff]
    %v93 = vld [vmem:[%s0 + $0xc8] sm:$0xff]
    %v94 = vld [vmem:[%s0 + $0xd0] sm:$0xff]
    %v95 = vld [vmem:[%s0 + $0xd8] sm:$0xff]
    %v96 = vld [vmem:[%s0 + $0xe0] sm:$0xff]
    %v97 = vld [vmem:[%s0 + $0xe8] sm:$0xff]
    %v98 = vld [vmem:[%s0 + $0xf0] sm:$0xff]
    %v99 = vld [vmem:[%s0 + $0xf8] sm:$0xff]
    %v100 = vld [vmem:[%s0 + $0x100] sm:$0xff]
    %v101 = vld [vmem:[%s0 + $0x108] sm:$0xff]
    %v102 = vld [vmem:[%s0 + $0x110] sm:$0xff]
    %v103 = vld [vmem:[%s0 + $0x118] sm:$0xff]
    %v104 = vld [vmem:[%s0 + $0x148] sm:$0xff]
    %v105 = vld [vmem:[%s0 + $0x150] sm:$0xff]
    %v106 = vld [vmem:[%s0 + $0x158] sm:$0xff]
    %v107 = vld [vmem:[%s0 + $0x160] sm:$0xff]
    %v108 = vld [vmem:[%s0 + $0x168] sm:$0xff]
    %v109 = vld [vmem:[%s0 + $0x170] sm:$0xff]
    %v110 = vld [vmem:[%s0 + $0x178] sm:$0xff]
    %v111 = vld [vmem:[%s0 + $0x180] sm:$0xff]
    %v112 = vld [vmem:[%s0 + $0x188] sm:$0xff]
    %v113 = vld [vmem:[%s0 + $0x190] sm:$0xff]
    %v114 = vld [vmem:[%s0 + $0x198] sm:$0xff]
    %v115 = vld [vmem:[%s0 + $0x1a0] sm:$0xff]
    %v116 = vld [vmem:[%s0 + $0x1a8] sm:$0xff]
    %v117 = vld [vmem:[%s0 + $0x1b0] sm:$0xff]
    %v118 = vld [vmem:[%s0 + $0x1b8] sm:$0xff]
    %v119 = vld [vmem:[%s0 + $0x1c0] sm:$0xff]
    %v120 = vld [vmem:[%s0 + $0x1c8] sm:$0xff]
    %v121 = vld [vmem:[%s0 + $0x1d0] sm:$0xff]
    %v122 = vld [vmem:[%s0 + $0x1d8] sm:$0xff]
    %v123 = vld [vmem:[%s0 + $0x1e0] sm:$0xff]
    %v124 = vld [vmem:[%s0 + $0x1e8] sm:$0xff]
    %v125 = vld [vmem:[%s0 + $0x1f0] sm:$0xff]
    %v126 = vld [vmem:[%s0 + $0x1f8] sm:$0xff]
    %v127 = vld [vmem:[%s0 + $0x200] sm:$0xff]
    %v128 = vld [vmem:[%s0 + $0x208] sm:$0xff]
    %v129 = vld [vmem:[%s0 + $0x210] sm:$0xff]
    %v130 = vld [vmem:[%s0 + $0x218] sm:$0xff]
    %v131 = vld [vmem:[%s0 + $0x220] sm:$0xff]
    %v132 = vld [vmem:[%s0 + $0x228] sm:$0xff]
    %v133 = vld [vmem:[%s0 + $0x230] sm:$0xff]
    %v134 = vld [vmem:[%s0 + $0x238] sm:$0xff]
    %v135 = vld [vmem:[%s0 + $0x240] sm:$0xff]
    %v136 = vld [vmem:[%s0 + $0x248] sm:$0xff]
    %v137 = vld [vmem:[%s0 + $0x250] sm:$0xff]
    %v138 = vld [vmem:[%s0 + $0x258] sm:$0xff]
    %v139 = vld [vmem:[%s0 + $0x260] sm:$0xff]
    %v140 = vpack.c.bf16 %v69, %v68
    %v141 = vpack.c.bf16 %v71, %v70
    %v142 = vpack.c.bf16 %v73, %v72
    %v143 = vpack.c.bf16 %v75, %v74
    %v144 = vpack.c.bf16 %v77, %v76
    %v145 = vpack.c.bf16 %v79, %v78
    %v146 = vpack.c.bf16 %v81, %v80
    %v147 = vpack.c.bf16 %v83, %v82
    %v148 = vpack.c.bf16 %v85, %v84
    %v149 = vpack.c.bf16 %v87, %v86
    %v150 = vpack.c.bf16 %v89, %v88
    %v151 = vpack.c.bf16 %v91, %v90
    %v152 = vpack.c.bf16 %v93, %v92
    %v153 = vpack.c.bf16 %v95, %v94
    %v154 = vpack.c.bf16 %v97, %v96
    %v155 = vpack.c.bf16 %v99, %v98
    %v156 = vpack.c.bf16 %v101, %v100
    %v157 = vpack.c.bf16 %v103, %v102
    %v158 = vpack.c.bf16 %v105, %v104
    %v159 = vpack.c.bf16 %v107, %v106
    %v160 = vpack.c.bf16 %v109, %v108
    %v161 = vpack.c.bf16 %v111, %v110
    %v162 = vpack.c.bf16 %v113, %v112
    %v163 = vpack.c.bf16 %v115, %v114
    %v164 = vpack.c.bf16 %v117, %v116
    %v165 = vpack.c.bf16 %v119, %v118
    %v166 = vpack.c.bf16 %v121, %v120
    %v167 = vpack.c.bf16 %v123, %v122
    %v168 = vpack.c.bf16 %v125, %v124
    %v169 = vpack.c.bf16 %v127, %v126
    %v170 = vpack.c.bf16 %v129, %v128
    %v171 = vpack.c.bf16 %v131, %v130
    %v172 = vpack.c.bf16 %v133, %v132
    %v173 = vpack.c.bf16 %v135, %v134
    %v174 = vpack.c.bf16 %v137, %v136
    %v175 = vpack.c.bf16 %v139, %v138
    %v176 = vld [vmem:[%s1] sm:$0xf]
    %v177 = vld [vmem:[%s1 + $0x4] sm:$0xf]
    %v180 = vunpack.c.l.b16 %v176
    %v181 = vunpack.c.l.b16 %v177
    %v182 = vpack.c.b16 %v181, %v180
    %v185 = vsel %vm16, %v140, 0
    %v188 = vsel %vm16, %v141, 0
    %v191 = vsel %vm16, %v142, 0
    %v194 = vsel %vm16, %v143, 0
    %v197 = vsel %vm16, %v144, 0
    %v200 = vsel %vm16, %v145, 0
    %v203 = vsel %vm16, %v146, 0
    %v206 = vsel %vm16, %v147, 0
    %v209 = vsel %vm16, %v148, 0
    %v212 = vsel %vm16, %v149, 0
    %v215 = vsel %vm16, %v150, 0
    %v218 = vsel %vm16, %v151, 0
    %v221 = vsel %vm16, %v152, 0
    %v224 = vsel %vm16, %v153, 0
    %v227 = vsel %vm16, %v154, 0
    %v230 = vsel %vm16, %v155, 0
    %v233 = vsel %vm16, %v156, 0
    %v236 = vsel %vm16, %v157, 0
    %v239 = vsel %vm16, %v158, 0
    %v242 = vsel %vm16, %v159, 0
    %v245 = vsel %vm16, %v160, 0
    %v248 = vsel %vm16, %v161, 0
    %v251 = vsel %vm16, %v162, 0
    %v254 = vsel %vm16, %v163, 0
    %v257 = vsel %vm16, %v164, 0
    %v260 = vsel %vm16, %v165, 0
    %v263 = vsel %vm16, %v166, 0
    %v266 = vsel %vm16, %v167, 0
    %v269 = vsel %vm16, %v168, 0
    %v272 = vsel %vm16, %v169, 0
    %v275 = vsel %vm16, %v170, 0
    %v278 = vsel %vm16, %v171, 0
    %v281 = vsel %vm16, %v172, 0
    %v284 = vsel %vm16, %v173, 0
    %v287 = vsel %vm16, %v174, 0
    %v290 = vsel %vm16, %v175, 0
    %292 = vmatprep.subr.bf16.mxu0 0
    %293 = vmatpush1.bf16.msra.mxu0 0
    %294 = vmatprep.subr.bf16.mxu0 0
    %295 = vmatpush1.bf16.msra.mxu0 0
    %296 = vmatprep.subr.bf16.mxu0 0
    %297 = vmatpush1.bf16.msra.mxu0 0
    %298 = vmatprep.subr.bf16.mxu0 0
    %299 = vmatpush1.bf16.msra.mxu0 0
    %300 = vmatprep.subr.bf16.mxu0 0
    %301 = vmatpush1.bf16.msra.mxu0 0
    %302 = vmatprep.subr.bf16.mxu0 0
    %303 = vmatpush1.bf16.msra.mxu0 0
    %304 = vmatprep.subr.bf16.mxu0 0
    %305 = vmatpush1.bf16.msra.mxu0 0
    %306 = vmatprep.subr.bf16.mxu0 0
    %307 = vmatpush1.bf16.msra.mxu0 %v182
    %308 = vmatprep.subr.bf16.mxu0 0
    %309 = vmatpush2.bf16.msra.mxu0 0
    %310 = vmatprep.subr.bf16.mxu0 0
    %311 = vmatpush2.bf16.msra.mxu0 0
    %312 = vmatprep.subr.bf16.mxu0 0
    %313 = vmatpush2.bf16.msra.mxu0 0
    %314 = vmatprep.subr.bf16.mxu0 0
    %315 = vmatpush2.bf16.msra.mxu0 0
    %316 = vmatprep.subr.bf16.mxu0 0
    %317 = vmatpush2.bf16.msra.mxu0 0
    %318 = vmatprep.subr.bf16.mxu0 0
    %319 = vmatpush2.bf16.msra.mxu0 0
    %320 = vmatprep.subr.bf16.mxu0 0
    %321 = vmatpush2.bf16.msra.mxu0 0
    %322 = vmatprep.subr.bf16.mxu0 0
    %323 = vmatpush2.bf16.msra.mxu0 0
    %324 = vmatprep.mubr.bf16.mxu0 0
    %325 = vmatmul.mubr.bf16.gmra.mxu0 %v185
    %v326 = vpop.f32.mrf.mxu0
    %v327 = vadd.f32 0.0, %v326
    %v328 = vpop.f32.mrf.mxu0
    %v329 = vpop.f32.mrf.mxu0
    %v330 = vadd.f32 0.0, %v329
    %v331 = vpop.f32.mrf.mxu0
    %332 = vmatprep.mubr.bf16.mxu0 0
    %333 = vmatmul.mubr.bf16.gmra.mxu0 %v188
    %v334 = vpop.f32.mrf.mxu0
    %v335 = vadd.f32 0.0, %v334
    %v336 = vpop.f32.mrf.mxu0
    %v337 = vpop.f32.mrf.mxu0
    %v338 = vadd.f32 0.0, %v337
    %v339 = vpop.f32.mrf.mxu0
    %340 = vmatprep.mubr.bf16.mxu0 0
    %341 = vmatmul.mubr.bf16.gmra.mxu0 %v191
    %v342 = vpop.f32.mrf.mxu0
    %v343 = vadd.f32 0.0, %v342
    %v344 = vpop.f32.mrf.mxu0
    %v345 = vpop.f32.mrf.mxu0
    %v346 = vadd.f32 0.0, %v345
    %v347 = vpop.f32.mrf.mxu0
    %348 = vmatprep.mubr.bf16.mxu0 0
    %349 = vmatmul.mubr.bf16.gmra.mxu0 %v194
    %v350 = vpop.f32.mrf.mxu0
    %v351 = vadd.f32 0.0, %v350
    %v352 = vpop.f32.mrf.mxu0
    %v353 = vpop.f32.mrf.mxu0
    %v354 = vadd.f32 0.0, %v353
    %v355 = vpop.f32.mrf.mxu0
    %356 = vmatprep.mubr.bf16.mxu0 0
    %357 = vmatmul.mubr.bf16.gmra.mxu0 %v197
    %v358 = vpop.f32.mrf.mxu0
    %v359 = vadd.f32 0.0, %v358
    %v360 = vpop.f32.mrf.mxu0
    %v361 = vpop.f32.mrf.mxu0
    %v362 = vadd.f32 0.0, %v361
    %v363 = vpop.f32.mrf.mxu0
    %364 = vmatprep.mubr.bf16.mxu0 0
    %365 = vmatmul.mubr.bf16.gmra.mxu0 %v200
    %v366 = vpop.f32.mrf.mxu0
    %v367 = vadd.f32 0.0, %v366
    %v368 = vpop.f32.mrf.mxu0
    %v369 = vpop.f32.mrf.mxu0
    %v370 = vadd.f32 0.0, %v369
    %v371 = vpop.f32.mrf.mxu0
    %372 = vmatprep.mubr.bf16.mxu0 0
    %373 = vmatmul.mubr.bf16.gmra.mxu0 %v203
    %v374 = vpop.f32.mrf.mxu0
    %v375 = vadd.f32 0.0, %v374
    %v376 = vpop.f32.mrf.mxu0
    %v377 = vpop.f32.mrf.mxu0
    %v378 = vadd.f32 0.0, %v377
    %v379 = vpop.f32.mrf.mxu0
    %380 = vmatprep.mubr.bf16.mxu0 0
    %381 = vmatmul.mubr.bf16.gmra.mxu0 %v206
    %v382 = vpop.f32.mrf.mxu0
    %v383 = vadd.f32 0.0, %v382
    %v384 = vpop.f32.mrf.mxu0
    %v385 = vpop.f32.mrf.mxu0
    %v386 = vadd.f32 0.0, %v385
    %v387 = vpop.f32.mrf.mxu0
    %388 = vmatprep.mubr.bf16.mxu0 0
    %389 = vmatmul.mubr.bf16.gmra.mxu0 %v209
    %v390 = vpop.f32.mrf.mxu0
    %v391 = vadd.f32 0.0, %v390
    %v392 = vpop.f32.mrf.mxu0
    %v393 = vpop.f32.mrf.mxu0
    %v394 = vadd.f32 0.0, %v393
    %v395 = vpop.f32.mrf.mxu0
    %396 = vmatprep.mubr.bf16.mxu0 0
    %397 = vmatmul.mubr.bf16.gmra.mxu0 %v212
    %v398 = vpop.f32.mrf.mxu0
    %v399 = vadd.f32 0.0, %v398
    %v400 = vpop.f32.mrf.mxu0
    %v401 = vpop.f32.mrf.mxu0
    %v402 = vadd.f32 0.0, %v401
    %v403 = vpop.f32.mrf.mxu0
    %404 = vmatprep.mubr.bf16.mxu0 0
    %405 = vmatmul.mubr.bf16.gmra.mxu0 %v215
    %v406 = vpop.f32.mrf.mxu0
    %v407 = vadd.f32 0.0, %v406
    %v408 = vpop.f32.mrf.mxu0
    %v409 = vpop.f32.mrf.mxu0
    %v410 = vadd.f32 0.0, %v409
    %v411 = vpop.f32.mrf.mxu0
    %412 = vmatprep.mubr.bf16.mxu0 0
    %413 = vmatmul.mubr.bf16.gmra.mxu0 %v218
    %v414 = vpop.f32.mrf.mxu0
    %v415 = vadd.f32 0.0, %v414
    %v416 = vpop.f32.mrf.mxu0
    %v417 = vpop.f32.mrf.mxu0
    %v418 = vadd.f32 0.0, %v417
    %v419 = vpop.f32.mrf.mxu0
    %420 = vmatprep.mubr.bf16.mxu0 0
    %421 = vmatmul.mubr.bf16.gmra.mxu0 %v221
    %v422 = vpop.f32.mrf.mxu0
    %v423 = vadd.f32 0.0, %v422
    %v424 = vpop.f32.mrf.mxu0
    %v425 = vpop.f32.mrf.mxu0
    %v426 = vadd.f32 0.0, %v425
    %v427 = vpop.f32.mrf.mxu0
    %428 = vmatprep.mubr.bf16.mxu0 0
    %429 = vmatmul.mubr.bf16.gmra.mxu0 %v224
    %v430 = vpop.f32.mrf.mxu0
    %v431 = vadd.f32 0.0, %v430
    %v432 = vpop.f32.mrf.mxu0
    %v433 = vpop.f32.mrf.mxu0
    %v434 = vadd.f32 0.0, %v433
    %v435 = vpop.f32.mrf.mxu0
    %436 = vmatprep.mubr.bf16.mxu0 0
    %437 = vmatmul.mubr.bf16.gmra.mxu0 %v227
    %v438 = vpop.f32.mrf.mxu0
    %v439 = vadd.f32 0.0, %v438
    %v440 = vpop.f32.mrf.mxu0
    %v441 = vpop.f32.mrf.mxu0
    %v442 = vadd.f32 0.0, %v441
    %v443 = vpop.f32.mrf.mxu0
    %444 = vmatprep.mubr.bf16.mxu0 0
    %445 = vmatmul.mubr.bf16.gmra.mxu0 %v230
    %v446 = vpop.f32.mrf.mxu0
    %v447 = vadd.f32 0.0, %v446
    %v448 = vpop.f32.mrf.mxu0
    %v449 = vpop.f32.mrf.mxu0
    %v450 = vadd.f32 0.0, %v449
    %v451 = vpop.f32.mrf.mxu0
    %452 = vmatprep.mubr.bf16.mxu0 0
    %453 = vmatmul.mubr.bf16.gmra.mxu0 %v233
    %v454 = vpop.f32.mrf.mxu0
    %v455 = vadd.f32 0.0, %v454
    %v456 = vpop.f32.mrf.mxu0
    %v457 = vpop.f32.mrf.mxu0
    %v458 = vadd.f32 0.0, %v457
    %v459 = vpop.f32.mrf.mxu0
    %460 = vmatprep.mubr.bf16.mxu0 0
    %461 = vmatmul.mubr.bf16.gmra.mxu0 %v236
    %v462 = vpop.f32.mrf.mxu0
    %v463 = vadd.f32 0.0, %v462
    %v464 = vpop.f32.mrf.mxu0
    %v465 = vpop.f32.mrf.mxu0
    %v466 = vadd.f32 0.0, %v465
    %v467 = vpop.f32.mrf.mxu0
    %468 = vmatprep.mubr.bf16.mxu0 0
    %469 = vmatmul.mubr.bf16.gmra.mxu0 %v239
    %v470 = vpop.f32.mrf.mxu0
    %v471 = vadd.f32 0.0, %v470
    %v472 = vpop.f32.mrf.mxu0
    %v473 = vpop.f32.mrf.mxu0
    %v474 = vadd.f32 0.0, %v473
    %v475 = vpop.f32.mrf.mxu0
    %476 = vmatprep.mubr.bf16.mxu0 0
    %477 = vmatmul.mubr.bf16.gmra.mxu0 %v242
    %v478 = vpop.f32.mrf.mxu0
    %v479 = vadd.f32 0.0, %v478
    %v480 = vpop.f32.mrf.mxu0
    %v481 = vpop.f32.mrf.mxu0
    %v482 = vadd.f32 0.0, %v481
    %v483 = vpop.f32.mrf.mxu0
    %484 = vmatprep.mubr.bf16.mxu0 0
    %485 = vmatmul.mubr.bf16.gmra.mxu0 %v245
    %v486 = vpop.f32.mrf.mxu0
    %v487 = vadd.f32 0.0, %v486
    %v488 = vpop.f32.mrf.mxu0
    %v489 = vpop.f32.mrf.mxu0
    %v490 = vadd.f32 0.0, %v489
    %v491 = vpop.f32.mrf.mxu0
    %492 = vmatprep.mubr.bf16.mxu0 0
    %493 = vmatmul.mubr.bf16.gmra.mxu0 %v248
    %v494 = vpop.f32.mrf.mxu0
    %v495 = vadd.f32 0.0, %v494
    %v496 = vpop.f32.mrf.mxu0
    %v497 = vpop.f32.mrf.mxu0
    %v498 = vadd.f32 0.0, %v497
    %v499 = vpop.f32.mrf.mxu0
    %500 = vmatprep.mubr.bf16.mxu0 0
    %501 = vmatmul.mubr.bf16.gmra.mxu0 %v251
    %v502 = vpop.f32.mrf.mxu0
    %v503 = vadd.f32 0.0, %v502
    %v504 = vpop.f32.mrf.mxu0
    %v505 = vpop.f32.mrf.mxu0
    %v506 = vadd.f32 0.0, %v505
    %v507 = vpop.f32.mrf.mxu0
    %508 = vmatprep.mubr.bf16.mxu0 0
    %509 = vmatmul.mubr.bf16.gmra.mxu0 %v254
    %v510 = vpop.f32.mrf.mxu0
    %v511 = vadd.f32 0.0, %v510
    %v512 = vpop.f32.mrf.mxu0
    %v513 = vpop.f32.mrf.mxu0
    %v514 = vadd.f32 0.0, %v513
    %v515 = vpop.f32.mrf.mxu0
    %516 = vmatprep.mubr.bf16.mxu0 0
    %517 = vmatmul.mubr.bf16.gmra.mxu0 %v257
    %v518 = vpop.f32.mrf.mxu0
    %v519 = vadd.f32 0.0, %v518
    %v520 = vpop.f32.mrf.mxu0
    %v521 = vpop.f32.mrf.mxu0
    %v522 = vadd.f32 0.0, %v521
    %v523 = vpop.f32.mrf.mxu0
    %524 = vmatprep.mubr.bf16.mxu0 0
    %525 = vmatmul.mubr.bf16.gmra.mxu0 %v260
    %v526 = vpop.f32.mrf.mxu0
    %v527 = vadd.f32 0.0, %v526
    %v528 = vpop.f32.mrf.mxu0
    %v529 = vpop.f32.mrf.mxu0
    %v530 = vadd.f32 0.0, %v529
    %v531 = vpop.f32.mrf.mxu0
    %532 = vmatprep.mubr.bf16.mxu0 0
    %533 = vmatmul.mubr.bf16.gmra.mxu0 %v263
    %v534 = vpop.f32.mrf.mxu0
    %v535 = vadd.f32 0.0, %v534
    %v536 = vpop.f32.mrf.mxu0
    %v537 = vpop.f32.mrf.mxu0
    %v538 = vadd.f32 0.0, %v537
    %v539 = vpop.f32.mrf.mxu0
    %540 = vmatprep.mubr.bf16.mxu0 0
    %541 = vmatmul.mubr.bf16.gmra.mxu0 %v266
    %v542 = vpop.f32.mrf.mxu0
    %v543 = vadd.f32 0.0, %v542
    %v544 = vpop.f32.mrf.mxu0
    %v545 = vpop.f32.mrf.mxu0
    %v546 = vadd.f32 0.0, %v545
    %v547 = vpop.f32.mrf.mxu0
    %548 = vmatprep.mubr.bf16.mxu0 0
    %549 = vmatmul.mubr.bf16.gmra.mxu0 %v269
    %v550 = vpop.f32.mrf.mxu0
    %v551 = vadd.f32 0.0, %v550
    %v552 = vpop.f32.mrf.mxu0
    %v553 = vpop.f32.mrf.mxu0
    %v554 = vadd.f32 0.0, %v553
    %v555 = vpop.f32.mrf.mxu0
    %556 = vmatprep.mubr.bf16.mxu0 0
    %557 = vmatmul.mubr.bf16.gmra.mxu0 %v272
    %v558 = vpop.f32.mrf.mxu0
    %v559 = vadd.f32 0.0, %v558
    %v560 = vpop.f32.mrf.mxu0
    %v561 = vpop.f32.mrf.mxu0
    %v562 = vadd.f32 0.0, %v561
    %v563 = vpop.f32.mrf.mxu0
    %564 = vmatprep.mubr.bf16.mxu0 0
    %565 = vmatmul.mubr.bf16.gmra.mxu0 %v275
    %v566 = vpop.f32.mrf.mxu0
    %v567 = vadd.f32 0.0, %v566
    %v568 = vpop.f32.mrf.mxu0
    %v569 = vpop.f32.mrf.mxu0
    %v570 = vadd.f32 0.0, %v569
    %v571 = vpop.f32.mrf.mxu0
    %572 = vmatprep.mubr.bf16.mxu0 0
    %573 = vmatmul.mubr.bf16.gmra.mxu0 %v278
    %v574 = vpop.f32.mrf.mxu0
    %v575 = vadd.f32 0.0, %v574
    %v576 = vpop.f32.mrf.mxu0
    %v577 = vpop.f32.mrf.mxu0
    %v578 = vadd.f32 0.0, %v577
    %v579 = vpop.f32.mrf.mxu0
    %580 = vmatprep.mubr.bf16.mxu0 0
    %581 = vmatmul.mubr.bf16.gmra.mxu0 %v281
    %v582 = vpop.f32.mrf.mxu0
    %v583 = vadd.f32 0.0, %v582
    %v584 = vpop.f32.mrf.mxu0
    %v585 = vpop.f32.mrf.mxu0
    %v586 = vadd.f32 0.0, %v585
    %v587 = vpop.f32.mrf.mxu0
    %588 = vmatprep.mubr.bf16.mxu0 0
    %589 = vmatmul.mubr.bf16.gmra.mxu0 %v284
    %v590 = vpop.f32.mrf.mxu0
    %v591 = vadd.f32 0.0, %v590
    %v592 = vpop.f32.mrf.mxu0
    %v593 = vpop.f32.mrf.mxu0
    %v594 = vadd.f32 0.0, %v593
    %v595 = vpop.f32.mrf.mxu0
    %596 = vmatprep.mubr.bf16.mxu0 0
    %597 = vmatmul.mubr.bf16.gmra.mxu0 %v287
    %v598 = vpop.f32.mrf.mxu0
    %v599 = vadd.f32 0.0, %v598
    %v600 = vpop.f32.mrf.mxu0
    %v601 = vpop.f32.mrf.mxu0
    %v602 = vadd.f32 0.0, %v601
    %v603 = vpop.f32.mrf.mxu0
    %604 = vmatprep.mubr.bf16.mxu0 0
    %605 = vmatmul.mubr.bf16.gmra.mxu0 %v290
    %v606 = vpop.f32.mrf.mxu0
    %v607 = vadd.f32 0.0, %v606
    %v608 = vpop.f32.mrf.mxu0
    %v609 = vpop.f32.mrf.mxu0
    %v610 = vadd.f32 0.0, %v609
    %v611 = vpop.f32.mrf.mxu0
    %612 = vdwg.mxu0
    %v613 = vadd.f32 %v66, %v327
    %v614 = vadd.f32 %v66, %v330
    %v615 = vadd.f32 %v66, %v335
    %v616 = vadd.f32 %v66, %v338
    %v617 = vadd.f32 %v66, %v343
    %v618 = vadd.f32 %v66, %v346
    %v619 = vadd.f32 %v66, %v351
    %v620 = vadd.f32 %v66, %v354
    %v621 = vadd.f32 %v66, %v359
    %v622 = vadd.f32 %v66, %v362
    %v623 = vadd.f32 %v66, %v367
    %v624 = vadd.f32 %v66, %v370
    %v625 = vadd.f32 %v66, %v375
    %v626 = vadd.f32 %v66, %v378
    %v627 = vadd.f32 %v66, %v383
    %v628 = vadd.f32 %v66, %v386
    %v629 = vadd.f32 %v66, %v391
    %v630 = vadd.f32 %v66, %v394
    %v631 = vadd.f32 %v66, %v399
    %v632 = vadd.f32 %v66, %v402
    %v633 = vadd.f32 %v66, %v407
    %v634 = vadd.f32 %v66, %v410
    %v635 = vadd.f32 %v66, %v415
    %v636 = vadd.f32 %v66, %v418
    %v637 = vadd.f32 %v66, %v423
    %v638 = vadd.f32 %v66, %v426
    %v639 = vadd.f32 %v66, %v431
    %v640 = vadd.f32 %v66, %v434
    %v641 = vadd.f32 %v66, %v439
    %v642 = vadd.f32 %v66, %v442
    %v643 = vadd.f32 %v66, %v447
    %v644 = vadd.f32 %v66, %v450
    %v645 = vadd.f32 %v66, %v455
    %v646 = vadd.f32 %v66, %v458
    %v647 = vadd.f32 %v66, %v463
    %v648 = vadd.f32 %v66, %v466
    %v649 = vadd.f32 %v66, %v471
    %v650 = vadd.f32 %v66, %v474
    %v651 = vadd.f32 %v66, %v479
    %v652 = vadd.f32 %v66, %v482
    %v653 = vadd.f32 %v66, %v487
    %v654 = vadd.f32 %v66, %v490
    %v655 = vadd.f32 %v66, %v495
    %v656 = vadd.f32 %v66, %v498
    %v657 = vadd.f32 %v66, %v503
    %v658 = vadd.f32 %v66, %v506
    %v659 = vadd.f32 %v66, %v511
    %v660 = vadd.f32 %v66, %v514
    %v661 = vadd.f32 %v66, %v519
    %v662 = vadd.f32 %v66, %v522
    %v663 = vadd.f32 %v66, %v527
    %v664 = vadd.f32 %v66, %v530
    %v665 = vadd.f32 %v66, %v535
    %v666 = vadd.f32 %v66, %v538
    %v667 = vadd.f32 %v66, %v543
    %v668 = vadd.f32 %v66, %v546
    %v669 = vadd.f32 %v66, %v551
    %v670 = vadd.f32 %v66, %v554
    %v671 = vadd.f32 %v66, %v559
    %v672 = vadd.f32 %v66, %v562
    %v673 = vadd.f32 %v66, %v567
    %v674 = vadd.f32 %v66, %v570
    %v675 = vadd.f32 %v66, %v575
    %v676 = vadd.f32 %v66, %v578
    %v677 = vadd.f32 %v66, %v583
    %v678 = vadd.f32 %v66, %v586
    %v679 = vadd.f32 %v66, %v591
    %v680 = vadd.f32 %v66, %v594
    %v681 = vadd.f32 %v66, %v599
    %v682 = vadd.f32 %v66, %v602
    %v683 = vadd.f32 %v66, %v607
    %v684 = vadd.f32 %v66, %v610
    %v685 = vld [vmem:[%s0 + $0x1] sm:$0xff]
    %v686 = vld [vmem:[%s0 + $0x9] sm:$0xff]
    %v687 = vld [vmem:[%s0 + $0x11] sm:$0xff]
    %v688 = vld [vmem:[%s0 + $0x19] sm:$0xff]
    %v689 = vld [vmem:[%s0 + $0x21] sm:$0xff]
    %v690 = vld [vmem:[%s0 + $0x29] sm:$0xff]
    %v691 = vld [vmem:[%s0 + $0x31] sm:$0xff]
    %v692 = vld [vmem:[%s0 + $0x39] sm:$0xff]
    %v693 = vld [vmem:[%s0 + $0x41] sm:$0xff]
    %v694 = vld [vmem:[%s0 + $0x49] sm:$0xff]
    %v695 = vld [vmem:[%s0 + $0x51] sm:$0xff]
    %v696 = vld [vmem:[%s0 + $0x59] sm:$0xff]
    %v697 = vld [vmem:[%s0 + $0x61] sm:$0xff]
    %v698 = vld [vmem:[%s0 + $0x69] sm:$0xff]
    %v699 = vld [vmem:[%s0 + $0x71] sm:$0xff]
    %v700 = vld [vmem:[%s0 + $0x79] sm:$0xff]
    %v701 = vld [vmem:[%s0 + $0x81] sm:$0xff]
    %v702 = vld [vmem:[%s0 + $0x89] sm:$0xff]
    %v703 = vld [vmem:[%s0 + $0x91] sm:$0xff]
    %v704 = vld [vmem:[%s0 + $0x99] sm:$0xff]
    %v705 = vld [vmem:[%s0 + $0xa1] sm:$0xff]
    %v706 = vld [vmem:[%s0 + $0xa9] sm:$0xff]
    %v707 = vld [vmem:[%s0 + $0xb1] sm:$0xff]
    %v708 = vld [vmem:[%s0 + $0xb9] sm:$0xff]
    %v709 = vld [vmem:[%s0 + $0xc1] sm:$0xff]
    %v710 = vld [vmem:[%s0 + $0xc9] sm:$0xff]
    %v711 = vld [vmem:[%s0 + $0xd1] sm:$0xff]
    %v712 = vld [vmem:[%s0 + $0xd9] sm:$0xff]
    %v713 = vld [vmem:[%s0 + $0xe1] sm:$0xff]
    %v714 = vld [vmem:[%s0 + $0xe9] sm:$0xff]
    %v715 = vld [vmem:[%s0 + $0xf1] sm:$0xff]
    %v716 = vld [vmem:[%s0 + $0xf9] sm:$0xff]
    %v717 = vld [vmem:[%s0 + $0x101] sm:$0xff]
    %v718 = vld [vmem:[%s0 + $0x109] sm:$0xff]
    %v719 = vld [vmem:[%s0 + $0x111] sm:$0xff]
    %v720 = vld [vmem:[%s0 + $0x119] sm:$0xff]
    %v721 = vld [vmem:[%s0 + $0x149] sm:$0xff]
    %v722 = vld [vmem:[%s0 + $0x151] sm:$0xff]
    %v723 = vld [vmem:[%s0 + $0x159] sm:$0xff]
    %v724 = vld [vmem:[%s0 + $0x161] sm:$0xff]
    %v725 = vld [vmem:[%s0 + $0x169] sm:$0xff]
    %v726 = vld [vmem:[%s0 + $0x171] sm:$0xff]
    %v727 = vld [vmem:[%s0 + $0x179] sm:$0xff]
    %v728 = vld [vmem:[%s0 + $0x181] sm:$0xff]
    %v729 = vld [vmem:[%s0 + $0x189] sm:$0xff]
    %v730 = vld [vmem:[%s0 + $0x191] sm:$0xff]
    %v731 = vld [vmem:[%s0 + $0x199] sm:$0xff]
    %v732 = vld [vmem:[%s0 + $0x1a1] sm:$0xff]
    %v733 = vld [vmem:[%s0 + $0x1a9] sm:$0xff]
    %v734 = vld [vmem:[%s0 + $0x1b1] sm:$0xff]
    %v735 = vld [vmem:[%s0 + $0x1b9] sm:$0xff]
    %v736 = vld [vmem:[%s0 + $0x1c1] sm:$0xff]
    %v737 = vld [vmem:[%s0 + $0x1c9] sm:$0xff]
    %v738 = vld [vmem:[%s0 + $0x1d1] sm:$0xff]
    %v739 = vld [vmem:[%s0 + $0x1d9] sm:$0xff]
    %v740 = vld [vmem:[%s0 + $0x1e1] sm:$0xff]
    %v741 = vld [vmem:[%s0 + $0x1e9] sm:$0xff]
    %v742 = vld [vmem:[%s0 + $0x1f1] sm:$0xff]
    %v743 = vld [vmem:[%s0 + $0x1f9] sm:$0xff]
    %v744 = vld [vmem:[%s0 + $0x201] sm:$0xff]
    %v745 = vld [vmem:[%s0 + $0x209] sm:$0xff]
    %v746 = vld [vmem:[%s0 + $0x211] sm:$0xff]
    %v747 = vld [vmem:[%s0 + $0x219] sm:$0xff]
    %v748 = vld [vmem:[%s0 + $0x221] sm:$0xff]
    %v749 = vld [vmem:[%s0 + $0x229] sm:$0xff]
    %v750 = vld [vmem:[%s0 + $0x231] sm:$0xff]
    %v751 = vld [vmem:[%s0 + $0x239] sm:$0xff]
    %v752 = vld [vmem:[%s0 + $0x241] sm:$0xff]
    %v753 = vld [vmem:[%s0 + $0x249] sm:$0xff]
    %v754 = vld [vmem:[%s0 + $0x251] sm:$0xff]
    %v755 = vld [vmem:[%s0 + $0x259] sm:$0xff]
    %v756 = vld [vmem:[%s0 + $0x261] sm:$0xff]
    %v757 = vpack.c.bf16 %v686, %v685
    %v758 = vpack.c.bf16 %v688, %v687
    %v759 = vpack.c.bf16 %v690, %v689
    %v760 = vpack.c.bf16 %v692, %v691
    %v761 = vpack.c.bf16 %v694, %v693
    %v762 = vpack.c.bf16 %v696, %v695
    %v763 = vpack.c.bf16 %v698, %v697
    %v764 = vpack.c.bf16 %v700, %v699
    %v765 = vpack.c.bf16 %v702, %v701
    %v766 = vpack.c.bf16 %v704, %v703
    %v767 = vpack.c.bf16 %v706, %v705
    %v768 = vpack.c.bf16 %v708, %v707
    %v769 = vpack.c.bf16 %v710, %v709
    %v770 = vpack.c.bf16 %v712, %v711
    %v771 = vpack.c.bf16 %v714, %v713
    %v772 = vpack.c.bf16 %v716, %v715
    %v773 = vpack.c.bf16 %v718, %v717
    %v774 = vpack.c.bf16 %v720, %v719
    %v775 = vpack.c.bf16 %v722, %v721
    %v776 = vpack.c.bf16 %v724, %v723
    %v777 = vpack.c.bf16 %v726, %v725
    %v778 = vpack.c.bf16 %v728, %v727
    %v779 = vpack.c.bf16 %v730, %v729
    %v780 = vpack.c.bf16 %v732, %v731
    %v781 = vpack.c.bf16 %v734, %v733
    %v782 = vpack.c.bf16 %v736, %v735
    %v783 = vpack.c.bf16 %v738, %v737
    %v784 = vpack.c.bf16 %v740, %v739
    %v785 = vpack.c.bf16 %v742, %v741
    %v786 = vpack.c.bf16 %v744, %v743
    %v787 = vpack.c.bf16 %v746, %v745
    %v788 = vpack.c.bf16 %v748, %v747
    %v789 = vpack.c.bf16 %v750, %v749
    %v790 = vpack.c.bf16 %v752, %v751
    %v791 = vpack.c.bf16 %v754, %v753
    %v792 = vpack.c.bf16 %v756, %v755
    %s793 = scalar_lea.vmem %s1, 8
    %v794 = vld [vmem:[%s793] sm:$0xf]
    %v795 = vld [vmem:[%s793 + $0x4] sm:$0xf]
    %v798 = vunpack.c.l.b16 %v794
    %v799 = vunpack.c.l.b16 %v795
    %v800 = vpack.c.b16 %v799, %v798
    %v803 = vsel %vm16, %v757, 0
    %v806 = vsel %vm16, %v758, 0
    %v809 = vsel %vm16, %v759, 0
    %v812 = vsel %vm16, %v760, 0
    %v815 = vsel %vm16, %v761, 0
    %v818 = vsel %vm16, %v762, 0
    %v821 = vsel %vm16, %v763, 0
    %v824 = vsel %vm16, %v764, 0
    %v827 = vsel %vm16, %v765, 0
    %v830 = vsel %vm16, %v766, 0
    %v833 = vsel %vm16, %v767, 0
    %v836 = vsel %vm16, %v768, 0
    %v839 = vsel %vm16, %v769, 0
    %v842 = vsel %vm16, %v770, 0
    %v845 = vsel %vm16, %v771, 0
    %v848 = vsel %vm16, %v772, 0
    %v851 = vsel %vm16, %v773, 0
    %v854 = vsel %vm16, %v774, 0
    %v857 = vsel %vm16, %v775, 0
    %v860 = vsel %vm16, %v776, 0
    %v863 = vsel %vm16, %v777, 0
    %v866 = vsel %vm16, %v778, 0
    %v869 = vsel %vm16, %v779, 0
    %v872 = vsel %vm16, %v780, 0
    %v875 = vsel %vm16, %v781, 0
    %v878 = vsel %vm16, %v782, 0
    %v881 = vsel %vm16, %v783, 0
    %v884 = vsel %vm16, %v784, 0
    %v887 = vsel %vm16, %v785, 0
    %v890 = vsel %vm16, %v786, 0
    %v893 = vsel %vm16, %v787, 0
    %v896 = vsel %vm16, %v788, 0
    %v899 = vsel %vm16, %v789, 0
    %v902 = vsel %vm16, %v790, 0
    %v905 = vsel %vm16, %v791, 0
    %v908 = vsel %vm16, %v792, 0
    %910 = vmatprep.subr.bf16.mxu0 0
    %911 = vmatpush1.bf16.msra.mxu0 0
    %912 = vmatprep.subr.bf16.mxu0 0
    %913 = vmatpush1.bf16.msra.mxu0 0
    %914 = vmatprep.subr.bf16.mxu0 0
    %915 = vmatpush1.bf16.msra.mxu0 0
    %916 = vmatprep.subr.bf16.mxu0 0
    %917 = vmatpush1.bf16.msra.mxu0 0
    %918 = vmatprep.subr.bf16.mxu0 0
    %919 = vmatpush1.bf16.msra.mxu0 0
    %920 = vmatprep.subr.bf16.mxu0 0
    %921 = vmatpush1.bf16.msra.mxu0 0
    %922 = vmatprep.subr.bf16.mxu0 0
    %923 = vmatpush1.bf16.msra.mxu0 0
    %924 = vmatprep.subr.bf16.mxu0 0
    %925 = vmatpush1.bf16.msra.mxu0 %v800
    %926 = vmatprep.subr.bf16.mxu0 0
    %927 = vmatpush2.bf16.msra.mxu0 0
    %928 = vmatprep.subr.bf16.mxu0 0
    %929 = vmatpush2.bf16.msra.mxu0 0
    %930 = vmatprep.subr.bf16.mxu0 0
    %931 = vmatpush2.bf16.msra.mxu0 0
    %932 = vmatprep.subr.bf16.mxu0 0
    %933 = vmatpush2.bf16.msra.mxu0 0
    %934 = vmatprep.subr.bf16.mxu0 0
    %935 = vmatpush2.bf16.msra.mxu0 0
    %936 = vmatprep.subr.bf16.mxu0 0
    %937 = vmatpush2.bf16.msra.mxu0 0
    %938 = vmatprep.subr.bf16.mxu0 0
    %939 = vmatpush2.bf16.msra.mxu0 0
    %940 = vmatprep.subr.bf16.mxu0 0
    %941 = vmatpush2.bf16.msra.mxu0 0
    %942 = vmatprep.mubr.bf16.mxu0 0
    %943 = vmatmul.mubr.bf16.gmra.mxu0 %v803
    %v944 = vpop.f32.mrf.mxu0
    %v945 = vadd.f32 0.0, %v944
    %v946 = vpop.f32.mrf.mxu0
    %v947 = vpop.f32.mrf.mxu0
    %v948 = vadd.f32 0.0, %v947
    %v949 = vpop.f32.mrf.mxu0
    %950 = vmatprep.mubr.bf16.mxu0 0
    %951 = vmatmul.mubr.bf16.gmra.mxu0 %v806
    %v952 = vpop.f32.mrf.mxu0
    %v953 = vadd.f32 0.0, %v952
    %v954 = vpop.f32.mrf.mxu0
    %v955 = vpop.f32.mrf.mxu0
    %v956 = vadd.f32 0.0, %v955
    %v957 = vpop.f32.mrf.mxu0
    %958 = vmatprep.mubr.bf16.mxu0 0
    %959 = vmatmul.mubr.bf16.gmra.mxu0 %v809
    %v960 = vpop.f32.mrf.mxu0
    %v961 = vadd.f32 0.0, %v960
    %v962 = vpop.f32.mrf.mxu0
    %v963 = vpop.f32.mrf.mxu0
    %v964 = vadd.f32 0.0, %v963
    %v965 = vpop.f32.mrf.mxu0
    %966 = vmatprep.mubr.bf16.mxu0 0
    %967 = vmatmul.mubr.bf16.gmra.mxu0 %v812
    %v968 = vpop.f32.mrf.mxu0
    %v969 = vadd.f32 0.0, %v968
    %v970 = vpop.f32.mrf.mxu0
    %v971 = vpop.f32.mrf.mxu0
    %v972 = vadd.f32 0.0, %v971
    %v973 = vpop.f32.mrf.mxu0
    %974 = vmatprep.mubr.bf16.mxu0 0
    %975 = vmatmul.mubr.bf16.gmra.mxu0 %v815
    %v976 = vpop.f32.mrf.mxu0
    %v977 = vadd.f32 0.0, %v976
    %v978 = vpop.f32.mrf.mxu0
    %v979 = vpop.f32.mrf.mxu0
    %v980 = vadd.f32 0.0, %v979
    %v981 = vpop.f32.mrf.mxu0
    %982 = vmatprep.mubr.bf16.mxu0 0
    %983 = vmatmul.mubr.bf16.gmra.mxu0 %v818
    %v984 = vpop.f32.mrf.mxu0
    %v985 = vadd.f32 0.0, %v984
    %v986 = vpop.f32.mrf.mxu0
    %v987 = vpop.f32.mrf.mxu0
    %v988 = vadd.f32 0.0, %v987
    %v989 = vpop.f32.mrf.mxu0
    %990 = vmatprep.mubr.bf16.mxu0 0
    %991 = vmatmul.mubr.bf16.gmra.mxu0 %v821
    %v992 = vpop.f32.mrf.mxu0
    %v993 = vadd.f32 0.0, %v992
    %v994 = vpop.f32.mrf.mxu0
    %v995 = vpop.f32.mrf.mxu0
    %v996 = vadd.f32 0.0, %v995
    %v997 = vpop.f32.mrf.mxu0
    %998 = vmatprep.mubr.bf16.mxu0 0
    %999 = vmatmul.mubr.bf16.gmra.mxu0 %v824
    %v1000 = vpop.f32.mrf.mxu0
    %v1001 = vadd.f32 0.0, %v1000
    %v1002 = vpop.f32.mrf.mxu0
    %v1003 = vpop.f32.mrf.mxu0
    %v1004 = vadd.f32 0.0, %v1003
    %v1005 = vpop.f32.mrf.mxu0
    %1006 = vmatprep.mubr.bf16.mxu0 0
    %1007 = vmatmul.mubr.bf16.gmra.mxu0 %v827
    %v1008 = vpop.f32.mrf.mxu0
    %v1009 = vadd.f32 0.0, %v1008
    %v1010 = vpop.f32.mrf.mxu0
    %v1011 = vpop.f32.mrf.mxu0
    %v1012 = vadd.f32 0.0, %v1011
    %v1013 = vpop.f32.mrf.mxu0
    %1014 = vmatprep.mubr.bf16.mxu0 0
    %1015 = vmatmul.mubr.bf16.gmra.mxu0 %v830
    %v1016 = vpop.f32.mrf.mxu0
    %v1017 = vadd.f32 0.0, %v1016
    %v1018 = vpop.f32.mrf.mxu0
    %v1019 = vpop.f32.mrf.mxu0
    %v1020 = vadd.f32 0.0, %v1019
    %v1021 = vpop.f32.mrf.mxu0
    %1022 = vmatprep.mubr.bf16.mxu0 0
    %1023 = vmatmul.mubr.bf16.gmra.mxu0 %v833
    %v1024 = vpop.f32.mrf.mxu0
    %v1025 = vadd.f32 0.0, %v1024
    %v1026 = vpop.f32.mrf.mxu0
    %v1027 = vpop.f32.mrf.mxu0
    %v1028 = vadd.f32 0.0, %v1027
    %v1029 = vpop.f32.mrf.mxu0
    %1030 = vmatprep.mubr.bf16.mxu0 0
    %1031 = vmatmul.mubr.bf16.gmra.mxu0 %v836
    %v1032 = vpop.f32.mrf.mxu0
    %v1033 = vadd.f32 0.0, %v1032
    %v1034 = vpop.f32.mrf.mxu0
    %v1035 = vpop.f32.mrf.mxu0
    %v1036 = vadd.f32 0.0, %v1035
    %v1037 = vpop.f32.mrf.mxu0
    %1038 = vmatprep.mubr.bf16.mxu0 0
    %1039 = vmatmul.mubr.bf16.gmra.mxu0 %v839
    %v1040 = vpop.f32.mrf.mxu0
    %v1041 = vadd.f32 0.0, %v1040
    %v1042 = vpop.f32.mrf.mxu0
    %v1043 = vpop.f32.mrf.mxu0
    %v1044 = vadd.f32 0.0, %v1043
    %v1045 = vpop.f32.mrf.mxu0
    %1046 = vmatprep.mubr.bf16.mxu0 0
    %1047 = vmatmul.mubr.bf16.gmra.mxu0 %v842
    %v1048 = vpop.f32.mrf.mxu0
    %v1049 = vadd.f32 0.0, %v1048
    %v1050 = vpop.f32.mrf.mxu0
    %v1051 = vpop.f32.mrf.mxu0
    %v1052 = vadd.f32 0.0, %v1051
    %v1053 = vpop.f32.mrf.mxu0
    %1054 = vmatprep.mubr.bf16.mxu0 0
    %1055 = vmatmul.mubr.bf16.gmra.mxu0 %v845
    %v1056 = vpop.f32.mrf.mxu0
    %v1057 = vadd.f32 0.0, %v1056
    %v1058 = vpop.f32.mrf.mxu0
    %v1059 = vpop.f32.mrf.mxu0
    %v1060 = vadd.f32 0.0, %v1059
    %v1061 = vpop.f32.mrf.mxu0
    %1062 = vmatprep.mubr.bf16.mxu0 0
    %1063 = vmatmul.mubr.bf16.gmra.mxu0 %v848
    %v1064 = vpop.f32.mrf.mxu0
    %v1065 = vadd.f32 0.0, %v1064
    %v1066 = vpop.f32.mrf.mxu0
    %v1067 = vpop.f32.mrf.mxu0
    %v1068 = vadd.f32 0.0, %v1067
    %v1069 = vpop.f32.mrf.mxu0
    %1070 = vmatprep.mubr.bf16.mxu0 0
    %1071 = vmatmul.mubr.bf16.gmra.mxu0 %v851
    %v1072 = vpop.f32.mrf.mxu0
    %v1073 = vadd.f32 0.0, %v1072
    %v1074 = vpop.f32.mrf.mxu0
    %v1075 = vpop.f32.mrf.mxu0
    %v1076 = vadd.f32 0.0, %v1075
    %v1077 = vpop.f32.mrf.mxu0
    %1078 = vmatprep.mubr.bf16.mxu0 0
    %1079 = vmatmul.mubr.bf16.gmra.mxu0 %v854
    %v1080 = vpop.f32.mrf.mxu0
    %v1081 = vadd.f32 0.0, %v1080
    %v1082 = vpop.f32.mrf.mxu0
    %v1083 = vpop.f32.mrf.mxu0
    %v1084 = vadd.f32 0.0, %v1083
    %v1085 = vpop.f32.mrf.mxu0
    %1086 = vmatprep.mubr.bf16.mxu0 0
    %1087 = vmatmul.mubr.bf16.gmra.mxu0 %v857
    %v1088 = vpop.f32.mrf.mxu0
    %v1089 = vadd.f32 0.0, %v1088
    %v1090 = vpop.f32.mrf.mxu0
    %v1091 = vpop.f32.mrf.mxu0
    %v1092 = vadd.f32 0.0, %v1091
    %v1093 = vpop.f32.mrf.mxu0
    %1094 = vmatprep.mubr.bf16.mxu0 0
    %1095 = vmatmul.mubr.bf16.gmra.mxu0 %v860
    %v1096 = vpop.f32.mrf.mxu0
    %v1097 = vadd.f32 0.0, %v1096
    %v1098 = vpop.f32.mrf.mxu0
    %v1099 = vpop.f32.mrf.mxu0
    %v1100 = vadd.f32 0.0, %v1099
    %v1101 = vpop.f32.mrf.mxu0
    %1102 = vmatprep.mubr.bf16.mxu0 0
    %1103 = vmatmul.mubr.bf16.gmra.mxu0 %v863
    %v1104 = vpop.f32.mrf.mxu0
    %v1105 = vadd.f32 0.0, %v1104
    %v1106 = vpop.f32.mrf.mxu0
    %v1107 = vpop.f32.mrf.mxu0
    %v1108 = vadd.f32 0.0, %v1107
    %v1109 = vpop.f32.mrf.mxu0
    %1110 = vmatprep.mubr.bf16.mxu0 0
    %1111 = vmatmul.mubr.bf16.gmra.mxu0 %v866
    %v1112 = vpop.f32.mrf.mxu0
    %v1113 = vadd.f32 0.0, %v1112
    %v1114 = vpop.f32.mrf.mxu0
    %v1115 = vpop.f32.mrf.mxu0
    %v1116 = vadd.f32 0.0, %v1115
    %v1117 = vpop.f32.mrf.mxu0
    %1118 = vmatprep.mubr.bf16.mxu0 0
    %1119 = vmatmul.mubr.bf16.gmra.mxu0 %v869
    %v1120 = vpop.f32.mrf.mxu0
    %v1121 = vadd.f32 0.0, %v1120
    %v1122 = vpop.f32.mrf.mxu0
    %v1123 = vpop.f32.mrf.mxu0
    %v1124 = vadd.f32 0.0, %v1123
    %v1125 = vpop.f32.mrf.mxu0
    %1126 = vmatprep.mubr.bf16.mxu0 0
    %1127 = vmatmul.mubr.bf16.gmra.mxu0 %v872
    %v1128 = vpop.f32.mrf.mxu0
    %v1129 = vadd.f32 0.0, %v1128
    %v1130 = vpop.f32.mrf.mxu0
    %v1131 = vpop.f32.mrf.mxu0
    %v1132 = vadd.f32 0.0, %v1131
    %v1133 = vpop.f32.mrf.mxu0
    %1134 = vmatprep.mubr.bf16.mxu0 0
    %1135 = vmatmul.mubr.bf16.gmra.mxu0 %v875
    %v1136 = vpop.f32.mrf.mxu0
    %v1137 = vadd.f32 0.0, %v1136
    %v1138 = vpop.f32.mrf.mxu0
    %v1139 = vpop.f32.mrf.mxu0
    %v1140 = vadd.f32 0.0, %v1139
    %v1141 = vpop.f32.mrf.mxu0
    %1142 = vmatprep.mubr.bf16.mxu0 0
    %1143 = vmatmul.mubr.bf16.gmra.mxu0 %v878
    %v1144 = vpop.f32.mrf.mxu0
    %v1145 = vadd.f32 0.0, %v1144
    %v1146 = vpop.f32.mrf.mxu0
    %v1147 = vpop.f32.mrf.mxu0
    %v1148 = vadd.f32 0.0, %v1147
    %v1149 = vpop.f32.mrf.mxu0
    %1150 = vmatprep.mubr.bf16.mxu0 0
    %1151 = vmatmul.mubr.bf16.gmra.mxu0 %v881
    %v1152 = vpop.f32.mrf.mxu0
    %v1153 = vadd.f32 0.0, %v1152
    %v1154 = vpop.f32.mrf.mxu0
    %v1155 = vpop.f32.mrf.mxu0
    %v1156 = vadd.f32 0.0, %v1155
    %v1157 = vpop.f32.mrf.mxu0
    %1158 = vmatprep.mubr.bf16.mxu0 0
    %1159 = vmatmul.mubr.bf16.gmra.mxu0 %v884
    %v1160 = vpop.f32.mrf.mxu0
    %v1161 = vadd.f32 0.0, %v1160
    %v1162 = vpop.f32.mrf.mxu0
    %v1163 = vpop.f32.mrf.mxu0
    %v1164 = vadd.f32 0.0, %v1163
    %v1165 = vpop.f32.mrf.mxu0
    %1166 = vmatprep.mubr.bf16.mxu0 0
    %1167 = vmatmul.mubr.bf16.gmra.mxu0 %v887
    %v1168 = vpop.f32.mrf.mxu0
    %v1169 = vadd.f32 0.0, %v1168
    %v1170 = vpop.f32.mrf.mxu0
    %v1171 = vpop.f32.mrf.mxu0
    %v1172 = vadd.f32 0.0, %v1171
    %v1173 = vpop.f32.mrf.mxu0
    %1174 = vmatprep.mubr.bf16.mxu0 0
    %1175 = vmatmul.mubr.bf16.gmra.mxu0 %v890
    %v1176 = vpop.f32.mrf.mxu0
    %v1177 = vadd.f32 0.0, %v1176
    %v1178 = vpop.f32.mrf.mxu0
    %v1179 = vpop.f32.mrf.mxu0
    %v1180 = vadd.f32 0.0, %v1179
    %v1181 = vpop.f32.mrf.mxu0
    %1182 = vmatprep.mubr.bf16.mxu0 0
    %1183 = vmatmul.mubr.bf16.gmra.mxu0 %v893
    %v1184 = vpop.f32.mrf.mxu0
    %v1185 = vadd.f32 0.0, %v1184
    %v1186 = vpop.f32.mrf.mxu0
    %v1187 = vpop.f32.mrf.mxu0
    %v1188 = vadd.f32 0.0, %v1187
    %v1189 = vpop.f32.mrf.mxu0
    %1190 = vmatprep.mubr.bf16.mxu0 0
    %1191 = vmatmul.mubr.bf16.gmra.mxu0 %v896
    %v1192 = vpop.f32.mrf.mxu0
    %v1193 = vadd.f32 0.0, %v1192
    %v1194 = vpop.f32.mrf.mxu0
    %v1195 = vpop.f32.mrf.mxu0
    %v1196 = vadd.f32 0.0, %v1195
    %v1197 = vpop.f32.mrf.mxu0
    %1198 = vmatprep.mubr.bf16.mxu0 0
    %1199 = vmatmul.mubr.bf16.gmra.mxu0 %v899
    %v1200 = vpop.f32.mrf.mxu0
    %v1201 = vadd.f32 0.0, %v1200
    %v1202 = vpop.f32.mrf.mxu0
    %v1203 = vpop.f32.mrf.mxu0
    %v1204 = vadd.f32 0.0, %v1203
    %v1205 = vpop.f32.mrf.mxu0
    %1206 = vmatprep.mubr.bf16.mxu0 0
    %1207 = vmatmul.mubr.bf16.gmra.mxu0 %v902
    %v1208 = vpop.f32.mrf.mxu0
    %v1209 = vadd.f32 0.0, %v1208
    %v1210 = vpop.f32.mrf.mxu0
    %v1211 = vpop.f32.mrf.mxu0
    %v1212 = vadd.f32 0.0, %v1211
    %v1213 = vpop.f32.mrf.mxu0
    %1214 = vmatprep.mubr.bf16.mxu0 0
    %1215 = vmatmul.mubr.bf16.gmra.mxu0 %v905
    %v1216 = vpop.f32.mrf.mxu0
    %v1217 = vadd.f32 0.0, %v1216
    %v1218 = vpop.f32.mrf.mxu0
    %v1219 = vpop.f32.mrf.mxu0
    %v1220 = vadd.f32 0.0, %v1219
    %v1221 = vpop.f32.mrf.mxu0
    %1222 = vmatprep.mubr.bf16.mxu0 0
    %1223 = vmatmul.mubr.bf16.gmra.mxu0 %v908
    %v1224 = vpop.f32.mrf.mxu0
    %v1225 = vadd.f32 0.0, %v1224
    %v1226 = vpop.f32.mrf.mxu0
    %v1227 = vpop.f32.mrf.mxu0
    %v1228 = vadd.f32 0.0, %v1227
    %v1229 = vpop.f32.mrf.mxu0
    %1230 = vdwg.mxu0
    %v1231 = vadd.f32 %v613, %v945
    %v1232 = vadd.f32 %v614, %v948
    %v1233 = vadd.f32 %v615, %v953
    %v1234 = vadd.f32 %v616, %v956
    %v1235 = vadd.f32 %v617, %v961
    %v1236 = vadd.f32 %v618, %v964
    %v1237 = vadd.f32 %v619, %v969
    %v1238 = vadd.f32 %v620, %v972
    %v1239 = vadd.f32 %v621, %v977
    %v1240 = vadd.f32 %v622, %v980
    %v1241 = vadd.f32 %v623, %v985
    %v1242 = vadd.f32 %v624, %v988
    %v1243 = vadd.f32 %v625, %v993
    %v1244 = vadd.f32 %v626, %v996
    %v1245 = vadd.f32 %v627, %v1001
    %v1246 = vadd.f32 %v628, %v1004
    %v1247 = vadd.f32 %v629, %v1009
    %v1248 = vadd.f32 %v630, %v1012
    %v1249 = vadd.f32 %v631, %v1017
    %v1250 = vadd.f32 %v632, %v1020
    %v1251 = vadd.f32 %v633, %v1025
    %v1252 = vadd.f32 %v634, %v1028
    %v1253 = vadd.f32 %v635, %v1033
    %v1254 = vadd.f32 %v636, %v1036
    %v1255 = vadd.f32 %v637, %v1041
    %v1256 = vadd.f32 %v638, %v1044
    %v1257 = vadd.f32 %v639, %v1049
    %v1258 = vadd.f32 %v640, %v1052
    %v1259 = vadd.f32 %v641, %v1057
    %v1260 = vadd.f32 %v642, %v1060
    %v1261 = vadd.f32 %v643, %v1065
    %v1262 = vadd.f32 %v644, %v1068
    %v1263 = vadd.f32 %v645, %v1073
    %v1264 = vadd.f32 %v646, %v1076
    %v1265 = vadd.f32 %v647, %v1081
    %v1266 = vadd.f32 %v648, %v1084
    %v1267 = vadd.f32 %v649, %v1089
    %v1268 = vadd.f32 %v650, %v1092
    %v1269 = vadd.f32 %v651, %v1097
    %v1270 = vadd.f32 %v652, %v1100
    %v1271 = vadd.f32 %v653, %v1105
    %v1272 = vadd.f32 %v654, %v1108
    %v1273 = vadd.f32 %v655, %v1113
    %v1274 = vadd.f32 %v656, %v1116
    %v1275 = vadd.f32 %v657, %v1121
    %v1276 = vadd.f32 %v658, %v1124
    %v1277 = vadd.f32 %v659, %v1129
    %v1278 = vadd.f32 %v660, %v1132
    %v1279 = vadd.f32 %v661, %v1137
    %v1280 = vadd.f32 %v662, %v1140
    %v1281 = vadd.f32 %v663, %v1145
    %v1282 = vadd.f32 %v664, %v1148
    %v1283 = vadd.f32 %v665, %v1153
    %v1284 = vadd.f32 %v666, %v1156
    %v1285 = vadd.f32 %v667, %v1161
    %v1286 = vadd.f32 %v668, %v1164
    %v1287 = vadd.f32 %v669, %v1169
    %v1288 = vadd.f32 %v670, %v1172
    %v1289 = vadd.f32 %v671, %v1177
    %v1290 = vadd.f32 %v672, %v1180
    %v1291 = vadd.f32 %v673, %v1185
    %v1292 = vadd.f32 %v674, %v1188
    %v1293 = vadd.f32 %v675, %v1193
    %v1294 = vadd.f32 %v676, %v1196
    %v1295 = vadd.f32 %v677, %v1201
    %v1296 = vadd.f32 %v678, %v1204
    %v1297 = vadd.f32 %v679, %v1209
    %v1298 = vadd.f32 %v680, %v1212
    %v1299 = vadd.f32 %v681, %v1217
    %v1300 = vadd.f32 %v682, %v1220
    %v1301 = vadd.f32 %v683, %v1225
    %v1302 = vadd.f32 %v684, %v1228
    %v1303 = vld [vmem:[%s0 + $0x2] sm:$0xff]
    %v1304 = vld [vmem:[%s0 + $0xa] sm:$0xff]
    %v1305 = vld [vmem:[%s0 + $0x12] sm:$0xff]
    %v1306 = vld [vmem:[%s0 + $0x1a] sm:$0xff]
    %v1307 = vld [vmem:[%s0 + $0x22] sm:$0xff]
    %v1308 = vld [vmem:[%s0 + $0x2a] sm:$0xff]
    %v1309 = vld [vmem:[%s0 + $0x32] sm:$0xff]
    %v1310 = vld [vmem:[%s0 + $0x3a] sm:$0xff]
    %v1311 = vld [vmem:[%s0 + $0x42] sm:$0xff]
    %v1312 = vld [vmem:[%s0 + $0x4a] sm:$0xff]
    %v1313 = vld [vmem:[%s0 + $0x52] sm:$0xff]
    %v1314 = vld [vmem:[%s0 + $0x5a] sm:$0xff]
    %v1315 = vld [vmem:[%s0 + $0x62] sm:$0xff]
    %v1316 = vld [vmem:[%s0 + $0x6a] sm:$0xff]
    %v1317 = vld [vmem:[%s0 + $0x72] sm:$0xff]
    %v1318 = vld [vmem:[%s0 + $0x7a] sm:$0xff]
    %v1319 = vld [vmem:[%s0 + $0x82] sm:$0xff]
    %v1320 = vld [vmem:[%s0 + $0x8a] sm:$0xff]
    %v1321 = vld [vmem:[%s0 + $0x92] sm:$0xff]
    %v1322 = vld [vmem:[%s0 + $0x9a] sm:$0xff]
    %v1323 = vld [vmem:[%s0 + $0xa2] sm:$0xff]
    %v1324 = vld [vmem:[%s0 + $0xaa] sm:$0xff]
    %v1325 = vld [vmem:[%s0 + $0xb2] sm:$0xff]
    %v1326 = vld [vmem:[%s0 + $0xba] sm:$0xff]
    %v1327 = vld [vmem:[%s0 + $0xc2] sm:$0xff]
    %v1328 = vld [vmem:[%s0 + $0xca] sm:$0xff]
    %v1329 = vld [vmem:[%s0 + $0xd2] sm:$0xff]
    %v1330 = vld [vmem:[%s0 + $0xda] sm:$0xff]
    %v1331 = vld [vmem:[%s0 + $0xe2] sm:$0xff]
    %v1332 = vld [vmem:[%s0 + $0xea] sm:$0xff]
    %v1333 = vld [vmem:[%s0 + $0xf2] sm:$0xff]
    %v1334 = vld [vmem:[%s0 + $0xfa] sm:$0xff]
    %v1335 = vld [vmem:[%s0 + $0x102] sm:$0xff]
    %v1336 = vld [vmem:[%s0 + $0x10a] sm:$0xff]
    %v1337 = vld [vmem:[%s0 + $0x112] sm:$0xff]
    %v1338 = vld [vmem:[%s0 + $0x11a] sm:$0xff]
    %v1339 = vld [vmem:[%s0 + $0x14a] sm:$0xff]
    %v1340 = vld [vmem:[%s0 + $0x152] sm:$0xff]
    %v1341 = vld [vmem:[%s0 + $0x15a] sm:$0xff]
    %v1342 = vld [vmem:[%s0 + $0x162] sm:$0xff]
    %v1343 = vld [vmem:[%s0 + $0x16a] sm:$0xff]
    %v1344 = vld [vmem:[%s0 + $0x172] sm:$0xff]
    %v1345 = vld [vmem:[%s0 + $0x17a] sm:$0xff]
    %v1346 = vld [vmem:[%s0 + $0x182] sm:$0xff]
    %v1347 = vld [vmem:[%s0 + $0x18a] sm:$0xff]
    %v1348 = vld [vmem:[%s0 + $0x192] sm:$0xff]
    %v1349 = vld [vmem:[%s0 + $0x19a] sm:$0xff]
    %v1350 = vld [vmem:[%s0 + $0x1a2] sm:$0xff]
    %v1351 = vld [vmem:[%s0 + $0x1aa] sm:$0xff]
    %v1352 = vld [vmem:[%s0 + $0x1b2] sm:$0xff]
    %v1353 = vld [vmem:[%s0 + $0x1ba] sm:$0xff]
    %v1354 = vld [vmem:[%s0 + $0x1c2] sm:$0xff]
    %v1355 = vld [vmem:[%s0 + $0x1ca] sm:$0xff]
    %v1356 = vld [vmem:[%s0 + $0x1d2] sm:$0xff]
    %v1357 = vld [vmem:[%s0 + $0x1da] sm:$0xff]
    %v1358 = vld [vmem:[%s0 + $0x1e2] sm:$0xff]
    %v1359 = vld [vmem:[%s0 + $0x1ea] sm:$0xff]
    %v1360 = vld [vmem:[%s0 + $0x1f2] sm:$0xff]
    %v1361 = vld [vmem:[%s0 + $0x1fa] sm:$0xff]
    %v1362 = vld [vmem:[%s0 + $0x202] sm:$0xff]
    %v1363 = vld [vmem:[%s0 + $0x20a] sm:$0xff]
    %v1364 = vld [vmem:[%s0 + $0x212] sm:$0xff]
    %v1365 = vld [vmem:[%s0 + $0x21a] sm:$0xff]
    %v1366 = vld [vmem:[%s0 + $0x222] sm:$0xff]
    %v1367 = vld [vmem:[%s0 + $0x22a] sm:$0xff]
    %v1368 = vld [vmem:[%s0 + $0x232] sm:$0xff]
    %v1369 = vld [vmem:[%s0 + $0x23a] sm:$0xff]
    %v1370 = vld [vmem:[%s0 + $0x242] sm:$0xff]
    %v1371 = vld [vmem:[%s0 + $0x24a] sm:$0xff]
    %v1372 = vld [vmem:[%s0 + $0x252] sm:$0xff]
    %v1373 = vld [vmem:[%s0 + $0x25a] sm:$0xff]
    %v1374 = vld [vmem:[%s0 + $0x262] sm:$0xff]
    %v1375 = vpack.c.bf16 %v1304, %v1303
    %v1376 = vpack.c.bf16 %v1306, %v1305
    %v1377 = vpack.c.bf16 %v1308, %v1307
    %v1378 = vpack.c.bf16 %v1310, %v1309
    %v1379 = vpack.c.bf16 %v1312, %v1311
    %v1380 = vpack.c.bf16 %v1314, %v1313
    %v1381 = vpack.c.bf16 %v1316, %v1315
    %v1382 = vpack.c.bf16 %v1318, %v1317
    %v1383 = vpack.c.bf16 %v1320, %v1319
    %v1384 = vpack.c.bf16 %v1322, %v1321
    %v1385 = vpack.c.bf16 %v1324, %v1323
    %v1386 = vpack.c.bf16 %v1326, %v1325
    %v1387 = vpack.c.bf16 %v1328, %v1327
    %v1388 = vpack.c.bf16 %v1330, %v1329
    %v1389 = vpack.c.bf16 %v1332, %v1331
    %v1390 = vpack.c.bf16 %v1334, %v1333
    %v1391 = vpack.c.bf16 %v1336, %v1335
    %v1392 = vpack.c.bf16 %v1338, %v1337
    %v1393 = vpack.c.bf16 %v1340, %v1339
    %v1394 = vpack.c.bf16 %v1342, %v1341
    %v1395 = vpack.c.bf16 %v1344, %v1343
    %v1396 = vpack.c.bf16 %v1346, %v1345
    %v1397 = vpack.c.bf16 %v1348, %v1347
    %v1398 = vpack.c.bf16 %v1350, %v1349
    %v1399 = vpack.c.bf16 %v1352, %v1351
    %v1400 = vpack.c.bf16 %v1354, %v1353
    %v1401 = vpack.c.bf16 %v1356, %v1355
    %v1402 = vpack.c.bf16 %v1358, %v1357
    %v1403 = vpack.c.bf16 %v1360, %v1359
    %v1404 = vpack.c.bf16 %v1362, %v1361
    %v1405 = vpack.c.bf16 %v1364, %v1363
    %v1406 = vpack.c.bf16 %v1366, %v1365
    %v1407 = vpack.c.bf16 %v1368, %v1367
    %v1408 = vpack.c.bf16 %v1370, %v1369
    %v1409 = vpack.c.bf16 %v1372, %v1371
    %v1410 = vpack.c.bf16 %v1374, %v1373
    %s1411 = scalar_lea.vmem %s1, 16
    %v1412 = vld [vmem:[%s1411] sm:$0xf]
    %v1413 = vld [vmem:[%s1411 + $0x4] sm:$0xf]
    %v1416 = vunpack.c.l.b16 %v1412
    %v1417 = vunpack.c.l.b16 %v1413
    %v1418 = vpack.c.b16 %v1417, %v1416
    %v1421 = vsel %vm16, %v1375, 0
    %v1424 = vsel %vm16, %v1376, 0
    %v1427 = vsel %vm16, %v1377, 0
    %v1430 = vsel %vm16, %v1378, 0
    %v1433 = vsel %vm16, %v1379, 0
    %v1436 = vsel %vm16, %v1380, 0
    %v1439 = vsel %vm16, %v1381, 0
    %v1442 = vsel %vm16, %v1382, 0
    %v1445 = vsel %vm16, %v1383, 0
    %v1448 = vsel %vm16, %v1384, 0
    %v1451 = vsel %vm16, %v1385, 0
    %v1454 = vsel %vm16, %v1386, 0
    %v1457 = vsel %vm16, %v1387, 0
    %v1460 = vsel %vm16, %v1388, 0
    %v1463 = vsel %vm16, %v1389, 0
    %v1466 = vsel %vm16, %v1390, 0
    %v1469 = vsel %vm16, %v1391, 0
    %v1472 = vsel %vm16, %v1392, 0
    %v1475 = vsel %vm16, %v1393, 0
    %v1478 = vsel %vm16, %v1394, 0
    %v1481 = vsel %vm16, %v1395, 0
    %v1484 = vsel %vm16, %v1396, 0
    %v1487 = vsel %vm16, %v1397, 0
    %v1490 = vsel %vm16, %v1398, 0
    %v1493 = vsel %vm16, %v1399, 0
    %v1496 = vsel %vm16, %v1400, 0
    %v1499 = vsel %vm16, %v1401, 0
    %v1502 = vsel %vm16, %v1402, 0
    %v1505 = vsel %vm16, %v1403, 0
    %v1508 = vsel %vm16, %v1404, 0
    %v1511 = vsel %vm16, %v1405, 0
    %v1514 = vsel %vm16, %v1406, 0
    %v1517 = vsel %vm16, %v1407, 0
    %v1520 = vsel %vm16, %v1408, 0
    %v1523 = vsel %vm16, %v1409, 0
    %v1526 = vsel %vm16, %v1410, 0
    %1528 = vmatprep.subr.bf16.mxu0 0
    %1529 = vmatpush1.bf16.msra.mxu0 0
    %1530 = vmatprep.subr.bf16.mxu0 0
    %1531 = vmatpush1.bf16.msra.mxu0 0
    %1532 = vmatprep.subr.bf16.mxu0 0
    %1533 = vmatpush1.bf16.msra.mxu0 0
    %1534 = vmatprep.subr.bf16.mxu0 0
    %1535 = vmatpush1.bf16.msra.mxu0 0
    %1536 = vmatprep.subr.bf16.mxu0 0
    %1537 = vmatpush1.bf16.msra.mxu0 0
    %1538 = vmatprep.subr.bf16.mxu0 0
    %1539 = vmatpush1.bf16.msra.mxu0 0
    %1540 = vmatprep.subr.bf16.mxu0 0
    %1541 = vmatpush1.bf16.msra.mxu0 0
    %1542 = vmatprep.subr.bf16.mxu0 0
    %1543 = vmatpush1.bf16.msra.mxu0 %v1418
    %1544 = vmatprep.subr.bf16.mxu0 0
    %1545 = vmatpush2.bf16.msra.mxu0 0
    %1546 = vmatprep.subr.bf16.mxu0 0
    %1547 = vmatpush2.bf16.msra.mxu0 0
    %1548 = vmatprep.subr.bf16.mxu0 0
    %1549 = vmatpush2.bf16.msra.mxu0 0
    %1550 = vmatprep.subr.bf16.mxu0 0
    %1551 = vmatpush2.bf16.msra.mxu0 0
    %1552 = vmatprep.subr.bf16.mxu0 0
    %1553 = vmatpush2.bf16.msra.mxu0 0
    %1554 = vmatprep.subr.bf16.mxu0 0
    %1555 = vmatpush2.bf16.msra.mxu0 0
    %1556 = vmatprep.subr.bf16.mxu0 0
    %1557 = vmatpush2.bf16.msra.mxu0 0
    %1558 = vmatprep.subr.bf16.mxu0 0
    %1559 = vmatpush2.bf16.msra.mxu0 0
    %1560 = vmatprep.mubr.bf16.mxu0 0
    %1561 = vmatmul.mubr.bf16.gmra.mxu0 %v1421
    %v1562 = vpop.f32.mrf.mxu0
    %v1563 = vadd.f32 0.0, %v1562
    %v1564 = vpop.f32.mrf.mxu0
    %v1565 = vpop.f32.mrf.mxu0
    %v1566 = vadd.f32 0.0, %v1565
    %v1567 = vpop.f32.mrf.mxu0
    %1568 = vmatprep.mubr.bf16.mxu0 0
    %1569 = vmatmul.mubr.bf16.gmra.mxu0 %v1424
    %v1570 = vpop.f32.mrf.mxu0
    %v1571 = vadd.f32 0.0, %v1570
    %v1572 = vpop.f32.mrf.mxu0
    %v1573 = vpop.f32.mrf.mxu0
    %v1574 = vadd.f32 0.0, %v1573
    %v1575 = vpop.f32.mrf.mxu0
    %1576 = vmatprep.mubr.bf16.mxu0 0
    %1577 = vmatmul.mubr.bf16.gmra.mxu0 %v1427
    %v1578 = vpop.f32.mrf.mxu0
    %v1579 = vadd.f32 0.0, %v1578
    %v1580 = vpop.f32.mrf.mxu0
    %v1581 = vpop.f32.mrf.mxu0
    %v1582 = vadd.f32 0.0, %v1581
    %v1583 = vpop.f32.mrf.mxu0
    %1584 = vmatprep.mubr.bf16.mxu0 0
    %1585 = vmatmul.mubr.bf16.gmra.mxu0 %v1430
    %v1586 = vpop.f32.mrf.mxu0
    %v1587 = vadd.f32 0.0, %v1586
    %v1588 = vpop.f32.mrf.mxu0
    %v1589 = vpop.f32.mrf.mxu0
    %v1590 = vadd.f32 0.0, %v1589
    %v1591 = vpop.f32.mrf.mxu0
    %1592 = vmatprep.mubr.bf16.mxu0 0
    %1593 = vmatmul.mubr.bf16.gmra.mxu0 %v1433
    %v1594 = vpop.f32.mrf.mxu0
    %v1595 = vadd.f32 0.0, %v1594
    %v1596 = vpop.f32.mrf.mxu0
    %v1597 = vpop.f32.mrf.mxu0
    %v1598 = vadd.f32 0.0, %v1597
    %v1599 = vpop.f32.mrf.mxu0
    %1600 = vmatprep.mubr.bf16.mxu0 0
    %1601 = vmatmul.mubr.bf16.gmra.mxu0 %v1436
    %v1602 = vpop.f32.mrf.mxu0
    %v1603 = vadd.f32 0.0, %v1602
    %v1604 = vpop.f32.mrf.mxu0
    %v1605 = vpop.f32.mrf.mxu0
    %v1606 = vadd.f32 0.0, %v1605
    %v1607 = vpop.f32.mrf.mxu0
    %1608 = vmatprep.mubr.bf16.mxu0 0
    %1609 = vmatmul.mubr.bf16.gmra.mxu0 %v1439
    %v1610 = vpop.f32.mrf.mxu0
    %v1611 = vadd.f32 0.0, %v1610
    %v1612 = vpop.f32.mrf.mxu0
    %v1613 = vpop.f32.mrf.mxu0
    %v1614 = vadd.f32 0.0, %v1613
    %v1615 = vpop.f32.mrf.mxu0
    %1616 = vmatprep.mubr.bf16.mxu0 0
    %1617 = vmatmul.mubr.bf16.gmra.mxu0 %v1442
    %v1618 = vpop.f32.mrf.mxu0
    %v1619 = vadd.f32 0.0, %v1618
    %v1620 = vpop.f32.mrf.mxu0
    %v1621 = vpop.f32.mrf.mxu0
    %v1622 = vadd.f32 0.0, %v1621
    %v1623 = vpop.f32.mrf.mxu0
    %1624 = vmatprep.mubr.bf16.mxu0 0
    %1625 = vmatmul.mubr.bf16.gmra.mxu0 %v1445
    %v1626 = vpop.f32.mrf.mxu0
    %v1627 = vadd.f32 0.0, %v1626
    %v1628 = vpop.f32.mrf.mxu0
    %v1629 = vpop.f32.mrf.mxu0
    %v1630 = vadd.f32 0.0, %v1629
    %v1631 = vpop.f32.mrf.mxu0
    %1632 = vmatprep.mubr.bf16.mxu0 0
    %1633 = vmatmul.mubr.bf16.gmra.mxu0 %v1448
    %v1634 = vpop.f32.mrf.mxu0
    %v1635 = vadd.f32 0.0, %v1634
    %v1636 = vpop.f32.mrf.mxu0
    %v1637 = vpop.f32.mrf.mxu0
    %v1638 = vadd.f32 0.0, %v1637
    %v1639 = vpop.f32.mrf.mxu0
    %1640 = vmatprep.mubr.bf16.mxu0 0
    %1641 = vmatmul.mubr.bf16.gmra.mxu0 %v1451
    %v1642 = vpop.f32.mrf.mxu0
    %v1643 = vadd.f32 0.0, %v1642
    %v1644 = vpop.f32.mrf.mxu0
    %v1645 = vpop.f32.mrf.mxu0
    %v1646 = vadd.f32 0.0, %v1645
    %v1647 = vpop.f32.mrf.mxu0
    %1648 = vmatprep.mubr.bf16.mxu0 0
    %1649 = vmatmul.mubr.bf16.gmra.mxu0 %v1454
    %v1650 = vpop.f32.mrf.mxu0
    %v1651 = vadd.f32 0.0, %v1650
    %v1652 = vpop.f32.mrf.mxu0
    %v1653 = vpop.f32.mrf.mxu0
    %v1654 = vadd.f32 0.0, %v1653
    %v1655 = vpop.f32.mrf.mxu0
    %1656 = vmatprep.mubr.bf16.mxu0 0
    %1657 = vmatmul.mubr.bf16.gmra.mxu0 %v1457
    %v1658 = vpop.f32.mrf.mxu0
    %v1659 = vadd.f32 0.0, %v1658
    %v1660 = vpop.f32.mrf.mxu0
    %v1661 = vpop.f32.mrf.mxu0
    %v1662 = vadd.f32 0.0, %v1661
    %v1663 = vpop.f32.mrf.mxu0
    %1664 = vmatprep.mubr.bf16.mxu0 0
    %1665 = vmatmul.mubr.bf16.gmra.mxu0 %v1460
    %v1666 = vpop.f32.mrf.mxu0
    %v1667 = vadd.f32 0.0, %v1666
    %v1668 = vpop.f32.mrf.mxu0
    %v1669 = vpop.f32.mrf.mxu0
    %v1670 = vadd.f32 0.0, %v1669
    %v1671 = vpop.f32.mrf.mxu0
    %1672 = vmatprep.mubr.bf16.mxu0 0
    %1673 = vmatmul.mubr.bf16.gmra.mxu0 %v1463
    %v1674 = vpop.f32.mrf.mxu0
    %v1675 = vadd.f32 0.0, %v1674
    %v1676 = vpop.f32.mrf.mxu0
    %v1677 = vpop.f32.mrf.mxu0
    %v1678 = vadd.f32 0.0, %v1677
    %v1679 = vpop.f32.mrf.mxu0
    %1680 = vmatprep.mubr.bf16.mxu0 0
    %1681 = vmatmul.mubr.bf16.gmra.mxu0 %v1466
    %v1682 = vpop.f32.mrf.mxu0
    %v1683 = vadd.f32 0.0, %v1682
    %v1684 = vpop.f32.mrf.mxu0
    %v1685 = vpop.f32.mrf.mxu0
    %v1686 = vadd.f32 0.0, %v1685
    %v1687 = vpop.f32.mrf.mxu0
    %1688 = vmatprep.mubr.bf16.mxu0 0
    %1689 = vmatmul.mubr.bf16.gmra.mxu0 %v1469
    %v1690 = vpop.f32.mrf.mxu0
    %v1691 = vadd.f32 0.0, %v1690
    %v1692 = vpop.f32.mrf.mxu0
    %v1693 = vpop.f32.mrf.mxu0
    %v1694 = vadd.f32 0.0, %v1693
    %v1695 = vpop.f32.mrf.mxu0
    %1696 = vmatprep.mubr.bf16.mxu0 0
    %1697 = vmatmul.mubr.bf16.gmra.mxu0 %v1472
    %v1698 = vpop.f32.mrf.mxu0
    %v1699 = vadd.f32 0.0, %v1698
    %v1700 = vpop.f32.mrf.mxu0
    %v1701 = vpop.f32.mrf.mxu0
    %v1702 = vadd.f32 0.0, %v1701
    %v1703 = vpop.f32.mrf.mxu0
    %1704 = vmatprep.mubr.bf16.mxu0 0
    %1705 = vmatmul.mubr.bf16.gmra.mxu0 %v1475
    %v1706 = vpop.f32.mrf.mxu0
    %v1707 = vadd.f32 0.0, %v1706
    %v1708 = vpop.f32.mrf.mxu0
    %v1709 = vpop.f32.mrf.mxu0
    %v1710 = vadd.f32 0.0, %v1709
    %v1711 = vpop.f32.mrf.mxu0
    %1712 = vmatprep.mubr.bf16.mxu0 0
    %1713 = vmatmul.mubr.bf16.gmra.mxu0 %v1478
    %v1714 = vpop.f32.mrf.mxu0
    %v1715 = vadd.f32 0.0, %v1714
    %v1716 = vpop.f32.mrf.mxu0
    %v1717 = vpop.f32.mrf.mxu0
    %v1718 = vadd.f32 0.0, %v1717
    %v1719 = vpop.f32.mrf.mxu0
    %1720 = vmatprep.mubr.bf16.mxu0 0
    %1721 = vmatmul.mubr.bf16.gmra.mxu0 %v1481
    %v1722 = vpop.f32.mrf.mxu0
    %v1723 = vadd.f32 0.0, %v1722
    %v1724 = vpop.f32.mrf.mxu0
    %v1725 = vpop.f32.mrf.mxu0
    %v1726 = vadd.f32 0.0, %v1725
    %v1727 = vpop.f32.mrf.mxu0
    %1728 = vmatprep.mubr.bf16.mxu0 0
    %1729 = vmatmul.mubr.bf16.gmra.mxu0 %v1484
    %v1730 = vpop.f32.mrf.mxu0
    %v1731 = vadd.f32 0.0, %v1730
    %v1732 = vpop.f32.mrf.mxu0
    %v1733 = vpop.f32.mrf.mxu0
    %v1734 = vadd.f32 0.0, %v1733
    %v1735 = vpop.f32.mrf.mxu0
    %1736 = vmatprep.mubr.bf16.mxu0 0
    %1737 = vmatmul.mubr.bf16.gmra.mxu0 %v1487
    %v1738 = vpop.f32.mrf.mxu0
    %v1739 = vadd.f32 0.0, %v1738
    %v1740 = vpop.f32.mrf.mxu0
    %v1741 = vpop.f32.mrf.mxu0
    %v1742 = vadd.f32 0.0, %v1741
    %v1743 = vpop.f32.mrf.mxu0
    %1744 = vmatprep.mubr.bf16.mxu0 0
    %1745 = vmatmul.mubr.bf16.gmra.mxu0 %v1490
    %v1746 = vpop.f32.mrf.mxu0
    %v1747 = vadd.f32 0.0, %v1746
    %v1748 = vpop.f32.mrf.mxu0
    %v1749 = vpop.f32.mrf.mxu0
    %v1750 = vadd.f32 0.0, %v1749
    %v1751 = vpop.f32.mrf.mxu0
    %1752 = vmatprep.mubr.bf16.mxu0 0
    %1753 = vmatmul.mubr.bf16.gmra.mxu0 %v1493
    %v1754 = vpop.f32.mrf.mxu0
    %v1755 = vadd.f32 0.0, %v1754
    %v1756 = vpop.f32.mrf.mxu0
    %v1757 = vpop.f32.mrf.mxu0
    %v1758 = vadd.f32 0.0, %v1757
    %v1759 = vpop.f32.mrf.mxu0
    %1760 = vmatprep.mubr.bf16.mxu0 0
    %1761 = vmatmul.mubr.bf16.gmra.mxu0 %v1496
    %v1762 = vpop.f32.mrf.mxu0
    %v1763 = vadd.f32 0.0, %v1762
    %v1764 = vpop.f32.mrf.mxu0
    %v1765 = vpop.f32.mrf.mxu0
    %v1766 = vadd.f32 0.0, %v1765
    %v1767 = vpop.f32.mrf.mxu0
    %1768 = vmatprep.mubr.bf16.mxu0 0
    %1769 = vmatmul.mubr.bf16.gmra.mxu0 %v1499
    %v1770 = vpop.f32.mrf.mxu0
    %v1771 = vadd.f32 0.0, %v1770
    %v1772 = vpop.f32.mrf.mxu0
    %v1773 = vpop.f32.mrf.mxu0
    %v1774 = vadd.f32 0.0, %v1773
    %v1775 = vpop.f32.mrf.mxu0
    %1776 = vmatprep.mubr.bf16.mxu0 0
    %1777 = vmatmul.mubr.bf16.gmra.mxu0 %v1502
    %v1778 = vpop.f32.mrf.mxu0
    %v1779 = vadd.f32 0.0, %v1778
    %v1780 = vpop.f32.mrf.mxu0
    %v1781 = vpop.f32.mrf.mxu0
    %v1782 = vadd.f32 0.0, %v1781
    %v1783 = vpop.f32.mrf.mxu0
    %1784 = vmatprep.mubr.bf16.mxu0 0
    %1785 = vmatmul.mubr.bf16.gmra.mxu0 %v1505
    %v1786 = vpop.f32.mrf.mxu0
    %v1787 = vadd.f32 0.0, %v1786
    %v1788 = vpop.f32.mrf.mxu0
    %v1789 = vpop.f32.mrf.mxu0
    %v1790 = vadd.f32 0.0, %v1789
    %v1791 = vpop.f32.mrf.mxu0
    %1792 = vmatprep.mubr.bf16.mxu0 0
    %1793 = vmatmul.mubr.bf16.gmra.mxu0 %v1508
    %v1794 = vpop.f32.mrf.mxu0
    %v1795 = vadd.f32 0.0, %v1794
    %v1796 = vpop.f32.mrf.mxu0
    %v1797 = vpop.f32.mrf.mxu0
    %v1798 = vadd.f32 0.0, %v1797
    %v1799 = vpop.f32.mrf.mxu0
    %1800 = vmatprep.mubr.bf16.mxu0 0
    %1801 = vmatmul.mubr.bf16.gmra.mxu0 %v1511
    %v1802 = vpop.f32.mrf.mxu0
    %v1803 = vadd.f32 0.0, %v1802
    %v1804 = vpop.f32.mrf.mxu0
    %v1805 = vpop.f32.mrf.mxu0
    %v1806 = vadd.f32 0.0, %v1805
    %v1807 = vpop.f32.mrf.mxu0
    %1808 = vmatprep.mubr.bf16.mxu0 0
    %1809 = vmatmul.mubr.bf16.gmra.mxu0 %v1514
    %v1810 = vpop.f32.mrf.mxu0
    %v1811 = vadd.f32 0.0, %v1810
    %v1812 = vpop.f32.mrf.mxu0
    %v1813 = vpop.f32.mrf.mxu0
    %v1814 = vadd.f32 0.0, %v1813
    %v1815 = vpop.f32.mrf.mxu0
    %1816 = vmatprep.mubr.bf16.mxu0 0
    %1817 = vmatmul.mubr.bf16.gmra.mxu0 %v1517
    %v1818 = vpop.f32.mrf.mxu0
    %v1819 = vadd.f32 0.0, %v1818
    %v1820 = vpop.f32.mrf.mxu0
    %v1821 = vpop.f32.mrf.mxu0
    %v1822 = vadd.f32 0.0, %v1821
    %v1823 = vpop.f32.mrf.mxu0
    %1824 = vmatprep.mubr.bf16.mxu0 0
    %1825 = vmatmul.mubr.bf16.gmra.mxu0 %v1520
    %v1826 = vpop.f32.mrf.mxu0
    %v1827 = vadd.f32 0.0, %v1826
    %v1828 = vpop.f32.mrf.mxu0
    %v1829 = vpop.f32.mrf.mxu0
    %v1830 = vadd.f32 0.0, %v1829
    %v1831 = vpop.f32.mrf.mxu0
    %1832 = vmatprep.mubr.bf16.mxu0 0
    %1833 = vmatmul.mubr.bf16.gmra.mxu0 %v1523
    %v1834 = vpop.f32.mrf.mxu0
    %v1835 = vadd.f32 0.0, %v1834
    %v1836 = vpop.f32.mrf.mxu0
    %v1837 = vpop.f32.mrf.mxu0
    %v1838 = vadd.f32 0.0, %v1837
    %v1839 = vpop.f32.mrf.mxu0
    %1840 = vmatprep.mubr.bf16.mxu0 0
    %1841 = vmatmul.mubr.bf16.gmra.mxu0 %v1526
    %v1842 = vpop.f32.mrf.mxu0
    %v1843 = vadd.f32 0.0, %v1842
    %v1844 = vpop.f32.mrf.mxu0
    %v1845 = vpop.f32.mrf.mxu0
    %v1846 = vadd.f32 0.0, %v1845
    %v1847 = vpop.f32.mrf.mxu0
    %1848 = vdwg.mxu0
    %v1849 = vadd.f32 %v1231, %v1563
    %v1850 = vadd.f32 %v1232, %v1566
    %v1851 = vadd.f32 %v1233, %v1571
    %v1852 = vadd.f32 %v1234, %v1574
    %v1853 = vadd.f32 %v1235, %v1579
    %v1854 = vadd.f32 %v1236, %v1582
    %v1855 = vadd.f32 %v1237, %v1587
    %v1856 = vadd.f32 %v1238, %v1590
    %v1857 = vadd.f32 %v1239, %v1595
    %v1858 = vadd.f32 %v1240, %v1598
    %v1859 = vadd.f32 %v1241, %v1603
    %v1860 = vadd.f32 %v1242, %v1606
    %v1861 = vadd.f32 %v1243, %v1611
    %v1862 = vadd.f32 %v1244, %v1614
    %v1863 = vadd.f32 %v1245, %v1619
    %v1864 = vadd.f32 %v1246, %v1622
    %v1865 = vadd.f32 %v1247, %v1627
    %v1866 = vadd.f32 %v1248, %v1630
    %v1867 = vadd.f32 %v1249, %v1635
    %v1868 = vadd.f32 %v1250, %v1638
    %v1869 = vadd.f32 %v1251, %v1643
    %v1870 = vadd.f32 %v1252, %v1646
    %v1871 = vadd.f32 %v1253, %v1651
    %v1872 = vadd.f32 %v1254, %v1654
    %v1873 = vadd.f32 %v1255, %v1659
    %v1874 = vadd.f32 %v1256, %v1662
    %v1875 = vadd.f32 %v1257, %v1667
    %v1876 = vadd.f32 %v1258, %v1670
    %v1877 = vadd.f32 %v1259, %v1675
    %v1878 = vadd.f32 %v1260, %v1678
    %v1879 = vadd.f32 %v1261, %v1683
    %v1880 = vadd.f32 %v1262, %v1686
    %v1881 = vadd.f32 %v1263, %v1691
    %v1882 = vadd.f32 %v1264, %v1694
    %v1883 = vadd.f32 %v1265, %v1699
    %v1884 = vadd.f32 %v1266, %v1702
    %v1885 = vadd.f32 %v1267, %v1707
    %v1886 = vadd.f32 %v1268, %v1710
    %v1887 = vadd.f32 %v1269, %v1715
    %v1888 = vadd.f32 %v1270, %v1718
    %v1889 = vadd.f32 %v1271, %v1723
    %v1890 = vadd.f32 %v1272, %v1726
    %v1891 = vadd.f32 %v1273, %v1731
    %v1892 = vadd.f32 %v1274, %v1734
    %v1893 = vadd.f32 %v1275, %v1739
    %v1894 = vadd.f32 %v1276, %v1742
    %v1895 = vadd.f32 %v1277, %v1747
    %v1896 = vadd.f32 %v1278, %v1750
    %v1897 = vadd.f32 %v1279, %v1755
    %v1898 = vadd.f32 %v1280, %v1758
    %v1899 = vadd.f32 %v1281, %v1763
    %v1900 = vadd.f32 %v1282, %v1766
    %v1901 = vadd.f32 %v1283, %v1771
    %v1902 = vadd.f32 %v1284, %v1774
    %v1903 = vadd.f32 %v1285, %v1779
    %v1904 = vadd.f32 %v1286, %v1782
    %v1905 = vadd.f32 %v1287, %v1787
    %v1906 = vadd.f32 %v1288, %v1790
    %v1907 = vadd.f32 %v1289, %v1795
    %v1908 = vadd.f32 %v1290, %v1798
    %v1909 = vadd.f32 %v1291, %v1803
    %v1910 = vadd.f32 %v1292, %v1806
    %v1911 = vadd.f32 %v1293, %v1811
    %v1912 = vadd.f32 %v1294, %v1814
    %v1913 = vadd.f32 %v1295, %v1819
    %v1914 = vadd.f32 %v1296, %v1822
    %v1915 = vadd.f32 %v1297, %v1827
    %v1916 = vadd.f32 %v1298, %v1830
    %v1917 = vadd.f32 %v1299, %v1835
    %v1918 = vadd.f32 %v1300, %v1838
    %v1919 = vadd.f32 %v1301, %v1843
    %v1920 = vadd.f32 %v1302, %v1846
    %v1921 = vld [vmem:[%s0 + $0x12] sm:$0xff]
    %v1922 = vld [vmem:[%s0 + $0x1a] sm:$0xff]
    %v1923 = vld [vmem:[%s0 + $0x22] sm:$0xff]
    %v1924 = vld [vmem:[%s0 + $0x2a] sm:$0xff]
    %v1925 = vld [vmem:[%s0 + $0x32] sm:$0xff]
    %v1926 = vld [vmem:[%s0 + $0x3a] sm:$0xff]
    %v1927 = vld [vmem:[%s0 + $0x42] sm:$0xff]
    %v1928 = vld [vmem:[%s0 + $0x4a] sm:$0xff]
    %v1929 = vld [vmem:[%s0 + $0x52] sm:$0xff]
    %v1930 = vld [vmem:[%s0 + $0x5a] sm:$0xff]
    %v1931 = vld [vmem:[%s0 + $0x62] sm:$0xff]
    %v1932 = vld [vmem:[%s0 + $0x6a] sm:$0xff]
    %v1933 = vld [vmem:[%s0 + $0x72] sm:$0xff]
    %v1934 = vld [vmem:[%s0 + $0x7a] sm:$0xff]
    %v1935 = vld [vmem:[%s0 + $0x82] sm:$0xff]
    %v1936 = vld [vmem:[%s0 + $0x8a] sm:$0xff]
    %v1937 = vld [vmem:[%s0 + $0x92] sm:$0xff]
    %v1938 = vld [vmem:[%s0 + $0x9a] sm:$0xff]
    %v1939 = vld [vmem:[%s0 + $0xa2] sm:$0xff]
    %v1940 = vld [vmem:[%s0 + $0xaa] sm:$0xff]
    %v1941 = vld [vmem:[%s0 + $0xb2] sm:$0xff]
    %v1942 = vld [vmem:[%s0 + $0xba] sm:$0xff]
    %v1943 = vld [vmem:[%s0 + $0xc2] sm:$0xff]
    %v1944 = vld [vmem:[%s0 + $0xca] sm:$0xff]
    %v1945 = vld [vmem:[%s0 + $0xd2] sm:$0xff]
    %v1946 = vld [vmem:[%s0 + $0xda] sm:$0xff]
    %v1947 = vld [vmem:[%s0 + $0xe2] sm:$0xff]
    %v1948 = vld [vmem:[%s0 + $0xea] sm:$0xff]
    %v1949 = vld [vmem:[%s0 + $0xf2] sm:$0xff]
    %v1950 = vld [vmem:[%s0 + $0xfa] sm:$0xff]
    %v1951 = vld [vmem:[%s0 + $0x102] sm:$0xff]
    %v1952 = vld [vmem:[%s0 + $0x10a] sm:$0xff]
    %v1953 = vld [vmem:[%s0 + $0x112] sm:$0xff]
    %v1954 = vld [vmem:[%s0 + $0x11a] sm:$0xff]
    %v1955 = vld [vmem:[%s0 + $0x122] sm:$0xff]
    %v1956 = vld [vmem:[%s0 + $0x12a] sm:$0xff]
    %v1957 = vld [vmem:[%s0 + $0x15a] sm:$0xff]
    %v1958 = vld [vmem:[%s0 + $0x162] sm:$0xff]
    %v1959 = vld [vmem:[%s0 + $0x16a] sm:$0xff]
    %v1960 = vld [vmem:[%s0 + $0x172] sm:$0xff]
    %v1961 = vld [vmem:[%s0 + $0x17a] sm:$0xff]
    %v1962 = vld [vmem:[%s0 + $0x182] sm:$0xff]
    %v1963 = vld [vmem:[%s0 + $0x18a] sm:$0xff]
    %v1964 = vld [vmem:[%s0 + $0x192] sm:$0xff]
    %v1965 = vld [vmem:[%s0 + $0x19a] sm:$0xff]
    %v1966 = vld [vmem:[%s0 + $0x1a2] sm:$0xff]
    %v1967 = vld [vmem:[%s0 + $0x1aa] sm:$0xff]
    %v1968 = vld [vmem:[%s0 + $0x1b2] sm:$0xff]
    %v1969 = vld [vmem:[%s0 + $0x1ba] sm:$0xff]
    %v1970 = vld [vmem:[%s0 + $0x1c2] sm:$0xff]
    %v1971 = vld [vmem:[%s0 + $0x1ca] sm:$0xff]
    %v1972 = vld [vmem:[%s0 + $0x1d2] sm:$0xff]
    %v1973 = vld [vmem:[%s0 + $0x1da] sm:$0xff]
    %v1974 = vld [vmem:[%s0 + $0x1e2] sm:$0xff]
    %v1975 = vld [vmem:[%s0 + $0x1ea] sm:$0xff]
    %v1976 = vld [vmem:[%s0 + $0x1f2] sm:$0xff]
    %v1977 = vld [vmem:[%s0 + $0x1fa] sm:$0xff]
    %v1978 = vld [vmem:[%s0 + $0x202] sm:$0xff]
    %v1979 = vld [vmem:[%s0 + $0x20a] sm:$0xff]
    %v1980 = vld [vmem:[%s0 + $0x212] sm:$0xff]
    %v1981 = vld [vmem:[%s0 + $0x21a] sm:$0xff]
    %v1982 = vld [vmem:[%s0 + $0x222] sm:$0xff]
    %v1983 = vld [vmem:[%s0 + $0x22a] sm:$0xff]
    %v1984 = vld [vmem:[%s0 + $0x232] sm:$0xff]
    %v1985 = vld [vmem:[%s0 + $0x23a] sm:$0xff]
    %v1986 = vld [vmem:[%s0 + $0x242] sm:$0xff]
    %v1987 = vld [vmem:[%s0 + $0x24a] sm:$0xff]
    %v1988 = vld [vmem:[%s0 + $0x252] sm:$0xff]
    %v1989 = vld [vmem:[%s0 + $0x25a] sm:$0xff]
    %v1990 = vld [vmem:[%s0 + $0x262] sm:$0xff]
    %v1991 = vld [vmem:[%s0 + $0x26a] sm:$0xff]
    %v1992 = vld [vmem:[%s0 + $0x272] sm:$0xff]
    %v1993 = vpack.c.bf16 %v1922, %v1921
    %v1994 = vpack.c.bf16 %v1924, %v1923
    %v1995 = vpack.c.bf16 %v1926, %v1925
    %v1996 = vpack.c.bf16 %v1928, %v1927
    %v1997 = vpack.c.bf16 %v1930, %v1929
    %v1998 = vpack.c.bf16 %v1932, %v1931
    %v1999 = vpack.c.bf16 %v1934, %v1933
    %v2000 = vpack.c.bf16 %v1936, %v1935
    %v2001 = vpack.c.bf16 %v1938, %v1937
    %v2002 = vpack.c.bf16 %v1940, %v1939
    %v2003 = vpack.c.bf16 %v1942, %v1941
    %v2004 = vpack.c.bf16 %v1944, %v1943
    %v2005 = vpack.c.bf16 %v1946, %v1945
    %v2006 = vpack.c.bf16 %v1948, %v1947
    %v2007 = vpack.c.bf16 %v1950, %v1949
    %v2008 = vpack.c.bf16 %v1952, %v1951
    %v2009 = vpack.c.bf16 %v1954, %v1953
    %v2010 = vpack.c.bf16 %v1956, %v1955
    %v2011 = vpack.c.bf16 %v1958, %v1957
    %v2012 = vpack.c.bf16 %v1960, %v1959
    %v2013 = vpack.c.bf16 %v1962, %v1961
    %v2014 = vpack.c.bf16 %v1964, %v1963
    %v2015 = vpack.c.bf16 %v1966, %v1965
    %v2016 = vpack.c.bf16 %v1968, %v1967
    %v2017 = vpack.c.bf16 %v1970, %v1969
    %v2018 = vpack.c.bf16 %v1972, %v1971
    %v2019 = vpack.c.bf16 %v1974, %v1973
    %v2020 = vpack.c.bf16 %v1976, %v1975
    %v2021 = vpack.c.bf16 %v1978, %v1977
    %v2022 = vpack.c.bf16 %v1980, %v1979
    %v2023 = vpack.c.bf16 %v1982, %v1981
    %v2024 = vpack.c.bf16 %v1984, %v1983
    %v2025 = vpack.c.bf16 %v1986, %v1985
    %v2026 = vpack.c.bf16 %v1988, %v1987
    %v2027 = vpack.c.bf16 %v1990, %v1989
    %v2028 = vpack.c.bf16 %v1992, %v1991
    %s2029 = scalar_lea.vmem %s1, 24
    %v2030 = vld [vmem:[%s2029] sm:$0xf]
    %v2031 = vld [vmem:[%s2029 + $0x4] sm:$0xf]
    %v2034 = vunpack.c.l.b16 %v2030
    %v2035 = vunpack.c.l.b16 %v2031
    %v2036 = vpack.c.b16 %v2035, %v2034
    %v2039 = vsel %vm16, %v1993, 0
    %v2042 = vsel %vm16, %v1994, 0
    %v2045 = vsel %vm16, %v1995, 0
    %v2048 = vsel %vm16, %v1996, 0
    %v2051 = vsel %vm16, %v1997, 0
    %v2054 = vsel %vm16, %v1998, 0
    %v2057 = vsel %vm16, %v1999, 0
    %v2060 = vsel %vm16, %v2000, 0
    %v2063 = vsel %vm16, %v2001, 0
    %v2066 = vsel %vm16, %v2002, 0
    %v2069 = vsel %vm16, %v2003, 0
    %v2072 = vsel %vm16, %v2004, 0
    %v2075 = vsel %vm16, %v2005, 0
    %v2078 = vsel %vm16, %v2006, 0
    %v2081 = vsel %vm16, %v2007, 0
    %v2084 = vsel %vm16, %v2008, 0
    %v2087 = vsel %vm16, %v2009, 0
    %v2090 = vsel %vm16, %v2010, 0
    %v2093 = vsel %vm16, %v2011, 0
    %v2096 = vsel %vm16, %v2012, 0
    %v2099 = vsel %vm16, %v2013, 0
    %v2102 = vsel %vm16, %v2014, 0
    %v2105 = vsel %vm16, %v2015, 0
    %v2108 = vsel %vm16, %v2016, 0
    %v2111 = vsel %vm16, %v2017, 0
    %v2114 = vsel %vm16, %v2018, 0
    %v2117 = vsel %vm16, %v2019, 0
    %v2120 = vsel %vm16, %v2020, 0
    %v2123 = vsel %vm16, %v2021, 0
    %v2126 = vsel %vm16, %v2022, 0
    %v2129 = vsel %vm16, %v2023, 0
    %v2132 = vsel %vm16, %v2024, 0
    %v2135 = vsel %vm16, %v2025, 0
    %v2138 = vsel %vm16, %v2026, 0
    %v2141 = vsel %vm16, %v2027, 0
    %v2144 = vsel %vm16, %v2028, 0
    %2146 = vmatprep.subr.bf16.mxu0 0
    %2147 = vmatpush1.bf16.msra.mxu0 0
    %2148 = vmatprep.subr.bf16.mxu0 0
    %2149 = vmatpush1.bf16.msra.mxu0 0
    %2150 = vmatprep.subr.bf16.mxu0 0
    %2151 = vmatpush1.bf16.msra.mxu0 0
    %2152 = vmatprep.subr.bf16.mxu0 0
    %2153 = vmatpush1.bf16.msra.mxu0 0
    %2154 = vmatprep.subr.bf16.mxu0 0
    %2155 = vmatpush1.bf16.msra.mxu0 0
    %2156 = vmatprep.subr.bf16.mxu0 0
    %2157 = vmatpush1.bf16.msra.mxu0 0
    %2158 = vmatprep.subr.bf16.mxu0 0
    %2159 = vmatpush1.bf16.msra.mxu0 0
    %2160 = vmatprep.subr.bf16.mxu0 0
    %2161 = vmatpush1.bf16.msra.mxu0 %v2036
    %2162 = vmatprep.subr.bf16.mxu0 0
    %2163 = vmatpush2.bf16.msra.mxu0 0
    %2164 = vmatprep.subr.bf16.mxu0 0
    %2165 = vmatpush2.bf16.msra.mxu0 0
    %2166 = vmatprep.subr.bf16.mxu0 0
    %2167 = vmatpush2.bf16.msra.mxu0 0
    %2168 = vmatprep.subr.bf16.mxu0 0
    %2169 = vmatpush2.bf16.msra.mxu0 0
    %2170 = vmatprep.subr.bf16.mxu0 0
    %2171 = vmatpush2.bf16.msra.mxu0 0
    %2172 = vmatprep.subr.bf16.mxu0 0
    %2173 = vmatpush2.bf16.msra.mxu0 0
    %2174 = vmatprep.subr.bf16.mxu0 0
    %2175 = vmatpush2.bf16.msra.mxu0 0
    %2176 = vmatprep.subr.bf16.mxu0 0
    %2177 = vmatpush2.bf16.msra.mxu0 0
    %2178 = vmatprep.mubr.bf16.mxu0 0
    %2179 = vmatmul.mubr.bf16.gmra.mxu0 %v2039
    %v2180 = vpop.f32.mrf.mxu0
    %v2181 = vadd.f32 0.0, %v2180
    %v2182 = vpop.f32.mrf.mxu0
    %v2183 = vpop.f32.mrf.mxu0
    %v2184 = vadd.f32 0.0, %v2183
    %v2185 = vpop.f32.mrf.mxu0
    %2186 = vmatprep.mubr.bf16.mxu0 0
    %2187 = vmatmul.mubr.bf16.gmra.mxu0 %v2042
    %v2188 = vpop.f32.mrf.mxu0
    %v2189 = vadd.f32 0.0, %v2188
    %v2190 = vpop.f32.mrf.mxu0
    %v2191 = vpop.f32.mrf.mxu0
    %v2192 = vadd.f32 0.0, %v2191
    %v2193 = vpop.f32.mrf.mxu0
    %2194 = vmatprep.mubr.bf16.mxu0 0
    %2195 = vmatmul.mubr.bf16.gmra.mxu0 %v2045
    %v2196 = vpop.f32.mrf.mxu0
    %v2197 = vadd.f32 0.0, %v2196
    %v2198 = vpop.f32.mrf.mxu0
    %v2199 = vpop.f32.mrf.mxu0
    %v2200 = vadd.f32 0.0, %v2199
    %v2201 = vpop.f32.mrf.mxu0
    %2202 = vmatprep.mubr.bf16.mxu0 0
    %2203 = vmatmul.mubr.bf16.gmra.mxu0 %v2048
    %v2204 = vpop.f32.mrf.mxu0
    %v2205 = vadd.f32 0.0, %v2204
    %v2206 = vpop.f32.mrf.mxu0
    %v2207 = vpop.f32.mrf.mxu0
    %v2208 = vadd.f32 0.0, %v2207
    %v2209 = vpop.f32.mrf.mxu0
    %2210 = vmatprep.mubr.bf16.mxu0 0
    %2211 = vmatmul.mubr.bf16.gmra.mxu0 %v2051
    %v2212 = vpop.f32.mrf.mxu0
    %v2213 = vadd.f32 0.0, %v2212
    %v2214 = vpop.f32.mrf.mxu0
    %v2215 = vpop.f32.mrf.mxu0
    %v2216 = vadd.f32 0.0, %v2215
    %v2217 = vpop.f32.mrf.mxu0
    %2218 = vmatprep.mubr.bf16.mxu0 0
    %2219 = vmatmul.mubr.bf16.gmra.mxu0 %v2054
    %v2220 = vpop.f32.mrf.mxu0
    %v2221 = vadd.f32 0.0, %v2220
    %v2222 = vpop.f32.mrf.mxu0
    %v2223 = vpop.f32.mrf.mxu0
    %v2224 = vadd.f32 0.0, %v2223
    %v2225 = vpop.f32.mrf.mxu0
    %2226 = vmatprep.mubr.bf16.mxu0 0
    %2227 = vmatmul.mubr.bf16.gmra.mxu0 %v2057
    %v2228 = vpop.f32.mrf.mxu0
    %v2229 = vadd.f32 0.0, %v2228
    %v2230 = vpop.f32.mrf.mxu0
    %v2231 = vpop.f32.mrf.mxu0
    %v2232 = vadd.f32 0.0, %v2231
    %v2233 = vpop.f32.mrf.mxu0
    %2234 = vmatprep.mubr.bf16.mxu0 0
    %2235 = vmatmul.mubr.bf16.gmra.mxu0 %v2060
    %v2236 = vpop.f32.mrf.mxu0
    %v2237 = vadd.f32 0.0, %v2236
    %v2238 = vpop.f32.mrf.mxu0
    %v2239 = vpop.f32.mrf.mxu0
    %v2240 = vadd.f32 0.0, %v2239
    %v2241 = vpop.f32.mrf.mxu0
    %2242 = vmatprep.mubr.bf16.mxu0 0
    %2243 = vmatmul.mubr.bf16.gmra.mxu0 %v2063
    %v2244 = vpop.f32.mrf.mxu0
    %v2245 = vadd.f32 0.0, %v2244
    %v2246 = vpop.f32.mrf.mxu0
    %v2247 = vpop.f32.mrf.mxu0
    %v2248 = vadd.f32 0.0, %v2247
    %v2249 = vpop.f32.mrf.mxu0
    %2250 = vmatprep.mubr.bf16.mxu0 0
    %2251 = vmatmul.mubr.bf16.gmra.mxu0 %v2066
    %v2252 = vpop.f32.mrf.mxu0
    %v2253 = vadd.f32 0.0, %v2252
    %v2254 = vpop.f32.mrf.mxu0
    %v2255 = vpop.f32.mrf.mxu0
    %v2256 = vadd.f32 0.0, %v2255
    %v2257 = vpop.f32.mrf.mxu0
    %2258 = vmatprep.mubr.bf16.mxu0 0
    %2259 = vmatmul.mubr.bf16.gmra.mxu0 %v2069
    %v2260 = vpop.f32.mrf.mxu0
    %v2261 = vadd.f32 0.0, %v2260
    %v2262 = vpop.f32.mrf.mxu0
    %v2263 = vpop.f32.mrf.mxu0
    %v2264 = vadd.f32 0.0, %v2263
    %v2265 = vpop.f32.mrf.mxu0
    %2266 = vmatprep.mubr.bf16.mxu0 0
    %2267 = vmatmul.mubr.bf16.gmra.mxu0 %v2072
    %v2268 = vpop.f32.mrf.mxu0
    %v2269 = vadd.f32 0.0, %v2268
    %v2270 = vpop.f32.mrf.mxu0
    %v2271 = vpop.f32.mrf.mxu0
    %v2272 = vadd.f32 0.0, %v2271
    %v2273 = vpop.f32.mrf.mxu0
    %2274 = vmatprep.mubr.bf16.mxu0 0
    %2275 = vmatmul.mubr.bf16.gmra.mxu0 %v2075
    %v2276 = vpop.f32.mrf.mxu0
    %v2277 = vadd.f32 0.0, %v2276
    %v2278 = vpop.f32.mrf.mxu0
    %v2279 = vpop.f32.mrf.mxu0
    %v2280 = vadd.f32 0.0, %v2279
    %v2281 = vpop.f32.mrf.mxu0
    %2282 = vmatprep.mubr.bf16.mxu0 0
    %2283 = vmatmul.mubr.bf16.gmra.mxu0 %v2078
    %v2284 = vpop.f32.mrf.mxu0
    %v2285 = vadd.f32 0.0, %v2284
    %v2286 = vpop.f32.mrf.mxu0
    %v2287 = vpop.f32.mrf.mxu0
    %v2288 = vadd.f32 0.0, %v2287
    %v2289 = vpop.f32.mrf.mxu0
    %2290 = vmatprep.mubr.bf16.mxu0 0
    %2291 = vmatmul.mubr.bf16.gmra.mxu0 %v2081
    %v2292 = vpop.f32.mrf.mxu0
    %v2293 = vadd.f32 0.0, %v2292
    %v2294 = vpop.f32.mrf.mxu0
    %v2295 = vpop.f32.mrf.mxu0
    %v2296 = vadd.f32 0.0, %v2295
    %v2297 = vpop.f32.mrf.mxu0
    %2298 = vmatprep.mubr.bf16.mxu0 0
    %2299 = vmatmul.mubr.bf16.gmra.mxu0 %v2084
    %v2300 = vpop.f32.mrf.mxu0
    %v2301 = vadd.f32 0.0, %v2300
    %v2302 = vpop.f32.mrf.mxu0
    %v2303 = vpop.f32.mrf.mxu0
    %v2304 = vadd.f32 0.0, %v2303
    %v2305 = vpop.f32.mrf.mxu0
    %2306 = vmatprep.mubr.bf16.mxu0 0
    %2307 = vmatmul.mubr.bf16.gmra.mxu0 %v2087
    %v2308 = vpop.f32.mrf.mxu0
    %v2309 = vadd.f32 0.0, %v2308
    %v2310 = vpop.f32.mrf.mxu0
    %v2311 = vpop.f32.mrf.mxu0
    %v2312 = vadd.f32 0.0, %v2311
    %v2313 = vpop.f32.mrf.mxu0
    %2314 = vmatprep.mubr.bf16.mxu0 0
    %2315 = vmatmul.mubr.bf16.gmra.mxu0 %v2090
    %v2316 = vpop.f32.mrf.mxu0
    %v2317 = vadd.f32 0.0, %v2316
    %v2318 = vpop.f32.mrf.mxu0
    %v2319 = vpop.f32.mrf.mxu0
    %v2320 = vadd.f32 0.0, %v2319
    %v2321 = vpop.f32.mrf.mxu0
    %2322 = vmatprep.mubr.bf16.mxu0 0
    %2323 = vmatmul.mubr.bf16.gmra.mxu0 %v2093
    %v2324 = vpop.f32.mrf.mxu0
    %v2325 = vadd.f32 0.0, %v2324
    %v2326 = vpop.f32.mrf.mxu0
    %v2327 = vpop.f32.mrf.mxu0
    %v2328 = vadd.f32 0.0, %v2327
    %v2329 = vpop.f32.mrf.mxu0
    %2330 = vmatprep.mubr.bf16.mxu0 0
    %2331 = vmatmul.mubr.bf16.gmra.mxu0 %v2096
    %v2332 = vpop.f32.mrf.mxu0
    %v2333 = vadd.f32 0.0, %v2332
    %v2334 = vpop.f32.mrf.mxu0
    %v2335 = vpop.f32.mrf.mxu0
    %v2336 = vadd.f32 0.0, %v2335
    %v2337 = vpop.f32.mrf.mxu0
    %2338 = vmatprep.mubr.bf16.mxu0 0
    %2339 = vmatmul.mubr.bf16.gmra.mxu0 %v2099
    %v2340 = vpop.f32.mrf.mxu0
    %v2341 = vadd.f32 0.0, %v2340
    %v2342 = vpop.f32.mrf.mxu0
    %v2343 = vpop.f32.mrf.mxu0
    %v2344 = vadd.f32 0.0, %v2343
    %v2345 = vpop.f32.mrf.mxu0
    %2346 = vmatprep.mubr.bf16.mxu0 0
    %2347 = vmatmul.mubr.bf16.gmra.mxu0 %v2102
    %v2348 = vpop.f32.mrf.mxu0
    %v2349 = vadd.f32 0.0, %v2348
    %v2350 = vpop.f32.mrf.mxu0
    %v2351 = vpop.f32.mrf.mxu0
    %v2352 = vadd.f32 0.0, %v2351
    %v2353 = vpop.f32.mrf.mxu0
    %2354 = vmatprep.mubr.bf16.mxu0 0
    %2355 = vmatmul.mubr.bf16.gmra.mxu0 %v2105
    %v2356 = vpop.f32.mrf.mxu0
    %v2357 = vadd.f32 0.0, %v2356
    %v2358 = vpop.f32.mrf.mxu0
    %v2359 = vpop.f32.mrf.mxu0
    %v2360 = vadd.f32 0.0, %v2359
    %v2361 = vpop.f32.mrf.mxu0
    %2362 = vmatprep.mubr.bf16.mxu0 0
    %2363 = vmatmul.mubr.bf16.gmra.mxu0 %v2108
    %v2364 = vpop.f32.mrf.mxu0
    %v2365 = vadd.f32 0.0, %v2364
    %v2366 = vpop.f32.mrf.mxu0
    %v2367 = vpop.f32.mrf.mxu0
    %v2368 = vadd.f32 0.0, %v2367
    %v2369 = vpop.f32.mrf.mxu0
    %2370 = vmatprep.mubr.bf16.mxu0 0
    %2371 = vmatmul.mubr.bf16.gmra.mxu0 %v2111
    %v2372 = vpop.f32.mrf.mxu0
    %v2373 = vadd.f32 0.0, %v2372
    %v2374 = vpop.f32.mrf.mxu0
    %v2375 = vpop.f32.mrf.mxu0
    %v2376 = vadd.f32 0.0, %v2375
    %v2377 = vpop.f32.mrf.mxu0
    %2378 = vmatprep.mubr.bf16.mxu0 0
    %2379 = vmatmul.mubr.bf16.gmra.mxu0 %v2114
    %v2380 = vpop.f32.mrf.mxu0
    %v2381 = vadd.f32 0.0, %v2380
    %v2382 = vpop.f32.mrf.mxu0
    %v2383 = vpop.f32.mrf.mxu0
    %v2384 = vadd.f32 0.0, %v2383
    %v2385 = vpop.f32.mrf.mxu0
    %2386 = vmatprep.mubr.bf16.mxu0 0
    %2387 = vmatmul.mubr.bf16.gmra.mxu0 %v2117
    %v2388 = vpop.f32.mrf.mxu0
    %v2389 = vadd.f32 0.0, %v2388
    %v2390 = vpop.f32.mrf.mxu0
    %v2391 = vpop.f32.mrf.mxu0
    %v2392 = vadd.f32 0.0, %v2391
    %v2393 = vpop.f32.mrf.mxu0
    %2394 = vmatprep.mubr.bf16.mxu0 0
    %2395 = vmatmul.mubr.bf16.gmra.mxu0 %v2120
    %v2396 = vpop.f32.mrf.mxu0
    %v2397 = vadd.f32 0.0, %v2396
    %v2398 = vpop.f32.mrf.mxu0
    %v2399 = vpop.f32.mrf.mxu0
    %v2400 = vadd.f32 0.0, %v2399
    %v2401 = vpop.f32.mrf.mxu0
    %2402 = vmatprep.mubr.bf16.mxu0 0
    %2403 = vmatmul.mubr.bf16.gmra.mxu0 %v2123
    %v2404 = vpop.f32.mrf.mxu0
    %v2405 = vadd.f32 0.0, %v2404
    %v2406 = vpop.f32.mrf.mxu0
    %v2407 = vpop.f32.mrf.mxu0
    %v2408 = vadd.f32 0.0, %v2407
    %v2409 = vpop.f32.mrf.mxu0
    %2410 = vmatprep.mubr.bf16.mxu0 0
    %2411 = vmatmul.mubr.bf16.gmra.mxu0 %v2126
    %v2412 = vpop.f32.mrf.mxu0
    %v2413 = vadd.f32 0.0, %v2412
    %v2414 = vpop.f32.mrf.mxu0
    %v2415 = vpop.f32.mrf.mxu0
    %v2416 = vadd.f32 0.0, %v2415
    %v2417 = vpop.f32.mrf.mxu0
    %2418 = vmatprep.mubr.bf16.mxu0 0
    %2419 = vmatmul.mubr.bf16.gmra.mxu0 %v2129
    %v2420 = vpop.f32.mrf.mxu0
    %v2421 = vadd.f32 0.0, %v2420
    %v2422 = vpop.f32.mrf.mxu0
    %v2423 = vpop.f32.mrf.mxu0
    %v2424 = vadd.f32 0.0, %v2423
    %v2425 = vpop.f32.mrf.mxu0
    %2426 = vmatprep.mubr.bf16.mxu0 0
    %2427 = vmatmul.mubr.bf16.gmra.mxu0 %v2132
    %v2428 = vpop.f32.mrf.mxu0
    %v2429 = vadd.f32 0.0, %v2428
    %v2430 = vpop.f32.mrf.mxu0
    %v2431 = vpop.f32.mrf.mxu0
    %v2432 = vadd.f32 0.0, %v2431
    %v2433 = vpop.f32.mrf.mxu0
    %2434 = vmatprep.mubr.bf16.mxu0 0
    %2435 = vmatmul.mubr.bf16.gmra.mxu0 %v2135
    %v2436 = vpop.f32.mrf.mxu0
    %v2437 = vadd.f32 0.0, %v2436
    %v2438 = vpop.f32.mrf.mxu0
    %v2439 = vpop.f32.mrf.mxu0
    %v2440 = vadd.f32 0.0, %v2439
    %v2441 = vpop.f32.mrf.mxu0
    %2442 = vmatprep.mubr.bf16.mxu0 0
    %2443 = vmatmul.mubr.bf16.gmra.mxu0 %v2138
    %v2444 = vpop.f32.mrf.mxu0
    %v2445 = vadd.f32 0.0, %v2444
    %v2446 = vpop.f32.mrf.mxu0
    %v2447 = vpop.f32.mrf.mxu0
    %v2448 = vadd.f32 0.0, %v2447
    %v2449 = vpop.f32.mrf.mxu0
    %2450 = vmatprep.mubr.bf16.mxu0 0
    %2451 = vmatmul.mubr.bf16.gmra.mxu0 %v2141
    %v2452 = vpop.f32.mrf.mxu0
    %v2453 = vadd.f32 0.0, %v2452
    %v2454 = vpop.f32.mrf.mxu0
    %v2455 = vpop.f32.mrf.mxu0
    %v2456 = vadd.f32 0.0, %v2455
    %v2457 = vpop.f32.mrf.mxu0
    %2458 = vmatprep.mubr.bf16.mxu0 0
    %2459 = vmatmul.mubr.bf16.gmra.mxu0 %v2144
    %v2460 = vpop.f32.mrf.mxu0
    %v2461 = vadd.f32 0.0, %v2460
    %v2462 = vpop.f32.mrf.mxu0
    %v2463 = vpop.f32.mrf.mxu0
    %v2464 = vadd.f32 0.0, %v2463
    %v2465 = vpop.f32.mrf.mxu0
    %2466 = vdwg.mxu0
    %v2467 = vadd.f32 %v1849, %v2181
    %v2468 = vadd.f32 %v1850, %v2184
    %v2469 = vadd.f32 %v1851, %v2189
    %v2470 = vadd.f32 %v1852, %v2192
    %v2471 = vadd.f32 %v1853, %v2197
    %v2472 = vadd.f32 %v1854, %v2200
    %v2473 = vadd.f32 %v1855, %v2205
    %v2474 = vadd.f32 %v1856, %v2208
    %v2475 = vadd.f32 %v1857, %v2213
    %v2476 = vadd.f32 %v1858, %v2216
    %v2477 = vadd.f32 %v1859, %v2221
    %v2478 = vadd.f32 %v1860, %v2224
    %v2479 = vadd.f32 %v1861, %v2229
    %v2480 = vadd.f32 %v1862, %v2232
    %v2481 = vadd.f32 %v1863, %v2237
    %v2482 = vadd.f32 %v1864, %v2240
    %v2483 = vadd.f32 %v1865, %v2245
    %v2484 = vadd.f32 %v1866, %v2248
    %v2485 = vadd.f32 %v1867, %v2253
    %v2486 = vadd.f32 %v1868, %v2256
    %v2487 = vadd.f32 %v1869, %v2261
    %v2488 = vadd.f32 %v1870, %v2264
    %v2489 = vadd.f32 %v1871, %v2269
    %v2490 = vadd.f32 %v1872, %v2272
    %v2491 = vadd.f32 %v1873, %v2277
    %v2492 = vadd.f32 %v1874, %v2280
    %v2493 = vadd.f32 %v1875, %v2285
    %v2494 = vadd.f32 %v1876, %v2288
    %v2495 = vadd.f32 %v1877, %v2293
    %v2496 = vadd.f32 %v1878, %v2296
    %v2497 = vadd.f32 %v1879, %v2301
    %v2498 = vadd.f32 %v1880, %v2304
    %v2499 = vadd.f32 %v1881, %v2309
    %v2500 = vadd.f32 %v1882, %v2312
    %v2501 = vadd.f32 %v1883, %v2317
    %v2502 = vadd.f32 %v1884, %v2320
    %v2503 = vadd.f32 %v1885, %v2325
    %v2504 = vadd.f32 %v1886, %v2328
    %v2505 = vadd.f32 %v1887, %v2333
    %v2506 = vadd.f32 %v1888, %v2336
    %v2507 = vadd.f32 %v1889, %v2341
    %v2508 = vadd.f32 %v1890, %v2344
    %v2509 = vadd.f32 %v1891, %v2349
    %v2510 = vadd.f32 %v1892, %v2352
    %v2511 = vadd.f32 %v1893, %v2357
    %v2512 = vadd.f32 %v1894, %v2360
    %v2513 = vadd.f32 %v1895, %v2365
    %v2514 = vadd.f32 %v1896, %v2368
    %v2515 = vadd.f32 %v1897, %v2373
    %v2516 = vadd.f32 %v1898, %v2376
    %v2517 = vadd.f32 %v1899, %v2381
    %v2518 = vadd.f32 %v1900, %v2384
    %v2519 = vadd.f32 %v1901, %v2389
    %v2520 = vadd.f32 %v1902, %v2392
    %v2521 = vadd.f32 %v1903, %v2397
    %v2522 = vadd.f32 %v1904, %v2400
    %v2523 = vadd.f32 %v1905, %v2405
    %v2524 = vadd.f32 %v1906, %v2408
    %v2525 = vadd.f32 %v1907, %v2413
    %v2526 = vadd.f32 %v1908, %v2416
    %v2527 = vadd.f32 %v1909, %v2421
    %v2528 = vadd.f32 %v1910, %v2424
    %v2529 = vadd.f32 %v1911, %v2429
    %v2530 = vadd.f32 %v1912, %v2432
    %v2531 = vadd.f32 %v1913, %v2437
    %v2532 = vadd.f32 %v1914, %v2440
    %v2533 = vadd.f32 %v1915, %v2445
    %v2534 = vadd.f32 %v1916, %v2448
    %v2535 = vadd.f32 %v1917, %v2453
    %v2536 = vadd.f32 %v1918, %v2456
    %v2537 = vadd.f32 %v1919, %v2461
    %v2538 = vadd.f32 %v1920, %v2464
    %v2539 = vld [vmem:[%s0 + $0x13] sm:$0xff]
    %v2540 = vld [vmem:[%s0 + $0x1b] sm:$0xff]
    %v2541 = vld [vmem:[%s0 + $0x23] sm:$0xff]
    %v2542 = vld [vmem:[%s0 + $0x2b] sm:$0xff]
    %v2543 = vld [vmem:[%s0 + $0x33] sm:$0xff]
    %v2544 = vld [vmem:[%s0 + $0x3b] sm:$0xff]
    %v2545 = vld [vmem:[%s0 + $0x43] sm:$0xff]
    %v2546 = vld [vmem:[%s0 + $0x4b] sm:$0xff]
    %v2547 = vld [vmem:[%s0 + $0x53] sm:$0xff]
    %v2548 = vld [vmem:[%s0 + $0x5b] sm:$0xff]
    %v2549 = vld [vmem:[%s0 + $0x63] sm:$0xff]
    %v2550 = vld [vmem:[%s0 + $0x6b] sm:$0xff]
    %v2551 = vld [vmem:[%s0 + $0x73] sm:$0xff]
    %v2552 = vld [vmem:[%s0 + $0x7b] sm:$0xff]
    %v2553 = vld [vmem:[%s0 + $0x83] sm:$0xff]
    %v2554 = vld [vmem:[%s0 + $0x8b] sm:$0xff]
    %v2555 = vld [vmem:[%s0 + $0x93] sm:$0xff]
    %v2556 = vld [vmem:[%s0 + $0x9b] sm:$0xff]
    %v2557 = vld [vmem:[%s0 + $0xa3] sm:$0xff]
    %v2558 = vld [vmem:[%s0 + $0xab] sm:$0xff]
    %v2559 = vld [vmem:[%s0 + $0xb3] sm:$0xff]
    %v2560 = vld [vmem:[%s0 + $0xbb] sm:$0xff]
    %v2561 = vld [vmem:[%s0 + $0xc3] sm:$0xff]
    %v2562 = vld [vmem:[%s0 + $0xcb] sm:$0xff]
    %v2563 = vld [vmem:[%s0 + $0xd3] sm:$0xff]
    %v2564 = vld [vmem:[%s0 + $0xdb] sm:$0xff]
    %v2565 = vld [vmem:[%s0 + $0xe3] sm:$0xff]
    %v2566 = vld [vmem:[%s0 + $0xeb] sm:$0xff]
    %v2567 = vld [vmem:[%s0 + $0xf3] sm:$0xff]
    %v2568 = vld [vmem:[%s0 + $0xfb] sm:$0xff]
    %v2569 = vld [vmem:[%s0 + $0x103] sm:$0xff]
    %v2570 = vld [vmem:[%s0 + $0x10b] sm:$0xff]
    %v2571 = vld [vmem:[%s0 + $0x113] sm:$0xff]
    %v2572 = vld [vmem:[%s0 + $0x11b] sm:$0xff]
    %v2573 = vld [vmem:[%s0 + $0x123] sm:$0xff]
    %v2574 = vld [vmem:[%s0 + $0x12b] sm:$0xff]
    %v2575 = vld [vmem:[%s0 + $0x15b] sm:$0xff]
    %v2576 = vld [vmem:[%s0 + $0x163] sm:$0xff]
    %v2577 = vld [vmem:[%s0 + $0x16b] sm:$0xff]
    %v2578 = vld [vmem:[%s0 + $0x173] sm:$0xff]
    %v2579 = vld [vmem:[%s0 + $0x17b] sm:$0xff]
    %v2580 = vld [vmem:[%s0 + $0x183] sm:$0xff]
    %v2581 = vld [vmem:[%s0 + $0x18b] sm:$0xff]
    %v2582 = vld [vmem:[%s0 + $0x193] sm:$0xff]
    %v2583 = vld [vmem:[%s0 + $0x19b] sm:$0xff]
    %v2584 = vld [vmem:[%s0 + $0x1a3] sm:$0xff]
    %v2585 = vld [vmem:[%s0 + $0x1ab] sm:$0xff]
    %v2586 = vld [vmem:[%s0 + $0x1b3] sm:$0xff]
    %v2587 = vld [vmem:[%s0 + $0x1bb] sm:$0xff]
    %v2588 = vld [vmem:[%s0 + $0x1c3] sm:$0xff]
    %v2589 = vld [vmem:[%s0 + $0x1cb] sm:$0xff]
    %v2590 = vld [vmem:[%s0 + $0x1d3] sm:$0xff]
    %v2591 = vld [vmem:[%s0 + $0x1db] sm:$0xff]
    %v2592 = vld [vmem:[%s0 + $0x1e3] sm:$0xff]
    %v2593 = vld [vmem:[%s0 + $0x1eb] sm:$0xff]
    %v2594 = vld [vmem:[%s0 + $0x1f3] sm:$0xff]
    %v2595 = vld [vmem:[%s0 + $0x1fb] sm:$0xff]
    %v2596 = vld [vmem:[%s0 + $0x203] sm:$0xff]
    %v2597 = vld [vmem:[%s0 + $0x20b] sm:$0xff]
    %v2598 = vld [vmem:[%s0 + $0x213] sm:$0xff]
    %v2599 = vld [vmem:[%s0 + $0x21b] sm:$0xff]
    %v2600 = vld [vmem:[%s0 + $0x223] sm:$0xff]
    %v2601 = vld [vmem:[%s0 + $0x22b] sm:$0xff]
    %v2602 = vld [vmem:[%s0 + $0x233] sm:$0xff]
    %v2603 = vld [vmem:[%s0 + $0x23b] sm:$0xff]
    %v2604 = vld [vmem:[%s0 + $0x243] sm:$0xff]
    %v2605 = vld [vmem:[%s0 + $0x24b] sm:$0xff]
    %v2606 = vld [vmem:[%s0 + $0x253] sm:$0xff]
    %v2607 = vld [vmem:[%s0 + $0x25b] sm:$0xff]
    %v2608 = vld [vmem:[%s0 + $0x263] sm:$0xff]
    %v2609 = vld [vmem:[%s0 + $0x26b] sm:$0xff]
    %v2610 = vld [vmem:[%s0 + $0x273] sm:$0xff]
    %v2611 = vpack.c.bf16 %v2540, %v2539
    %v2612 = vpack.c.bf16 %v2542, %v2541
    %v2613 = vpack.c.bf16 %v2544, %v2543
    %v2614 = vpack.c.bf16 %v2546, %v2545
    %v2615 = vpack.c.bf16 %v2548, %v2547
    %v2616 = vpack.c.bf16 %v2550, %v2549
    %v2617 = vpack.c.bf16 %v2552, %v2551
    %v2618 = vpack.c.bf16 %v2554, %v2553
    %v2619 = vpack.c.bf16 %v2556, %v2555
    %v2620 = vpack.c.bf16 %v2558, %v2557
    %v2621 = vpack.c.bf16 %v2560, %v2559
    %v2622 = vpack.c.bf16 %v2562, %v2561
    %v2623 = vpack.c.bf16 %v2564, %v2563
    %v2624 = vpack.c.bf16 %v2566, %v2565
    %v2625 = vpack.c.bf16 %v2568, %v2567
    %v2626 = vpack.c.bf16 %v2570, %v2569
    %v2627 = vpack.c.bf16 %v2572, %v2571
    %v2628 = vpack.c.bf16 %v2574, %v2573
    %v2629 = vpack.c.bf16 %v2576, %v2575
    %v2630 = vpack.c.bf16 %v2578, %v2577
    %v2631 = vpack.c.bf16 %v2580, %v2579
    %v2632 = vpack.c.bf16 %v2582, %v2581
    %v2633 = vpack.c.bf16 %v2584, %v2583
    %v2634 = vpack.c.bf16 %v2586, %v2585
    %v2635 = vpack.c.bf16 %v2588, %v2587
    %v2636 = vpack.c.bf16 %v2590, %v2589
    %v2637 = vpack.c.bf16 %v2592, %v2591
    %v2638 = vpack.c.bf16 %v2594, %v2593
    %v2639 = vpack.c.bf16 %v2596, %v2595
    %v2640 = vpack.c.bf16 %v2598, %v2597
    %v2641 = vpack.c.bf16 %v2600, %v2599
    %v2642 = vpack.c.bf16 %v2602, %v2601
    %v2643 = vpack.c.bf16 %v2604, %v2603
    %v2644 = vpack.c.bf16 %v2606, %v2605
    %v2645 = vpack.c.bf16 %v2608, %v2607
    %v2646 = vpack.c.bf16 %v2610, %v2609
    %s2647 = scalar_lea.vmem %s1, 32
    %v2648 = vld [vmem:[%s2647] sm:$0xf]
    %v2649 = vld [vmem:[%s2647 + $0x4] sm:$0xf]
    %v2652 = vunpack.c.l.b16 %v2648
    %v2653 = vunpack.c.l.b16 %v2649
    %v2654 = vpack.c.b16 %v2653, %v2652
    %v2657 = vsel %vm16, %v2611, 0
    %v2660 = vsel %vm16, %v2612, 0
    %v2663 = vsel %vm16, %v2613, 0
    %v2666 = vsel %vm16, %v2614, 0
    %v2669 = vsel %vm16, %v2615, 0
    %v2672 = vsel %vm16, %v2616, 0
    %v2675 = vsel %vm16, %v2617, 0
    %v2678 = vsel %vm16, %v2618, 0
    %v2681 = vsel %vm16, %v2619, 0
    %v2684 = vsel %vm16, %v2620, 0
    %v2687 = vsel %vm16, %v2621, 0
    %v2690 = vsel %vm16, %v2622, 0
    %v2693 = vsel %vm16, %v2623, 0
    %v2696 = vsel %vm16, %v2624, 0
    %v2699 = vsel %vm16, %v2625, 0
    %v2702 = vsel %vm16, %v2626, 0
    %v2705 = vsel %vm16, %v2627, 0
    %v2708 = vsel %vm16, %v2628, 0
    %v2711 = vsel %vm16, %v2629, 0
    %v2714 = vsel %vm16, %v2630, 0
    %v2717 = vsel %vm16, %v2631, 0
    %v2720 = vsel %vm16, %v2632, 0
    %v2723 = vsel %vm16, %v2633, 0
    %v2726 = vsel %vm16, %v2634, 0
    %v2729 = vsel %vm16, %v2635, 0
    %v2732 = vsel %vm16, %v2636, 0
    %v2735 = vsel %vm16, %v2637, 0
    %v2738 = vsel %vm16, %v2638, 0
    %v2741 = vsel %vm16, %v2639, 0
    %v2744 = vsel %vm16, %v2640, 0
    %v2747 = vsel %vm16, %v2641, 0
    %v2750 = vsel %vm16, %v2642, 0
    %v2753 = vsel %vm16, %v2643, 0
    %v2756 = vsel %vm16, %v2644, 0
    %v2759 = vsel %vm16, %v2645, 0
    %v2762 = vsel %vm16, %v2646, 0
    %2764 = vmatprep.subr.bf16.mxu0 0
    %2765 = vmatpush1.bf16.msra.mxu0 0
    %2766 = vmatprep.subr.bf16.mxu0 0
    %2767 = vmatpush1.bf16.msra.mxu0 0
    %2768 = vmatprep.subr.bf16.mxu0 0
    %2769 = vmatpush1.bf16.msra.mxu0 0
    %2770 = vmatprep.subr.bf16.mxu0 0
    %2771 = vmatpush1.bf16.msra.mxu0 0
    %2772 = vmatprep.subr.bf16.mxu0 0
    %2773 = vmatpush1.bf16.msra.mxu0 0
    %2774 = vmatprep.subr.bf16.mxu0 0
    %2775 = vmatpush1.bf16.msra.mxu0 0
    %2776 = vmatprep.subr.bf16.mxu0 0
    %2777 = vmatpush1.bf16.msra.mxu0 0
    %2778 = vmatprep.subr.bf16.mxu0 0
    %2779 = vmatpush1.bf16.msra.mxu0 %v2654
    %2780 = vmatprep.subr.bf16.mxu0 0
    %2781 = vmatpush2.bf16.msra.mxu0 0
    %2782 = vmatprep.subr.bf16.mxu0 0
    %2783 = vmatpush2.bf16.msra.mxu0 0
    %2784 = vmatprep.subr.bf16.mxu0 0
    %2785 = vmatpush2.bf16.msra.mxu0 0
    %2786 = vmatprep.subr.bf16.mxu0 0
    %2787 = vmatpush2.bf16.msra.mxu0 0
    %2788 = vmatprep.subr.bf16.mxu0 0
    %2789 = vmatpush2.bf16.msra.mxu0 0
    %2790 = vmatprep.subr.bf16.mxu0 0
    %2791 = vmatpush2.bf16.msra.mxu0 0
    %2792 = vmatprep.subr.bf16.mxu0 0
    %2793 = vmatpush2.bf16.msra.mxu0 0
    %2794 = vmatprep.subr.bf16.mxu0 0
    %2795 = vmatpush2.bf16.msra.mxu0 0
    %2796 = vmatprep.mubr.bf16.mxu0 0
    %2797 = vmatmul.mubr.bf16.gmra.mxu0 %v2657
    %v2798 = vpop.f32.mrf.mxu0
    %v2799 = vadd.f32 0.0, %v2798
    %v2800 = vpop.f32.mrf.mxu0
    %v2801 = vpop.f32.mrf.mxu0
    %v2802 = vadd.f32 0.0, %v2801
    %v2803 = vpop.f32.mrf.mxu0
    %2804 = vmatprep.mubr.bf16.mxu0 0
    %2805 = vmatmul.mubr.bf16.gmra.mxu0 %v2660
    %v2806 = vpop.f32.mrf.mxu0
    %v2807 = vadd.f32 0.0, %v2806
    %v2808 = vpop.f32.mrf.mxu0
    %v2809 = vpop.f32.mrf.mxu0
    %v2810 = vadd.f32 0.0, %v2809
    %v2811 = vpop.f32.mrf.mxu0
    %2812 = vmatprep.mubr.bf16.mxu0 0
    %2813 = vmatmul.mubr.bf16.gmra.mxu0 %v2663
    %v2814 = vpop.f32.mrf.mxu0
    %v2815 = vadd.f32 0.0, %v2814
    %v2816 = vpop.f32.mrf.mxu0
    %v2817 = vpop.f32.mrf.mxu0
    %v2818 = vadd.f32 0.0, %v2817
    %v2819 = vpop.f32.mrf.mxu0
    %2820 = vmatprep.mubr.bf16.mxu0 0
    %2821 = vmatmul.mubr.bf16.gmra.mxu0 %v2666
    %v2822 = vpop.f32.mrf.mxu0
    %v2823 = vadd.f32 0.0, %v2822
    %v2824 = vpop.f32.mrf.mxu0
    %v2825 = vpop.f32.mrf.mxu0
    %v2826 = vadd.f32 0.0, %v2825
    %v2827 = vpop.f32.mrf.mxu0
    %2828 = vmatprep.mubr.bf16.mxu0 0
    %2829 = vmatmul.mubr.bf16.gmra.mxu0 %v2669
    %v2830 = vpop.f32.mrf.mxu0
    %v2831 = vadd.f32 0.0, %v2830
    %v2832 = vpop.f32.mrf.mxu0
    %v2833 = vpop.f32.mrf.mxu0
    %v2834 = vadd.f32 0.0, %v2833
    %v2835 = vpop.f32.mrf.mxu0
    %2836 = vmatprep.mubr.bf16.mxu0 0
    %2837 = vmatmul.mubr.bf16.gmra.mxu0 %v2672
    %v2838 = vpop.f32.mrf.mxu0
    %v2839 = vadd.f32 0.0, %v2838
    %v2840 = vpop.f32.mrf.mxu0
    %v2841 = vpop.f32.mrf.mxu0
    %v2842 = vadd.f32 0.0, %v2841
    %v2843 = vpop.f32.mrf.mxu0
    %2844 = vmatprep.mubr.bf16.mxu0 0
    %2845 = vmatmul.mubr.bf16.gmra.mxu0 %v2675
    %v2846 = vpop.f32.mrf.mxu0
    %v2847 = vadd.f32 0.0, %v2846
    %v2848 = vpop.f32.mrf.mxu0
    %v2849 = vpop.f32.mrf.mxu0
    %v2850 = vadd.f32 0.0, %v2849
    %v2851 = vpop.f32.mrf.mxu0
    %2852 = vmatprep.mubr.bf16.mxu0 0
    %2853 = vmatmul.mubr.bf16.gmra.mxu0 %v2678
    %v2854 = vpop.f32.mrf.mxu0
    %v2855 = vadd.f32 0.0, %v2854
    %v2856 = vpop.f32.mrf.mxu0
    %v2857 = vpop.f32.mrf.mxu0
    %v2858 = vadd.f32 0.0, %v2857
    %v2859 = vpop.f32.mrf.mxu0
    %2860 = vmatprep.mubr.bf16.mxu0 0
    %2861 = vmatmul.mubr.bf16.gmra.mxu0 %v2681
    %v2862 = vpop.f32.mrf.mxu0
    %v2863 = vadd.f32 0.0, %v2862
    %v2864 = vpop.f32.mrf.mxu0
    %v2865 = vpop.f32.mrf.mxu0
    %v2866 = vadd.f32 0.0, %v2865
    %v2867 = vpop.f32.mrf.mxu0
    %2868 = vmatprep.mubr.bf16.mxu0 0
    %2869 = vmatmul.mubr.bf16.gmra.mxu0 %v2684
    %v2870 = vpop.f32.mrf.mxu0
    %v2871 = vadd.f32 0.0, %v2870
    %v2872 = vpop.f32.mrf.mxu0
    %v2873 = vpop.f32.mrf.mxu0
    %v2874 = vadd.f32 0.0, %v2873
    %v2875 = vpop.f32.mrf.mxu0
    %2876 = vmatprep.mubr.bf16.mxu0 0
    %2877 = vmatmul.mubr.bf16.gmra.mxu0 %v2687
    %v2878 = vpop.f32.mrf.mxu0
    %v2879 = vadd.f32 0.0, %v2878
    %v2880 = vpop.f32.mrf.mxu0
    %v2881 = vpop.f32.mrf.mxu0
    %v2882 = vadd.f32 0.0, %v2881
    %v2883 = vpop.f32.mrf.mxu0
    %2884 = vmatprep.mubr.bf16.mxu0 0
    %2885 = vmatmul.mubr.bf16.gmra.mxu0 %v2690
    %v2886 = vpop.f32.mrf.mxu0
    %v2887 = vadd.f32 0.0, %v2886
    %v2888 = vpop.f32.mrf.mxu0
    %v2889 = vpop.f32.mrf.mxu0
    %v2890 = vadd.f32 0.0, %v2889
    %v2891 = vpop.f32.mrf.mxu0
    %2892 = vmatprep.mubr.bf16.mxu0 0
    %2893 = vmatmul.mubr.bf16.gmra.mxu0 %v2693
    %v2894 = vpop.f32.mrf.mxu0
    %v2895 = vadd.f32 0.0, %v2894
    %v2896 = vpop.f32.mrf.mxu0
    %v2897 = vpop.f32.mrf.mxu0
    %v2898 = vadd.f32 0.0, %v2897
    %v2899 = vpop.f32.mrf.mxu0
    %2900 = vmatprep.mubr.bf16.mxu0 0
    %2901 = vmatmul.mubr.bf16.gmra.mxu0 %v2696
    %v2902 = vpop.f32.mrf.mxu0
    %v2903 = vadd.f32 0.0, %v2902
    %v2904 = vpop.f32.mrf.mxu0
    %v2905 = vpop.f32.mrf.mxu0
    %v2906 = vadd.f32 0.0, %v2905
    %v2907 = vpop.f32.mrf.mxu0
    %2908 = vmatprep.mubr.bf16.mxu0 0
    %2909 = vmatmul.mubr.bf16.gmra.mxu0 %v2699
    %v2910 = vpop.f32.mrf.mxu0
    %v2911 = vadd.f32 0.0, %v2910
    %v2912 = vpop.f32.mrf.mxu0
    %v2913 = vpop.f32.mrf.mxu0
    %v2914 = vadd.f32 0.0, %v2913
    %v2915 = vpop.f32.mrf.mxu0
    %2916 = vmatprep.mubr.bf16.mxu0 0
    %2917 = vmatmul.mubr.bf16.gmra.mxu0 %v2702
    %v2918 = vpop.f32.mrf.mxu0
    %v2919 = vadd.f32 0.0, %v2918
    %v2920 = vpop.f32.mrf.mxu0
    %v2921 = vpop.f32.mrf.mxu0
    %v2922 = vadd.f32 0.0, %v2921
    %v2923 = vpop.f32.mrf.mxu0
    %2924 = vmatprep.mubr.bf16.mxu0 0
    %2925 = vmatmul.mubr.bf16.gmra.mxu0 %v2705
    %v2926 = vpop.f32.mrf.mxu0
    %v2927 = vadd.f32 0.0, %v2926
    %v2928 = vpop.f32.mrf.mxu0
    %v2929 = vpop.f32.mrf.mxu0
    %v2930 = vadd.f32 0.0, %v2929
    %v2931 = vpop.f32.mrf.mxu0
    %2932 = vmatprep.mubr.bf16.mxu0 0
    %2933 = vmatmul.mubr.bf16.gmra.mxu0 %v2708
    %v2934 = vpop.f32.mrf.mxu0
    %v2935 = vadd.f32 0.0, %v2934
    %v2936 = vpop.f32.mrf.mxu0
    %v2937 = vpop.f32.mrf.mxu0
    %v2938 = vadd.f32 0.0, %v2937
    %v2939 = vpop.f32.mrf.mxu0
    %2940 = vmatprep.mubr.bf16.mxu0 0
    %2941 = vmatmul.mubr.bf16.gmra.mxu0 %v2711
    %v2942 = vpop.f32.mrf.mxu0
    %v2943 = vadd.f32 0.0, %v2942
    %v2944 = vpop.f32.mrf.mxu0
    %v2945 = vpop.f32.mrf.mxu0
    %v2946 = vadd.f32 0.0, %v2945
    %v2947 = vpop.f32.mrf.mxu0
    %2948 = vmatprep.mubr.bf16.mxu0 0
    %2949 = vmatmul.mubr.bf16.gmra.mxu0 %v2714
    %v2950 = vpop.f32.mrf.mxu0
    %v2951 = vadd.f32 0.0, %v2950
    %v2952 = vpop.f32.mrf.mxu0
    %v2953 = vpop.f32.mrf.mxu0
    %v2954 = vadd.f32 0.0, %v2953
    %v2955 = vpop.f32.mrf.mxu0
    %2956 = vmatprep.mubr.bf16.mxu0 0
    %2957 = vmatmul.mubr.bf16.gmra.mxu0 %v2717
    %v2958 = vpop.f32.mrf.mxu0
    %v2959 = vadd.f32 0.0, %v2958
    %v2960 = vpop.f32.mrf.mxu0
    %v2961 = vpop.f32.mrf.mxu0
    %v2962 = vadd.f32 0.0, %v2961
    %v2963 = vpop.f32.mrf.mxu0
    %2964 = vmatprep.mubr.bf16.mxu0 0
    %2965 = vmatmul.mubr.bf16.gmra.mxu0 %v2720
    %v2966 = vpop.f32.mrf.mxu0
    %v2967 = vadd.f32 0.0, %v2966
    %v2968 = vpop.f32.mrf.mxu0
    %v2969 = vpop.f32.mrf.mxu0
    %v2970 = vadd.f32 0.0, %v2969
    %v2971 = vpop.f32.mrf.mxu0
    %2972 = vmatprep.mubr.bf16.mxu0 0
    %2973 = vmatmul.mubr.bf16.gmra.mxu0 %v2723
    %v2974 = vpop.f32.mrf.mxu0
    %v2975 = vadd.f32 0.0, %v2974
    %v2976 = vpop.f32.mrf.mxu0
    %v2977 = vpop.f32.mrf.mxu0
    %v2978 = vadd.f32 0.0, %v2977
    %v2979 = vpop.f32.mrf.mxu0
    %2980 = vmatprep.mubr.bf16.mxu0 0
    %2981 = vmatmul.mubr.bf16.gmra.mxu0 %v2726
    %v2982 = vpop.f32.mrf.mxu0
    %v2983 = vadd.f32 0.0, %v2982
    %v2984 = vpop.f32.mrf.mxu0
    %v2985 = vpop.f32.mrf.mxu0
    %v2986 = vadd.f32 0.0, %v2985
    %v2987 = vpop.f32.mrf.mxu0
    %2988 = vmatprep.mubr.bf16.mxu0 0
    %2989 = vmatmul.mubr.bf16.gmra.mxu0 %v2729
    %v2990 = vpop.f32.mrf.mxu0
    %v2991 = vadd.f32 0.0, %v2990
    %v2992 = vpop.f32.mrf.mxu0
    %v2993 = vpop.f32.mrf.mxu0
    %v2994 = vadd.f32 0.0, %v2993
    %v2995 = vpop.f32.mrf.mxu0
    %2996 = vmatprep.mubr.bf16.mxu0 0
    %2997 = vmatmul.mubr.bf16.gmra.mxu0 %v2732
    %v2998 = vpop.f32.mrf.mxu0
    %v2999 = vadd.f32 0.0, %v2998
    %v3000 = vpop.f32.mrf.mxu0
    %v3001 = vpop.f32.mrf.mxu0
    %v3002 = vadd.f32 0.0, %v3001
    %v3003 = vpop.f32.mrf.mxu0
    %3004 = vmatprep.mubr.bf16.mxu0 0
    %3005 = vmatmul.mubr.bf16.gmra.mxu0 %v2735
    %v3006 = vpop.f32.mrf.mxu0
    %v3007 = vadd.f32 0.0, %v3006
    %v3008 = vpop.f32.mrf.mxu0
    %v3009 = vpop.f32.mrf.mxu0
    %v3010 = vadd.f32 0.0, %v3009
    %v3011 = vpop.f32.mrf.mxu0
    %3012 = vmatprep.mubr.bf16.mxu0 0
    %3013 = vmatmul.mubr.bf16.gmra.mxu0 %v2738
    %v3014 = vpop.f32.mrf.mxu0
    %v3015 = vadd.f32 0.0, %v3014
    %v3016 = vpop.f32.mrf.mxu0
    %v3017 = vpop.f32.mrf.mxu0
    %v3018 = vadd.f32 0.0, %v3017
    %v3019 = vpop.f32.mrf.mxu0
    %3020 = vmatprep.mubr.bf16.mxu0 0
    %3021 = vmatmul.mubr.bf16.gmra.mxu0 %v2741
    %v3022 = vpop.f32.mrf.mxu0
    %v3023 = vadd.f32 0.0, %v3022
    %v3024 = vpop.f32.mrf.mxu0
    %v3025 = vpop.f32.mrf.mxu0
    %v3026 = vadd.f32 0.0, %v3025
    %v3027 = vpop.f32.mrf.mxu0
    %3028 = vmatprep.mubr.bf16.mxu0 0
    %3029 = vmatmul.mubr.bf16.gmra.mxu0 %v2744
    %v3030 = vpop.f32.mrf.mxu0
    %v3031 = vadd.f32 0.0, %v3030
    %v3032 = vpop.f32.mrf.mxu0
    %v3033 = vpop.f32.mrf.mxu0
    %v3034 = vadd.f32 0.0, %v3033
    %v3035 = vpop.f32.mrf.mxu0
    %3036 = vmatprep.mubr.bf16.mxu0 0
    %3037 = vmatmul.mubr.bf16.gmra.mxu0 %v2747
    %v3038 = vpop.f32.mrf.mxu0
    %v3039 = vadd.f32 0.0, %v3038
    %v3040 = vpop.f32.mrf.mxu0
    %v3041 = vpop.f32.mrf.mxu0
    %v3042 = vadd.f32 0.0, %v3041
    %v3043 = vpop.f32.mrf.mxu0
    %3044 = vmatprep.mubr.bf16.mxu0 0
    %3045 = vmatmul.mubr.bf16.gmra.mxu0 %v2750
    %v3046 = vpop.f32.mrf.mxu0
    %v3047 = vadd.f32 0.0, %v3046
    %v3048 = vpop.f32.mrf.mxu0
    %v3049 = vpop.f32.mrf.mxu0
    %v3050 = vadd.f32 0.0, %v3049
    %v3051 = vpop.f32.mrf.mxu0
    %3052 = vmatprep.mubr.bf16.mxu0 0
    %3053 = vmatmul.mubr.bf16.gmra.mxu0 %v2753
    %v3054 = vpop.f32.mrf.mxu0
    %v3055 = vadd.f32 0.0, %v3054
    %v3056 = vpop.f32.mrf.mxu0
    %v3057 = vpop.f32.mrf.mxu0
    %v3058 = vadd.f32 0.0, %v3057
    %v3059 = vpop.f32.mrf.mxu0
    %3060 = vmatprep.mubr.bf16.mxu0 0
    %3061 = vmatmul.mubr.bf16.gmra.mxu0 %v2756
    %v3062 = vpop.f32.mrf.mxu0
    %v3063 = vadd.f32 0.0, %v3062
    %v3064 = vpop.f32.mrf.mxu0
    %v3065 = vpop.f32.mrf.mxu0
    %v3066 = vadd.f32 0.0, %v3065
    %v3067 = vpop.f32.mrf.mxu0
    %3068 = vmatprep.mubr.bf16.mxu0 0
    %3069 = vmatmul.mubr.bf16.gmra.mxu0 %v2759
    %v3070 = vpop.f32.mrf.mxu0
    %v3071 = vadd.f32 0.0, %v3070
    %v3072 = vpop.f32.mrf.mxu0
    %v3073 = vpop.f32.mrf.mxu0
    %v3074 = vadd.f32 0.0, %v3073
    %v3075 = vpop.f32.mrf.mxu0
    %3076 = vmatprep.mubr.bf16.mxu0 0
    %3077 = vmatmul.mubr.bf16.gmra.mxu0 %v2762
    %v3078 = vpop.f32.mrf.mxu0
    %v3079 = vadd.f32 0.0, %v3078
    %v3080 = vpop.f32.mrf.mxu0
    %v3081 = vpop.f32.mrf.mxu0
    %v3082 = vadd.f32 0.0, %v3081
    %v3083 = vpop.f32.mrf.mxu0
    %3084 = vdwg.mxu0
    %v3085 = vadd.f32 %v2467, %v2799
    %v3086 = vadd.f32 %v2468, %v2802
    %v3087 = vadd.f32 %v2469, %v2807
    %v3088 = vadd.f32 %v2470, %v2810
    %v3089 = vadd.f32 %v2471, %v2815
    %v3090 = vadd.f32 %v2472, %v2818
    %v3091 = vadd.f32 %v2473, %v2823
    %v3092 = vadd.f32 %v2474, %v2826
    %v3093 = vadd.f32 %v2475, %v2831
    %v3094 = vadd.f32 %v2476, %v2834
    %v3095 = vadd.f32 %v2477, %v2839
    %v3096 = vadd.f32 %v2478, %v2842
    %v3097 = vadd.f32 %v2479, %v2847
    %v3098 = vadd.f32 %v2480, %v2850
    %v3099 = vadd.f32 %v2481, %v2855
    %v3100 = vadd.f32 %v2482, %v2858
    %v3101 = vadd.f32 %v2483, %v2863
    %v3102 = vadd.f32 %v2484, %v2866
    %v3103 = vadd.f32 %v2485, %v2871
    %v3104 = vadd.f32 %v2486, %v2874
    %v3105 = vadd.f32 %v2487, %v2879
    %v3106 = vadd.f32 %v2488, %v2882
    %v3107 = vadd.f32 %v2489, %v2887
    %v3108 = vadd.f32 %v2490, %v2890
    %v3109 = vadd.f32 %v2491, %v2895
    %v3110 = vadd.f32 %v2492, %v2898
    %v3111 = vadd.f32 %v2493, %v2903
    %v3112 = vadd.f32 %v2494, %v2906
    %v3113 = vadd.f32 %v2495, %v2911
    %v3114 = vadd.f32 %v2496, %v2914
    %v3115 = vadd.f32 %v2497, %v2919
    %v3116 = vadd.f32 %v2498, %v2922
    %v3117 = vadd.f32 %v2499, %v2927
    %v3118 = vadd.f32 %v2500, %v2930
    %v3119 = vadd.f32 %v2501, %v2935
    %v3120 = vadd.f32 %v2502, %v2938
    %v3121 = vadd.f32 %v2503, %v2943
    %v3122 = vadd.f32 %v2504, %v2946
    %v3123 = vadd.f32 %v2505, %v2951
    %v3124 = vadd.f32 %v2506, %v2954
    %v3125 = vadd.f32 %v2507, %v2959
    %v3126 = vadd.f32 %v2508, %v2962
    %v3127 = vadd.f32 %v2509, %v2967
    %v3128 = vadd.f32 %v2510, %v2970
    %v3129 = vadd.f32 %v2511, %v2975
    %v3130 = vadd.f32 %v2512, %v2978
    %v3131 = vadd.f32 %v2513, %v2983
    %v3132 = vadd.f32 %v2514, %v2986
    %v3133 = vadd.f32 %v2515, %v2991
    %v3134 = vadd.f32 %v2516, %v2994
    %v3135 = vadd.f32 %v2517, %v2999
    %v3136 = vadd.f32 %v2518, %v3002
    %v3137 = vadd.f32 %v2519, %v3007
    %v3138 = vadd.f32 %v2520, %v3010
    %v3139 = vadd.f32 %v2521, %v3015
    %v3140 = vadd.f32 %v2522, %v3018
    %v3141 = vadd.f32 %v2523, %v3023
    %v3142 = vadd.f32 %v2524, %v3026
    %v3143 = vadd.f32 %v2525, %v3031
    %v3144 = vadd.f32 %v2526, %v3034
    %v3145 = vadd.f32 %v2527, %v3039
    %v3146 = vadd.f32 %v2528, %v3042
    %v3147 = vadd.f32 %v2529, %v3047
    %v3148 = vadd.f32 %v2530, %v3050
    %v3149 = vadd.f32 %v2531, %v3055
    %v3150 = vadd.f32 %v2532, %v3058
    %v3151 = vadd.f32 %v2533, %v3063
    %v3152 = vadd.f32 %v2534, %v3066
    %v3153 = vadd.f32 %v2535, %v3071
    %v3154 = vadd.f32 %v2536, %v3074
    %v3155 = vadd.f32 %v2537, %v3079
    %v3156 = vadd.f32 %v2538, %v3082
    %v3157 = vld [vmem:[%s0 + $0x14] sm:$0xff]
    %v3158 = vld [vmem:[%s0 + $0x1c] sm:$0xff]
    %v3159 = vld [vmem:[%s0 + $0x24] sm:$0xff]
    %v3160 = vld [vmem:[%s0 + $0x2c] sm:$0xff]
    %v3161 = vld [vmem:[%s0 + $0x34] sm:$0xff]
    %v3162 = vld [vmem:[%s0 + $0x3c] sm:$0xff]
    %v3163 = vld [vmem:[%s0 + $0x44] sm:$0xff]
    %v3164 = vld [vmem:[%s0 + $0x4c] sm:$0xff]
    %v3165 = vld [vmem:[%s0 + $0x54] sm:$0xff]
    %v3166 = vld [vmem:[%s0 + $0x5c] sm:$0xff]
    %v3167 = vld [vmem:[%s0 + $0x64] sm:$0xff]
    %v3168 = vld [vmem:[%s0 + $0x6c] sm:$0xff]
    %v3169 = vld [vmem:[%s0 + $0x74] sm:$0xff]
    %v3170 = vld [vmem:[%s0 + $0x7c] sm:$0xff]
    %v3171 = vld [vmem:[%s0 + $0x84] sm:$0xff]
    %v3172 = vld [vmem:[%s0 + $0x8c] sm:$0xff]
    %v3173 = vld [vmem:[%s0 + $0x94] sm:$0xff]
    %v3174 = vld [vmem:[%s0 + $0x9c] sm:$0xff]
    %v3175 = vld [vmem:[%s0 + $0xa4] sm:$0xff]
    %v3176 = vld [vmem:[%s0 + $0xac] sm:$0xff]
    %v3177 = vld [vmem:[%s0 + $0xb4] sm:$0xff]
    %v3178 = vld [vmem:[%s0 + $0xbc] sm:$0xff]
    %v3179 = vld [vmem:[%s0 + $0xc4] sm:$0xff]
    %v3180 = vld [vmem:[%s0 + $0xcc] sm:$0xff]
    %v3181 = vld [vmem:[%s0 + $0xd4] sm:$0xff]
    %v3182 = vld [vmem:[%s0 + $0xdc] sm:$0xff]
    %v3183 = vld [vmem:[%s0 + $0xe4] sm:$0xff]
    %v3184 = vld [vmem:[%s0 + $0xec] sm:$0xff]
    %v3185 = vld [vmem:[%s0 + $0xf4] sm:$0xff]
    %v3186 = vld [vmem:[%s0 + $0xfc] sm:$0xff]
    %v3187 = vld [vmem:[%s0 + $0x104] sm:$0xff]
    %v3188 = vld [vmem:[%s0 + $0x10c] sm:$0xff]
    %v3189 = vld [vmem:[%s0 + $0x114] sm:$0xff]
    %v3190 = vld [vmem:[%s0 + $0x11c] sm:$0xff]
    %v3191 = vld [vmem:[%s0 + $0x124] sm:$0xff]
    %v3192 = vld [vmem:[%s0 + $0x12c] sm:$0xff]
    %v3193 = vld [vmem:[%s0 + $0x15c] sm:$0xff]
    %v3194 = vld [vmem:[%s0 + $0x164] sm:$0xff]
    %v3195 = vld [vmem:[%s0 + $0x16c] sm:$0xff]
    %v3196 = vld [vmem:[%s0 + $0x174] sm:$0xff]
    %v3197 = vld [vmem:[%s0 + $0x17c] sm:$0xff]
    %v3198 = vld [vmem:[%s0 + $0x184] sm:$0xff]
    %v3199 = vld [vmem:[%s0 + $0x18c] sm:$0xff]
    %v3200 = vld [vmem:[%s0 + $0x194] sm:$0xff]
    %v3201 = vld [vmem:[%s0 + $0x19c] sm:$0xff]
    %v3202 = vld [vmem:[%s0 + $0x1a4] sm:$0xff]
    %v3203 = vld [vmem:[%s0 + $0x1ac] sm:$0xff]
    %v3204 = vld [vmem:[%s0 + $0x1b4] sm:$0xff]
    %v3205 = vld [vmem:[%s0 + $0x1bc] sm:$0xff]
    %v3206 = vld [vmem:[%s0 + $0x1c4] sm:$0xff]
    %v3207 = vld [vmem:[%s0 + $0x1cc] sm:$0xff]
    %v3208 = vld [vmem:[%s0 + $0x1d4] sm:$0xff]
    %v3209 = vld [vmem:[%s0 + $0x1dc] sm:$0xff]
    %v3210 = vld [vmem:[%s0 + $0x1e4] sm:$0xff]
    %v3211 = vld [vmem:[%s0 + $0x1ec] sm:$0xff]
    %v3212 = vld [vmem:[%s0 + $0x1f4] sm:$0xff]
    %v3213 = vld [vmem:[%s0 + $0x1fc] sm:$0xff]
    %v3214 = vld [vmem:[%s0 + $0x204] sm:$0xff]
    %v3215 = vld [vmem:[%s0 + $0x20c] sm:$0xff]
    %v3216 = vld [vmem:[%s0 + $0x214] sm:$0xff]
    %v3217 = vld [vmem:[%s0 + $0x21c] sm:$0xff]
    %v3218 = vld [vmem:[%s0 + $0x224] sm:$0xff]
    %v3219 = vld [vmem:[%s0 + $0x22c] sm:$0xff]
    %v3220 = vld [vmem:[%s0 + $0x234] sm:$0xff]
    %v3221 = vld [vmem:[%s0 + $0x23c] sm:$0xff]
    %v3222 = vld [vmem:[%s0 + $0x244] sm:$0xff]
    %v3223 = vld [vmem:[%s0 + $0x24c] sm:$0xff]
    %v3224 = vld [vmem:[%s0 + $0x254] sm:$0xff]
    %v3225 = vld [vmem:[%s0 + $0x25c] sm:$0xff]
    %v3226 = vld [vmem:[%s0 + $0x264] sm:$0xff]
    %v3227 = vld [vmem:[%s0 + $0x26c] sm:$0xff]
    %v3228 = vld [vmem:[%s0 + $0x274] sm:$0xff]
    %v3229 = vpack.c.bf16 %v3158, %v3157
    %v3230 = vpack.c.bf16 %v3160, %v3159
    %v3231 = vpack.c.bf16 %v3162, %v3161
    %v3232 = vpack.c.bf16 %v3164, %v3163
    %v3233 = vpack.c.bf16 %v3166, %v3165
    %v3234 = vpack.c.bf16 %v3168, %v3167
    %v3235 = vpack.c.bf16 %v3170, %v3169
    %v3236 = vpack.c.bf16 %v3172, %v3171
    %v3237 = vpack.c.bf16 %v3174, %v3173
    %v3238 = vpack.c.bf16 %v3176, %v3175
    %v3239 = vpack.c.bf16 %v3178, %v3177
    %v3240 = vpack.c.bf16 %v3180, %v3179
    %v3241 = vpack.c.bf16 %v3182, %v3181
    %v3242 = vpack.c.bf16 %v3184, %v3183
    %v3243 = vpack.c.bf16 %v3186, %v3185
    %v3244 = vpack.c.bf16 %v3188, %v3187
    %v3245 = vpack.c.bf16 %v3190, %v3189
    %v3246 = vpack.c.bf16 %v3192, %v3191
    %v3247 = vpack.c.bf16 %v3194, %v3193
    %v3248 = vpack.c.bf16 %v3196, %v3195
    %v3249 = vpack.c.bf16 %v3198, %v3197
    %v3250 = vpack.c.bf16 %v3200, %v3199
    %v3251 = vpack.c.bf16 %v3202, %v3201
    %v3252 = vpack.c.bf16 %v3204, %v3203
    %v3253 = vpack.c.bf16 %v3206, %v3205
    %v3254 = vpack.c.bf16 %v3208, %v3207
    %v3255 = vpack.c.bf16 %v3210, %v3209
    %v3256 = vpack.c.bf16 %v3212, %v3211
    %v3257 = vpack.c.bf16 %v3214, %v3213
    %v3258 = vpack.c.bf16 %v3216, %v3215
    %v3259 = vpack.c.bf16 %v3218, %v3217
    %v3260 = vpack.c.bf16 %v3220, %v3219
    %v3261 = vpack.c.bf16 %v3222, %v3221
    %v3262 = vpack.c.bf16 %v3224, %v3223
    %v3263 = vpack.c.bf16 %v3226, %v3225
    %v3264 = vpack.c.bf16 %v3228, %v3227
    %s3265 = scalar_lea.vmem %s1, 40
    %v3266 = vld [vmem:[%s3265] sm:$0xf]
    %v3267 = vld [vmem:[%s3265 + $0x4] sm:$0xf]
    %v3270 = vunpack.c.l.b16 %v3266
    %v3271 = vunpack.c.l.b16 %v3267
    %v3272 = vpack.c.b16 %v3271, %v3270
    %v3275 = vsel %vm16, %v3229, 0
    %v3278 = vsel %vm16, %v3230, 0
    %v3281 = vsel %vm16, %v3231, 0
    %v3284 = vsel %vm16, %v3232, 0
    %v3287 = vsel %vm16, %v3233, 0
    %v3290 = vsel %vm16, %v3234, 0
    %v3293 = vsel %vm16, %v3235, 0
    %v3296 = vsel %vm16, %v3236, 0
    %v3299 = vsel %vm16, %v3237, 0
    %v3302 = vsel %vm16, %v3238, 0
    %v3305 = vsel %vm16, %v3239, 0
    %v3308 = vsel %vm16, %v3240, 0
    %v3311 = vsel %vm16, %v3241, 0
    %v3314 = vsel %vm16, %v3242, 0
    %v3317 = vsel %vm16, %v3243, 0
    %v3320 = vsel %vm16, %v3244, 0
    %v3323 = vsel %vm16, %v3245, 0
    %v3326 = vsel %vm16, %v3246, 0
    %v3329 = vsel %vm16, %v3247, 0
    %v3332 = vsel %vm16, %v3248, 0
    %v3335 = vsel %vm16, %v3249, 0
    %v3338 = vsel %vm16, %v3250, 0
    %v3341 = vsel %vm16, %v3251, 0
    %v3344 = vsel %vm16, %v3252, 0
    %v3347 = vsel %vm16, %v3253, 0
    %v3350 = vsel %vm16, %v3254, 0
    %v3353 = vsel %vm16, %v3255, 0
    %v3356 = vsel %vm16, %v3256, 0
    %v3359 = vsel %vm16, %v3257, 0
    %v3362 = vsel %vm16, %v3258, 0
    %v3365 = vsel %vm16, %v3259, 0
    %v3368 = vsel %vm16, %v3260, 0
    %v3371 = vsel %vm16, %v3261, 0
    %v3374 = vsel %vm16, %v3262, 0
    %v3377 = vsel %vm16, %v3263, 0
    %v3380 = vsel %vm16, %v3264, 0
    %3382 = vmatprep.subr.bf16.mxu0 0
    %3383 = vmatpush1.bf16.msra.mxu0 0
    %3384 = vmatprep.subr.bf16.mxu0 0
    %3385 = vmatpush1.bf16.msra.mxu0 0
    %3386 = vmatprep.subr.bf16.mxu0 0
    %3387 = vmatpush1.bf16.msra.mxu0 0
    %3388 = vmatprep.subr.bf16.mxu0 0
    %3389 = vmatpush1.bf16.msra.mxu0 0
    %3390 = vmatprep.subr.bf16.mxu0 0
    %3391 = vmatpush1.bf16.msra.mxu0 0
    %3392 = vmatprep.subr.bf16.mxu0 0
    %3393 = vmatpush1.bf16.msra.mxu0 0
    %3394 = vmatprep.subr.bf16.mxu0 0
    %3395 = vmatpush1.bf16.msra.mxu0 0
    %3396 = vmatprep.subr.bf16.mxu0 0
    %3397 = vmatpush1.bf16.msra.mxu0 %v3272
    %3398 = vmatprep.subr.bf16.mxu0 0
    %3399 = vmatpush2.bf16.msra.mxu0 0
    %3400 = vmatprep.subr.bf16.mxu0 0
    %3401 = vmatpush2.bf16.msra.mxu0 0
    %3402 = vmatprep.subr.bf16.mxu0 0
    %3403 = vmatpush2.bf16.msra.mxu0 0
    %3404 = vmatprep.subr.bf16.mxu0 0
    %3405 = vmatpush2.bf16.msra.mxu0 0
    %3406 = vmatprep.subr.bf16.mxu0 0
    %3407 = vmatpush2.bf16.msra.mxu0 0
    %3408 = vmatprep.subr.bf16.mxu0 0
    %3409 = vmatpush2.bf16.msra.mxu0 0
    %3410 = vmatprep.subr.bf16.mxu0 0
    %3411 = vmatpush2.bf16.msra.mxu0 0
    %3412 = vmatprep.subr.bf16.mxu0 0
    %3413 = vmatpush2.bf16.msra.mxu0 0
    %3414 = vmatprep.mubr.bf16.mxu0 0
    %3415 = vmatmul.mubr.bf16.gmra.mxu0 %v3275
    %v3416 = vpop.f32.mrf.mxu0
    %v3417 = vadd.f32 0.0, %v3416
    %v3418 = vpop.f32.mrf.mxu0
    %v3419 = vpop.f32.mrf.mxu0
    %v3420 = vadd.f32 0.0, %v3419
    %v3421 = vpop.f32.mrf.mxu0
    %3422 = vmatprep.mubr.bf16.mxu0 0
    %3423 = vmatmul.mubr.bf16.gmra.mxu0 %v3278
    %v3424 = vpop.f32.mrf.mxu0
    %v3425 = vadd.f32 0.0, %v3424
    %v3426 = vpop.f32.mrf.mxu0
    %v3427 = vpop.f32.mrf.mxu0
    %v3428 = vadd.f32 0.0, %v3427
    %v3429 = vpop.f32.mrf.mxu0
    %3430 = vmatprep.mubr.bf16.mxu0 0
    %3431 = vmatmul.mubr.bf16.gmra.mxu0 %v3281
    %v3432 = vpop.f32.mrf.mxu0
    %v3433 = vadd.f32 0.0, %v3432
    %v3434 = vpop.f32.mrf.mxu0
    %v3435 = vpop.f32.mrf.mxu0
    %v3436 = vadd.f32 0.0, %v3435
    %v3437 = vpop.f32.mrf.mxu0
    %3438 = vmatprep.mubr.bf16.mxu0 0
    %3439 = vmatmul.mubr.bf16.gmra.mxu0 %v3284
    %v3440 = vpop.f32.mrf.mxu0
    %v3441 = vadd.f32 0.0, %v3440
    %v3442 = vpop.f32.mrf.mxu0
    %v3443 = vpop.f32.mrf.mxu0
    %v3444 = vadd.f32 0.0, %v3443
    %v3445 = vpop.f32.mrf.mxu0
    %3446 = vmatprep.mubr.bf16.mxu0 0
    %3447 = vmatmul.mubr.bf16.gmra.mxu0 %v3287
    %v3448 = vpop.f32.mrf.mxu0
    %v3449 = vadd.f32 0.0, %v3448
    %v3450 = vpop.f32.mrf.mxu0
    %v3451 = vpop.f32.mrf.mxu0
    %v3452 = vadd.f32 0.0, %v3451
    %v3453 = vpop.f32.mrf.mxu0
    %3454 = vmatprep.mubr.bf16.mxu0 0
    %3455 = vmatmul.mubr.bf16.gmra.mxu0 %v3290
    %v3456 = vpop.f32.mrf.mxu0
    %v3457 = vadd.f32 0.0, %v3456
    %v3458 = vpop.f32.mrf.mxu0
    %v3459 = vpop.f32.mrf.mxu0
    %v3460 = vadd.f32 0.0, %v3459
    %v3461 = vpop.f32.mrf.mxu0
    %3462 = vmatprep.mubr.bf16.mxu0 0
    %3463 = vmatmul.mubr.bf16.gmra.mxu0 %v3293
    %v3464 = vpop.f32.mrf.mxu0
    %v3465 = vadd.f32 0.0, %v3464
    %v3466 = vpop.f32.mrf.mxu0
    %v3467 = vpop.f32.mrf.mxu0
    %v3468 = vadd.f32 0.0, %v3467
    %v3469 = vpop.f32.mrf.mxu0
    %3470 = vmatprep.mubr.bf16.mxu0 0
    %3471 = vmatmul.mubr.bf16.gmra.mxu0 %v3296
    %v3472 = vpop.f32.mrf.mxu0
    %v3473 = vadd.f32 0.0, %v3472
    %v3474 = vpop.f32.mrf.mxu0
    %v3475 = vpop.f32.mrf.mxu0
    %v3476 = vadd.f32 0.0, %v3475
    %v3477 = vpop.f32.mrf.mxu0
    %3478 = vmatprep.mubr.bf16.mxu0 0
    %3479 = vmatmul.mubr.bf16.gmra.mxu0 %v3299
    %v3480 = vpop.f32.mrf.mxu0
    %v3481 = vadd.f32 0.0, %v3480
    %v3482 = vpop.f32.mrf.mxu0
    %v3483 = vpop.f32.mrf.mxu0
    %v3484 = vadd.f32 0.0, %v3483
    %v3485 = vpop.f32.mrf.mxu0
    %3486 = vmatprep.mubr.bf16.mxu0 0
    %3487 = vmatmul.mubr.bf16.gmra.mxu0 %v3302
    %v3488 = vpop.f32.mrf.mxu0
    %v3489 = vadd.f32 0.0, %v3488
    %v3490 = vpop.f32.mrf.mxu0
    %v3491 = vpop.f32.mrf.mxu0
    %v3492 = vadd.f32 0.0, %v3491
    %v3493 = vpop.f32.mrf.mxu0
    %3494 = vmatprep.mubr.bf16.mxu0 0
    %3495 = vmatmul.mubr.bf16.gmra.mxu0 %v3305
    %v3496 = vpop.f32.mrf.mxu0
    %v3497 = vadd.f32 0.0, %v3496
    %v3498 = vpop.f32.mrf.mxu0
    %v3499 = vpop.f32.mrf.mxu0
    %v3500 = vadd.f32 0.0, %v3499
    %v3501 = vpop.f32.mrf.mxu0
    %3502 = vmatprep.mubr.bf16.mxu0 0
    %3503 = vmatmul.mubr.bf16.gmra.mxu0 %v3308
    %v3504 = vpop.f32.mrf.mxu0
    %v3505 = vadd.f32 0.0, %v3504
    %v3506 = vpop.f32.mrf.mxu0
    %v3507 = vpop.f32.mrf.mxu0
    %v3508 = vadd.f32 0.0, %v3507
    %v3509 = vpop.f32.mrf.mxu0
    %3510 = vmatprep.mubr.bf16.mxu0 0
    %3511 = vmatmul.mubr.bf16.gmra.mxu0 %v3311
    %v3512 = vpop.f32.mrf.mxu0
    %v3513 = vadd.f32 0.0, %v3512
    %v3514 = vpop.f32.mrf.mxu0
    %v3515 = vpop.f32.mrf.mxu0
    %v3516 = vadd.f32 0.0, %v3515
    %v3517 = vpop.f32.mrf.mxu0
    %3518 = vmatprep.mubr.bf16.mxu0 0
    %3519 = vmatmul.mubr.bf16.gmra.mxu0 %v3314
    %v3520 = vpop.f32.mrf.mxu0
    %v3521 = vadd.f32 0.0, %v3520
    %v3522 = vpop.f32.mrf.mxu0
    %v3523 = vpop.f32.mrf.mxu0
    %v3524 = vadd.f32 0.0, %v3523
    %v3525 = vpop.f32.mrf.mxu0
    %3526 = vmatprep.mubr.bf16.mxu0 0
    %3527 = vmatmul.mubr.bf16.gmra.mxu0 %v3317
    %v3528 = vpop.f32.mrf.mxu0
    %v3529 = vadd.f32 0.0, %v3528
    %v3530 = vpop.f32.mrf.mxu0
    %v3531 = vpop.f32.mrf.mxu0
    %v3532 = vadd.f32 0.0, %v3531
    %v3533 = vpop.f32.mrf.mxu0
    %3534 = vmatprep.mubr.bf16.mxu0 0
    %3535 = vmatmul.mubr.bf16.gmra.mxu0 %v3320
    %v3536 = vpop.f32.mrf.mxu0
    %v3537 = vadd.f32 0.0, %v3536
    %v3538 = vpop.f32.mrf.mxu0
    %v3539 = vpop.f32.mrf.mxu0
    %v3540 = vadd.f32 0.0, %v3539
    %v3541 = vpop.f32.mrf.mxu0
    %3542 = vmatprep.mubr.bf16.mxu0 0
    %3543 = vmatmul.mubr.bf16.gmra.mxu0 %v3323
    %v3544 = vpop.f32.mrf.mxu0
    %v3545 = vadd.f32 0.0, %v3544
    %v3546 = vpop.f32.mrf.mxu0
    %v3547 = vpop.f32.mrf.mxu0
    %v3548 = vadd.f32 0.0, %v3547
    %v3549 = vpop.f32.mrf.mxu0
    %3550 = vmatprep.mubr.bf16.mxu0 0
    %3551 = vmatmul.mubr.bf16.gmra.mxu0 %v3326
    %v3552 = vpop.f32.mrf.mxu0
    %v3553 = vadd.f32 0.0, %v3552
    %v3554 = vpop.f32.mrf.mxu0
    %v3555 = vpop.f32.mrf.mxu0
    %v3556 = vadd.f32 0.0, %v3555
    %v3557 = vpop.f32.mrf.mxu0
    %3558 = vmatprep.mubr.bf16.mxu0 0
    %3559 = vmatmul.mubr.bf16.gmra.mxu0 %v3329
    %v3560 = vpop.f32.mrf.mxu0
    %v3561 = vadd.f32 0.0, %v3560
    %v3562 = vpop.f32.mrf.mxu0
    %v3563 = vpop.f32.mrf.mxu0
    %v3564 = vadd.f32 0.0, %v3563
    %v3565 = vpop.f32.mrf.mxu0
    %3566 = vmatprep.mubr.bf16.mxu0 0
    %3567 = vmatmul.mubr.bf16.gmra.mxu0 %v3332
    %v3568 = vpop.f32.mrf.mxu0
    %v3569 = vadd.f32 0.0, %v3568
    %v3570 = vpop.f32.mrf.mxu0
    %v3571 = vpop.f32.mrf.mxu0
    %v3572 = vadd.f32 0.0, %v3571
    %v3573 = vpop.f32.mrf.mxu0
    %3574 = vmatprep.mubr.bf16.mxu0 0
    %3575 = vmatmul.mubr.bf16.gmra.mxu0 %v3335
    %v3576 = vpop.f32.mrf.mxu0
    %v3577 = vadd.f32 0.0, %v3576
    %v3578 = vpop.f32.mrf.mxu0
    %v3579 = vpop.f32.mrf.mxu0
    %v3580 = vadd.f32 0.0, %v3579
    %v3581 = vpop.f32.mrf.mxu0
    %3582 = vmatprep.mubr.bf16.mxu0 0
    %3583 = vmatmul.mubr.bf16.gmra.mxu0 %v3338
    %v3584 = vpop.f32.mrf.mxu0
    %v3585 = vadd.f32 0.0, %v3584
    %v3586 = vpop.f32.mrf.mxu0
    %v3587 = vpop.f32.mrf.mxu0
    %v3588 = vadd.f32 0.0, %v3587
    %v3589 = vpop.f32.mrf.mxu0
    %3590 = vmatprep.mubr.bf16.mxu0 0
    %3591 = vmatmul.mubr.bf16.gmra.mxu0 %v3341
    %v3592 = vpop.f32.mrf.mxu0
    %v3593 = vadd.f32 0.0, %v3592
    %v3594 = vpop.f32.mrf.mxu0
    %v3595 = vpop.f32.mrf.mxu0
    %v3596 = vadd.f32 0.0, %v3595
    %v3597 = vpop.f32.mrf.mxu0
    %3598 = vmatprep.mubr.bf16.mxu0 0
    %3599 = vmatmul.mubr.bf16.gmra.mxu0 %v3344
    %v3600 = vpop.f32.mrf.mxu0
    %v3601 = vadd.f32 0.0, %v3600
    %v3602 = vpop.f32.mrf.mxu0
    %v3603 = vpop.f32.mrf.mxu0
    %v3604 = vadd.f32 0.0, %v3603
    %v3605 = vpop.f32.mrf.mxu0
    %3606 = vmatprep.mubr.bf16.mxu0 0
    %3607 = vmatmul.mubr.bf16.gmra.mxu0 %v3347
    %v3608 = vpop.f32.mrf.mxu0
    %v3609 = vadd.f32 0.0, %v3608
    %v3610 = vpop.f32.mrf.mxu0
    %v3611 = vpop.f32.mrf.mxu0
    %v3612 = vadd.f32 0.0, %v3611
    %v3613 = vpop.f32.mrf.mxu0
    %3614 = vmatprep.mubr.bf16.mxu0 0
    %3615 = vmatmul.mubr.bf16.gmra.mxu0 %v3350
    %v3616 = vpop.f32.mrf.mxu0
    %v3617 = vadd.f32 0.0, %v3616
    %v3618 = vpop.f32.mrf.mxu0
    %v3619 = vpop.f32.mrf.mxu0
    %v3620 = vadd.f32 0.0, %v3619
    %v3621 = vpop.f32.mrf.mxu0
    %3622 = vmatprep.mubr.bf16.mxu0 0
    %3623 = vmatmul.mubr.bf16.gmra.mxu0 %v3353
    %v3624 = vpop.f32.mrf.mxu0
    %v3625 = vadd.f32 0.0, %v3624
    %v3626 = vpop.f32.mrf.mxu0
    %v3627 = vpop.f32.mrf.mxu0
    %v3628 = vadd.f32 0.0, %v3627
    %v3629 = vpop.f32.mrf.mxu0
    %3630 = vmatprep.mubr.bf16.mxu0 0
    %3631 = vmatmul.mubr.bf16.gmra.mxu0 %v3356
    %v3632 = vpop.f32.mrf.mxu0
    %v3633 = vadd.f32 0.0, %v3632
    %v3634 = vpop.f32.mrf.mxu0
    %v3635 = vpop.f32.mrf.mxu0
    %v3636 = vadd.f32 0.0, %v3635
    %v3637 = vpop.f32.mrf.mxu0
    %3638 = vmatprep.mubr.bf16.mxu0 0
    %3639 = vmatmul.mubr.bf16.gmra.mxu0 %v3359
    %v3640 = vpop.f32.mrf.mxu0
    %v3641 = vadd.f32 0.0, %v3640
    %v3642 = vpop.f32.mrf.mxu0
    %v3643 = vpop.f32.mrf.mxu0
    %v3644 = vadd.f32 0.0, %v3643
    %v3645 = vpop.f32.mrf.mxu0
    %3646 = vmatprep.mubr.bf16.mxu0 0
    %3647 = vmatmul.mubr.bf16.gmra.mxu0 %v3362
    %v3648 = vpop.f32.mrf.mxu0
    %v3649 = vadd.f32 0.0, %v3648
    %v3650 = vpop.f32.mrf.mxu0
    %v3651 = vpop.f32.mrf.mxu0
    %v3652 = vadd.f32 0.0, %v3651
    %v3653 = vpop.f32.mrf.mxu0
    %3654 = vmatprep.mubr.bf16.mxu0 0
    %3655 = vmatmul.mubr.bf16.gmra.mxu0 %v3365
    %v3656 = vpop.f32.mrf.mxu0
    %v3657 = vadd.f32 0.0, %v3656
    %v3658 = vpop.f32.mrf.mxu0
    %v3659 = vpop.f32.mrf.mxu0
    %v3660 = vadd.f32 0.0, %v3659
    %v3661 = vpop.f32.mrf.mxu0
    %3662 = vmatprep.mubr.bf16.mxu0 0
    %3663 = vmatmul.mubr.bf16.gmra.mxu0 %v3368
    %v3664 = vpop.f32.mrf.mxu0
    %v3665 = vadd.f32 0.0, %v3664
    %v3666 = vpop.f32.mrf.mxu0
    %v3667 = vpop.f32.mrf.mxu0
    %v3668 = vadd.f32 0.0, %v3667
    %v3669 = vpop.f32.mrf.mxu0
    %3670 = vmatprep.mubr.bf16.mxu0 0
    %3671 = vmatmul.mubr.bf16.gmra.mxu0 %v3371
    %v3672 = vpop.f32.mrf.mxu0
    %v3673 = vadd.f32 0.0, %v3672
    %v3674 = vpop.f32.mrf.mxu0
    %v3675 = vpop.f32.mrf.mxu0
    %v3676 = vadd.f32 0.0, %v3675
    %v3677 = vpop.f32.mrf.mxu0
    %3678 = vmatprep.mubr.bf16.mxu0 0
    %3679 = vmatmul.mubr.bf16.gmra.mxu0 %v3374
    %v3680 = vpop.f32.mrf.mxu0
    %v3681 = vadd.f32 0.0, %v3680
    %v3682 = vpop.f32.mrf.mxu0
    %v3683 = vpop.f32.mrf.mxu0
    %v3684 = vadd.f32 0.0, %v3683
    %v3685 = vpop.f32.mrf.mxu0
    %3686 = vmatprep.mubr.bf16.mxu0 0
    %3687 = vmatmul.mubr.bf16.gmra.mxu0 %v3377
    %v3688 = vpop.f32.mrf.mxu0
    %v3689 = vadd.f32 0.0, %v3688
    %v3690 = vpop.f32.mrf.mxu0
    %v3691 = vpop.f32.mrf.mxu0
    %v3692 = vadd.f32 0.0, %v3691
    %v3693 = vpop.f32.mrf.mxu0
    %3694 = vmatprep.mubr.bf16.mxu0 0
    %3695 = vmatmul.mubr.bf16.gmra.mxu0 %v3380
    %v3696 = vpop.f32.mrf.mxu0
    %v3697 = vadd.f32 0.0, %v3696
    %v3698 = vpop.f32.mrf.mxu0
    %v3699 = vpop.f32.mrf.mxu0
    %v3700 = vadd.f32 0.0, %v3699
    %v3701 = vpop.f32.mrf.mxu0
    %3702 = vdwg.mxu0
    %v3703 = vadd.f32 %v3085, %v3417
    %v3704 = vadd.f32 %v3086, %v3420
    %v3705 = vadd.f32 %v3087, %v3425
    %v3706 = vadd.f32 %v3088, %v3428
    %v3707 = vadd.f32 %v3089, %v3433
    %v3708 = vadd.f32 %v3090, %v3436
    %v3709 = vadd.f32 %v3091, %v3441
    %v3710 = vadd.f32 %v3092, %v3444
    %v3711 = vadd.f32 %v3093, %v3449
    %v3712 = vadd.f32 %v3094, %v3452
    %v3713 = vadd.f32 %v3095, %v3457
    %v3714 = vadd.f32 %v3096, %v3460
    %v3715 = vadd.f32 %v3097, %v3465
    %v3716 = vadd.f32 %v3098, %v3468
    %v3717 = vadd.f32 %v3099, %v3473
    %v3718 = vadd.f32 %v3100, %v3476
    %v3719 = vadd.f32 %v3101, %v3481
    %v3720 = vadd.f32 %v3102, %v3484
    %v3721 = vadd.f32 %v3103, %v3489
    %v3722 = vadd.f32 %v3104, %v3492
    %v3723 = vadd.f32 %v3105, %v3497
    %v3724 = vadd.f32 %v3106, %v3500
    %v3725 = vadd.f32 %v3107, %v3505
    %v3726 = vadd.f32 %v3108, %v3508
    %v3727 = vadd.f32 %v3109, %v3513
    %v3728 = vadd.f32 %v3110, %v3516
    %v3729 = vadd.f32 %v3111, %v3521
    %v3730 = vadd.f32 %v3112, %v3524
    %v3731 = vadd.f32 %v3113, %v3529
    %v3732 = vadd.f32 %v3114, %v3532
    %v3733 = vadd.f32 %v3115, %v3537
    %v3734 = vadd.f32 %v3116, %v3540
    %v3735 = vadd.f32 %v3117, %v3545
    %v3736 = vadd.f32 %v3118, %v3548
    %v3737 = vadd.f32 %v3119, %v3553
    %v3738 = vadd.f32 %v3120, %v3556
    %v3739 = vadd.f32 %v3121, %v3561
    %v3740 = vadd.f32 %v3122, %v3564
    %v3741 = vadd.f32 %v3123, %v3569
    %v3742 = vadd.f32 %v3124, %v3572
    %v3743 = vadd.f32 %v3125, %v3577
    %v3744 = vadd.f32 %v3126, %v3580
    %v3745 = vadd.f32 %v3127, %v3585
    %v3746 = vadd.f32 %v3128, %v3588
    %v3747 = vadd.f32 %v3129, %v3593
    %v3748 = vadd.f32 %v3130, %v3596
    %v3749 = vadd.f32 %v3131, %v3601
    %v3750 = vadd.f32 %v3132, %v3604
    %v3751 = vadd.f32 %v3133, %v3609
    %v3752 = vadd.f32 %v3134, %v3612
    %v3753 = vadd.f32 %v3135, %v3617
    %v3754 = vadd.f32 %v3136, %v3620
    %v3755 = vadd.f32 %v3137, %v3625
    %v3756 = vadd.f32 %v3138, %v3628
    %v3757 = vadd.f32 %v3139, %v3633
    %v3758 = vadd.f32 %v3140, %v3636
    %v3759 = vadd.f32 %v3141, %v3641
    %v3760 = vadd.f32 %v3142, %v3644
    %v3761 = vadd.f32 %v3143, %v3649
    %v3762 = vadd.f32 %v3144, %v3652
    %v3763 = vadd.f32 %v3145, %v3657
    %v3764 = vadd.f32 %v3146, %v3660
    %v3765 = vadd.f32 %v3147, %v3665
    %v3766 = vadd.f32 %v3148, %v3668
    %v3767 = vadd.f32 %v3149, %v3673
    %v3768 = vadd.f32 %v3150, %v3676
    %v3769 = vadd.f32 %v3151, %v3681
    %v3770 = vadd.f32 %v3152, %v3684
    %v3771 = vadd.f32 %v3153, %v3689
    %v3772 = vadd.f32 %v3154, %v3692
    %v3773 = vadd.f32 %v3155, %v3697
    %v3774 = vadd.f32 %v3156, %v3700
    %v3775 = vld [vmem:[%s0 + $0x24] sm:$0xff]
    %v3776 = vld [vmem:[%s0 + $0x2c] sm:$0xff]
    %v3777 = vld [vmem:[%s0 + $0x34] sm:$0xff]
    %v3778 = vld [vmem:[%s0 + $0x3c] sm:$0xff]
    %v3779 = vld [vmem:[%s0 + $0x44] sm:$0xff]
    %v3780 = vld [vmem:[%s0 + $0x4c] sm:$0xff]
    %v3781 = vld [vmem:[%s0 + $0x54] sm:$0xff]
    %v3782 = vld [vmem:[%s0 + $0x5c] sm:$0xff]
    %v3783 = vld [vmem:[%s0 + $0x64] sm:$0xff]
    %v3784 = vld [vmem:[%s0 + $0x6c] sm:$0xff]
    %v3785 = vld [vmem:[%s0 + $0x74] sm:$0xff]
    %v3786 = vld [vmem:[%s0 + $0x7c] sm:$0xff]
    %v3787 = vld [vmem:[%s0 + $0x84] sm:$0xff]
    %v3788 = vld [vmem:[%s0 + $0x8c] sm:$0xff]
    %v3789 = vld [vmem:[%s0 + $0x94] sm:$0xff]
    %v3790 = vld [vmem:[%s0 + $0x9c] sm:$0xff]
    %v3791 = vld [vmem:[%s0 + $0xa4] sm:$0xff]
    %v3792 = vld [vmem:[%s0 + $0xac] sm:$0xff]
    %v3793 = vld [vmem:[%s0 + $0xb4] sm:$0xff]
    %v3794 = vld [vmem:[%s0 + $0xbc] sm:$0xff]
    %v3795 = vld [vmem:[%s0 + $0xc4] sm:$0xff]
    %v3796 = vld [vmem:[%s0 + $0xcc] sm:$0xff]
    %v3797 = vld [vmem:[%s0 + $0xd4] sm:$0xff]
    %v3798 = vld [vmem:[%s0 + $0xdc] sm:$0xff]
    %v3799 = vld [vmem:[%s0 + $0xe4] sm:$0xff]
    %v3800 = vld [vmem:[%s0 + $0xec] sm:$0xff]
    %v3801 = vld [vmem:[%s0 + $0xf4] sm:$0xff]
    %v3802 = vld [vmem:[%s0 + $0xfc] sm:$0xff]
    %v3803 = vld [vmem:[%s0 + $0x104] sm:$0xff]
    %v3804 = vld [vmem:[%s0 + $0x10c] sm:$0xff]
    %v3805 = vld [vmem:[%s0 + $0x114] sm:$0xff]
    %v3806 = vld [vmem:[%s0 + $0x11c] sm:$0xff]
    %v3807 = vld [vmem:[%s0 + $0x124] sm:$0xff]
    %v3808 = vld [vmem:[%s0 + $0x12c] sm:$0xff]
    %v3809 = vld [vmem:[%s0 + $0x134] sm:$0xff]
    %v3810 = vld [vmem:[%s0 + $0x13c] sm:$0xff]
    %v3811 = vld [vmem:[%s0 + $0x16c] sm:$0xff]
    %v3812 = vld [vmem:[%s0 + $0x174] sm:$0xff]
    %v3813 = vld [vmem:[%s0 + $0x17c] sm:$0xff]
    %v3814 = vld [vmem:[%s0 + $0x184] sm:$0xff]
    %v3815 = vld [vmem:[%s0 + $0x18c] sm:$0xff]
    %v3816 = vld [vmem:[%s0 + $0x194] sm:$0xff]
    %v3817 = vld [vmem:[%s0 + $0x19c] sm:$0xff]
    %v3818 = vld [vmem:[%s0 + $0x1a4] sm:$0xff]
    %v3819 = vld [vmem:[%s0 + $0x1ac] sm:$0xff]
    %v3820 = vld [vmem:[%s0 + $0x1b4] sm:$0xff]
    %v3821 = vld [vmem:[%s0 + $0x1bc] sm:$0xff]
    %v3822 = vld [vmem:[%s0 + $0x1c4] sm:$0xff]
    %v3823 = vld [vmem:[%s0 + $0x1cc] sm:$0xff]
    %v3824 = vld [vmem:[%s0 + $0x1d4] sm:$0xff]
    %v3825 = vld [vmem:[%s0 + $0x1dc] sm:$0xff]
    %v3826 = vld [vmem:[%s0 + $0x1e4] sm:$0xff]
    %v3827 = vld [vmem:[%s0 + $0x1ec] sm:$0xff]
    %v3828 = vld [vmem:[%s0 + $0x1f4] sm:$0xff]
    %v3829 = vld [vmem:[%s0 + $0x1fc] sm:$0xff]
    %v3830 = vld [vmem:[%s0 + $0x204] sm:$0xff]
    %v3831 = vld [vmem:[%s0 + $0x20c] sm:$0xff]
    %v3832 = vld [vmem:[%s0 + $0x214] sm:$0xff]
    %v3833 = vld [vmem:[%s0 + $0x21c] sm:$0xff]
    %v3834 = vld [vmem:[%s0 + $0x224] sm:$0xff]
    %v3835 = vld [vmem:[%s0 + $0x22c] sm:$0xff]
    %v3836 = vld [vmem:[%s0 + $0x234] sm:$0xff]
    %v3837 = vld [vmem:[%s0 + $0x23c] sm:$0xff]
    %v3838 = vld [vmem:[%s0 + $0x244] sm:$0xff]
    %v3839 = vld [vmem:[%s0 + $0x24c] sm:$0xff]
    %v3840 = vld [vmem:[%s0 + $0x254] sm:$0xff]
    %v3841 = vld [vmem:[%s0 + $0x25c] sm:$0xff]
    %v3842 = vld [vmem:[%s0 + $0x264] sm:$0xff]
    %v3843 = vld [vmem:[%s0 + $0x26c] sm:$0xff]
    %v3844 = vld [vmem:[%s0 + $0x274] sm:$0xff]
    %v3845 = vld [vmem:[%s0 + $0x27c] sm:$0xff]
    %v3846 = vld [vmem:[%s0 + $0x284] sm:$0xff]
    %v3847 = vpack.c.bf16 %v3776, %v3775
    %v3848 = vpack.c.bf16 %v3778, %v3777
    %v3849 = vpack.c.bf16 %v3780, %v3779
    %v3850 = vpack.c.bf16 %v3782, %v3781
    %v3851 = vpack.c.bf16 %v3784, %v3783
    %v3852 = vpack.c.bf16 %v3786, %v3785
    %v3853 = vpack.c.bf16 %v3788, %v3787
    %v3854 = vpack.c.bf16 %v3790, %v3789
    %v3855 = vpack.c.bf16 %v3792, %v3791
    %v3856 = vpack.c.bf16 %v3794, %v3793
    %v3857 = vpack.c.bf16 %v3796, %v3795
    %v3858 = vpack.c.bf16 %v3798, %v3797
    %v3859 = vpack.c.bf16 %v3800, %v3799
    %v3860 = vpack.c.bf16 %v3802, %v3801
    %v3861 = vpack.c.bf16 %v3804, %v3803
    %v3862 = vpack.c.bf16 %v3806, %v3805
    %v3863 = vpack.c.bf16 %v3808, %v3807
    %v3864 = vpack.c.bf16 %v3810, %v3809
    %v3865 = vpack.c.bf16 %v3812, %v3811
    %v3866 = vpack.c.bf16 %v3814, %v3813
    %v3867 = vpack.c.bf16 %v3816, %v3815
    %v3868 = vpack.c.bf16 %v3818, %v3817
    %v3869 = vpack.c.bf16 %v3820, %v3819
    %v3870 = vpack.c.bf16 %v3822, %v3821
    %v3871 = vpack.c.bf16 %v3824, %v3823
    %v3872 = vpack.c.bf16 %v3826, %v3825
    %v3873 = vpack.c.bf16 %v3828, %v3827
    %v3874 = vpack.c.bf16 %v3830, %v3829
    %v3875 = vpack.c.bf16 %v3832, %v3831
    %v3876 = vpack.c.bf16 %v3834, %v3833
    %v3877 = vpack.c.bf16 %v3836, %v3835
    %v3878 = vpack.c.bf16 %v3838, %v3837
    %v3879 = vpack.c.bf16 %v3840, %v3839
    %v3880 = vpack.c.bf16 %v3842, %v3841
    %v3881 = vpack.c.bf16 %v3844, %v3843
    %v3882 = vpack.c.bf16 %v3846, %v3845
    %s3883 = scalar_lea.vmem %s1, 48
    %v3884 = vld [vmem:[%s3883] sm:$0xf]
    %v3885 = vld [vmem:[%s3883 + $0x4] sm:$0xf]
    %v3888 = vunpack.c.l.b16 %v3884
    %v3889 = vunpack.c.l.b16 %v3885
    %v3890 = vpack.c.b16 %v3889, %v3888
    %v3893 = vsel %vm16, %v3847, 0
    %v3896 = vsel %vm16, %v3848, 0
    %v3899 = vsel %vm16, %v3849, 0
    %v3902 = vsel %vm16, %v3850, 0
    %v3905 = vsel %vm16, %v3851, 0
    %v3908 = vsel %vm16, %v3852, 0
    %v3911 = vsel %vm16, %v3853, 0
    %v3914 = vsel %vm16, %v3854, 0
    %v3917 = vsel %vm16, %v3855, 0
    %v3920 = vsel %vm16, %v3856, 0
    %v3923 = vsel %vm16, %v3857, 0
    %v3926 = vsel %vm16, %v3858, 0
    %v3929 = vsel %vm16, %v3859, 0
    %v3932 = vsel %vm16, %v3860, 0
    %v3935 = vsel %vm16, %v3861, 0
    %v3938 = vsel %vm16, %v3862, 0
    %v3941 = vsel %vm16, %v3863, 0
    %v3944 = vsel %vm16, %v3864, 0
    %v3947 = vsel %vm16, %v3865, 0
    %v3950 = vsel %vm16, %v3866, 0
    %v3953 = vsel %vm16, %v3867, 0
    %v3956 = vsel %vm16, %v3868, 0
    %v3959 = vsel %vm16, %v3869, 0
    %v3962 = vsel %vm16, %v3870, 0
    %v3965 = vsel %vm16, %v3871, 0
    %v3968 = vsel %vm16, %v3872, 0
    %v3971 = vsel %vm16, %v3873, 0
    %v3974 = vsel %vm16, %v3874, 0
    %v3977 = vsel %vm16, %v3875, 0
    %v3980 = vsel %vm16, %v3876, 0
    %v3983 = vsel %vm16, %v3877, 0
    %v3986 = vsel %vm16, %v3878, 0
    %v3989 = vsel %vm16, %v3879, 0
    %v3992 = vsel %vm16, %v3880, 0
    %v3995 = vsel %vm16, %v3881, 0
    %v3998 = vsel %vm16, %v3882, 0
    %4000 = vmatprep.subr.bf16.mxu0 0
    %4001 = vmatpush1.bf16.msra.mxu0 0
    %4002 = vmatprep.subr.bf16.mxu0 0
    %4003 = vmatpush1.bf16.msra.mxu0 0
    %4004 = vmatprep.subr.bf16.mxu0 0
    %4005 = vmatpush1.bf16.msra.mxu0 0
    %4006 = vmatprep.subr.bf16.mxu0 0
    %4007 = vmatpush1.bf16.msra.mxu0 0
    %4008 = vmatprep.subr.bf16.mxu0 0
    %4009 = vmatpush1.bf16.msra.mxu0 0
    %4010 = vmatprep.subr.bf16.mxu0 0
    %4011 = vmatpush1.bf16.msra.mxu0 0
    %4012 = vmatprep.subr.bf16.mxu0 0
    %4013 = vmatpush1.bf16.msra.mxu0 0
    %4014 = vmatprep.subr.bf16.mxu0 0
    %4015 = vmatpush1.bf16.msra.mxu0 %v3890
    %4016 = vmatprep.subr.bf16.mxu0 0
    %4017 = vmatpush2.bf16.msra.mxu0 0
    %4018 = vmatprep.subr.bf16.mxu0 0
    %4019 = vmatpush2.bf16.msra.mxu0 0
    %4020 = vmatprep.subr.bf16.mxu0 0
    %4021 = vmatpush2.bf16.msra.mxu0 0
    %4022 = vmatprep.subr.bf16.mxu0 0
    %4023 = vmatpush2.bf16.msra.mxu0 0
    %4024 = vmatprep.subr.bf16.mxu0 0
    %4025 = vmatpush2.bf16.msra.mxu0 0
    %4026 = vmatprep.subr.bf16.mxu0 0
    %4027 = vmatpush2.bf16.msra.mxu0 0
    %4028 = vmatprep.subr.bf16.mxu0 0
    %4029 = vmatpush2.bf16.msra.mxu0 0
    %4030 = vmatprep.subr.bf16.mxu0 0
    %4031 = vmatpush2.bf16.msra.mxu0 0
    %4032 = vmatprep.mubr.bf16.mxu0 0
    %4033 = vmatmul.mubr.bf16.gmra.mxu0 %v3893
    %v4034 = vpop.f32.mrf.mxu0
    %v4035 = vadd.f32 0.0, %v4034
    %v4036 = vpop.f32.mrf.mxu0
    %v4037 = vpop.f32.mrf.mxu0
    %v4038 = vadd.f32 0.0, %v4037
    %v4039 = vpop.f32.mrf.mxu0
    %4040 = vmatprep.mubr.bf16.mxu0 0
    %4041 = vmatmul.mubr.bf16.gmra.mxu0 %v3896
    %v4042 = vpop.f32.mrf.mxu0
    %v4043 = vadd.f32 0.0, %v4042
    %v4044 = vpop.f32.mrf.mxu0
    %v4045 = vpop.f32.mrf.mxu0
    %v4046 = vadd.f32 0.0, %v4045
    %v4047 = vpop.f32.mrf.mxu0
    %4048 = vmatprep.mubr.bf16.mxu0 0
    %4049 = vmatmul.mubr.bf16.gmra.mxu0 %v3899
    %v4050 = vpop.f32.mrf.mxu0
    %v4051 = vadd.f32 0.0, %v4050
    %v4052 = vpop.f32.mrf.mxu0
    %v4053 = vpop.f32.mrf.mxu0
    %v4054 = vadd.f32 0.0, %v4053
    %v4055 = vpop.f32.mrf.mxu0
    %4056 = vmatprep.mubr.bf16.mxu0 0
    %4057 = vmatmul.mubr.bf16.gmra.mxu0 %v3902
    %v4058 = vpop.f32.mrf.mxu0
    %v4059 = vadd.f32 0.0, %v4058
    %v4060 = vpop.f32.mrf.mxu0
    %v4061 = vpop.f32.mrf.mxu0
    %v4062 = vadd.f32 0.0, %v4061
    %v4063 = vpop.f32.mrf.mxu0
    %4064 = vmatprep.mubr.bf16.mxu0 0
    %4065 = vmatmul.mubr.bf16.gmra.mxu0 %v3905
    %v4066 = vpop.f32.mrf.mxu0
    %v4067 = vadd.f32 0.0, %v4066
    %v4068 = vpop.f32.mrf.mxu0
    %v4069 = vpop.f32.mrf.mxu0
    %v4070 = vadd.f32 0.0, %v4069
    %v4071 = vpop.f32.mrf.mxu0
    %4072 = vmatprep.mubr.bf16.mxu0 0
    %4073 = vmatmul.mubr.bf16.gmra.mxu0 %v3908
    %v4074 = vpop.f32.mrf.mxu0
    %v4075 = vadd.f32 0.0, %v4074
    %v4076 = vpop.f32.mrf.mxu0
    %v4077 = vpop.f32.mrf.mxu0
    %v4078 = vadd.f32 0.0, %v4077
    %v4079 = vpop.f32.mrf.mxu0
    %4080 = vmatprep.mubr.bf16.mxu0 0
    %4081 = vmatmul.mubr.bf16.gmra.mxu0 %v3911
    %v4082 = vpop.f32.mrf.mxu0
    %v4083 = vadd.f32 0.0, %v4082
    %v4084 = vpop.f32.mrf.mxu0
    %v4085 = vpop.f32.mrf.mxu0
    %v4086 = vadd.f32 0.0, %v4085
    %v4087 = vpop.f32.mrf.mxu0
    %4088 = vmatprep.mubr.bf16.mxu0 0
    %4089 = vmatmul.mubr.bf16.gmra.mxu0 %v3914
    %v4090 = vpop.f32.mrf.mxu0
    %v4091 = vadd.f32 0.0, %v4090
    %v4092 = vpop.f32.mrf.mxu0
    %v4093 = vpop.f32.mrf.mxu0
    %v4094 = vadd.f32 0.0, %v4093
    %v4095 = vpop.f32.mrf.mxu0
    %4096 = vmatprep.mubr.bf16.mxu0 0
    %4097 = vmatmul.mubr.bf16.gmra.mxu0 %v3917
    %v4098 = vpop.f32.mrf.mxu0
    %v4099 = vadd.f32 0.0, %v4098
    %v4100 = vpop.f32.mrf.mxu0
    %v4101 = vpop.f32.mrf.mxu0
    %v4102 = vadd.f32 0.0, %v4101
    %v4103 = vpop.f32.mrf.mxu0
    %4104 = vmatprep.mubr.bf16.mxu0 0
    %4105 = vmatmul.mubr.bf16.gmra.mxu0 %v3920
    %v4106 = vpop.f32.mrf.mxu0
    %v4107 = vadd.f32 0.0, %v4106
    %v4108 = vpop.f32.mrf.mxu0
    %v4109 = vpop.f32.mrf.mxu0
    %v4110 = vadd.f32 0.0, %v4109
    %v4111 = vpop.f32.mrf.mxu0
    %4112 = vmatprep.mubr.bf16.mxu0 0
    %4113 = vmatmul.mubr.bf16.gmra.mxu0 %v3923
    %v4114 = vpop.f32.mrf.mxu0
    %v4115 = vadd.f32 0.0, %v4114
    %v4116 = vpop.f32.mrf.mxu0
    %v4117 = vpop.f32.mrf.mxu0
    %v4118 = vadd.f32 0.0, %v4117
    %v4119 = vpop.f32.mrf.mxu0
    %4120 = vmatprep.mubr.bf16.mxu0 0
    %4121 = vmatmul.mubr.bf16.gmra.mxu0 %v3926
    %v4122 = vpop.f32.mrf.mxu0
    %v4123 = vadd.f32 0.0, %v4122
    %v4124 = vpop.f32.mrf.mxu0
    %v4125 = vpop.f32.mrf.mxu0
    %v4126 = vadd.f32 0.0, %v4125
    %v4127 = vpop.f32.mrf.mxu0
    %4128 = vmatprep.mubr.bf16.mxu0 0
    %4129 = vmatmul.mubr.bf16.gmra.mxu0 %v3929
    %v4130 = vpop.f32.mrf.mxu0
    %v4131 = vadd.f32 0.0, %v4130
    %v4132 = vpop.f32.mrf.mxu0
    %v4133 = vpop.f32.mrf.mxu0
    %v4134 = vadd.f32 0.0, %v4133
    %v4135 = vpop.f32.mrf.mxu0
    %4136 = vmatprep.mubr.bf16.mxu0 0
    %4137 = vmatmul.mubr.bf16.gmra.mxu0 %v3932
    %v4138 = vpop.f32.mrf.mxu0
    %v4139 = vadd.f32 0.0, %v4138
    %v4140 = vpop.f32.mrf.mxu0
    %v4141 = vpop.f32.mrf.mxu0
    %v4142 = vadd.f32 0.0, %v4141
    %v4143 = vpop.f32.mrf.mxu0
    %4144 = vmatprep.mubr.bf16.mxu0 0
    %4145 = vmatmul.mubr.bf16.gmra.mxu0 %v3935
    %v4146 = vpop.f32.mrf.mxu0
    %v4147 = vadd.f32 0.0, %v4146
    %v4148 = vpop.f32.mrf.mxu0
    %v4149 = vpop.f32.mrf.mxu0
    %v4150 = vadd.f32 0.0, %v4149
    %v4151 = vpop.f32.mrf.mxu0
    %4152 = vmatprep.mubr.bf16.mxu0 0
    %4153 = vmatmul.mubr.bf16.gmra.mxu0 %v3938
    %v4154 = vpop.f32.mrf.mxu0
    %v4155 = vadd.f32 0.0, %v4154
    %v4156 = vpop.f32.mrf.mxu0
    %v4157 = vpop.f32.mrf.mxu0
    %v4158 = vadd.f32 0.0, %v4157
    %v4159 = vpop.f32.mrf.mxu0
    %4160 = vmatprep.mubr.bf16.mxu0 0
    %4161 = vmatmul.mubr.bf16.gmra.mxu0 %v3941
    %v4162 = vpop.f32.mrf.mxu0
    %v4163 = vadd.f32 0.0, %v4162
    %v4164 = vpop.f32.mrf.mxu0
    %v4165 = vpop.f32.mrf.mxu0
    %v4166 = vadd.f32 0.0, %v4165
    %v4167 = vpop.f32.mrf.mxu0
    %4168 = vmatprep.mubr.bf16.mxu0 0
    %4169 = vmatmul.mubr.bf16.gmra.mxu0 %v3944
    %v4170 = vpop.f32.mrf.mxu0
    %v4171 = vadd.f32 0.0, %v4170
    %v4172 = vpop.f32.mrf.mxu0
    %v4173 = vpop.f32.mrf.mxu0
    %v4174 = vadd.f32 0.0, %v4173
    %v4175 = vpop.f32.mrf.mxu0
    %4176 = vmatprep.mubr.bf16.mxu0 0
    %4177 = vmatmul.mubr.bf16.gmra.mxu0 %v3947
    %v4178 = vpop.f32.mrf.mxu0
    %v4179 = vadd.f32 0.0, %v4178
    %v4180 = vpop.f32.mrf.mxu0
    %v4181 = vpop.f32.mrf.mxu0
    %v4182 = vadd.f32 0.0, %v4181
    %v4183 = vpop.f32.mrf.mxu0
    %4184 = vmatprep.mubr.bf16.mxu0 0
    %4185 = vmatmul.mubr.bf16.gmra.mxu0 %v3950
    %v4186 = vpop.f32.mrf.mxu0
    %v4187 = vadd.f32 0.0, %v4186
    %v4188 = vpop.f32.mrf.mxu0
    %v4189 = vpop.f32.mrf.mxu0
    %v4190 = vadd.f32 0.0, %v4189
    %v4191 = vpop.f32.mrf.mxu0
    %4192 = vmatprep.mubr.bf16.mxu0 0
    %4193 = vmatmul.mubr.bf16.gmra.mxu0 %v3953
    %v4194 = vpop.f32.mrf.mxu0
    %v4195 = vadd.f32 0.0, %v4194
    %v4196 = vpop.f32.mrf.mxu0
    %v4197 = vpop.f32.mrf.mxu0
    %v4198 = vadd.f32 0.0, %v4197
    %v4199 = vpop.f32.mrf.mxu0
    %4200 = vmatprep.mubr.bf16.mxu0 0
    %4201 = vmatmul.mubr.bf16.gmra.mxu0 %v3956
    %v4202 = vpop.f32.mrf.mxu0
    %v4203 = vadd.f32 0.0, %v4202
    %v4204 = vpop.f32.mrf.mxu0
    %v4205 = vpop.f32.mrf.mxu0
    %v4206 = vadd.f32 0.0, %v4205
    %v4207 = vpop.f32.mrf.mxu0
    %4208 = vmatprep.mubr.bf16.mxu0 0
    %4209 = vmatmul.mubr.bf16.gmra.mxu0 %v3959
    %v4210 = vpop.f32.mrf.mxu0
    %v4211 = vadd.f32 0.0, %v4210
    %v4212 = vpop.f32.mrf.mxu0
    %v4213 = vpop.f32.mrf.mxu0
    %v4214 = vadd.f32 0.0, %v4213
    %v4215 = vpop.f32.mrf.mxu0
    %4216 = vmatprep.mubr.bf16.mxu0 0
    %4217 = vmatmul.mubr.bf16.gmra.mxu0 %v3962
    %v4218 = vpop.f32.mrf.mxu0
    %v4219 = vadd.f32 0.0, %v4218
    %v4220 = vpop.f32.mrf.mxu0
    %v4221 = vpop.f32.mrf.mxu0
    %v4222 = vadd.f32 0.0, %v4221
    %v4223 = vpop.f32.mrf.mxu0
    %4224 = vmatprep.mubr.bf16.mxu0 0
    %4225 = vmatmul.mubr.bf16.gmra.mxu0 %v3965
    %v4226 = vpop.f32.mrf.mxu0
    %v4227 = vadd.f32 0.0, %v4226
    %v4228 = vpop.f32.mrf.mxu0
    %v4229 = vpop.f32.mrf.mxu0
    %v4230 = vadd.f32 0.0, %v4229
    %v4231 = vpop.f32.mrf.mxu0
    %4232 = vmatprep.mubr.bf16.mxu0 0
    %4233 = vmatmul.mubr.bf16.gmra.mxu0 %v3968
    %v4234 = vpop.f32.mrf.mxu0
    %v4235 = vadd.f32 0.0, %v4234
    %v4236 = vpop.f32.mrf.mxu0
    %v4237 = vpop.f32.mrf.mxu0
    %v4238 = vadd.f32 0.0, %v4237
    %v4239 = vpop.f32.mrf.mxu0
    %4240 = vmatprep.mubr.bf16.mxu0 0
    %4241 = vmatmul.mubr.bf16.gmra.mxu0 %v3971
    %v4242 = vpop.f32.mrf.mxu0
    %v4243 = vadd.f32 0.0, %v4242
    %v4244 = vpop.f32.mrf.mxu0
    %v4245 = vpop.f32.mrf.mxu0
    %v4246 = vadd.f32 0.0, %v4245
    %v4247 = vpop.f32.mrf.mxu0
    %4248 = vmatprep.mubr.bf16.mxu0 0
    %4249 = vmatmul.mubr.bf16.gmra.mxu0 %v3974
    %v4250 = vpop.f32.mrf.mxu0
    %v4251 = vadd.f32 0.0, %v4250
    %v4252 = vpop.f32.mrf.mxu0
    %v4253 = vpop.f32.mrf.mxu0
    %v4254 = vadd.f32 0.0, %v4253
    %v4255 = vpop.f32.mrf.mxu0
    %4256 = vmatprep.mubr.bf16.mxu0 0
    %4257 = vmatmul.mubr.bf16.gmra.mxu0 %v3977
    %v4258 = vpop.f32.mrf.mxu0
    %v4259 = vadd.f32 0.0, %v4258
    %v4260 = vpop.f32.mrf.mxu0
    %v4261 = vpop.f32.mrf.mxu0
    %v4262 = vadd.f32 0.0, %v4261
    %v4263 = vpop.f32.mrf.mxu0
    %4264 = vmatprep.mubr.bf16.mxu0 0
    %4265 = vmatmul.mubr.bf16.gmra.mxu0 %v3980
    %v4266 = vpop.f32.mrf.mxu0
    %v4267 = vadd.f32 0.0, %v4266
    %v4268 = vpop.f32.mrf.mxu0
    %v4269 = vpop.f32.mrf.mxu0
    %v4270 = vadd.f32 0.0, %v4269
    %v4271 = vpop.f32.mrf.mxu0
    %4272 = vmatprep.mubr.bf16.mxu0 0
    %4273 = vmatmul.mubr.bf16.gmra.mxu0 %v3983
    %v4274 = vpop.f32.mrf.mxu0
    %v4275 = vadd.f32 0.0, %v4274
    %v4276 = vpop.f32.mrf.mxu0
    %v4277 = vpop.f32.mrf.mxu0
    %v4278 = vadd.f32 0.0, %v4277
    %v4279 = vpop.f32.mrf.mxu0
    %4280 = vmatprep.mubr.bf16.mxu0 0
    %4281 = vmatmul.mubr.bf16.gmra.mxu0 %v3986
    %v4282 = vpop.f32.mrf.mxu0
    %v4283 = vadd.f32 0.0, %v4282
    %v4284 = vpop.f32.mrf.mxu0
    %v4285 = vpop.f32.mrf.mxu0
    %v4286 = vadd.f32 0.0, %v4285
    %v4287 = vpop.f32.mrf.mxu0
    %4288 = vmatprep.mubr.bf16.mxu0 0
    %4289 = vmatmul.mubr.bf16.gmra.mxu0 %v3989
    %v4290 = vpop.f32.mrf.mxu0
    %v4291 = vadd.f32 0.0, %v4290
    %v4292 = vpop.f32.mrf.mxu0
    %v4293 = vpop.f32.mrf.mxu0
    %v4294 = vadd.f32 0.0, %v4293
    %v4295 = vpop.f32.mrf.mxu0
    %4296 = vmatprep.mubr.bf16.mxu0 0
    %4297 = vmatmul.mubr.bf16.gmra.mxu0 %v3992
    %v4298 = vpop.f32.mrf.mxu0
    %v4299 = vadd.f32 0.0, %v4298
    %v4300 = vpop.f32.mrf.mxu0
    %v4301 = vpop.f32.mrf.mxu0
    %v4302 = vadd.f32 0.0, %v4301
    %v4303 = vpop.f32.mrf.mxu0
    %4304 = vmatprep.mubr.bf16.mxu0 0
    %4305 = vmatmul.mubr.bf16.gmra.mxu0 %v3995
    %v4306 = vpop.f32.mrf.mxu0
    %v4307 = vadd.f32 0.0, %v4306
    %v4308 = vpop.f32.mrf.mxu0
    %v4309 = vpop.f32.mrf.mxu0
    %v4310 = vadd.f32 0.0, %v4309
    %v4311 = vpop.f32.mrf.mxu0
    %4312 = vmatprep.mubr.bf16.mxu0 0
    %4313 = vmatmul.mubr.bf16.gmra.mxu0 %v3998
    %v4314 = vpop.f32.mrf.mxu0
    %v4315 = vadd.f32 0.0, %v4314
    %v4316 = vpop.f32.mrf.mxu0
    %v4317 = vpop.f32.mrf.mxu0
    %v4318 = vadd.f32 0.0, %v4317
    %v4319 = vpop.f32.mrf.mxu0
    %4320 = vdwg.mxu0
    %v4321 = vadd.f32 %v3703, %v4035
    %v4322 = vadd.f32 %v3704, %v4038
    %v4323 = vadd.f32 %v3705, %v4043
    %v4324 = vadd.f32 %v3706, %v4046
    %v4325 = vadd.f32 %v3707, %v4051
    %v4326 = vadd.f32 %v3708, %v4054
    %v4327 = vadd.f32 %v3709, %v4059
    %v4328 = vadd.f32 %v3710, %v4062
    %v4329 = vadd.f32 %v3711, %v4067
    %v4330 = vadd.f32 %v3712, %v4070
    %v4331 = vadd.f32 %v3713, %v4075
    %v4332 = vadd.f32 %v3714, %v4078
    %v4333 = vadd.f32 %v3715, %v4083
    %v4334 = vadd.f32 %v3716, %v4086
    %v4335 = vadd.f32 %v3717, %v4091
    %v4336 = vadd.f32 %v3718, %v4094
    %v4337 = vadd.f32 %v3719, %v4099
    %v4338 = vadd.f32 %v3720, %v4102
    %v4339 = vadd.f32 %v3721, %v4107
    %v4340 = vadd.f32 %v3722, %v4110
    %v4341 = vadd.f32 %v3723, %v4115
    %v4342 = vadd.f32 %v3724, %v4118
    %v4343 = vadd.f32 %v3725, %v4123
    %v4344 = vadd.f32 %v3726, %v4126
    %v4345 = vadd.f32 %v3727, %v4131
    %v4346 = vadd.f32 %v3728, %v4134
    %v4347 = vadd.f32 %v3729, %v4139
    %v4348 = vadd.f32 %v3730, %v4142
    %v4349 = vadd.f32 %v3731, %v4147
    %v4350 = vadd.f32 %v3732, %v4150
    %v4351 = vadd.f32 %v3733, %v4155
    %v4352 = vadd.f32 %v3734, %v4158
    %v4353 = vadd.f32 %v3735, %v4163
    %v4354 = vadd.f32 %v3736, %v4166
    %v4355 = vadd.f32 %v3737, %v4171
    %v4356 = vadd.f32 %v3738, %v4174
    %v4357 = vadd.f32 %v3739, %v4179
    %v4358 = vadd.f32 %v3740, %v4182
    %v4359 = vadd.f32 %v3741, %v4187
    %v4360 = vadd.f32 %v3742, %v4190
    %v4361 = vadd.f32 %v3743, %v4195
    %v4362 = vadd.f32 %v3744, %v4198
    %v4363 = vadd.f32 %v3745, %v4203
    %v4364 = vadd.f32 %v3746, %v4206
    %v4365 = vadd.f32 %v3747, %v4211
    %v4366 = vadd.f32 %v3748, %v4214
    %v4367 = vadd.f32 %v3749, %v4219
    %v4368 = vadd.f32 %v3750, %v4222
    %v4369 = vadd.f32 %v3751, %v4227
    %v4370 = vadd.f32 %v3752, %v4230
    %v4371 = vadd.f32 %v3753, %v4235
    %v4372 = vadd.f32 %v3754, %v4238
    %v4373 = vadd.f32 %v3755, %v4243
    %v4374 = vadd.f32 %v3756, %v4246
    %v4375 = vadd.f32 %v3757, %v4251
    %v4376 = vadd.f32 %v3758, %v4254
    %v4377 = vadd.f32 %v3759, %v4259
    %v4378 = vadd.f32 %v3760, %v4262
    %v4379 = vadd.f32 %v3761, %v4267
    %v4380 = vadd.f32 %v3762, %v4270
    %v4381 = vadd.f32 %v3763, %v4275
    %v4382 = vadd.f32 %v3764, %v4278
    %v4383 = vadd.f32 %v3765, %v4283
    %v4384 = vadd.f32 %v3766, %v4286
    %v4385 = vadd.f32 %v3767, %v4291
    %v4386 = vadd.f32 %v3768, %v4294
    %v4387 = vadd.f32 %v3769, %v4299
    %v4388 = vadd.f32 %v3770, %v4302
    %v4389 = vadd.f32 %v3771, %v4307
    %v4390 = vadd.f32 %v3772, %v4310
    %v4391 = vadd.f32 %v3773, %v4315
    %v4392 = vadd.f32 %v3774, %v4318
    %v4393 = vld [vmem:[%s0 + $0x25] sm:$0xff]
    %v4394 = vld [vmem:[%s0 + $0x2d] sm:$0xff]
    %v4395 = vld [vmem:[%s0 + $0x35] sm:$0xff]
    %v4396 = vld [vmem:[%s0 + $0x3d] sm:$0xff]
    %v4397 = vld [vmem:[%s0 + $0x45] sm:$0xff]
    %v4398 = vld [vmem:[%s0 + $0x4d] sm:$0xff]
    %v4399 = vld [vmem:[%s0 + $0x55] sm:$0xff]
    %v4400 = vld [vmem:[%s0 + $0x5d] sm:$0xff]
    %v4401 = vld [vmem:[%s0 + $0x65] sm:$0xff]
    %v4402 = vld [vmem:[%s0 + $0x6d] sm:$0xff]
    %v4403 = vld [vmem:[%s0 + $0x75] sm:$0xff]
    %v4404 = vld [vmem:[%s0 + $0x7d] sm:$0xff]
    %v4405 = vld [vmem:[%s0 + $0x85] sm:$0xff]
    %v4406 = vld [vmem:[%s0 + $0x8d] sm:$0xff]
    %v4407 = vld [vmem:[%s0 + $0x95] sm:$0xff]
    %v4408 = vld [vmem:[%s0 + $0x9d] sm:$0xff]
    %v4409 = vld [vmem:[%s0 + $0xa5] sm:$0xff]
    %v4410 = vld [vmem:[%s0 + $0xad] sm:$0xff]
    %v4411 = vld [vmem:[%s0 + $0xb5] sm:$0xff]
    %v4412 = vld [vmem:[%s0 + $0xbd] sm:$0xff]
    %v4413 = vld [vmem:[%s0 + $0xc5] sm:$0xff]
    %v4414 = vld [vmem:[%s0 + $0xcd] sm:$0xff]
    %v4415 = vld [vmem:[%s0 + $0xd5] sm:$0xff]
    %v4416 = vld [vmem:[%s0 + $0xdd] sm:$0xff]
    %v4417 = vld [vmem:[%s0 + $0xe5] sm:$0xff]
    %v4418 = vld [vmem:[%s0 + $0xed] sm:$0xff]
    %v4419 = vld [vmem:[%s0 + $0xf5] sm:$0xff]
    %v4420 = vld [vmem:[%s0 + $0xfd] sm:$0xff]
    %v4421 = vld [vmem:[%s0 + $0x105] sm:$0xff]
    %v4422 = vld [vmem:[%s0 + $0x10d] sm:$0xff]
    %v4423 = vld [vmem:[%s0 + $0x115] sm:$0xff]
    %v4424 = vld [vmem:[%s0 + $0x11d] sm:$0xff]
    %v4425 = vld [vmem:[%s0 + $0x125] sm:$0xff]
    %v4426 = vld [vmem:[%s0 + $0x12d] sm:$0xff]
    %v4427 = vld [vmem:[%s0 + $0x135] sm:$0xff]
    %v4428 = vld [vmem:[%s0 + $0x13d] sm:$0xff]
    %v4429 = vld [vmem:[%s0 + $0x16d] sm:$0xff]
    %v4430 = vld [vmem:[%s0 + $0x175] sm:$0xff]
    %v4431 = vld [vmem:[%s0 + $0x17d] sm:$0xff]
    %v4432 = vld [vmem:[%s0 + $0x185] sm:$0xff]
    %v4433 = vld [vmem:[%s0 + $0x18d] sm:$0xff]
    %v4434 = vld [vmem:[%s0 + $0x195] sm:$0xff]
    %v4435 = vld [vmem:[%s0 + $0x19d] sm:$0xff]
    %v4436 = vld [vmem:[%s0 + $0x1a5] sm:$0xff]
    %v4437 = vld [vmem:[%s0 + $0x1ad] sm:$0xff]
    %v4438 = vld [vmem:[%s0 + $0x1b5] sm:$0xff]
    %v4439 = vld [vmem:[%s0 + $0x1bd] sm:$0xff]
    %v4440 = vld [vmem:[%s0 + $0x1c5] sm:$0xff]
    %v4441 = vld [vmem:[%s0 + $0x1cd] sm:$0xff]
    %v4442 = vld [vmem:[%s0 + $0x1d5] sm:$0xff]
    %v4443 = vld [vmem:[%s0 + $0x1dd] sm:$0xff]
    %v4444 = vld [vmem:[%s0 + $0x1e5] sm:$0xff]
    %v4445 = vld [vmem:[%s0 + $0x1ed] sm:$0xff]
    %v4446 = vld [vmem:[%s0 + $0x1f5] sm:$0xff]
    %v4447 = vld [vmem:[%s0 + $0x1fd] sm:$0xff]
    %v4448 = vld [vmem:[%s0 + $0x205] sm:$0xff]
    %v4449 = vld [vmem:[%s0 + $0x20d] sm:$0xff]
    %v4450 = vld [vmem:[%s0 + $0x215] sm:$0xff]
    %v4451 = vld [vmem:[%s0 + $0x21d] sm:$0xff]
    %v4452 = vld [vmem:[%s0 + $0x225] sm:$0xff]
    %v4453 = vld [vmem:[%s0 + $0x22d] sm:$0xff]
    %v4454 = vld [vmem:[%s0 + $0x235] sm:$0xff]
    %v4455 = vld [vmem:[%s0 + $0x23d] sm:$0xff]
    %v4456 = vld [vmem:[%s0 + $0x245] sm:$0xff]
    %v4457 = vld [vmem:[%s0 + $0x24d] sm:$0xff]
    %v4458 = vld [vmem:[%s0 + $0x255] sm:$0xff]
    %v4459 = vld [vmem:[%s0 + $0x25d] sm:$0xff]
    %v4460 = vld [vmem:[%s0 + $0x265] sm:$0xff]
    %v4461 = vld [vmem:[%s0 + $0x26d] sm:$0xff]
    %v4462 = vld [vmem:[%s0 + $0x275] sm:$0xff]
    %v4463 = vld [vmem:[%s0 + $0x27d] sm:$0xff]
    %v4464 = vld [vmem:[%s0 + $0x285] sm:$0xff]
    %v4465 = vpack.c.bf16 %v4394, %v4393
    %v4466 = vpack.c.bf16 %v4396, %v4395
    %v4467 = vpack.c.bf16 %v4398, %v4397
    %v4468 = vpack.c.bf16 %v4400, %v4399
    %v4469 = vpack.c.bf16 %v4402, %v4401
    %v4470 = vpack.c.bf16 %v4404, %v4403
    %v4471 = vpack.c.bf16 %v4406, %v4405
    %v4472 = vpack.c.bf16 %v4408, %v4407
    %v4473 = vpack.c.bf16 %v4410, %v4409
    %v4474 = vpack.c.bf16 %v4412, %v4411
    %v4475 = vpack.c.bf16 %v4414, %v4413
    %v4476 = vpack.c.bf16 %v4416, %v4415
    %v4477 = vpack.c.bf16 %v4418, %v4417
    %v4478 = vpack.c.bf16 %v4420, %v4419
    %v4479 = vpack.c.bf16 %v4422, %v4421
    %v4480 = vpack.c.bf16 %v4424, %v4423
    %v4481 = vpack.c.bf16 %v4426, %v4425
    %v4482 = vpack.c.bf16 %v4428, %v4427
    %v4483 = vpack.c.bf16 %v4430, %v4429
    %v4484 = vpack.c.bf16 %v4432, %v4431
    %v4485 = vpack.c.bf16 %v4434, %v4433
    %v4486 = vpack.c.bf16 %v4436, %v4435
    %v4487 = vpack.c.bf16 %v4438, %v4437
    %v4488 = vpack.c.bf16 %v4440, %v4439
    %v4489 = vpack.c.bf16 %v4442, %v4441
    %v4490 = vpack.c.bf16 %v4444, %v4443
    %v4491 = vpack.c.bf16 %v4446, %v4445
    %v4492 = vpack.c.bf16 %v4448, %v4447
    %v4493 = vpack.c.bf16 %v4450, %v4449
    %v4494 = vpack.c.bf16 %v4452, %v4451
    %v4495 = vpack.c.bf16 %v4454, %v4453
    %v4496 = vpack.c.bf16 %v4456, %v4455
    %v4497 = vpack.c.bf16 %v4458, %v4457
    %v4498 = vpack.c.bf16 %v4460, %v4459
    %v4499 = vpack.c.bf16 %v4462, %v4461
    %v4500 = vpack.c.bf16 %v4464, %v4463
    %s4501 = scalar_lea.vmem %s1, 56
    %v4502 = vld [vmem:[%s4501] sm:$0xf]
    %v4503 = vld [vmem:[%s4501 + $0x4] sm:$0xf]
    %v4506 = vunpack.c.l.b16 %v4502
    %v4507 = vunpack.c.l.b16 %v4503
    %v4508 = vpack.c.b16 %v4507, %v4506
    %v4511 = vsel %vm16, %v4465, 0
    %v4514 = vsel %vm16, %v4466, 0
    %v4517 = vsel %vm16, %v4467, 0
    %v4520 = vsel %vm16, %v4468, 0
    %v4523 = vsel %vm16, %v4469, 0
    %v4526 = vsel %vm16, %v4470, 0
    %v4529 = vsel %vm16, %v4471, 0
    %v4532 = vsel %vm16, %v4472, 0
    %v4535 = vsel %vm16, %v4473, 0
    %v4538 = vsel %vm16, %v4474, 0
    %v4541 = vsel %vm16, %v4475, 0
    %v4544 = vsel %vm16, %v4476, 0
    %v4547 = vsel %vm16, %v4477, 0
    %v4550 = vsel %vm16, %v4478, 0
    %v4553 = vsel %vm16, %v4479, 0
    %v4556 = vsel %vm16, %v4480, 0
    %v4559 = vsel %vm16, %v4481, 0
    %v4562 = vsel %vm16, %v4482, 0
    %v4565 = vsel %vm16, %v4483, 0
    %v4568 = vsel %vm16, %v4484, 0
    %v4571 = vsel %vm16, %v4485, 0
    %v4574 = vsel %vm16, %v4486, 0
    %v4577 = vsel %vm16, %v4487, 0
    %v4580 = vsel %vm16, %v4488, 0
    %v4583 = vsel %vm16, %v4489, 0
    %v4586 = vsel %vm16, %v4490, 0
    %v4589 = vsel %vm16, %v4491, 0
    %v4592 = vsel %vm16, %v4492, 0
    %v4595 = vsel %vm16, %v4493, 0
    %v4598 = vsel %vm16, %v4494, 0
    %v4601 = vsel %vm16, %v4495, 0
    %v4604 = vsel %vm16, %v4496, 0
    %v4607 = vsel %vm16, %v4497, 0
    %v4610 = vsel %vm16, %v4498, 0
    %v4613 = vsel %vm16, %v4499, 0
    %v4616 = vsel %vm16, %v4500, 0
    %4618 = vmatprep.subr.bf16.mxu0 0
    %4619 = vmatpush1.bf16.msra.mxu0 0
    %4620 = vmatprep.subr.bf16.mxu0 0
    %4621 = vmatpush1.bf16.msra.mxu0 0
    %4622 = vmatprep.subr.bf16.mxu0 0
    %4623 = vmatpush1.bf16.msra.mxu0 0
    %4624 = vmatprep.subr.bf16.mxu0 0
    %4625 = vmatpush1.bf16.msra.mxu0 0
    %4626 = vmatprep.subr.bf16.mxu0 0
    %4627 = vmatpush1.bf16.msra.mxu0 0
    %4628 = vmatprep.subr.bf16.mxu0 0
    %4629 = vmatpush1.bf16.msra.mxu0 0
    %4630 = vmatprep.subr.bf16.mxu0 0
    %4631 = vmatpush1.bf16.msra.mxu0 0
    %4632 = vmatprep.subr.bf16.mxu0 0
    %4633 = vmatpush1.bf16.msra.mxu0 %v4508
    %4634 = vmatprep.subr.bf16.mxu0 0
    %4635 = vmatpush2.bf16.msra.mxu0 0
    %4636 = vmatprep.subr.bf16.mxu0 0
    %4637 = vmatpush2.bf16.msra.mxu0 0
    %4638 = vmatprep.subr.bf16.mxu0 0
    %4639 = vmatpush2.bf16.msra.mxu0 0
    %4640 = vmatprep.subr.bf16.mxu0 0
    %4641 = vmatpush2.bf16.msra.mxu0 0
    %4642 = vmatprep.subr.bf16.mxu0 0
    %4643 = vmatpush2.bf16.msra.mxu0 0
    %4644 = vmatprep.subr.bf16.mxu0 0
    %4645 = vmatpush2.bf16.msra.mxu0 0
    %4646 = vmatprep.subr.bf16.mxu0 0
    %4647 = vmatpush2.bf16.msra.mxu0 0
    %4648 = vmatprep.subr.bf16.mxu0 0
    %4649 = vmatpush2.bf16.msra.mxu0 0
    %4650 = vmatprep.mubr.bf16.mxu0 0
    %4651 = vmatmul.mubr.bf16.gmra.mxu0 %v4511
    %v4652 = vpop.f32.mrf.mxu0
    %v4653 = vadd.f32 0.0, %v4652
    %v4654 = vpop.f32.mrf.mxu0
    %v4655 = vpop.f32.mrf.mxu0
    %v4656 = vadd.f32 0.0, %v4655
    %v4657 = vpop.f32.mrf.mxu0
    %4658 = vmatprep.mubr.bf16.mxu0 0
    %4659 = vmatmul.mubr.bf16.gmra.mxu0 %v4514
    %v4660 = vpop.f32.mrf.mxu0
    %v4661 = vadd.f32 0.0, %v4660
    %v4662 = vpop.f32.mrf.mxu0
    %v4663 = vpop.f32.mrf.mxu0
    %v4664 = vadd.f32 0.0, %v4663
    %v4665 = vpop.f32.mrf.mxu0
    %4666 = vmatprep.mubr.bf16.mxu0 0
    %4667 = vmatmul.mubr.bf16.gmra.mxu0 %v4517
    %v4668 = vpop.f32.mrf.mxu0
    %v4669 = vadd.f32 0.0, %v4668
    %v4670 = vpop.f32.mrf.mxu0
    %v4671 = vpop.f32.mrf.mxu0
    %v4672 = vadd.f32 0.0, %v4671
    %v4673 = vpop.f32.mrf.mxu0
    %4674 = vmatprep.mubr.bf16.mxu0 0
    %4675 = vmatmul.mubr.bf16.gmra.mxu0 %v4520
    %v4676 = vpop.f32.mrf.mxu0
    %v4677 = vadd.f32 0.0, %v4676
    %v4678 = vpop.f32.mrf.mxu0
    %v4679 = vpop.f32.mrf.mxu0
    %v4680 = vadd.f32 0.0, %v4679
    %v4681 = vpop.f32.mrf.mxu0
    %4682 = vmatprep.mubr.bf16.mxu0 0
    %4683 = vmatmul.mubr.bf16.gmra.mxu0 %v4523
    %v4684 = vpop.f32.mrf.mxu0
    %v4685 = vadd.f32 0.0, %v4684
    %v4686 = vpop.f32.mrf.mxu0
    %v4687 = vpop.f32.mrf.mxu0
    %v4688 = vadd.f32 0.0, %v4687
    %v4689 = vpop.f32.mrf.mxu0
    %4690 = vmatprep.mubr.bf16.mxu0 0
    %4691 = vmatmul.mubr.bf16.gmra.mxu0 %v4526
    %v4692 = vpop.f32.mrf.mxu0
    %v4693 = vadd.f32 0.0, %v4692
    %v4694 = vpop.f32.mrf.mxu0
    %v4695 = vpop.f32.mrf.mxu0
    %v4696 = vadd.f32 0.0, %v4695
    %v4697 = vpop.f32.mrf.mxu0
    %4698 = vmatprep.mubr.bf16.mxu0 0
    %4699 = vmatmul.mubr.bf16.gmra.mxu0 %v4529
    %v4700 = vpop.f32.mrf.mxu0
    %v4701 = vadd.f32 0.0, %v4700
    %v4702 = vpop.f32.mrf.mxu0
    %v4703 = vpop.f32.mrf.mxu0
    %v4704 = vadd.f32 0.0, %v4703
    %v4705 = vpop.f32.mrf.mxu0
    %4706 = vmatprep.mubr.bf16.mxu0 0
    %4707 = vmatmul.mubr.bf16.gmra.mxu0 %v4532
    %v4708 = vpop.f32.mrf.mxu0
    %v4709 = vadd.f32 0.0, %v4708
    %v4710 = vpop.f32.mrf.mxu0
    %v4711 = vpop.f32.mrf.mxu0
    %v4712 = vadd.f32 0.0, %v4711
    %v4713 = vpop.f32.mrf.mxu0
    %4714 = vmatprep.mubr.bf16.mxu0 0
    %4715 = vmatmul.mubr.bf16.gmra.mxu0 %v4535
    %v4716 = vpop.f32.mrf.mxu0
    %v4717 = vadd.f32 0.0, %v4716
    %v4718 = vpop.f32.mrf.mxu0
    %v4719 = vpop.f32.mrf.mxu0
    %v4720 = vadd.f32 0.0, %v4719
    %v4721 = vpop.f32.mrf.mxu0
    %4722 = vmatprep.mubr.bf16.mxu0 0
    %4723 = vmatmul.mubr.bf16.gmra.mxu0 %v4538
    %v4724 = vpop.f32.mrf.mxu0
    %v4725 = vadd.f32 0.0, %v4724
    %v4726 = vpop.f32.mrf.mxu0
    %v4727 = vpop.f32.mrf.mxu0
    %v4728 = vadd.f32 0.0, %v4727
    %v4729 = vpop.f32.mrf.mxu0
    %4730 = vmatprep.mubr.bf16.mxu0 0
    %4731 = vmatmul.mubr.bf16.gmra.mxu0 %v4541
    %v4732 = vpop.f32.mrf.mxu0
    %v4733 = vadd.f32 0.0, %v4732
    %v4734 = vpop.f32.mrf.mxu0
    %v4735 = vpop.f32.mrf.mxu0
    %v4736 = vadd.f32 0.0, %v4735
    %v4737 = vpop.f32.mrf.mxu0
    %4738 = vmatprep.mubr.bf16.mxu0 0
    %4739 = vmatmul.mubr.bf16.gmra.mxu0 %v4544
    %v4740 = vpop.f32.mrf.mxu0
    %v4741 = vadd.f32 0.0, %v4740
    %v4742 = vpop.f32.mrf.mxu0
    %v4743 = vpop.f32.mrf.mxu0
    %v4744 = vadd.f32 0.0, %v4743
    %v4745 = vpop.f32.mrf.mxu0
    %4746 = vmatprep.mubr.bf16.mxu0 0
    %4747 = vmatmul.mubr.bf16.gmra.mxu0 %v4547
    %v4748 = vpop.f32.mrf.mxu0
    %v4749 = vadd.f32 0.0, %v4748
    %v4750 = vpop.f32.mrf.mxu0
    %v4751 = vpop.f32.mrf.mxu0
    %v4752 = vadd.f32 0.0, %v4751
    %v4753 = vpop.f32.mrf.mxu0
    %4754 = vmatprep.mubr.bf16.mxu0 0
    %4755 = vmatmul.mubr.bf16.gmra.mxu0 %v4550
    %v4756 = vpop.f32.mrf.mxu0
    %v4757 = vadd.f32 0.0, %v4756
    %v4758 = vpop.f32.mrf.mxu0
    %v4759 = vpop.f32.mrf.mxu0
    %v4760 = vadd.f32 0.0, %v4759
    %v4761 = vpop.f32.mrf.mxu0
    %4762 = vmatprep.mubr.bf16.mxu0 0
    %4763 = vmatmul.mubr.bf16.gmra.mxu0 %v4553
    %v4764 = vpop.f32.mrf.mxu0
    %v4765 = vadd.f32 0.0, %v4764
    %v4766 = vpop.f32.mrf.mxu0
    %v4767 = vpop.f32.mrf.mxu0
    %v4768 = vadd.f32 0.0, %v4767
    %v4769 = vpop.f32.mrf.mxu0
    %4770 = vmatprep.mubr.bf16.mxu0 0
    %4771 = vmatmul.mubr.bf16.gmra.mxu0 %v4556
    %v4772 = vpop.f32.mrf.mxu0
    %v4773 = vadd.f32 0.0, %v4772
    %v4774 = vpop.f32.mrf.mxu0
    %v4775 = vpop.f32.mrf.mxu0
    %v4776 = vadd.f32 0.0, %v4775
    %v4777 = vpop.f32.mrf.mxu0
    %4778 = vmatprep.mubr.bf16.mxu0 0
    %4779 = vmatmul.mubr.bf16.gmra.mxu0 %v4559
    %v4780 = vpop.f32.mrf.mxu0
    %v4781 = vadd.f32 0.0, %v4780
    %v4782 = vpop.f32.mrf.mxu0
    %v4783 = vpop.f32.mrf.mxu0
    %v4784 = vadd.f32 0.0, %v4783
    %v4785 = vpop.f32.mrf.mxu0
    %4786 = vmatprep.mubr.bf16.mxu0 0
    %4787 = vmatmul.mubr.bf16.gmra.mxu0 %v4562
    %v4788 = vpop.f32.mrf.mxu0
    %v4789 = vadd.f32 0.0, %v4788
    %v4790 = vpop.f32.mrf.mxu0
    %v4791 = vpop.f32.mrf.mxu0
    %v4792 = vadd.f32 0.0, %v4791
    %v4793 = vpop.f32.mrf.mxu0
    %4794 = vmatprep.mubr.bf16.mxu0 0
    %4795 = vmatmul.mubr.bf16.gmra.mxu0 %v4565
    %v4796 = vpop.f32.mrf.mxu0
    %v4797 = vadd.f32 0.0, %v4796
    %v4798 = vpop.f32.mrf.mxu0
    %v4799 = vpop.f32.mrf.mxu0
    %v4800 = vadd.f32 0.0, %v4799
    %v4801 = vpop.f32.mrf.mxu0
    %4802 = vmatprep.mubr.bf16.mxu0 0
    %4803 = vmatmul.mubr.bf16.gmra.mxu0 %v4568
    %v4804 = vpop.f32.mrf.mxu0
    %v4805 = vadd.f32 0.0, %v4804
    %v4806 = vpop.f32.mrf.mxu0
    %v4807 = vpop.f32.mrf.mxu0
    %v4808 = vadd.f32 0.0, %v4807
    %v4809 = vpop.f32.mrf.mxu0
    %4810 = vmatprep.mubr.bf16.mxu0 0
    %4811 = vmatmul.mubr.bf16.gmra.mxu0 %v4571
    %v4812 = vpop.f32.mrf.mxu0
    %v4813 = vadd.f32 0.0, %v4812
    %v4814 = vpop.f32.mrf.mxu0
    %v4815 = vpop.f32.mrf.mxu0
    %v4816 = vadd.f32 0.0, %v4815
    %v4817 = vpop.f32.mrf.mxu0
    %4818 = vmatprep.mubr.bf16.mxu0 0
    %4819 = vmatmul.mubr.bf16.gmra.mxu0 %v4574
    %v4820 = vpop.f32.mrf.mxu0
    %v4821 = vadd.f32 0.0, %v4820
    %v4822 = vpop.f32.mrf.mxu0
    %v4823 = vpop.f32.mrf.mxu0
    %v4824 = vadd.f32 0.0, %v4823
    %v4825 = vpop.f32.mrf.mxu0
    %4826 = vmatprep.mubr.bf16.mxu0 0
    %4827 = vmatmul.mubr.bf16.gmra.mxu0 %v4577
    %v4828 = vpop.f32.mrf.mxu0
    %v4829 = vadd.f32 0.0, %v4828
    %v4830 = vpop.f32.mrf.mxu0
    %v4831 = vpop.f32.mrf.mxu0
    %v4832 = vadd.f32 0.0, %v4831
    %v4833 = vpop.f32.mrf.mxu0
    %4834 = vmatprep.mubr.bf16.mxu0 0
    %4835 = vmatmul.mubr.bf16.gmra.mxu0 %v4580
    %v4836 = vpop.f32.mrf.mxu0
    %v4837 = vadd.f32 0.0, %v4836
    %v4838 = vpop.f32.mrf.mxu0
    %v4839 = vpop.f32.mrf.mxu0
    %v4840 = vadd.f32 0.0, %v4839
    %v4841 = vpop.f32.mrf.mxu0
    %4842 = vmatprep.mubr.bf16.mxu0 0
    %4843 = vmatmul.mubr.bf16.gmra.mxu0 %v4583
    %v4844 = vpop.f32.mrf.mxu0
    %v4845 = vadd.f32 0.0, %v4844
    %v4846 = vpop.f32.mrf.mxu0
    %v4847 = vpop.f32.mrf.mxu0
    %v4848 = vadd.f32 0.0, %v4847
    %v4849 = vpop.f32.mrf.mxu0
    %4850 = vmatprep.mubr.bf16.mxu0 0
    %4851 = vmatmul.mubr.bf16.gmra.mxu0 %v4586
    %v4852 = vpop.f32.mrf.mxu0
    %v4853 = vadd.f32 0.0, %v4852
    %v4854 = vpop.f32.mrf.mxu0
    %v4855 = vpop.f32.mrf.mxu0
    %v4856 = vadd.f32 0.0, %v4855
    %v4857 = vpop.f32.mrf.mxu0
    %4858 = vmatprep.mubr.bf16.mxu0 0
    %4859 = vmatmul.mubr.bf16.gmra.mxu0 %v4589
    %v4860 = vpop.f32.mrf.mxu0
    %v4861 = vadd.f32 0.0, %v4860
    %v4862 = vpop.f32.mrf.mxu0
    %v4863 = vpop.f32.mrf.mxu0
    %v4864 = vadd.f32 0.0, %v4863
    %v4865 = vpop.f32.mrf.mxu0
    %4866 = vmatprep.mubr.bf16.mxu0 0
    %4867 = vmatmul.mubr.bf16.gmra.mxu0 %v4592
    %v4868 = vpop.f32.mrf.mxu0
    %v4869 = vadd.f32 0.0, %v4868
    %v4870 = vpop.f32.mrf.mxu0
    %v4871 = vpop.f32.mrf.mxu0
    %v4872 = vadd.f32 0.0, %v4871
    %v4873 = vpop.f32.mrf.mxu0
    %4874 = vmatprep.mubr.bf16.mxu0 0
    %4875 = vmatmul.mubr.bf16.gmra.mxu0 %v4595
    %v4876 = vpop.f32.mrf.mxu0
    %v4877 = vadd.f32 0.0, %v4876
    %v4878 = vpop.f32.mrf.mxu0
    %v4879 = vpop.f32.mrf.mxu0
    %v4880 = vadd.f32 0.0, %v4879
    %v4881 = vpop.f32.mrf.mxu0
    %4882 = vmatprep.mubr.bf16.mxu0 0
    %4883 = vmatmul.mubr.bf16.gmra.mxu0 %v4598
    %v4884 = vpop.f32.mrf.mxu0
    %v4885 = vadd.f32 0.0, %v4884
    %v4886 = vpop.f32.mrf.mxu0
    %v4887 = vpop.f32.mrf.mxu0
    %v4888 = vadd.f32 0.0, %v4887
    %v4889 = vpop.f32.mrf.mxu0
    %4890 = vmatprep.mubr.bf16.mxu0 0
    %4891 = vmatmul.mubr.bf16.gmra.mxu0 %v4601
    %v4892 = vpop.f32.mrf.mxu0
    %v4893 = vadd.f32 0.0, %v4892
    %v4894 = vpop.f32.mrf.mxu0
    %v4895 = vpop.f32.mrf.mxu0
    %v4896 = vadd.f32 0.0, %v4895
    %v4897 = vpop.f32.mrf.mxu0
    %4898 = vmatprep.mubr.bf16.mxu0 0
    %4899 = vmatmul.mubr.bf16.gmra.mxu0 %v4604
    %v4900 = vpop.f32.mrf.mxu0
    %v4901 = vadd.f32 0.0, %v4900
    %v4902 = vpop.f32.mrf.mxu0
    %v4903 = vpop.f32.mrf.mxu0
    %v4904 = vadd.f32 0.0, %v4903
    %v4905 = vpop.f32.mrf.mxu0
    %4906 = vmatprep.mubr.bf16.mxu0 0
    %4907 = vmatmul.mubr.bf16.gmra.mxu0 %v4607
    %v4908 = vpop.f32.mrf.mxu0
    %v4909 = vadd.f32 0.0, %v4908
    %v4910 = vpop.f32.mrf.mxu0
    %v4911 = vpop.f32.mrf.mxu0
    %v4912 = vadd.f32 0.0, %v4911
    %v4913 = vpop.f32.mrf.mxu0
    %4914 = vmatprep.mubr.bf16.mxu0 0
    %4915 = vmatmul.mubr.bf16.gmra.mxu0 %v4610
    %v4916 = vpop.f32.mrf.mxu0
    %v4917 = vadd.f32 0.0, %v4916
    %v4918 = vpop.f32.mrf.mxu0
    %v4919 = vpop.f32.mrf.mxu0
    %v4920 = vadd.f32 0.0, %v4919
    %v4921 = vpop.f32.mrf.mxu0
    %4922 = vmatprep.mubr.bf16.mxu0 0
    %4923 = vmatmul.mubr.bf16.gmra.mxu0 %v4613
    %v4924 = vpop.f32.mrf.mxu0
    %v4925 = vadd.f32 0.0, %v4924
    %v4926 = vpop.f32.mrf.mxu0
    %v4927 = vpop.f32.mrf.mxu0
    %v4928 = vadd.f32 0.0, %v4927
    %v4929 = vpop.f32.mrf.mxu0
    %4930 = vmatprep.mubr.bf16.mxu0 0
    %4931 = vmatmul.mubr.bf16.gmra.mxu0 %v4616
    %v4932 = vpop.f32.mrf.mxu0
    %v4933 = vadd.f32 0.0, %v4932
    %v4934 = vpop.f32.mrf.mxu0
    %v4935 = vpop.f32.mrf.mxu0
    %v4936 = vadd.f32 0.0, %v4935
    %v4937 = vpop.f32.mrf.mxu0
    %4938 = vdwg.mxu0
    %v4939 = vadd.f32 %v4321, %v4653
    %v4940 = vadd.f32 %v4322, %v4656
    %v4941 = vadd.f32 %v4323, %v4661
    %v4942 = vadd.f32 %v4324, %v4664
    %v4943 = vadd.f32 %v4325, %v4669
    %v4944 = vadd.f32 %v4326, %v4672
    %v4945 = vadd.f32 %v4327, %v4677
    %v4946 = vadd.f32 %v4328, %v4680
    %v4947 = vadd.f32 %v4329, %v4685
    %v4948 = vadd.f32 %v4330, %v4688
    %v4949 = vadd.f32 %v4331, %v4693
    %v4950 = vadd.f32 %v4332, %v4696
    %v4951 = vadd.f32 %v4333, %v4701
    %v4952 = vadd.f32 %v4334, %v4704
    %v4953 = vadd.f32 %v4335, %v4709
    %v4954 = vadd.f32 %v4336, %v4712
    %v4955 = vadd.f32 %v4337, %v4717
    %v4956 = vadd.f32 %v4338, %v4720
    %v4957 = vadd.f32 %v4339, %v4725
    %v4958 = vadd.f32 %v4340, %v4728
    %v4959 = vadd.f32 %v4341, %v4733
    %v4960 = vadd.f32 %v4342, %v4736
    %v4961 = vadd.f32 %v4343, %v4741
    %v4962 = vadd.f32 %v4344, %v4744
    %v4963 = vadd.f32 %v4345, %v4749
    %v4964 = vadd.f32 %v4346, %v4752
    %v4965 = vadd.f32 %v4347, %v4757
    %v4966 = vadd.f32 %v4348, %v4760
    %v4967 = vadd.f32 %v4349, %v4765
    %v4968 = vadd.f32 %v4350, %v4768
    %v4969 = vadd.f32 %v4351, %v4773
    %v4970 = vadd.f32 %v4352, %v4776
    %v4971 = vadd.f32 %v4353, %v4781
    %v4972 = vadd.f32 %v4354, %v4784
    %v4973 = vadd.f32 %v4355, %v4789
    %v4974 = vadd.f32 %v4356, %v4792
    %v4975 = vadd.f32 %v4357, %v4797
    %v4976 = vadd.f32 %v4358, %v4800
    %v4977 = vadd.f32 %v4359, %v4805
    %v4978 = vadd.f32 %v4360, %v4808
    %v4979 = vadd.f32 %v4361, %v4813
    %v4980 = vadd.f32 %v4362, %v4816
    %v4981 = vadd.f32 %v4363, %v4821
    %v4982 = vadd.f32 %v4364, %v4824
    %v4983 = vadd.f32 %v4365, %v4829
    %v4984 = vadd.f32 %v4366, %v4832
    %v4985 = vadd.f32 %v4367, %v4837
    %v4986 = vadd.f32 %v4368, %v4840
    %v4987 = vadd.f32 %v4369, %v4845
    %v4988 = vadd.f32 %v4370, %v4848
    %v4989 = vadd.f32 %v4371, %v4853
    %v4990 = vadd.f32 %v4372, %v4856
    %v4991 = vadd.f32 %v4373, %v4861
    %v4992 = vadd.f32 %v4374, %v4864
    %v4993 = vadd.f32 %v4375, %v4869
    %v4994 = vadd.f32 %v4376, %v4872
    %v4995 = vadd.f32 %v4377, %v4877
    %v4996 = vadd.f32 %v4378, %v4880
    %v4997 = vadd.f32 %v4379, %v4885
    %v4998 = vadd.f32 %v4380, %v4888
    %v4999 = vadd.f32 %v4381, %v4893
    %v5000 = vadd.f32 %v4382, %v4896
    %v5001 = vadd.f32 %v4383, %v4901
    %v5002 = vadd.f32 %v4384, %v4904
    %v5003 = vadd.f32 %v4385, %v4909
    %v5004 = vadd.f32 %v4386, %v4912
    %v5005 = vadd.f32 %v4387, %v4917
    %v5006 = vadd.f32 %v4388, %v4920
    %v5007 = vadd.f32 %v4389, %v4925
    %v5008 = vadd.f32 %v4390, %v4928
    %v5009 = vadd.f32 %v4391, %v4933
    %v5010 = vadd.f32 %v4392, %v4936
    %v5011 = vld [vmem:[%s0 + $0x26] sm:$0xff]
    %v5012 = vld [vmem:[%s0 + $0x2e] sm:$0xff]
    %v5013 = vld [vmem:[%s0 + $0x36] sm:$0xff]
    %v5014 = vld [vmem:[%s0 + $0x3e] sm:$0xff]
    %v5015 = vld [vmem:[%s0 + $0x46] sm:$0xff]
    %v5016 = vld [vmem:[%s0 + $0x4e] sm:$0xff]
    %v5017 = vld [vmem:[%s0 + $0x56] sm:$0xff]
    %v5018 = vld [vmem:[%s0 + $0x5e] sm:$0xff]
    %v5019 = vld [vmem:[%s0 + $0x66] sm:$0xff]
    %v5020 = vld [vmem:[%s0 + $0x6e] sm:$0xff]
    %v5021 = vld [vmem:[%s0 + $0x76] sm:$0xff]
    %v5022 = vld [vmem:[%s0 + $0x7e] sm:$0xff]
    %v5023 = vld [vmem:[%s0 + $0x86] sm:$0xff]
    %v5024 = vld [vmem:[%s0 + $0x8e] sm:$0xff]
    %v5025 = vld [vmem:[%s0 + $0x96] sm:$0xff]
    %v5026 = vld [vmem:[%s0 + $0x9e] sm:$0xff]
    %v5027 = vld [vmem:[%s0 + $0xa6] sm:$0xff]
    %v5028 = vld [vmem:[%s0 + $0xae] sm:$0xff]
    %v5029 = vld [vmem:[%s0 + $0xb6] sm:$0xff]
    %v5030 = vld [vmem:[%s0 + $0xbe] sm:$0xff]
    %v5031 = vld [vmem:[%s0 + $0xc6] sm:$0xff]
    %v5032 = vld [vmem:[%s0 + $0xce] sm:$0xff]
    %v5033 = vld [vmem:[%s0 + $0xd6] sm:$0xff]
    %v5034 = vld [vmem:[%s0 + $0xde] sm:$0xff]
    %v5035 = vld [vmem:[%s0 + $0xe6] sm:$0xff]
    %v5036 = vld [vmem:[%s0 + $0xee] sm:$0xff]
    %v5037 = vld [vmem:[%s0 + $0xf6] sm:$0xff]
    %v5038 = vld [vmem:[%s0 + $0xfe] sm:$0xff]
    %v5039 = vld [vmem:[%s0 + $0x106] sm:$0xff]
    %v5040 = vld [vmem:[%s0 + $0x10e] sm:$0xff]
    %v5041 = vld [vmem:[%s0 + $0x116] sm:$0xff]
    %v5042 = vld [vmem:[%s0 + $0x11e] sm:$0xff]
    %v5043 = vld [vmem:[%s0 + $0x126] sm:$0xff]
    %v5044 = vld [vmem:[%s0 + $0x12e] sm:$0xff]
    %v5045 = vld [vmem:[%s0 + $0x136] sm:$0xff]
    %v5046 = vld [vmem:[%s0 + $0x13e] sm:$0xff]
    %v5047 = vld [vmem:[%s0 + $0x16e] sm:$0xff]
    %v5048 = vld [vmem:[%s0 + $0x176] sm:$0xff]
    %v5049 = vld [vmem:[%s0 + $0x17e] sm:$0xff]
    %v5050 = vld [vmem:[%s0 + $0x186] sm:$0xff]
    %v5051 = vld [vmem:[%s0 + $0x18e] sm:$0xff]
    %v5052 = vld [vmem:[%s0 + $0x196] sm:$0xff]
    %v5053 = vld [vmem:[%s0 + $0x19e] sm:$0xff]
    %v5054 = vld [vmem:[%s0 + $0x1a6] sm:$0xff]
    %v5055 = vld [vmem:[%s0 + $0x1ae] sm:$0xff]
    %v5056 = vld [vmem:[%s0 + $0x1b6] sm:$0xff]
    %v5057 = vld [vmem:[%s0 + $0x1be] sm:$0xff]
    %v5058 = vld [vmem:[%s0 + $0x1c6] sm:$0xff]
    %v5059 = vld [vmem:[%s0 + $0x1ce] sm:$0xff]
    %v5060 = vld [vmem:[%s0 + $0x1d6] sm:$0xff]
    %v5061 = vld [vmem:[%s0 + $0x1de] sm:$0xff]
    %v5062 = vld [vmem:[%s0 + $0x1e6] sm:$0xff]
    %v5063 = vld [vmem:[%s0 + $0x1ee] sm:$0xff]
    %v5064 = vld [vmem:[%s0 + $0x1f6] sm:$0xff]
    %v5065 = vld [vmem:[%s0 + $0x1fe] sm:$0xff]
    %v5066 = vld [vmem:[%s0 + $0x206] sm:$0xff]
    %v5067 = vld [vmem:[%s0 + $0x20e] sm:$0xff]
    %v5068 = vld [vmem:[%s0 + $0x216] sm:$0xff]
    %v5069 = vld [vmem:[%s0 + $0x21e] sm:$0xff]
    %v5070 = vld [vmem:[%s0 + $0x226] sm:$0xff]
    %v5071 = vld [vmem:[%s0 + $0x22e] sm:$0xff]
    %v5072 = vld [vmem:[%s0 + $0x236] sm:$0xff]
    %v5073 = vld [vmem:[%s0 + $0x23e] sm:$0xff]
    %v5074 = vld [vmem:[%s0 + $0x246] sm:$0xff]
    %v5075 = vld [vmem:[%s0 + $0x24e] sm:$0xff]
    %v5076 = vld [vmem:[%s0 + $0x256] sm:$0xff]
    %v5077 = vld [vmem:[%s0 + $0x25e] sm:$0xff]
    %v5078 = vld [vmem:[%s0 + $0x266] sm:$0xff]
    %v5079 = vld [vmem:[%s0 + $0x26e] sm:$0xff]
    %v5080 = vld [vmem:[%s0 + $0x276] sm:$0xff]
    %v5081 = vld [vmem:[%s0 + $0x27e] sm:$0xff]
    %v5082 = vld [vmem:[%s0 + $0x286] sm:$0xff]
    %v5083 = vpack.c.bf16 %v5012, %v5011
    %v5084 = vpack.c.bf16 %v5014, %v5013
    %v5085 = vpack.c.bf16 %v5016, %v5015
    %v5086 = vpack.c.bf16 %v5018, %v5017
    %v5087 = vpack.c.bf16 %v5020, %v5019
    %v5088 = vpack.c.bf16 %v5022, %v5021
    %v5089 = vpack.c.bf16 %v5024, %v5023
    %v5090 = vpack.c.bf16 %v5026, %v5025
    %v5091 = vpack.c.bf16 %v5028, %v5027
    %v5092 = vpack.c.bf16 %v5030, %v5029
    %v5093 = vpack.c.bf16 %v5032, %v5031
    %v5094 = vpack.c.bf16 %v5034, %v5033
    %v5095 = vpack.c.bf16 %v5036, %v5035
    %v5096 = vpack.c.bf16 %v5038, %v5037
    %v5097 = vpack.c.bf16 %v5040, %v5039
    %v5098 = vpack.c.bf16 %v5042, %v5041
    %v5099 = vpack.c.bf16 %v5044, %v5043
    %v5100 = vpack.c.bf16 %v5046, %v5045
    %v5101 = vpack.c.bf16 %v5048, %v5047
    %v5102 = vpack.c.bf16 %v5050, %v5049
    %v5103 = vpack.c.bf16 %v5052, %v5051
    %v5104 = vpack.c.bf16 %v5054, %v5053
    %v5105 = vpack.c.bf16 %v5056, %v5055
    %v5106 = vpack.c.bf16 %v5058, %v5057
    %v5107 = vpack.c.bf16 %v5060, %v5059
    %v5108 = vpack.c.bf16 %v5062, %v5061
    %v5109 = vpack.c.bf16 %v5064, %v5063
    %v5110 = vpack.c.bf16 %v5066, %v5065
    %v5111 = vpack.c.bf16 %v5068, %v5067
    %v5112 = vpack.c.bf16 %v5070, %v5069
    %v5113 = vpack.c.bf16 %v5072, %v5071
    %v5114 = vpack.c.bf16 %v5074, %v5073
    %v5115 = vpack.c.bf16 %v5076, %v5075
    %v5116 = vpack.c.bf16 %v5078, %v5077
    %v5117 = vpack.c.bf16 %v5080, %v5079
    %v5118 = vpack.c.bf16 %v5082, %v5081
    %s5119 = scalar_lea.vmem %s1, 64
    %v5120 = vld [vmem:[%s5119] sm:$0xf]
    %v5121 = vld [vmem:[%s5119 + $0x4] sm:$0xf]
    %v5124 = vunpack.c.l.b16 %v5120
    %v5125 = vunpack.c.l.b16 %v5121
    %v5126 = vpack.c.b16 %v5125, %v5124
    %v5129 = vsel %vm16, %v5083, 0
    %v5132 = vsel %vm16, %v5084, 0
    %v5135 = vsel %vm16, %v5085, 0
    %v5138 = vsel %vm16, %v5086, 0
    %v5141 = vsel %vm16, %v5087, 0
    %v5144 = vsel %vm16, %v5088, 0
    %v5147 = vsel %vm16, %v5089, 0
    %v5150 = vsel %vm16, %v5090, 0
    %v5153 = vsel %vm16, %v5091, 0
    %v5156 = vsel %vm16, %v5092, 0
    %v5159 = vsel %vm16, %v5093, 0
    %v5162 = vsel %vm16, %v5094, 0
    %v5165 = vsel %vm16, %v5095, 0
    %v5168 = vsel %vm16, %v5096, 0
    %v5171 = vsel %vm16, %v5097, 0
    %v5174 = vsel %vm16, %v5098, 0
    %v5177 = vsel %vm16, %v5099, 0
    %v5180 = vsel %vm16, %v5100, 0
    %v5183 = vsel %vm16, %v5101, 0
    %v5186 = vsel %vm16, %v5102, 0
    %v5189 = vsel %vm16, %v5103, 0
    %v5192 = vsel %vm16, %v5104, 0
    %v5195 = vsel %vm16, %v5105, 0
    %v5198 = vsel %vm16, %v5106, 0
    %v5201 = vsel %vm16, %v5107, 0
    %v5204 = vsel %vm16, %v5108, 0
    %v5207 = vsel %vm16, %v5109, 0
    %v5210 = vsel %vm16, %v5110, 0
    %v5213 = vsel %vm16, %v5111, 0
    %v5216 = vsel %vm16, %v5112, 0
    %v5219 = vsel %vm16, %v5113, 0
    %v5222 = vsel %vm16, %v5114, 0
    %v5225 = vsel %vm16, %v5115, 0
    %v5228 = vsel %vm16, %v5116, 0
    %v5231 = vsel %vm16, %v5117, 0
    %v5234 = vsel %vm16, %v5118, 0
    %5236 = vmatprep.subr.bf16.mxu0 0
    %5237 = vmatpush1.bf16.msra.mxu0 0
    %5238 = vmatprep.subr.bf16.mxu0 0
    %5239 = vmatpush1.bf16.msra.mxu0 0
    %5240 = vmatprep.subr.bf16.mxu0 0
    %5241 = vmatpush1.bf16.msra.mxu0 0
    %5242 = vmatprep.subr.bf16.mxu0 0
    %5243 = vmatpush1.bf16.msra.mxu0 0
    %5244 = vmatprep.subr.bf16.mxu0 0
    %5245 = vmatpush1.bf16.msra.mxu0 0
    %5246 = vmatprep.subr.bf16.mxu0 0
    %5247 = vmatpush1.bf16.msra.mxu0 0
    %5248 = vmatprep.subr.bf16.mxu0 0
    %5249 = vmatpush1.bf16.msra.mxu0 0
    %5250 = vmatprep.subr.bf16.mxu0 0
    %5251 = vmatpush1.bf16.msra.mxu0 %v5126
    %5252 = vmatprep.subr.bf16.mxu0 0
    %5253 = vmatpush2.bf16.msra.mxu0 0
    %5254 = vmatprep.subr.bf16.mxu0 0
    %5255 = vmatpush2.bf16.msra.mxu0 0
    %5256 = vmatprep.subr.bf16.mxu0 0
    %5257 = vmatpush2.bf16.msra.mxu0 0
    %5258 = vmatprep.subr.bf16.mxu0 0
    %5259 = vmatpush2.bf16.msra.mxu0 0
    %5260 = vmatprep.subr.bf16.mxu0 0
    %5261 = vmatpush2.bf16.msra.mxu0 0
    %5262 = vmatprep.subr.bf16.mxu0 0
    %5263 = vmatpush2.bf16.msra.mxu0 0
    %5264 = vmatprep.subr.bf16.mxu0 0
    %5265 = vmatpush2.bf16.msra.mxu0 0
    %5266 = vmatprep.subr.bf16.mxu0 0
    %5267 = vmatpush2.bf16.msra.mxu0 0
    %5268 = vmatprep.mubr.bf16.mxu0 0
    %5269 = vmatmul.mubr.bf16.gmra.mxu0 %v5129
    %v5270 = vpop.f32.mrf.mxu0
    %v5271 = vadd.f32 0.0, %v5270
    %v5272 = vpop.f32.mrf.mxu0
    %v5273 = vpop.f32.mrf.mxu0
    %v5274 = vadd.f32 0.0, %v5273
    %v5275 = vpop.f32.mrf.mxu0
    %5276 = vmatprep.mubr.bf16.mxu0 0
    %5277 = vmatmul.mubr.bf16.gmra.mxu0 %v5132
    %v5278 = vpop.f32.mrf.mxu0
    %v5279 = vadd.f32 0.0, %v5278
    %v5280 = vpop.f32.mrf.mxu0
    %v5281 = vpop.f32.mrf.mxu0
    %v5282 = vadd.f32 0.0, %v5281
    %v5283 = vpop.f32.mrf.mxu0
    %5284 = vmatprep.mubr.bf16.mxu0 0
    %5285 = vmatmul.mubr.bf16.gmra.mxu0 %v5135
    %v5286 = vpop.f32.mrf.mxu0
    %v5287 = vadd.f32 0.0, %v5286
    %v5288 = vpop.f32.mrf.mxu0
    %v5289 = vpop.f32.mrf.mxu0
    %v5290 = vadd.f32 0.0, %v5289
    %v5291 = vpop.f32.mrf.mxu0
    %5292 = vmatprep.mubr.bf16.mxu0 0
    %5293 = vmatmul.mubr.bf16.gmra.mxu0 %v5138
    %v5294 = vpop.f32.mrf.mxu0
    %v5295 = vadd.f32 0.0, %v5294
    %v5296 = vpop.f32.mrf.mxu0
    %v5297 = vpop.f32.mrf.mxu0
    %v5298 = vadd.f32 0.0, %v5297
    %v5299 = vpop.f32.mrf.mxu0
    %5300 = vmatprep.mubr.bf16.mxu0 0
    %5301 = vmatmul.mubr.bf16.gmra.mxu0 %v5141
    %v5302 = vpop.f32.mrf.mxu0
    %v5303 = vadd.f32 0.0, %v5302
    %v5304 = vpop.f32.mrf.mxu0
    %v5305 = vpop.f32.mrf.mxu0
    %v5306 = vadd.f32 0.0, %v5305
    %v5307 = vpop.f32.mrf.mxu0
    %5308 = vmatprep.mubr.bf16.mxu0 0
    %5309 = vmatmul.mubr.bf16.gmra.mxu0 %v5144
    %v5310 = vpop.f32.mrf.mxu0
    %v5311 = vadd.f32 0.0, %v5310
    %v5312 = vpop.f32.mrf.mxu0
    %v5313 = vpop.f32.mrf.mxu0
    %v5314 = vadd.f32 0.0, %v5313
    %v5315 = vpop.f32.mrf.mxu0
    %5316 = vmatprep.mubr.bf16.mxu0 0
    %5317 = vmatmul.mubr.bf16.gmra.mxu0 %v5147
    %v5318 = vpop.f32.mrf.mxu0
    %v5319 = vadd.f32 0.0, %v5318
    %v5320 = vpop.f32.mrf.mxu0
    %v5321 = vpop.f32.mrf.mxu0
    %v5322 = vadd.f32 0.0, %v5321
    %v5323 = vpop.f32.mrf.mxu0
    %5324 = vmatprep.mubr.bf16.mxu0 0
    %5325 = vmatmul.mubr.bf16.gmra.mxu0 %v5150
    %v5326 = vpop.f32.mrf.mxu0
    %v5327 = vadd.f32 0.0, %v5326
    %v5328 = vpop.f32.mrf.mxu0
    %v5329 = vpop.f32.mrf.mxu0
    %v5330 = vadd.f32 0.0, %v5329
    %v5331 = vpop.f32.mrf.mxu0
    %5332 = vmatprep.mubr.bf16.mxu0 0
    %5333 = vmatmul.mubr.bf16.gmra.mxu0 %v5153
    %v5334 = vpop.f32.mrf.mxu0
    %v5335 = vadd.f32 0.0, %v5334
    %v5336 = vpop.f32.mrf.mxu0
    %v5337 = vpop.f32.mrf.mxu0
    %v5338 = vadd.f32 0.0, %v5337
    %v5339 = vpop.f32.mrf.mxu0
    %5340 = vmatprep.mubr.bf16.mxu0 0
    %5341 = vmatmul.mubr.bf16.gmra.mxu0 %v5156
    %v5342 = vpop.f32.mrf.mxu0
    %v5343 = vadd.f32 0.0, %v5342
    %v5344 = vpop.f32.mrf.mxu0
    %v5345 = vpop.f32.mrf.mxu0
    %v5346 = vadd.f32 0.0, %v5345
    %v5347 = vpop.f32.mrf.mxu0
    %5348 = vmatprep.mubr.bf16.mxu0 0
    %5349 = vmatmul.mubr.bf16.gmra.mxu0 %v5159
    %v5350 = vpop.f32.mrf.mxu0
    %v5351 = vadd.f32 0.0, %v5350
    %v5352 = vpop.f32.mrf.mxu0
    %v5353 = vpop.f32.mrf.mxu0
    %v5354 = vadd.f32 0.0, %v5353
    %v5355 = vpop.f32.mrf.mxu0
    %5356 = vmatprep.mubr.bf16.mxu0 0
    %5357 = vmatmul.mubr.bf16.gmra.mxu0 %v5162
    %v5358 = vpop.f32.mrf.mxu0
    %v5359 = vadd.f32 0.0, %v5358
    %v5360 = vpop.f32.mrf.mxu0
    %v5361 = vpop.f32.mrf.mxu0
    %v5362 = vadd.f32 0.0, %v5361
    %v5363 = vpop.f32.mrf.mxu0
    %5364 = vmatprep.mubr.bf16.mxu0 0
    %5365 = vmatmul.mubr.bf16.gmra.mxu0 %v5165
    %v5366 = vpop.f32.mrf.mxu0
    %v5367 = vadd.f32 0.0, %v5366
    %v5368 = vpop.f32.mrf.mxu0
    %v5369 = vpop.f32.mrf.mxu0
    %v5370 = vadd.f32 0.0, %v5369
    %v5371 = vpop.f32.mrf.mxu0
    %5372 = vmatprep.mubr.bf16.mxu0 0
    %5373 = vmatmul.mubr.bf16.gmra.mxu0 %v5168
    %v5374 = vpop.f32.mrf.mxu0
    %v5375 = vadd.f32 0.0, %v5374
    %v5376 = vpop.f32.mrf.mxu0
    %v5377 = vpop.f32.mrf.mxu0
    %v5378 = vadd.f32 0.0, %v5377
    %v5379 = vpop.f32.mrf.mxu0
    %5380 = vmatprep.mubr.bf16.mxu0 0
    %5381 = vmatmul.mubr.bf16.gmra.mxu0 %v5171
    %v5382 = vpop.f32.mrf.mxu0
    %v5383 = vadd.f32 0.0, %v5382
    %v5384 = vpop.f32.mrf.mxu0
    %v5385 = vpop.f32.mrf.mxu0
    %v5386 = vadd.f32 0.0, %v5385
    %v5387 = vpop.f32.mrf.mxu0
    %5388 = vmatprep.mubr.bf16.mxu0 0
    %5389 = vmatmul.mubr.bf16.gmra.mxu0 %v5174
    %v5390 = vpop.f32.mrf.mxu0
    %v5391 = vadd.f32 0.0, %v5390
    %v5392 = vpop.f32.mrf.mxu0
    %v5393 = vpop.f32.mrf.mxu0
    %v5394 = vadd.f32 0.0, %v5393
    %v5395 = vpop.f32.mrf.mxu0
    %5396 = vmatprep.mubr.bf16.mxu0 0
    %5397 = vmatmul.mubr.bf16.gmra.mxu0 %v5177
    %v5398 = vpop.f32.mrf.mxu0
    %v5399 = vadd.f32 0.0, %v5398
    %v5400 = vpop.f32.mrf.mxu0
    %v5401 = vpop.f32.mrf.mxu0
    %v5402 = vadd.f32 0.0, %v5401
    %v5403 = vpop.f32.mrf.mxu0
    %5404 = vmatprep.mubr.bf16.mxu0 0
    %5405 = vmatmul.mubr.bf16.gmra.mxu0 %v5180
    %v5406 = vpop.f32.mrf.mxu0
    %v5407 = vadd.f32 0.0, %v5406
    %v5408 = vpop.f32.mrf.mxu0
    %v5409 = vpop.f32.mrf.mxu0
    %v5410 = vadd.f32 0.0, %v5409
    %v5411 = vpop.f32.mrf.mxu0
    %5412 = vmatprep.mubr.bf16.mxu0 0
    %5413 = vmatmul.mubr.bf16.gmra.mxu0 %v5183
    %v5414 = vpop.f32.mrf.mxu0
    %v5415 = vadd.f32 0.0, %v5414
    %v5416 = vpop.f32.mrf.mxu0
    %v5417 = vpop.f32.mrf.mxu0
    %v5418 = vadd.f32 0.0, %v5417
    %v5419 = vpop.f32.mrf.mxu0
    %5420 = vmatprep.mubr.bf16.mxu0 0
    %5421 = vmatmul.mubr.bf16.gmra.mxu0 %v5186
    %v5422 = vpop.f32.mrf.mxu0
    %v5423 = vadd.f32 0.0, %v5422
    %v5424 = vpop.f32.mrf.mxu0
    %v5425 = vpop.f32.mrf.mxu0
    %v5426 = vadd.f32 0.0, %v5425
    %v5427 = vpop.f32.mrf.mxu0
    %5428 = vmatprep.mubr.bf16.mxu0 0
    %5429 = vmatmul.mubr.bf16.gmra.mxu0 %v5189
    %v5430 = vpop.f32.mrf.mxu0
    %v5431 = vadd.f32 0.0, %v5430
    %v5432 = vpop.f32.mrf.mxu0
    %v5433 = vpop.f32.mrf.mxu0
    %v5434 = vadd.f32 0.0, %v5433
    %v5435 = vpop.f32.mrf.mxu0
    %5436 = vmatprep.mubr.bf16.mxu0 0
    %5437 = vmatmul.mubr.bf16.gmra.mxu0 %v5192
    %v5438 = vpop.f32.mrf.mxu0
    %v5439 = vadd.f32 0.0, %v5438
    %v5440 = vpop.f32.mrf.mxu0
    %v5441 = vpop.f32.mrf.mxu0
    %v5442 = vadd.f32 0.0, %v5441
    %v5443 = vpop.f32.mrf.mxu0
    %5444 = vmatprep.mubr.bf16.mxu0 0
    %5445 = vmatmul.mubr.bf16.gmra.mxu0 %v5195
    %v5446 = vpop.f32.mrf.mxu0
    %v5447 = vadd.f32 0.0, %v5446
    %v5448 = vpop.f32.mrf.mxu0
    %v5449 = vpop.f32.mrf.mxu0
    %v5450 = vadd.f32 0.0, %v5449
    %v5451 = vpop.f32.mrf.mxu0
    %5452 = vmatprep.mubr.bf16.mxu0 0
    %5453 = vmatmul.mubr.bf16.gmra.mxu0 %v5198
    %v5454 = vpop.f32.mrf.mxu0
    %v5455 = vadd.f32 0.0, %v5454
    %v5456 = vpop.f32.mrf.mxu0
    %v5457 = vpop.f32.mrf.mxu0
    %v5458 = vadd.f32 0.0, %v5457
    %v5459 = vpop.f32.mrf.mxu0
    %5460 = vmatprep.mubr.bf16.mxu0 0
    %5461 = vmatmul.mubr.bf16.gmra.mxu0 %v5201
    %v5462 = vpop.f32.mrf.mxu0
    %v5463 = vadd.f32 0.0, %v5462
    %v5464 = vpop.f32.mrf.mxu0
    %v5465 = vpop.f32.mrf.mxu0
    %v5466 = vadd.f32 0.0, %v5465
    %v5467 = vpop.f32.mrf.mxu0
    %5468 = vmatprep.mubr.bf16.mxu0 0
    %5469 = vmatmul.mubr.bf16.gmra.mxu0 %v5204
    %v5470 = vpop.f32.mrf.mxu0
    %v5471 = vadd.f32 0.0, %v5470
    %v5472 = vpop.f32.mrf.mxu0
    %v5473 = vpop.f32.mrf.mxu0
    %v5474 = vadd.f32 0.0, %v5473
    %v5475 = vpop.f32.mrf.mxu0
    %5476 = vmatprep.mubr.bf16.mxu0 0
    %5477 = vmatmul.mubr.bf16.gmra.mxu0 %v5207
    %v5478 = vpop.f32.mrf.mxu0
    %v5479 = vadd.f32 0.0, %v5478
    %v5480 = vpop.f32.mrf.mxu0
    %v5481 = vpop.f32.mrf.mxu0
    %v5482 = vadd.f32 0.0, %v5481
    %v5483 = vpop.f32.mrf.mxu0
    %5484 = vmatprep.mubr.bf16.mxu0 0
    %5485 = vmatmul.mubr.bf16.gmra.mxu0 %v5210
    %v5486 = vpop.f32.mrf.mxu0
    %v5487 = vadd.f32 0.0, %v5486
    %v5488 = vpop.f32.mrf.mxu0
    %v5489 = vpop.f32.mrf.mxu0
    %v5490 = vadd.f32 0.0, %v5489
    %v5491 = vpop.f32.mrf.mxu0
    %5492 = vmatprep.mubr.bf16.mxu0 0
    %5493 = vmatmul.mubr.bf16.gmra.mxu0 %v5213
    %v5494 = vpop.f32.mrf.mxu0
    %v5495 = vadd.f32 0.0, %v5494
    %v5496 = vpop.f32.mrf.mxu0
    %v5497 = vpop.f32.mrf.mxu0
    %v5498 = vadd.f32 0.0, %v5497
    %v5499 = vpop.f32.mrf.mxu0
    %5500 = vmatprep.mubr.bf16.mxu0 0
    %5501 = vmatmul.mubr.bf16.gmra.mxu0 %v5216
    %v5502 = vpop.f32.mrf.mxu0
    %v5503 = vadd.f32 0.0, %v5502
    %v5504 = vpop.f32.mrf.mxu0
    %v5505 = vpop.f32.mrf.mxu0
    %v5506 = vadd.f32 0.0, %v5505
    %v5507 = vpop.f32.mrf.mxu0
    %5508 = vmatprep.mubr.bf16.mxu0 0
    %5509 = vmatmul.mubr.bf16.gmra.mxu0 %v5219
    %v5510 = vpop.f32.mrf.mxu0
    %v5511 = vadd.f32 0.0, %v5510
    %v5512 = vpop.f32.mrf.mxu0
    %v5513 = vpop.f32.mrf.mxu0
    %v5514 = vadd.f32 0.0, %v5513
    %v5515 = vpop.f32.mrf.mxu0
    %5516 = vmatprep.mubr.bf16.mxu0 0
    %5517 = vmatmul.mubr.bf16.gmra.mxu0 %v5222
    %v5518 = vpop.f32.mrf.mxu0
    %v5519 = vadd.f32 0.0, %v5518
    %v5520 = vpop.f32.mrf.mxu0
    %v5521 = vpop.f32.mrf.mxu0
    %v5522 = vadd.f32 0.0, %v5521
    %v5523 = vpop.f32.mrf.mxu0
    %5524 = vmatprep.mubr.bf16.mxu0 0
    %5525 = vmatmul.mubr.bf16.gmra.mxu0 %v5225
    %v5526 = vpop.f32.mrf.mxu0
    %v5527 = vadd.f32 0.0, %v5526
    %v5528 = vpop.f32.mrf.mxu0
    %v5529 = vpop.f32.mrf.mxu0
    %v5530 = vadd.f32 0.0, %v5529
    %v5531 = vpop.f32.mrf.mxu0
    %5532 = vmatprep.mubr.bf16.mxu0 0
    %5533 = vmatmul.mubr.bf16.gmra.mxu0 %v5228
    %v5534 = vpop.f32.mrf.mxu0
    %v5535 = vadd.f32 0.0, %v5534
    %v5536 = vpop.f32.mrf.mxu0
    %v5537 = vpop.f32.mrf.mxu0
    %v5538 = vadd.f32 0.0, %v5537
    %v5539 = vpop.f32.mrf.mxu0
    %5540 = vmatprep.mubr.bf16.mxu0 0
    %5541 = vmatmul.mubr.bf16.gmra.mxu0 %v5231
    %v5542 = vpop.f32.mrf.mxu0
    %v5543 = vadd.f32 0.0, %v5542
    %v5544 = vpop.f32.mrf.mxu0
    %v5545 = vpop.f32.mrf.mxu0
    %v5546 = vadd.f32 0.0, %v5545
    %v5547 = vpop.f32.mrf.mxu0
    %5548 = vmatprep.mubr.bf16.mxu0 0
    %5549 = vmatmul.mubr.bf16.gmra.mxu0 %v5234
    %v5550 = vpop.f32.mrf.mxu0
    %v5551 = vadd.f32 0.0, %v5550
    %v5552 = vpop.f32.mrf.mxu0
    %v5553 = vpop.f32.mrf.mxu0
    %v5554 = vadd.f32 0.0, %v5553
    %v5555 = vpop.f32.mrf.mxu0
    %5556 = vdwg.mxu0
    %v5557 = vadd.f32 %v4939, %v5271
    %v5558 = vadd.f32 %v4940, %v5274
    %v5559 = vadd.f32 %v4941, %v5279
    %v5560 = vadd.f32 %v4942, %v5282
    %v5561 = vadd.f32 %v4943, %v5287
    %v5562 = vadd.f32 %v4944, %v5290
    %v5563 = vadd.f32 %v4945, %v5295
    %v5564 = vadd.f32 %v4946, %v5298
    %v5565 = vadd.f32 %v4947, %v5303
    %v5566 = vadd.f32 %v4948, %v5306
    %v5567 = vadd.f32 %v4949, %v5311
    %v5568 = vadd.f32 %v4950, %v5314
    %v5569 = vadd.f32 %v4951, %v5319
    %v5570 = vadd.f32 %v4952, %v5322
    %v5571 = vadd.f32 %v4953, %v5327
    %v5572 = vadd.f32 %v4954, %v5330
    %v5573 = vadd.f32 %v4955, %v5335
    %v5574 = vadd.f32 %v4956, %v5338
    %v5575 = vadd.f32 %v4957, %v5343
    %v5576 = vadd.f32 %v4958, %v5346
    %v5577 = vadd.f32 %v4959, %v5351
    %v5578 = vadd.f32 %v4960, %v5354
    %v5579 = vadd.f32 %v4961, %v5359
    %v5580 = vadd.f32 %v4962, %v5362
    %v5581 = vadd.f32 %v4963, %v5367
    %v5582 = vadd.f32 %v4964, %v5370
    %v5583 = vadd.f32 %v4965, %v5375
    %v5584 = vadd.f32 %v4966, %v5378
    %v5585 = vadd.f32 %v4967, %v5383
    %v5586 = vadd.f32 %v4968, %v5386
    %v5587 = vadd.f32 %v4969, %v5391
    %v5588 = vadd.f32 %v4970, %v5394
    %v5589 = vadd.f32 %v4971, %v5399
    %v5590 = vadd.f32 %v4972, %v5402
    %v5591 = vadd.f32 %v4973, %v5407
    %v5592 = vadd.f32 %v4974, %v5410
    %v5593 = vadd.f32 %v4975, %v5415
    %v5594 = vadd.f32 %v4976, %v5418
    %v5595 = vadd.f32 %v4977, %v5423
    %v5596 = vadd.f32 %v4978, %v5426
    %v5597 = vadd.f32 %v4979, %v5431
    %v5598 = vadd.f32 %v4980, %v5434
    %v5599 = vadd.f32 %v4981, %v5439
    %v5600 = vadd.f32 %v4982, %v5442
    %v5601 = vadd.f32 %v4983, %v5447
    %v5602 = vadd.f32 %v4984, %v5450
    %v5603 = vadd.f32 %v4985, %v5455
    %v5604 = vadd.f32 %v4986, %v5458
    %v5605 = vadd.f32 %v4987, %v5463
    %v5606 = vadd.f32 %v4988, %v5466
    %v5607 = vadd.f32 %v4989, %v5471
    %v5608 = vadd.f32 %v4990, %v5474
    %v5609 = vadd.f32 %v4991, %v5479
    %v5610 = vadd.f32 %v4992, %v5482
    %v5611 = vadd.f32 %v4993, %v5487
    %v5612 = vadd.f32 %v4994, %v5490
    %v5613 = vadd.f32 %v4995, %v5495
    %v5614 = vadd.f32 %v4996, %v5498
    %v5615 = vadd.f32 %v4997, %v5503
    %v5616 = vadd.f32 %v4998, %v5506
    %v5617 = vadd.f32 %v4999, %v5511
    %v5618 = vadd.f32 %v5000, %v5514
    %v5619 = vadd.f32 %v5001, %v5519
    %v5620 = vadd.f32 %v5002, %v5522
    %v5621 = vadd.f32 %v5003, %v5527
    %v5622 = vadd.f32 %v5004, %v5530
    %v5623 = vadd.f32 %v5005, %v5535
    %v5624 = vadd.f32 %v5006, %v5538
    %v5625 = vadd.f32 %v5007, %v5543
    %v5626 = vadd.f32 %v5008, %v5546
    %v5627 = vadd.f32 %v5009, %v5551
    %v5628 = vadd.f32 %v5010, %v5554
    %v5629 = vmax.f32 %v5557, 0.0
    %v5630 = vmax.f32 %v5558, 0.0
    %v5631 = vmax.f32 %v5559, 0.0
    %v5632 = vmax.f32 %v5560, 0.0
    %v5633 = vmax.f32 %v5561, 0.0
    %v5634 = vmax.f32 %v5562, 0.0
    %v5635 = vmax.f32 %v5563, 0.0
    %v5636 = vmax.f32 %v5564, 0.0
    %v5637 = vmax.f32 %v5565, 0.0
    %v5638 = vmax.f32 %v5566, 0.0
    %v5639 = vmax.f32 %v5567, 0.0
    %v5640 = vmax.f32 %v5568, 0.0
    %v5641 = vmax.f32 %v5569, 0.0
    %v5642 = vmax.f32 %v5570, 0.0
    %v5643 = vmax.f32 %v5571, 0.0
    %v5644 = vmax.f32 %v5572, 0.0
    %v5645 = vmax.f32 %v5573, 0.0
    %v5646 = vmax.f32 %v5574, 0.0
    %v5647 = vmax.f32 %v5575, 0.0
    %v5648 = vmax.f32 %v5576, 0.0
    %v5649 = vmax.f32 %v5577, 0.0
    %v5650 = vmax.f32 %v5578, 0.0
    %v5651 = vmax.f32 %v5579, 0.0
    %v5652 = vmax.f32 %v5580, 0.0
    %v5653 = vmax.f32 %v5581, 0.0
    %v5654 = vmax.f32 %v5582, 0.0
    %v5655 = vmax.f32 %v5583, 0.0
    %v5656 = vmax.f32 %v5584, 0.0
    %v5657 = vmax.f32 %v5585, 0.0
    %v5658 = vmax.f32 %v5586, 0.0
    %v5659 = vmax.f32 %v5587, 0.0
    %v5660 = vmax.f32 %v5588, 0.0
    %v5661 = vmax.f32 %v5589, 0.0
    %v5662 = vmax.f32 %v5590, 0.0
    %v5663 = vmax.f32 %v5591, 0.0
    %v5664 = vmax.f32 %v5592, 0.0
    %v5665 = vmax.f32 %v5593, 0.0
    %v5666 = vmax.f32 %v5594, 0.0
    %v5667 = vmax.f32 %v5595, 0.0
    %v5668 = vmax.f32 %v5596, 0.0
    %v5669 = vmax.f32 %v5597, 0.0
    %v5670 = vmax.f32 %v5598, 0.0
    %v5671 = vmax.f32 %v5599, 0.0
    %v5672 = vmax.f32 %v5600, 0.0
    %v5673 = vmax.f32 %v5601, 0.0
    %v5674 = vmax.f32 %v5602, 0.0
    %v5675 = vmax.f32 %v5603, 0.0
    %v5676 = vmax.f32 %v5604, 0.0
    %v5677 = vmax.f32 %v5605, 0.0
    %v5678 = vmax.f32 %v5606, 0.0
    %v5679 = vmax.f32 %v5607, 0.0
    %v5680 = vmax.f32 %v5608, 0.0
    %v5681 = vmax.f32 %v5609, 0.0
    %v5682 = vmax.f32 %v5610, 0.0
    %v5683 = vmax.f32 %v5611, 0.0
    %v5684 = vmax.f32 %v5612, 0.0
    %v5685 = vmax.f32 %v5613, 0.0
    %v5686 = vmax.f32 %v5614, 0.0
    %v5687 = vmax.f32 %v5615, 0.0
    %v5688 = vmax.f32 %v5616, 0.0
    %v5689 = vmax.f32 %v5617, 0.0
    %v5690 = vmax.f32 %v5618, 0.0
    %v5691 = vmax.f32 %v5619, 0.0
    %v5692 = vmax.f32 %v5620, 0.0
    %v5693 = vmax.f32 %v5621, 0.0
    %v5694 = vmax.f32 %v5622, 0.0
    %v5695 = vmax.f32 %v5623, 0.0
    %v5696 = vmax.f32 %v5624, 0.0
    %v5697 = vmax.f32 %v5625, 0.0
    %v5698 = vmax.f32 %v5626, 0.0
    %v5699 = vmax.f32 %v5627, 0.0
    %v5700 = vmax.f32 %v5628, 0.0
    %5701 = vst.msk [vmem:[#allocation5] sm:$0xff] %vm16, %v5629
    %5702 = vst.msk [vmem:[#allocation5 + $0x8] sm:$0xff] %vm16, %v5630
    %5703 = vst.msk [vmem:[#allocation5 + $0x10] sm:$0xff] %vm16, %v5631
    %5704 = vst.msk [vmem:[#allocation5 + $0x18] sm:$0xff] %vm16, %v5632
    %5705 = vst.msk [vmem:[#allocation5 + $0x20] sm:$0xff] %vm16, %v5633
    %5706 = vst.msk [vmem:[#allocation5 + $0x28] sm:$0xff] %vm16, %v5634
    %5707 = vst.msk [vmem:[#allocation5 + $0x30] sm:$0xff] %vm16, %v5635
    %5708 = vst.msk [vmem:[#allocation5 + $0x38] sm:$0xff] %vm16, %v5636
    %5709 = vst.msk [vmem:[#allocation5 + $0x40] sm:$0xff] %vm16, %v5637
    %5710 = vst.msk [vmem:[#allocation5 + $0x48] sm:$0xff] %vm16, %v5638
    %5711 = vst.msk [vmem:[#allocation5 + $0x50] sm:$0xff] %vm16, %v5639
    %5712 = vst.msk [vmem:[#allocation5 + $0x58] sm:$0xff] %vm16, %v5640
    %5713 = vst.msk [vmem:[#allocation5 + $0x60] sm:$0xff] %vm16, %v5641
    %5714 = vst.msk [vmem:[#allocation5 + $0x68] sm:$0xff] %vm16, %v5642
    %5715 = vst.msk [vmem:[#allocation5 + $0x70] sm:$0xff] %vm16, %v5643
    %5716 = vst.msk [vmem:[#allocation5 + $0x78] sm:$0xff] %vm16, %v5644
    %5717 = vst.msk [vmem:[#allocation5 + $0x80] sm:$0xff] %vm16, %v5645
    %5718 = vst.msk [vmem:[#allocation5 + $0x88] sm:$0xff] %vm16, %v5646
    %5719 = vst.msk [vmem:[#allocation5 + $0x90] sm:$0xff] %vm16, %v5647
    %5720 = vst.msk [vmem:[#allocation5 + $0x98] sm:$0xff] %vm16, %v5648
    %5721 = vst.msk [vmem:[#allocation5 + $0xa0] sm:$0xff] %vm16, %v5649
    %5722 = vst.msk [vmem:[#allocation5 + $0xa8] sm:$0xff] %vm16, %v5650
    %5723 = vst.msk [vmem:[#allocation5 + $0xb0] sm:$0xff] %vm16, %v5651
    %5724 = vst.msk [vmem:[#allocation5 + $0xb8] sm:$0xff] %vm16, %v5652
    %5725 = vst.msk [vmem:[#allocation5 + $0xc0] sm:$0xff] %vm16, %v5653
    %5726 = vst.msk [vmem:[#allocation5 + $0xc8] sm:$0xff] %vm16, %v5654
    %5727 = vst.msk [vmem:[#allocation5 + $0xd0] sm:$0xff] %vm16, %v5655
    %5728 = vst.msk [vmem:[#allocation5 + $0xd8] sm:$0xff] %vm16, %v5656
    %5729 = vst.msk [vmem:[#allocation5 + $0xe0] sm:$0xff] %vm16, %v5657
    %5730 = vst.msk [vmem:[#allocation5 + $0xe8] sm:$0xff] %vm16, %v5658
    %5731 = vst.msk [vmem:[#allocation5 + $0xf0] sm:$0xff] %vm16, %v5659
    %5732 = vst.msk [vmem:[#allocation5 + $0xf8] sm:$0xff] %vm16, %v5660
    %5733 = vst.msk [vmem:[#allocation5 + $0x100] sm:$0xff] %vm16, %v5661
    %5734 = vst.msk [vmem:[#allocation5 + $0x108] sm:$0xff] %vm16, %v5662
    %5735 = vst.msk [vmem:[#allocation5 + $0x110] sm:$0xff] %vm16, %v5663
    %5736 = vst.msk [vmem:[#allocation5 + $0x118] sm:$0xff] %vm16, %v5664
    %5737 = vst.msk [vmem:[#allocation5 + $0x120] sm:$0xff] %vm16, %v5665
    %5738 = vst.msk [vmem:[#allocation5 + $0x128] sm:$0xff] %vm16, %v5666
    %5739 = vst.msk [vmem:[#allocation5 + $0x130] sm:$0xff] %vm16, %v5667
    %5740 = vst.msk [vmem:[#allocation5 + $0x138] sm:$0xff] %vm16, %v5668
    %5741 = vst.msk [vmem:[#allocation5 + $0x140] sm:$0xff] %vm16, %v5669
    %5742 = vst.msk [vmem:[#allocation5 + $0x148] sm:$0xff] %vm16, %v5670
    %5743 = vst.msk [vmem:[#allocation5 + $0x150] sm:$0xff] %vm16, %v5671
    %5744 = vst.msk [vmem:[#allocation5 + $0x158] sm:$0xff] %vm16, %v5672
    %5745 = vst.msk [vmem:[#allocation5 + $0x160] sm:$0xff] %vm16, %v5673
    %5746 = vst.msk [vmem:[#allocation5 + $0x168] sm:$0xff] %vm16, %v5674
    %5747 = vst.msk [vmem:[#allocation5 + $0x170] sm:$0xff] %vm16, %v5675
    %5748 = vst.msk [vmem:[#allocation5 + $0x178] sm:$0xff] %vm16, %v5676
    %5749 = vst.msk [vmem:[#allocation5 + $0x180] sm:$0xff] %vm16, %v5677
    %5750 = vst.msk [vmem:[#allocation5 + $0x188] sm:$0xff] %vm16, %v5678
    %5751 = vst.msk [vmem:[#allocation5 + $0x190] sm:$0xff] %vm16, %v5679
    %5752 = vst.msk [vmem:[#allocation5 + $0x198] sm:$0xff] %vm16, %v5680
    %5753 = vst.msk [vmem:[#allocation5 + $0x1a0] sm:$0xff] %vm16, %v5681
    %5754 = vst.msk [vmem:[#allocation5 + $0x1a8] sm:$0xff] %vm16, %v5682
    %5755 = vst.msk [vmem:[#allocation5 + $0x1b0] sm:$0xff] %vm16, %v5683
    %5756 = vst.msk [vmem:[#allocation5 + $0x1b8] sm:$0xff] %vm16, %v5684
    %5757 = vst.msk [vmem:[#allocation5 + $0x1c0] sm:$0xff] %vm16, %v5685
    %5758 = vst.msk [vmem:[#allocation5 + $0x1c8] sm:$0xff] %vm16, %v5686
    %5759 = vst.msk [vmem:[#allocation5 + $0x1d0] sm:$0xff] %vm16, %v5687
    %5760 = vst.msk [vmem:[#allocation5 + $0x1d8] sm:$0xff] %vm16, %v5688
    %5761 = vst.msk [vmem:[#allocation5 + $0x1e0] sm:$0xff] %vm16, %v5689
    %5762 = vst.msk [vmem:[#allocation5 + $0x1e8] sm:$0xff] %vm16, %v5690
    %5763 = vst.msk [vmem:[#allocation5 + $0x1f0] sm:$0xff] %vm16, %v5691
    %5764 = vst.msk [vmem:[#allocation5 + $0x1f8] sm:$0xff] %vm16, %v5692
    %5765 = vst.msk [vmem:[#allocation5 + $0x200] sm:$0xff] %vm16, %v5693
    %5766 = vst.msk [vmem:[#allocation5 + $0x208] sm:$0xff] %vm16, %v5694
    %5767 = vst.msk [vmem:[#allocation5 + $0x210] sm:$0xff] %vm16, %v5695
    %5768 = vst.msk [vmem:[#allocation5 + $0x218] sm:$0xff] %vm16, %v5696
    %5769 = vst.msk [vmem:[#allocation5 + $0x220] sm:$0xff] %vm16, %v5697
    %5770 = vst.msk [vmem:[#allocation5 + $0x228] sm:$0xff] %vm16, %v5698
    %5771 = vst.msk [vmem:[#allocation5 + $0x230] sm:$0xff] %vm16, %v5699
    %5772 = vst.msk [vmem:[#allocation5 + $0x238] sm:$0xff] %vm16, %v5700
    %v5773 = vld [vmem:[#allocation5] ss:$2 sm:$0xff]
    %s5774 = scalar_lea.vmem [#allocation5], 1
    %v5775 = vld [vmem:[%s5774] ss:$2 sm:$0xff]
    %s5776 = scalar_lea.vmem [#allocation5], 18
    %v5777 = vld [vmem:[%s5776] ss:$2 sm:$0xff]
    %s5778 = scalar_lea.vmem [#allocation5], 19
    %v5779 = vld [vmem:[%s5778] ss:$2 sm:$0xff]
    %v5780 = vmax.f32 %v5773, %v5775
    %v5781 = vmax.f32 %v5777, %v5779
    %v5782 = vmax.f32 %v5780, %v5781
    %5783 = vst.msk [vmem:[#allocation2 + $0xb] sm:$0xff] %vm16, %v5782
    %s5784 = scalar_lea.vmem [#allocation5], 36
    %v5785 = vld [vmem:[%s5784] ss:$2 sm:$0xff]
    %s5786 = scalar_lea.vmem [#allocation5], 37
    %v5787 = vld [vmem:[%s5786] ss:$2 sm:$0xff]
    %s5788 = scalar_lea.vmem [#allocation5], 54
    %v5789 = vld [vmem:[%s5788] ss:$2 sm:$0xff]
    %s5790 = scalar_lea.vmem [#allocation5], 55
    %v5791 = vld [vmem:[%s5790] ss:$2 sm:$0xff]
    %v5792 = vmax.f32 %v5785, %v5787
    %v5793 = vmax.f32 %v5789, %v5791
    %v5794 = vmax.f32 %v5792, %v5793
    %5795 = vst.msk [vmem:[#allocation2 + $0x15] sm:$0xff] %vm16, %v5794
    %s5796 = scalar_lea.vmem [#allocation5], 72
    %v5797 = vld [vmem:[%s5796] ss:$2 sm:$0xff]
    %s5798 = scalar_lea.vmem [#allocation5], 73
    %v5799 = vld [vmem:[%s5798] ss:$2 sm:$0xff]
    %s5800 = scalar_lea.vmem [#allocation5], 90
    %v5801 = vld [vmem:[%s5800] ss:$2 sm:$0xff]
    %s5802 = scalar_lea.vmem [#allocation5], 91
    %v5803 = vld [vmem:[%s5802] ss:$2 sm:$0xff]
    %v5804 = vmax.f32 %v5797, %v5799
    %v5805 = vmax.f32 %v5801, %v5803
    %v5806 = vmax.f32 %v5804, %v5805
    %5807 = vst.msk [vmem:[#allocation2 + $0x1f] sm:$0xff] %vm16, %v5806
    %s5808 = scalar_lea.vmem [#allocation5], 108
    %v5809 = vld [vmem:[%s5808] ss:$2 sm:$0xff]
    %s5810 = scalar_lea.vmem [#allocation5], 109
    %v5811 = vld [vmem:[%s5810] ss:$2 sm:$0xff]
    %s5812 = scalar_lea.vmem [#allocation5], 126
    %v5813 = vld [vmem:[%s5812] ss:$2 sm:$0xff]
    %s5814 = scalar_lea.vmem [#allocation5], 127
    %v5815 = vld [vmem:[%s5814] ss:$2 sm:$0xff]
    %v5816 = vmax.f32 %v5809, %v5811
    %v5817 = vmax.f32 %v5813, %v5815
    %v5818 = vmax.f32 %v5816, %v5817
    %5819 = vst.msk [vmem:[#allocation2 + $0x29] sm:$0xff] %vm16, %v5818
    %s5820 = scalar_lea.vmem [#allocation5], 144
    %v5821 = vld [vmem:[%s5820] ss:$2 sm:$0xff]
    %s5822 = scalar_lea.vmem [#allocation5], 145
    %v5823 = vld [vmem:[%s5822] ss:$2 sm:$0xff]
    %s5824 = scalar_lea.vmem [#allocation5], 162
    %v5825 = vld [vmem:[%s5824] ss:$2 sm:$0xff]
    %s5826 = scalar_lea.vmem [#allocation5], 163
    %v5827 = vld [vmem:[%s5826] ss:$2 sm:$0xff]
    %v5828 = vmax.f32 %v5821, %v5823
    %v5829 = vmax.f32 %v5825, %v5827
    %v5830 = vmax.f32 %v5828, %v5829
    %5831 = vst.msk [vmem:[#allocation2 + $0x33] sm:$0xff] %vm16, %v5830
    %s5832 = scalar_lea.vmem [#allocation5], 180
    %v5833 = vld [vmem:[%s5832] ss:$2 sm:$0xff]
    %s5834 = scalar_lea.vmem [#allocation5], 181
    %v5835 = vld [vmem:[%s5834] ss:$2 sm:$0xff]
    %s5836 = scalar_lea.vmem [#allocation5], 198
    %v5837 = vld [vmem:[%s5836] ss:$2 sm:$0xff]
    %s5838 = scalar_lea.vmem [#allocation5], 199
    %v5839 = vld [vmem:[%s5838] ss:$2 sm:$0xff]
    %v5840 = vmax.f32 %v5833, %v5835
    %v5841 = vmax.f32 %v5837, %v5839
    %v5842 = vmax.f32 %v5840, %v5841
    %5843 = vst.msk [vmem:[#allocation2 + $0x3d] sm:$0xff] %vm16, %v5842
    %s5844 = scalar_lea.vmem [#allocation5], 216
    %v5845 = vld [vmem:[%s5844] ss:$2 sm:$0xff]
    %s5846 = scalar_lea.vmem [#allocation5], 217
    %v5847 = vld [vmem:[%s5846] ss:$2 sm:$0xff]
    %s5848 = scalar_lea.vmem [#allocation5], 234
    %v5849 = vld [vmem:[%s5848] ss:$2 sm:$0xff]
    %s5850 = scalar_lea.vmem [#allocation5], 235
    %v5851 = vld [vmem:[%s5850] ss:$2 sm:$0xff]
    %v5852 = vmax.f32 %v5845, %v5847
    %v5853 = vmax.f32 %v5849, %v5851
    %v5854 = vmax.f32 %v5852, %v5853
    %5855 = vst.msk [vmem:[#allocation2 + $0x47] sm:$0xff] %vm16, %v5854
    %s5856 = scalar_lea.vmem [#allocation5], 252
    %v5857 = vld [vmem:[%s5856] ss:$2 sm:$0xff]
    %s5858 = scalar_lea.vmem [#allocation5], 253
    %v5859 = vld [vmem:[%s5858] ss:$2 sm:$0xff]
    %s5860 = scalar_lea.vmem [#allocation5], 270
    %v5861 = vld [vmem:[%s5860] ss:$2 sm:$0xff]
    %s5862 = scalar_lea.vmem [#allocation5], 271
    %v5863 = vld [vmem:[%s5862] ss:$2 sm:$0xff]
    %v5864 = vmax.f32 %v5857, %v5859
    %v5865 = vmax.f32 %v5861, %v5863
    %v5866 = vmax.f32 %v5864, %v5865
    %5867 = vst.msk [vmem:[#allocation2 + $0x51] sm:$0xff] %vm16, %v5866
    %s5868 = scalar_lea.vmem [#allocation5], 288
    %v5869 = vld [vmem:[%s5868] ss:$2 sm:$0xff]
    %s5870 = scalar_lea.vmem [#allocation5], 289
    %v5871 = vld [vmem:[%s5870] ss:$2 sm:$0xff]
    %s5872 = scalar_lea.vmem [#allocation5], 306
    %v5873 = vld [vmem:[%s5872] ss:$2 sm:$0xff]
    %s5874 = scalar_lea.vmem [#allocation5], 307
    %v5875 = vld [vmem:[%s5874] ss:$2 sm:$0xff]
    %v5876 = vmax.f32 %v5869, %v5871
    %v5877 = vmax.f32 %v5873, %v5875
    %v5878 = vmax.f32 %v5876, %v5877
    %s5879 = scalar_lea.vmem [#allocation2], 104
    %5880 = vst.msk [vmem:[%s5879 + $0xb] sm:$0xff] %vm16, %v5878
    %s5881 = scalar_lea.vmem [#allocation5], 324
    %v5882 = vld [vmem:[%s5881] ss:$2 sm:$0xff]
    %s5883 = scalar_lea.vmem [#allocation5], 325
    %v5884 = vld [vmem:[%s5883] ss:$2 sm:$0xff]
    %s5885 = scalar_lea.vmem [#allocation5], 342
    %v5886 = vld [vmem:[%s5885] ss:$2 sm:$0xff]
    %s5887 = scalar_lea.vmem [#allocation5], 343
    %v5888 = vld [vmem:[%s5887] ss:$2 sm:$0xff]
    %v5889 = vmax.f32 %v5882, %v5884
    %v5890 = vmax.f32 %v5886, %v5888
    %v5891 = vmax.f32 %v5889, %v5890
    %5892 = vst.msk [vmem:[%s5879 + $0x15] sm:$0xff] %vm16, %v5891
    %s5893 = scalar_lea.vmem [#allocation5], 360
    %v5894 = vld [vmem:[%s5893] ss:$2 sm:$0xff]
    %s5895 = scalar_lea.vmem [#allocation5], 361
    %v5896 = vld [vmem:[%s5895] ss:$2 sm:$0xff]
    %s5897 = scalar_lea.vmem [#allocation5], 378
    %v5898 = vld [vmem:[%s5897] ss:$2 sm:$0xff]
    %s5899 = scalar_lea.vmem [#allocation5], 379
    %v5900 = vld [vmem:[%s5899] ss:$2 sm:$0xff]
    %v5901 = vmax.f32 %v5894, %v5896
    %v5902 = vmax.f32 %v5898, %v5900
    %v5903 = vmax.f32 %v5901, %v5902
    %5904 = vst.msk [vmem:[%s5879 + $0x1f] sm:$0xff] %vm16, %v5903
    %s5905 = scalar_lea.vmem [#allocation5], 396
    %v5906 = vld [vmem:[%s5905] ss:$2 sm:$0xff]
    %s5907 = scalar_lea.vmem [#allocation5], 397
    %v5908 = vld [vmem:[%s5907] ss:$2 sm:$0xff]
    %s5909 = scalar_lea.vmem [#allocation5], 414
    %v5910 = vld [vmem:[%s5909] ss:$2 sm:$0xff]
    %s5911 = scalar_lea.vmem [#allocation5], 415
    %v5912 = vld [vmem:[%s5911] ss:$2 sm:$0xff]
    %v5913 = vmax.f32 %v5906, %v5908
    %v5914 = vmax.f32 %v5910, %v5912
    %v5915 = vmax.f32 %v5913, %v5914
    %5916 = vst.msk [vmem:[%s5879 + $0x29] sm:$0xff] %vm16, %v5915
    %s5917 = scalar_lea.vmem [#allocation5], 432
    %v5918 = vld [vmem:[%s5917] ss:$2 sm:$0xff]
    %s5919 = scalar_lea.vmem [#allocation5], 433
    %v5920 = vld [vmem:[%s5919] ss:$2 sm:$0xff]
    %s5921 = scalar_lea.vmem [#allocation5], 450
    %v5922 = vld [vmem:[%s5921] ss:$2 sm:$0xff]
    %s5923 = scalar_lea.vmem [#allocation5], 451
    %v5924 = vld [vmem:[%s5923] ss:$2 sm:$0xff]
    %v5925 = vmax.f32 %v5918, %v5920
    %v5926 = vmax.f32 %v5922, %v5924
    %v5927 = vmax.f32 %v5925, %v5926
    %5928 = vst.msk [vmem:[%s5879 + $0x33] sm:$0xff] %vm16, %v5927
    %s5929 = scalar_lea.vmem [#allocation5], 468
    %v5930 = vld [vmem:[%s5929] ss:$2 sm:$0xff]
    %s5931 = scalar_lea.vmem [#allocation5], 469
    %v5932 = vld [vmem:[%s5931] ss:$2 sm:$0xff]
    %s5933 = scalar_lea.vmem [#allocation5], 486
    %v5934 = vld [vmem:[%s5933] ss:$2 sm:$0xff]
    %s5935 = scalar_lea.vmem [#allocation5], 487
    %v5936 = vld [vmem:[%s5935] ss:$2 sm:$0xff]
    %v5937 = vmax.f32 %v5930, %v5932
    %v5938 = vmax.f32 %v5934, %v5936
    %v5939 = vmax.f32 %v5937, %v5938
    %5940 = vst.msk [vmem:[%s5879 + $0x3d] sm:$0xff] %vm16, %v5939
    %s5941 = scalar_lea.vmem [#allocation5], 504
    %v5942 = vld [vmem:[%s5941] ss:$2 sm:$0xff]
    %s5943 = scalar_lea.vmem [#allocation5], 505
    %v5944 = vld [vmem:[%s5943] ss:$2 sm:$0xff]
    %s5945 = scalar_lea.vmem [#allocation5], 522
    %v5946 = vld [vmem:[%s5945] ss:$2 sm:$0xff]
    %s5947 = scalar_lea.vmem [#allocation5], 523
    %v5948 = vld [vmem:[%s5947] ss:$2 sm:$0xff]
    %v5949 = vmax.f32 %v5942, %v5944
    %v5950 = vmax.f32 %v5946, %v5948
    %v5951 = vmax.f32 %v5949, %v5950
    %5952 = vst.msk [vmem:[%s5879 + $0x47] sm:$0xff] %vm16, %v5951
    %s5953 = scalar_lea.vmem [#allocation5], 540
    %v5954 = vld [vmem:[%s5953] ss:$2 sm:$0xff]
    %s5955 = scalar_lea.vmem [#allocation5], 541
    %v5956 = vld [vmem:[%s5955] ss:$2 sm:$0xff]
    %s5957 = scalar_lea.vmem [#allocation5], 558
    %v5958 = vld [vmem:[%s5957] ss:$2 sm:$0xff]
    %s5959 = scalar_lea.vmem [#allocation5], 559
    %v5960 = vld [vmem:[%s5959] ss:$2 sm:$0xff]
    %v5961 = vmax.f32 %v5954, %v5956
    %v5962 = vmax.f32 %v5958, %v5960
    %v5963 = vmax.f32 %v5961, %v5962
    %5964 = vst.msk [vmem:[%s5879 + $0x51] sm:$0xff] %vm16, %v5963
    %s5965 = scalar_lea.vmem %s2, 1
    %v5966 = vld [vmem:[%s5965] sm:$0x1]
    %v5968 = vlaneseq
    %v5969 = vshrl.u32 %v5968, 7
    %v5970 = vsub.s32 0, %v5969
    %v5971 = vrot.slane %v5966, %v5970
    %v5973 = vld [vmem:[#allocation2] sm:$0xff]
    %v5974 = vld [vmem:[#allocation2 + $0x8] sm:$0xff]
    %v5975 = vld [vmem:[#allocation2 + $0x10] sm:$0xff]
    %v5976 = vld [vmem:[#allocation2 + $0x18] sm:$0xff]
    %v5977 = vld [vmem:[#allocation2 + $0x20] sm:$0xff]
    %v5978 = vld [vmem:[#allocation2 + $0x28] sm:$0xff]
    %v5979 = vld [vmem:[#allocation2 + $0x30] sm:$0xff]
    %v5980 = vld [vmem:[#allocation2 + $0x38] sm:$0xff]
    %v5981 = vld [vmem:[#allocation2 + $0x40] sm:$0xff]
    %v5982 = vld [vmem:[#allocation2 + $0x48] sm:$0xff]
    %v5983 = vld [vmem:[#allocation2 + $0x68] sm:$0xff]
    %v5984 = vld [vmem:[#allocation2 + $0x70] sm:$0xff]
    %v5985 = vld [vmem:[#allocation2 + $0x78] sm:$0xff]
    %v5986 = vld [vmem:[#allocation2 + $0x80] sm:$0xff]
    %v5987 = vld [vmem:[#allocation2 + $0x88] sm:$0xff]
    %v5988 = vld [vmem:[#allocation2 + $0x90] sm:$0xff]
    %v5989 = vld [vmem:[#allocation2 + $0x98] sm:$0xff]
    %v5990 = vld [vmem:[#allocation2 + $0xa0] sm:$0xff]
    %v5991 = vld [vmem:[#allocation2 + $0xa8] sm:$0xff]
    %v5992 = vld [vmem:[#allocation2 + $0xb0] sm:$0xff]
    %v5993 = vpack.c.bf16 %v5974, %v5973
    %v5994 = vpack.c.bf16 %v5976, %v5975
    %v5995 = vpack.c.bf16 %v5978, %v5977
    %v5996 = vpack.c.bf16 %v5980, %v5979
    %v5997 = vpack.c.bf16 %v5982, %v5981
    %v5998 = vpack.c.bf16 %v5984, %v5983
    %v5999 = vpack.c.bf16 %v5986, %v5985
    %v6000 = vpack.c.bf16 %v5988, %v5987
    %v6001 = vpack.c.bf16 %v5990, %v5989
    %v6002 = vpack.c.bf16 %v5992, %v5991
    %s6003 = scalar_lea.vmem %s1, 72
    %v6004 = vld [vmem:[%s6003] sm:$0xf]
    %v6005 = vld [vmem:[%s6003 + $0x4] sm:$0xf]
    %v6008 = vunpack.c.l.b16 %v6004
    %v6009 = vunpack.c.l.b16 %v6005
    %v6010 = vpack.c.b16 %v6009, %v6008
    %v6013 = vsel %vm16, %v5993, 0
    %v6016 = vsel %vm16, %v5994, 0
    %v6019 = vsel %vm16, %v5995, 0
    %v6022 = vsel %vm16, %v5996, 0
    %v6025 = vsel %vm16, %v5997, 0
    %v6028 = vsel %vm16, %v5998, 0
    %v6031 = vsel %vm16, %v5999, 0
    %v6034 = vsel %vm16, %v6000, 0
    %v6037 = vsel %vm16, %v6001, 0
    %v6040 = vsel %vm16, %v6002, 0
    %6042 = vmatprep.subr.bf16.mxu0 0
    %6043 = vmatpush1.bf16.msra.mxu0 0
    %6044 = vmatprep.subr.bf16.mxu0 0
    %6045 = vmatpush1.bf16.msra.mxu0 0
    %6046 = vmatprep.subr.bf16.mxu0 0
    %6047 = vmatpush1.bf16.msra.mxu0 0
    %6048 = vmatprep.subr.bf16.mxu0 0
    %6049 = vmatpush1.bf16.msra.mxu0 0
    %6050 = vmatprep.subr.bf16.mxu0 0
    %6051 = vmatpush1.bf16.msra.mxu0 0
    %6052 = vmatprep.subr.bf16.mxu0 0
    %6053 = vmatpush1.bf16.msra.mxu0 0
    %6054 = vmatprep.subr.bf16.mxu0 0
    %6055 = vmatpush1.bf16.msra.mxu0 0
    %6056 = vmatprep.subr.bf16.mxu0 0
    %6057 = vmatpush1.bf16.msra.mxu0 %v6010
    %6058 = vmatprep.subr.bf16.mxu0 0
    %6059 = vmatpush2.bf16.msra.mxu0 0
    %6060 = vmatprep.subr.bf16.mxu0 0
    %6061 = vmatpush2.bf16.msra.mxu0 0
    %6062 = vmatprep.subr.bf16.mxu0 0
    %6063 = vmatpush2.bf16.msra.mxu0 0
    %6064 = vmatprep.subr.bf16.mxu0 0
    %6065 = vmatpush2.bf16.msra.mxu0 0
    %6066 = vmatprep.subr.bf16.mxu0 0
    %6067 = vmatpush2.bf16.msra.mxu0 0
    %6068 = vmatprep.subr.bf16.mxu0 0
    %6069 = vmatpush2.bf16.msra.mxu0 0
    %6070 = vmatprep.subr.bf16.mxu0 0
    %6071 = vmatpush2.bf16.msra.mxu0 0
    %6072 = vmatprep.subr.bf16.mxu0 0
    %6073 = vmatpush2.bf16.msra.mxu0 0
    %6074 = vmatprep.mubr.bf16.mxu0 0
    %6075 = vmatmul.mubr.bf16.gmra.mxu0 %v6013
    %v6076 = vpop.f32.mrf.mxu0
    %v6077 = vadd.f32 0.0, %v6076
    %v6078 = vpop.f32.mrf.mxu0
    %v6079 = vpop.f32.mrf.mxu0
    %v6080 = vadd.f32 0.0, %v6079
    %v6081 = vpop.f32.mrf.mxu0
    %6082 = vmatprep.mubr.bf16.mxu0 0
    %6083 = vmatmul.mubr.bf16.gmra.mxu0 %v6016
    %v6084 = vpop.f32.mrf.mxu0
    %v6085 = vadd.f32 0.0, %v6084
    %v6086 = vpop.f32.mrf.mxu0
    %v6087 = vpop.f32.mrf.mxu0
    %v6088 = vadd.f32 0.0, %v6087
    %v6089 = vpop.f32.mrf.mxu0
    %6090 = vmatprep.mubr.bf16.mxu0 0
    %6091 = vmatmul.mubr.bf16.gmra.mxu0 %v6019
    %v6092 = vpop.f32.mrf.mxu0
    %v6093 = vadd.f32 0.0, %v6092
    %v6094 = vpop.f32.mrf.mxu0
    %v6095 = vpop.f32.mrf.mxu0
    %v6096 = vadd.f32 0.0, %v6095
    %v6097 = vpop.f32.mrf.mxu0
    %6098 = vmatprep.mubr.bf16.mxu0 0
    %6099 = vmatmul.mubr.bf16.gmra.mxu0 %v6022
    %v6100 = vpop.f32.mrf.mxu0
    %v6101 = vadd.f32 0.0, %v6100
    %v6102 = vpop.f32.mrf.mxu0
    %v6103 = vpop.f32.mrf.mxu0
    %v6104 = vadd.f32 0.0, %v6103
    %v6105 = vpop.f32.mrf.mxu0
    %6106 = vmatprep.mubr.bf16.mxu0 0
    %6107 = vmatmul.mubr.bf16.gmra.mxu0 %v6025
    %v6108 = vpop.f32.mrf.mxu0
    %v6109 = vadd.f32 0.0, %v6108
    %v6110 = vpop.f32.mrf.mxu0
    %v6111 = vpop.f32.mrf.mxu0
    %v6112 = vadd.f32 0.0, %v6111
    %v6113 = vpop.f32.mrf.mxu0
    %6114 = vmatprep.mubr.bf16.mxu0 0
    %6115 = vmatmul.mubr.bf16.gmra.mxu0 %v6028
    %v6116 = vpop.f32.mrf.mxu0
    %v6117 = vadd.f32 0.0, %v6116
    %v6118 = vpop.f32.mrf.mxu0
    %v6119 = vpop.f32.mrf.mxu0
    %v6120 = vadd.f32 0.0, %v6119
    %v6121 = vpop.f32.mrf.mxu0
    %6122 = vmatprep.mubr.bf16.mxu0 0
    %6123 = vmatmul.mubr.bf16.gmra.mxu0 %v6031
    %v6124 = vpop.f32.mrf.mxu0
    %v6125 = vadd.f32 0.0, %v6124
    %v6126 = vpop.f32.mrf.mxu0
    %v6127 = vpop.f32.mrf.mxu0
    %v6128 = vadd.f32 0.0, %v6127
    %v6129 = vpop.f32.mrf.mxu0
    %6130 = vmatprep.mubr.bf16.mxu0 0
    %6131 = vmatmul.mubr.bf16.gmra.mxu0 %v6034
    %v6132 = vpop.f32.mrf.mxu0
    %v6133 = vadd.f32 0.0, %v6132
    %v6134 = vpop.f32.mrf.mxu0
    %v6135 = vpop.f32.mrf.mxu0
    %v6136 = vadd.f32 0.0, %v6135
    %v6137 = vpop.f32.mrf.mxu0
    %6138 = vmatprep.mubr.bf16.mxu0 0
    %6139 = vmatmul.mubr.bf16.gmra.mxu0 %v6037
    %v6140 = vpop.f32.mrf.mxu0
    %v6141 = vadd.f32 0.0, %v6140
    %v6142 = vpop.f32.mrf.mxu0
    %v6143 = vpop.f32.mrf.mxu0
    %v6144 = vadd.f32 0.0, %v6143
    %v6145 = vpop.f32.mrf.mxu0
    %6146 = vmatprep.mubr.bf16.mxu0 0
    %6147 = vmatmul.mubr.bf16.gmra.mxu0 %v6040
    %v6148 = vpop.f32.mrf.mxu0
    %v6149 = vadd.f32 0.0, %v6148
    %v6150 = vpop.f32.mrf.mxu0
    %v6151 = vpop.f32.mrf.mxu0
    %v6152 = vadd.f32 0.0, %v6151
    %v6153 = vpop.f32.mrf.mxu0
    %6154 = vdwg.mxu0
    %v6155 = vadd.f32 %v5971, %v6077
    %v6156 = vadd.f32 %v5971, %v6080
    %v6157 = vadd.f32 %v5971, %v6085
    %v6158 = vadd.f32 %v5971, %v6088
    %v6159 = vadd.f32 %v5971, %v6093
    %v6160 = vadd.f32 %v5971, %v6096
    %v6161 = vadd.f32 %v5971, %v6101
    %v6162 = vadd.f32 %v5971, %v6104
    %v6163 = vadd.f32 %v5971, %v6109
    %v6164 = vadd.f32 %v5971, %v6112
    %v6165 = vadd.f32 %v5971, %v6117
    %v6166 = vadd.f32 %v5971, %v6120
    %v6167 = vadd.f32 %v5971, %v6125
    %v6168 = vadd.f32 %v5971, %v6128
    %v6169 = vadd.f32 %v5971, %v6133
    %v6170 = vadd.f32 %v5971, %v6136
    %v6171 = vadd.f32 %v5971, %v6141
    %v6172 = vadd.f32 %v5971, %v6144
    %v6173 = vadd.f32 %v5971, %v6149
    %v6174 = vadd.f32 %v5971, %v6152
    %v6175 = vld [vmem:[#allocation2 + $0x1] sm:$0xff]
    %v6176 = vld [vmem:[#allocation2 + $0x9] sm:$0xff]
    %v6177 = vld [vmem:[#allocation2 + $0x11] sm:$0xff]
    %v6178 = vld [vmem:[#allocation2 + $0x19] sm:$0xff]
    %v6179 = vld [vmem:[#allocation2 + $0x21] sm:$0xff]
    %v6180 = vld [vmem:[#allocation2 + $0x29] sm:$0xff]
    %v6181 = vld [vmem:[#allocation2 + $0x31] sm:$0xff]
    %v6182 = vld [vmem:[#allocation2 + $0x39] sm:$0xff]
    %v6183 = vld [vmem:[#allocation2 + $0x41] sm:$0xff]
    %v6184 = vld [vmem:[#allocation2 + $0x49] sm:$0xff]
    %v6185 = vld [vmem:[#allocation2 + $0x69] sm:$0xff]
    %v6186 = vld [vmem:[#allocation2 + $0x71] sm:$0xff]
    %v6187 = vld [vmem:[#allocation2 + $0x79] sm:$0xff]
    %v6188 = vld [vmem:[#allocation2 + $0x81] sm:$0xff]
    %v6189 = vld [vmem:[#allocation2 + $0x89] sm:$0xff]
    %v6190 = vld [vmem:[#allocation2 + $0x91] sm:$0xff]
    %v6191 = vld [vmem:[#allocation2 + $0x99] sm:$0xff]
    %v6192 = vld [vmem:[#allocation2 + $0xa1] sm:$0xff]
    %v6193 = vld [vmem:[#allocation2 + $0xa9] sm:$0xff]
    %v6194 = vld [vmem:[#allocation2 + $0xb1] sm:$0xff]
    %v6195 = vpack.c.bf16 %v6176, %v6175
    %v6196 = vpack.c.bf16 %v6178, %v6177
    %v6197 = vpack.c.bf16 %v6180, %v6179
    %v6198 = vpack.c.bf16 %v6182, %v6181
    %v6199 = vpack.c.bf16 %v6184, %v6183
    %v6200 = vpack.c.bf16 %v6186, %v6185
    %v6201 = vpack.c.bf16 %v6188, %v6187
    %v6202 = vpack.c.bf16 %v6190, %v6189
    %v6203 = vpack.c.bf16 %v6192, %v6191
    %v6204 = vpack.c.bf16 %v6194, %v6193
    %s6205 = scalar_lea.vmem %s1, 80
    %v6206 = vld [vmem:[%s6205] sm:$0xf]
    %v6207 = vld [vmem:[%s6205 + $0x4] sm:$0xf]
    %v6210 = vunpack.c.l.b16 %v6206
    %v6211 = vunpack.c.l.b16 %v6207
    %v6212 = vpack.c.b16 %v6211, %v6210
    %v6215 = vsel %vm16, %v6195, 0
    %v6218 = vsel %vm16, %v6196, 0
    %v6221 = vsel %vm16, %v6197, 0
    %v6224 = vsel %vm16, %v6198, 0
    %v6227 = vsel %vm16, %v6199, 0
    %v6230 = vsel %vm16, %v6200, 0
    %v6233 = vsel %vm16, %v6201, 0
    %v6236 = vsel %vm16, %v6202, 0
    %v6239 = vsel %vm16, %v6203, 0
    %v6242 = vsel %vm16, %v6204, 0
    %6244 = vmatprep.subr.bf16.mxu0 0
    %6245 = vmatpush1.bf16.msra.mxu0 0
    %6246 = vmatprep.subr.bf16.mxu0 0
    %6247 = vmatpush1.bf16.msra.mxu0 0
    %6248 = vmatprep.subr.bf16.mxu0 0
    %6249 = vmatpush1.bf16.msra.mxu0 0
    %6250 = vmatprep.subr.bf16.mxu0 0
    %6251 = vmatpush1.bf16.msra.mxu0 0
    %6252 = vmatprep.subr.bf16.mxu0 0
    %6253 = vmatpush1.bf16.msra.mxu0 0
    %6254 = vmatprep.subr.bf16.mxu0 0
    %6255 = vmatpush1.bf16.msra.mxu0 0
    %6256 = vmatprep.subr.bf16.mxu0 0
    %6257 = vmatpush1.bf16.msra.mxu0 0
    %6258 = vmatprep.subr.bf16.mxu0 0
    %6259 = vmatpush1.bf16.msra.mxu0 %v6212
    %6260 = vmatprep.subr.bf16.mxu0 0
    %6261 = vmatpush2.bf16.msra.mxu0 0
    %6262 = vmatprep.subr.bf16.mxu0 0
    %6263 = vmatpush2.bf16.msra.mxu0 0
    %6264 = vmatprep.subr.bf16.mxu0 0
    %6265 = vmatpush2.bf16.msra.mxu0 0
    %6266 = vmatprep.subr.bf16.mxu0 0
    %6267 = vmatpush2.bf16.msra.mxu0 0
    %6268 = vmatprep.subr.bf16.mxu0 0
    %6269 = vmatpush2.bf16.msra.mxu0 0
    %6270 = vmatprep.subr.bf16.mxu0 0
    %6271 = vmatpush2.bf16.msra.mxu0 0
    %6272 = vmatprep.subr.bf16.mxu0 0
    %6273 = vmatpush2.bf16.msra.mxu0 0
    %6274 = vmatprep.subr.bf16.mxu0 0
    %6275 = vmatpush2.bf16.msra.mxu0 0
    %6276 = vmatprep.mubr.bf16.mxu0 0
    %6277 = vmatmul.mubr.bf16.gmra.mxu0 %v6215
    %v6278 = vpop.f32.mrf.mxu0
    %v6279 = vadd.f32 0.0, %v6278
    %v6280 = vpop.f32.mrf.mxu0
    %v6281 = vpop.f32.mrf.mxu0
    %v6282 = vadd.f32 0.0, %v6281
    %v6283 = vpop.f32.mrf.mxu0
    %6284 = vmatprep.mubr.bf16.mxu0 0
    %6285 = vmatmul.mubr.bf16.gmra.mxu0 %v6218
    %v6286 = vpop.f32.mrf.mxu0
    %v6287 = vadd.f32 0.0, %v6286
    %v6288 = vpop.f32.mrf.mxu0
    %v6289 = vpop.f32.mrf.mxu0
    %v6290 = vadd.f32 0.0, %v6289
    %v6291 = vpop.f32.mrf.mxu0
    %6292 = vmatprep.mubr.bf16.mxu0 0
    %6293 = vmatmul.mubr.bf16.gmra.mxu0 %v6221
    %v6294 = vpop.f32.mrf.mxu0
    %v6295 = vadd.f32 0.0, %v6294
    %v6296 = vpop.f32.mrf.mxu0
    %v6297 = vpop.f32.mrf.mxu0
    %v6298 = vadd.f32 0.0, %v6297
    %v6299 = vpop.f32.mrf.mxu0
    %6300 = vmatprep.mubr.bf16.mxu0 0
    %6301 = vmatmul.mubr.bf16.gmra.mxu0 %v6224
    %v6302 = vpop.f32.mrf.mxu0
    %v6303 = vadd.f32 0.0, %v6302
    %v6304 = vpop.f32.mrf.mxu0
    %v6305 = vpop.f32.mrf.mxu0
    %v6306 = vadd.f32 0.0, %v6305
    %v6307 = vpop.f32.mrf.mxu0
    %6308 = vmatprep.mubr.bf16.mxu0 0
    %6309 = vmatmul.mubr.bf16.gmra.mxu0 %v6227
    %v6310 = vpop.f32.mrf.mxu0
    %v6311 = vadd.f32 0.0, %v6310
    %v6312 = vpop.f32.mrf.mxu0
    %v6313 = vpop.f32.mrf.mxu0
    %v6314 = vadd.f32 0.0, %v6313
    %v6315 = vpop.f32.mrf.mxu0
    %6316 = vmatprep.mubr.bf16.mxu0 0
    %6317 = vmatmul.mubr.bf16.gmra.mxu0 %v6230
    %v6318 = vpop.f32.mrf.mxu0
    %v6319 = vadd.f32 0.0, %v6318
    %v6320 = vpop.f32.mrf.mxu0
    %v6321 = vpop.f32.mrf.mxu0
    %v6322 = vadd.f32 0.0, %v6321
    %v6323 = vpop.f32.mrf.mxu0
    %6324 = vmatprep.mubr.bf16.mxu0 0
    %6325 = vmatmul.mubr.bf16.gmra.mxu0 %v6233
    %v6326 = vpop.f32.mrf.mxu0
    %v6327 = vadd.f32 0.0, %v6326
    %v6328 = vpop.f32.mrf.mxu0
    %v6329 = vpop.f32.mrf.mxu0
    %v6330 = vadd.f32 0.0, %v6329
    %v6331 = vpop.f32.mrf.mxu0
    %6332 = vmatprep.mubr.bf16.mxu0 0
    %6333 = vmatmul.mubr.bf16.gmra.mxu0 %v6236
    %v6334 = vpop.f32.mrf.mxu0
    %v6335 = vadd.f32 0.0, %v6334
    %v6336 = vpop.f32.mrf.mxu0
    %v6337 = vpop.f32.mrf.mxu0
    %v6338 = vadd.f32 0.0, %v6337
    %v6339 = vpop.f32.mrf.mxu0
    %6340 = vmatprep.mubr.bf16.mxu0 0
    %6341 = vmatmul.mubr.bf16.gmra.mxu0 %v6239
    %v6342 = vpop.f32.mrf.mxu0
    %v6343 = vadd.f32 0.0, %v6342
    %v6344 = vpop.f32.mrf.mxu0
    %v6345 = vpop.f32.mrf.mxu0
    %v6346 = vadd.f32 0.0, %v6345
    %v6347 = vpop.f32.mrf.mxu0
    %6348 = vmatprep.mubr.bf16.mxu0 0
    %6349 = vmatmul.mubr.bf16.gmra.mxu0 %v6242
    %v6350 = vpop.f32.mrf.mxu0
    %v6351 = vadd.f32 0.0, %v6350
    %v6352 = vpop.f32.mrf.mxu0
    %v6353 = vpop.f32.mrf.mxu0
    %v6354 = vadd.f32 0.0, %v6353
    %v6355 = vpop.f32.mrf.mxu0
    %6356 = vdwg.mxu0
    %v6357 = vadd.f32 %v6155, %v6279
    %v6358 = vadd.f32 %v6156, %v6282
    %v6359 = vadd.f32 %v6157, %v6287
    %v6360 = vadd.f32 %v6158, %v6290
    %v6361 = vadd.f32 %v6159, %v6295
    %v6362 = vadd.f32 %v6160, %v6298
    %v6363 = vadd.f32 %v6161, %v6303
    %v6364 = vadd.f32 %v6162, %v6306
    %v6365 = vadd.f32 %v6163, %v6311
    %v6366 = vadd.f32 %v6164, %v6314
    %v6367 = vadd.f32 %v6165, %v6319
    %v6368 = vadd.f32 %v6166, %v6322
    %v6369 = vadd.f32 %v6167, %v6327
    %v6370 = vadd.f32 %v6168, %v6330
    %v6371 = vadd.f32 %v6169, %v6335
    %v6372 = vadd.f32 %v6170, %v6338
    %v6373 = vadd.f32 %v6171, %v6343
    %v6374 = vadd.f32 %v6172, %v6346
    %v6375 = vadd.f32 %v6173, %v6351
    %v6376 = vadd.f32 %v6174, %v6354
    %v6377 = vld [vmem:[#allocation2 + $0x2] sm:$0xff]
    %v6378 = vld [vmem:[#allocation2 + $0xa] sm:$0xff]
    %v6379 = vld [vmem:[#allocation2 + $0x12] sm:$0xff]
    %v6380 = vld [vmem:[#allocation2 + $0x1a] sm:$0xff]
    %v6381 = vld [vmem:[#allocation2 + $0x22] sm:$0xff]
    %v6382 = vld [vmem:[#allocation2 + $0x2a] sm:$0xff]
    %v6383 = vld [vmem:[#allocation2 + $0x32] sm:$0xff]
    %v6384 = vld [vmem:[#allocation2 + $0x3a] sm:$0xff]
    %v6385 = vld [vmem:[#allocation2 + $0x42] sm:$0xff]
    %v6386 = vld [vmem:[#allocation2 + $0x4a] sm:$0xff]
    %v6387 = vld [vmem:[#allocation2 + $0x6a] sm:$0xff]
    %v6388 = vld [vmem:[#allocation2 + $0x72] sm:$0xff]
    %v6389 = vld [vmem:[#allocation2 + $0x7a] sm:$0xff]
    %v6390 = vld [vmem:[#allocation2 + $0x82] sm:$0xff]
    %v6391 = vld [vmem:[#allocation2 + $0x8a] sm:$0xff]
    %v6392 = vld [vmem:[#allocation2 + $0x92] sm:$0xff]
    %v6393 = vld [vmem:[#allocation2 + $0x9a] sm:$0xff]
    %v6394 = vld [vmem:[#allocation2 + $0xa2] sm:$0xff]
    %v6395 = vld [vmem:[#allocation2 + $0xaa] sm:$0xff]
    %v6396 = vld [vmem:[#allocation2 + $0xb2] sm:$0xff]
    %v6397 = vpack.c.bf16 %v6378, %v6377
    %v6398 = vpack.c.bf16 %v6380, %v6379
    %v6399 = vpack.c.bf16 %v6382, %v6381
    %v6400 = vpack.c.bf16 %v6384, %v6383
    %v6401 = vpack.c.bf16 %v6386, %v6385
    %v6402 = vpack.c.bf16 %v6388, %v6387
    %v6403 = vpack.c.bf16 %v6390, %v6389
    %v6404 = vpack.c.bf16 %v6392, %v6391
    %v6405 = vpack.c.bf16 %v6394, %v6393
    %v6406 = vpack.c.bf16 %v6396, %v6395
    %s6407 = scalar_lea.vmem %s1, 88
    %v6408 = vld [vmem:[%s6407] sm:$0xf]
    %v6409 = vld [vmem:[%s6407 + $0x4] sm:$0xf]
    %v6412 = vunpack.c.l.b16 %v6408
    %v6413 = vunpack.c.l.b16 %v6409
    %v6414 = vpack.c.b16 %v6413, %v6412
    %v6417 = vsel %vm16, %v6397, 0
    %v6420 = vsel %vm16, %v6398, 0
    %v6423 = vsel %vm16, %v6399, 0
    %v6426 = vsel %vm16, %v6400, 0
    %v6429 = vsel %vm16, %v6401, 0
    %v6432 = vsel %vm16, %v6402, 0
    %v6435 = vsel %vm16, %v6403, 0
    %v6438 = vsel %vm16, %v6404, 0
    %v6441 = vsel %vm16, %v6405, 0
    %v6444 = vsel %vm16, %v6406, 0
    %6446 = vmatprep.subr.bf16.mxu0 0
    %6447 = vmatpush1.bf16.msra.mxu0 0
    %6448 = vmatprep.subr.bf16.mxu0 0
    %6449 = vmatpush1.bf16.msra.mxu0 0
    %6450 = vmatprep.subr.bf16.mxu0 0
    %6451 = vmatpush1.bf16.msra.mxu0 0
    %6452 = vmatprep.subr.bf16.mxu0 0
    %6453 = vmatpush1.bf16.msra.mxu0 0
    %6454 = vmatprep.subr.bf16.mxu0 0
    %6455 = vmatpush1.bf16.msra.mxu0 0
    %6456 = vmatprep.subr.bf16.mxu0 0
    %6457 = vmatpush1.bf16.msra.mxu0 0
    %6458 = vmatprep.subr.bf16.mxu0 0
    %6459 = vmatpush1.bf16.msra.mxu0 0
    %6460 = vmatprep.subr.bf16.mxu0 0
    %6461 = vmatpush1.bf16.msra.mxu0 %v6414
    %6462 = vmatprep.subr.bf16.mxu0 0
    %6463 = vmatpush2.bf16.msra.mxu0 0
    %6464 = vmatprep.subr.bf16.mxu0 0
    %6465 = vmatpush2.bf16.msra.mxu0 0
    %6466 = vmatprep.subr.bf16.mxu0 0
    %6467 = vmatpush2.bf16.msra.mxu0 0
    %6468 = vmatprep.subr.bf16.mxu0 0
    %6469 = vmatpush2.bf16.msra.mxu0 0
    %6470 = vmatprep.subr.bf16.mxu0 0
    %6471 = vmatpush2.bf16.msra.mxu0 0
    %6472 = vmatprep.subr.bf16.mxu0 0
    %6473 = vmatpush2.bf16.msra.mxu0 0
    %6474 = vmatprep.subr.bf16.mxu0 0
    %6475 = vmatpush2.bf16.msra.mxu0 0
    %6476 = vmatprep.subr.bf16.mxu0 0
    %6477 = vmatpush2.bf16.msra.mxu0 0
    %6478 = vmatprep.mubr.bf16.mxu0 0
    %6479 = vmatmul.mubr.bf16.gmra.mxu0 %v6417
    %v6480 = vpop.f32.mrf.mxu0
    %v6481 = vadd.f32 0.0, %v6480
    %v6482 = vpop.f32.mrf.mxu0
    %v6483 = vpop.f32.mrf.mxu0
    %v6484 = vadd.f32 0.0, %v6483
    %v6485 = vpop.f32.mrf.mxu0
    %6486 = vmatprep.mubr.bf16.mxu0 0
    %6487 = vmatmul.mubr.bf16.gmra.mxu0 %v6420
    %v6488 = vpop.f32.mrf.mxu0
    %v6489 = vadd.f32 0.0, %v6488
    %v6490 = vpop.f32.mrf.mxu0
    %v6491 = vpop.f32.mrf.mxu0
    %v6492 = vadd.f32 0.0, %v6491
    %v6493 = vpop.f32.mrf.mxu0
    %6494 = vmatprep.mubr.bf16.mxu0 0
    %6495 = vmatmul.mubr.bf16.gmra.mxu0 %v6423
    %v6496 = vpop.f32.mrf.mxu0
    %v6497 = vadd.f32 0.0, %v6496
    %v6498 = vpop.f32.mrf.mxu0
    %v6499 = vpop.f32.mrf.mxu0
    %v6500 = vadd.f32 0.0, %v6499
    %v6501 = vpop.f32.mrf.mxu0
    %6502 = vmatprep.mubr.bf16.mxu0 0
    %6503 = vmatmul.mubr.bf16.gmra.mxu0 %v6426
    %v6504 = vpop.f32.mrf.mxu0
    %v6505 = vadd.f32 0.0, %v6504
    %v6506 = vpop.f32.mrf.mxu0
    %v6507 = vpop.f32.mrf.mxu0
    %v6508 = vadd.f32 0.0, %v6507
    %v6509 = vpop.f32.mrf.mxu0
    %6510 = vmatprep.mubr.bf16.mxu0 0
    %6511 = vmatmul.mubr.bf16.gmra.mxu0 %v6429
    %v6512 = vpop.f32.mrf.mxu0
    %v6513 = vadd.f32 0.0, %v6512
    %v6514 = vpop.f32.mrf.mxu0
    %v6515 = vpop.f32.mrf.mxu0
    %v6516 = vadd.f32 0.0, %v6515
    %v6517 = vpop.f32.mrf.mxu0
    %6518 = vmatprep.mubr.bf16.mxu0 0
    %6519 = vmatmul.mubr.bf16.gmra.mxu0 %v6432
    %v6520 = vpop.f32.mrf.mxu0
    %v6521 = vadd.f32 0.0, %v6520
    %v6522 = vpop.f32.mrf.mxu0
    %v6523 = vpop.f32.mrf.mxu0
    %v6524 = vadd.f32 0.0, %v6523
    %v6525 = vpop.f32.mrf.mxu0
    %6526 = vmatprep.mubr.bf16.mxu0 0
    %6527 = vmatmul.mubr.bf16.gmra.mxu0 %v6435
    %v6528 = vpop.f32.mrf.mxu0
    %v6529 = vadd.f32 0.0, %v6528
    %v6530 = vpop.f32.mrf.mxu0
    %v6531 = vpop.f32.mrf.mxu0
    %v6532 = vadd.f32 0.0, %v6531
    %v6533 = vpop.f32.mrf.mxu0
    %6534 = vmatprep.mubr.bf16.mxu0 0
    %6535 = vmatmul.mubr.bf16.gmra.mxu0 %v6438
    %v6536 = vpop.f32.mrf.mxu0
    %v6537 = vadd.f32 0.0, %v6536
    %v6538 = vpop.f32.mrf.mxu0
    %v6539 = vpop.f32.mrf.mxu0
    %v6540 = vadd.f32 0.0, %v6539
    %v6541 = vpop.f32.mrf.mxu0
    %6542 = vmatprep.mubr.bf16.mxu0 0
    %6543 = vmatmul.mubr.bf16.gmra.mxu0 %v6441
    %v6544 = vpop.f32.mrf.mxu0
    %v6545 = vadd.f32 0.0, %v6544
    %v6546 = vpop.f32.mrf.mxu0
    %v6547 = vpop.f32.mrf.mxu0
    %v6548 = vadd.f32 0.0, %v6547
    %v6549 = vpop.f32.mrf.mxu0
    %6550 = vmatprep.mubr.bf16.mxu0 0
    %6551 = vmatmul.mubr.bf16.gmra.mxu0 %v6444
    %v6552 = vpop.f32.mrf.mxu0
    %v6553 = vadd.f32 0.0, %v6552
    %v6554 = vpop.f32.mrf.mxu0
    %v6555 = vpop.f32.mrf.mxu0
    %v6556 = vadd.f32 0.0, %v6555
    %v6557 = vpop.f32.mrf.mxu0
    %6558 = vdwg.mxu0
    %v6559 = vadd.f32 %v6357, %v6481
    %v6560 = vadd.f32 %v6358, %v6484
    %v6561 = vadd.f32 %v6359, %v6489
    %v6562 = vadd.f32 %v6360, %v6492
    %v6563 = vadd.f32 %v6361, %v6497
    %v6564 = vadd.f32 %v6362, %v6500
    %v6565 = vadd.f32 %v6363, %v6505
    %v6566 = vadd.f32 %v6364, %v6508
    %v6567 = vadd.f32 %v6365, %v6513
    %v6568 = vadd.f32 %v6366, %v6516
    %v6569 = vadd.f32 %v6367, %v6521
    %v6570 = vadd.f32 %v6368, %v6524
    %v6571 = vadd.f32 %v6369, %v6529
    %v6572 = vadd.f32 %v6370, %v6532
    %v6573 = vadd.f32 %v6371, %v6537
    %v6574 = vadd.f32 %v6372, %v6540
    %v6575 = vadd.f32 %v6373, %v6545
    %v6576 = vadd.f32 %v6374, %v6548
    %v6577 = vadd.f32 %v6375, %v6553
    %v6578 = vadd.f32 %v6376, %v6556
    %v6579 = vld [vmem:[#allocation2 + $0xa] sm:$0xff]
    %v6580 = vld [vmem:[#allocation2 + $0x12] sm:$0xff]
    %v6581 = vld [vmem:[#allocation2 + $0x1a] sm:$0xff]
    %v6582 = vld [vmem:[#allocation2 + $0x22] sm:$0xff]
    %v6583 = vld [vmem:[#allocation2 + $0x2a] sm:$0xff]
    %v6584 = vld [vmem:[#allocation2 + $0x32] sm:$0xff]
    %v6585 = vld [vmem:[#allocation2 + $0x3a] sm:$0xff]
    %v6586 = vld [vmem:[#allocation2 + $0x42] sm:$0xff]
    %v6587 = vld [vmem:[#allocation2 + $0x4a] sm:$0xff]
    %v6588 = vld [vmem:[#allocation2 + $0x52] sm:$0xff]
    %v6589 = vld [vmem:[#allocation2 + $0x72] sm:$0xff]
    %v6590 = vld [vmem:[#allocation2 + $0x7a] sm:$0xff]
    %v6591 = vld [vmem:[#allocation2 + $0x82] sm:$0xff]
    %v6592 = vld [vmem:[#allocation2 + $0x8a] sm:$0xff]
    %v6593 = vld [vmem:[#allocation2 + $0x92] sm:$0xff]
    %v6594 = vld [vmem:[#allocation2 + $0x9a] sm:$0xff]
    %v6595 = vld [vmem:[#allocation2 + $0xa2] sm:$0xff]
    %v6596 = vld [vmem:[#allocation2 + $0xaa] sm:$0xff]
    %v6597 = vld [vmem:[#allocation2 + $0xb2] sm:$0xff]
    %v6598 = vld [vmem:[#allocation2 + $0xba] sm:$0xff]
    %v6599 = vpack.c.bf16 %v6580, %v6579
    %v6600 = vpack.c.bf16 %v6582, %v6581
    %v6601 = vpack.c.bf16 %v6584, %v6583
    %v6602 = vpack.c.bf16 %v6586, %v6585
    %v6603 = vpack.c.bf16 %v6588, %v6587
    %v6604 = vpack.c.bf16 %v6590, %v6589
    %v6605 = vpack.c.bf16 %v6592, %v6591
    %v6606 = vpack.c.bf16 %v6594, %v6593
    %v6607 = vpack.c.bf16 %v6596, %v6595
    %v6608 = vpack.c.bf16 %v6598, %v6597
    %s6609 = scalar_lea.vmem %s1, 96
    %v6610 = vld [vmem:[%s6609] sm:$0xf]
    %v6611 = vld [vmem:[%s6609 + $0x4] sm:$0xf]
    %v6614 = vunpack.c.l.b16 %v6610
    %v6615 = vunpack.c.l.b16 %v6611
    %v6616 = vpack.c.b16 %v6615, %v6614
    %v6619 = vsel %vm16, %v6599, 0
    %v6622 = vsel %vm16, %v6600, 0
    %v6625 = vsel %vm16, %v6601, 0
    %v6628 = vsel %vm16, %v6602, 0
    %v6631 = vsel %vm16, %v6603, 0
    %v6634 = vsel %vm16, %v6604, 0
    %v6637 = vsel %vm16, %v6605, 0
    %v6640 = vsel %vm16, %v6606, 0
    %v6643 = vsel %vm16, %v6607, 0
    %v6646 = vsel %vm16, %v6608, 0
    %6648 = vmatprep.subr.bf16.mxu0 0
    %6649 = vmatpush1.bf16.msra.mxu0 0
    %6650 = vmatprep.subr.bf16.mxu0 0
    %6651 = vmatpush1.bf16.msra.mxu0 0
    %6652 = vmatprep.subr.bf16.mxu0 0
    %6653 = vmatpush1.bf16.msra.mxu0 0
    %6654 = vmatprep.subr.bf16.mxu0 0
    %6655 = vmatpush1.bf16.msra.mxu0 0
    %6656 = vmatprep.subr.bf16.mxu0 0
    %6657 = vmatpush1.bf16.msra.mxu0 0
    %6658 = vmatprep.subr.bf16.mxu0 0
    %6659 = vmatpush1.bf16.msra.mxu0 0
    %6660 = vmatprep.subr.bf16.mxu0 0
    %6661 = vmatpush1.bf16.msra.mxu0 0
    %6662 = vmatprep.subr.bf16.mxu0 0
    %6663 = vmatpush1.bf16.msra.mxu0 %v6616
    %6664 = vmatprep.subr.bf16.mxu0 0
    %6665 = vmatpush2.bf16.msra.mxu0 0
    %6666 = vmatprep.subr.bf16.mxu0 0
    %6667 = vmatpush2.bf16.msra.mxu0 0
    %6668 = vmatprep.subr.bf16.mxu0 0
    %6669 = vmatpush2.bf16.msra.mxu0 0
    %6670 = vmatprep.subr.bf16.mxu0 0
    %6671 = vmatpush2.bf16.msra.mxu0 0
    %6672 = vmatprep.subr.bf16.mxu0 0
    %6673 = vmatpush2.bf16.msra.mxu0 0
    %6674 = vmatprep.subr.bf16.mxu0 0
    %6675 = vmatpush2.bf16.msra.mxu0 0
    %6676 = vmatprep.subr.bf16.mxu0 0
    %6677 = vmatpush2.bf16.msra.mxu0 0
    %6678 = vmatprep.subr.bf16.mxu0 0
    %6679 = vmatpush2.bf16.msra.mxu0 0
    %6680 = vmatprep.mubr.bf16.mxu0 0
    %6681 = vmatmul.mubr.bf16.gmra.mxu0 %v6619
    %v6682 = vpop.f32.mrf.mxu0
    %v6683 = vadd.f32 0.0, %v6682
    %v6684 = vpop.f32.mrf.mxu0
    %v6685 = vpop.f32.mrf.mxu0
    %v6686 = vadd.f32 0.0, %v6685
    %v6687 = vpop.f32.mrf.mxu0
    %6688 = vmatprep.mubr.bf16.mxu0 0
    %6689 = vmatmul.mubr.bf16.gmra.mxu0 %v6622
    %v6690 = vpop.f32.mrf.mxu0
    %v6691 = vadd.f32 0.0, %v6690
    %v6692 = vpop.f32.mrf.mxu0
    %v6693 = vpop.f32.mrf.mxu0
    %v6694 = vadd.f32 0.0, %v6693
    %v6695 = vpop.f32.mrf.mxu0
    %6696 = vmatprep.mubr.bf16.mxu0 0
    %6697 = vmatmul.mubr.bf16.gmra.mxu0 %v6625
    %v6698 = vpop.f32.mrf.mxu0
    %v6699 = vadd.f32 0.0, %v6698
    %v6700 = vpop.f32.mrf.mxu0
    %v6701 = vpop.f32.mrf.mxu0
    %v6702 = vadd.f32 0.0, %v6701
    %v6703 = vpop.f32.mrf.mxu0
    %6704 = vmatprep.mubr.bf16.mxu0 0
    %6705 = vmatmul.mubr.bf16.gmra.mxu0 %v6628
    %v6706 = vpop.f32.mrf.mxu0
    %v6707 = vadd.f32 0.0, %v6706
    %v6708 = vpop.f32.mrf.mxu0
    %v6709 = vpop.f32.mrf.mxu0
    %v6710 = vadd.f32 0.0, %v6709
    %v6711 = vpop.f32.mrf.mxu0
    %6712 = vmatprep.mubr.bf16.mxu0 0
    %6713 = vmatmul.mubr.bf16.gmra.mxu0 %v6631
    %v6714 = vpop.f32.mrf.mxu0
    %v6715 = vadd.f32 0.0, %v6714
    %v6716 = vpop.f32.mrf.mxu0
    %v6717 = vpop.f32.mrf.mxu0
    %v6718 = vadd.f32 0.0, %v6717
    %v6719 = vpop.f32.mrf.mxu0
    %6720 = vmatprep.mubr.bf16.mxu0 0
    %6721 = vmatmul.mubr.bf16.gmra.mxu0 %v6634
    %v6722 = vpop.f32.mrf.mxu0
    %v6723 = vadd.f32 0.0, %v6722
    %v6724 = vpop.f32.mrf.mxu0
    %v6725 = vpop.f32.mrf.mxu0
    %v6726 = vadd.f32 0.0, %v6725
    %v6727 = vpop.f32.mrf.mxu0
    %6728 = vmatprep.mubr.bf16.mxu0 0
    %6729 = vmatmul.mubr.bf16.gmra.mxu0 %v6637
    %v6730 = vpop.f32.mrf.mxu0
    %v6731 = vadd.f32 0.0, %v6730
    %v6732 = vpop.f32.mrf.mxu0
    %v6733 = vpop.f32.mrf.mxu0
    %v6734 = vadd.f32 0.0, %v6733
    %v6735 = vpop.f32.mrf.mxu0
    %6736 = vmatprep.mubr.bf16.mxu0 0
    %6737 = vmatmul.mubr.bf16.gmra.mxu0 %v6640
    %v6738 = vpop.f32.mrf.mxu0
    %v6739 = vadd.f32 0.0, %v6738
    %v6740 = vpop.f32.mrf.mxu0
    %v6741 = vpop.f32.mrf.mxu0
    %v6742 = vadd.f32 0.0, %v6741
    %v6743 = vpop.f32.mrf.mxu0
    %6744 = vmatprep.mubr.bf16.mxu0 0
    %6745 = vmatmul.mubr.bf16.gmra.mxu0 %v6643
    %v6746 = vpop.f32.mrf.mxu0
    %v6747 = vadd.f32 0.0, %v6746
    %v6748 = vpop.f32.mrf.mxu0
    %v6749 = vpop.f32.mrf.mxu0
    %v6750 = vadd.f32 0.0, %v6749
    %v6751 = vpop.f32.mrf.mxu0
    %6752 = vmatprep.mubr.bf16.mxu0 0
    %6753 = vmatmul.mubr.bf16.gmra.mxu0 %v6646
    %v6754 = vpop.f32.mrf.mxu0
    %v6755 = vadd.f32 0.0, %v6754
    %v6756 = vpop.f32.mrf.mxu0
    %v6757 = vpop.f32.mrf.mxu0
    %v6758 = vadd.f32 0.0, %v6757
    %v6759 = vpop.f32.mrf.mxu0
    %6760 = vdwg.mxu0
    %v6761 = vadd.f32 %v6559, %v6683
    %v6762 = vadd.f32 %v6560, %v6686
    %v6763 = vadd.f32 %v6561, %v6691
    %v6764 = vadd.f32 %v6562, %v6694
    %v6765 = vadd.f32 %v6563, %v6699
    %v6766 = vadd.f32 %v6564, %v6702
    %v6767 = vadd.f32 %v6565, %v6707
    %v6768 = vadd.f32 %v6566, %v6710
    %v6769 = vadd.f32 %v6567, %v6715
    %v6770 = vadd.f32 %v6568, %v6718
    %v6771 = vadd.f32 %v6569, %v6723
    %v6772 = vadd.f32 %v6570, %v6726
    %v6773 = vadd.f32 %v6571, %v6731
    %v6774 = vadd.f32 %v6572, %v6734
    %v6775 = vadd.f32 %v6573, %v6739
    %v6776 = vadd.f32 %v6574, %v6742
    %v6777 = vadd.f32 %v6575, %v6747
    %v6778 = vadd.f32 %v6576, %v6750
    %v6779 = vadd.f32 %v6577, %v6755
    %v6780 = vadd.f32 %v6578, %v6758
    %v6781 = vld [vmem:[#allocation2 + $0xb] sm:$0xff]
    %v6782 = vld [vmem:[#allocation2 + $0x13] sm:$0xff]
    %v6783 = vld [vmem:[#allocation2 + $0x1b] sm:$0xff]
    %v6784 = vld [vmem:[#allocation2 + $0x23] sm:$0xff]
    %v6785 = vld [vmem:[#allocation2 + $0x2b] sm:$0xff]
    %v6786 = vld [vmem:[#allocation2 + $0x33] sm:$0xff]
    %v6787 = vld [vmem:[#allocation2 + $0x3b] sm:$0xff]
    %v6788 = vld [vmem:[#allocation2 + $0x43] sm:$0xff]
    %v6789 = vld [vmem:[#allocation2 + $0x4b] sm:$0xff]
    %v6790 = vld [vmem:[#allocation2 + $0x53] sm:$0xff]
    %v6791 = vld [vmem:[#allocation2 + $0x73] sm:$0xff]
    %v6792 = vld [vmem:[#allocation2 + $0x7b] sm:$0xff]
    %v6793 = vld [vmem:[#allocation2 + $0x83] sm:$0xff]
    %v6794 = vld [vmem:[#allocation2 + $0x8b] sm:$0xff]
    %v6795 = vld [vmem:[#allocation2 + $0x93] sm:$0xff]
    %v6796 = vld [vmem:[#allocation2 + $0x9b] sm:$0xff]
    %v6797 = vld [vmem:[#allocation2 + $0xa3] sm:$0xff]
    %v6798 = vld [vmem:[#allocation2 + $0xab] sm:$0xff]
    %v6799 = vld [vmem:[#allocation2 + $0xb3] sm:$0xff]
    %v6800 = vld [vmem:[#allocation2 + $0xbb] sm:$0xff]
    %v6801 = vpack.c.bf16 %v6782, %v6781
    %v6802 = vpack.c.bf16 %v6784, %v6783
    %v6803 = vpack.c.bf16 %v6786, %v6785
    %v6804 = vpack.c.bf16 %v6788, %v6787
    %v6805 = vpack.c.bf16 %v6790, %v6789
    %v6806 = vpack.c.bf16 %v6792, %v6791
    %v6807 = vpack.c.bf16 %v6794, %v6793
    %v6808 = vpack.c.bf16 %v6796, %v6795
    %v6809 = vpack.c.bf16 %v6798, %v6797
    %v6810 = vpack.c.bf16 %v6800, %v6799
    %s6811 = scalar_lea.vmem %s1, 104
    %v6812 = vld [vmem:[%s6811] sm:$0xf]
    %v6813 = vld [vmem:[%s6811 + $0x4] sm:$0xf]
    %v6816 = vunpack.c.l.b16 %v6812
    %v6817 = vunpack.c.l.b16 %v6813
    %v6818 = vpack.c.b16 %v6817, %v6816
    %v6821 = vsel %vm16, %v6801, 0
    %v6824 = vsel %vm16, %v6802, 0
    %v6827 = vsel %vm16, %v6803, 0
    %v6830 = vsel %vm16, %v6804, 0
    %v6833 = vsel %vm16, %v6805, 0
    %v6836 = vsel %vm16, %v6806, 0
    %v6839 = vsel %vm16, %v6807, 0
    %v6842 = vsel %vm16, %v6808, 0
    %v6845 = vsel %vm16, %v6809, 0
    %v6848 = vsel %vm16, %v6810, 0
    %6850 = vmatprep.subr.bf16.mxu0 0
    %6851 = vmatpush1.bf16.msra.mxu0 0
    %6852 = vmatprep.subr.bf16.mxu0 0
    %6853 = vmatpush1.bf16.msra.mxu0 0
    %6854 = vmatprep.subr.bf16.mxu0 0
    %6855 = vmatpush1.bf16.msra.mxu0 0
    %6856 = vmatprep.subr.bf16.mxu0 0
    %6857 = vmatpush1.bf16.msra.mxu0 0
    %6858 = vmatprep.subr.bf16.mxu0 0
    %6859 = vmatpush1.bf16.msra.mxu0 0
    %6860 = vmatprep.subr.bf16.mxu0 0
    %6861 = vmatpush1.bf16.msra.mxu0 0
    %6862 = vmatprep.subr.bf16.mxu0 0
    %6863 = vmatpush1.bf16.msra.mxu0 0
    %6864 = vmatprep.subr.bf16.mxu0 0
    %6865 = vmatpush1.bf16.msra.mxu0 %v6818
    %6866 = vmatprep.subr.bf16.mxu0 0
    %6867 = vmatpush2.bf16.msra.mxu0 0
    %6868 = vmatprep.subr.bf16.mxu0 0
    %6869 = vmatpush2.bf16.msra.mxu0 0
    %6870 = vmatprep.subr.bf16.mxu0 0
    %6871 = vmatpush2.bf16.msra.mxu0 0
    %6872 = vmatprep.subr.bf16.mxu0 0
    %6873 = vmatpush2.bf16.msra.mxu0 0
    %6874 = vmatprep.subr.bf16.mxu0 0
    %6875 = vmatpush2.bf16.msra.mxu0 0
    %6876 = vmatprep.subr.bf16.mxu0 0
    %6877 = vmatpush2.bf16.msra.mxu0 0
    %6878 = vmatprep.subr.bf16.mxu0 0
    %6879 = vmatpush2.bf16.msra.mxu0 0
    %6880 = vmatprep.subr.bf16.mxu0 0
    %6881 = vmatpush2.bf16.msra.mxu0 0
    %6882 = vmatprep.mubr.bf16.mxu0 0
    %6883 = vmatmul.mubr.bf16.gmra.mxu0 %v6821
    %v6884 = vpop.f32.mrf.mxu0
    %v6885 = vadd.f32 0.0, %v6884
    %v6886 = vpop.f32.mrf.mxu0
    %v6887 = vpop.f32.mrf.mxu0
    %v6888 = vadd.f32 0.0, %v6887
    %v6889 = vpop.f32.mrf.mxu0
    %6890 = vmatprep.mubr.bf16.mxu0 0
    %6891 = vmatmul.mubr.bf16.gmra.mxu0 %v6824
    %v6892 = vpop.f32.mrf.mxu0
    %v6893 = vadd.f32 0.0, %v6892
    %v6894 = vpop.f32.mrf.mxu0
    %v6895 = vpop.f32.mrf.mxu0
    %v6896 = vadd.f32 0.0, %v6895
    %v6897 = vpop.f32.mrf.mxu0
    %6898 = vmatprep.mubr.bf16.mxu0 0
    %6899 = vmatmul.mubr.bf16.gmra.mxu0 %v6827
    %v6900 = vpop.f32.mrf.mxu0
    %v6901 = vadd.f32 0.0, %v6900
    %v6902 = vpop.f32.mrf.mxu0
    %v6903 = vpop.f32.mrf.mxu0
    %v6904 = vadd.f32 0.0, %v6903
    %v6905 = vpop.f32.mrf.mxu0
    %6906 = vmatprep.mubr.bf16.mxu0 0
    %6907 = vmatmul.mubr.bf16.gmra.mxu0 %v6830
    %v6908 = vpop.f32.mrf.mxu0
    %v6909 = vadd.f32 0.0, %v6908
    %v6910 = vpop.f32.mrf.mxu0
    %v6911 = vpop.f32.mrf.mxu0
    %v6912 = vadd.f32 0.0, %v6911
    %v6913 = vpop.f32.mrf.mxu0
    %6914 = vmatprep.mubr.bf16.mxu0 0
    %6915 = vmatmul.mubr.bf16.gmra.mxu0 %v6833
    %v6916 = vpop.f32.mrf.mxu0
    %v6917 = vadd.f32 0.0, %v6916
    %v6918 = vpop.f32.mrf.mxu0
    %v6919 = vpop.f32.mrf.mxu0
    %v6920 = vadd.f32 0.0, %v6919
    %v6921 = vpop.f32.mrf.mxu0
    %6922 = vmatprep.mubr.bf16.mxu0 0
    %6923 = vmatmul.mubr.bf16.gmra.mxu0 %v6836
    %v6924 = vpop.f32.mrf.mxu0
    %v6925 = vadd.f32 0.0, %v6924
    %v6926 = vpop.f32.mrf.mxu0
    %v6927 = vpop.f32.mrf.mxu0
    %v6928 = vadd.f32 0.0, %v6927
    %v6929 = vpop.f32.mrf.mxu0
    %6930 = vmatprep.mubr.bf16.mxu0 0
    %6931 = vmatmul.mubr.bf16.gmra.mxu0 %v6839
    %v6932 = vpop.f32.mrf.mxu0
    %v6933 = vadd.f32 0.0, %v6932
    %v6934 = vpop.f32.mrf.mxu0
    %v6935 = vpop.f32.mrf.mxu0
    %v6936 = vadd.f32 0.0, %v6935
    %v6937 = vpop.f32.mrf.mxu0
    %6938 = vmatprep.mubr.bf16.mxu0 0
    %6939 = vmatmul.mubr.bf16.gmra.mxu0 %v6842
    %v6940 = vpop.f32.mrf.mxu0
    %v6941 = vadd.f32 0.0, %v6940
    %v6942 = vpop.f32.mrf.mxu0
    %v6943 = vpop.f32.mrf.mxu0
    %v6944 = vadd.f32 0.0, %v6943
    %v6945 = vpop.f32.mrf.mxu0
    %6946 = vmatprep.mubr.bf16.mxu0 0
    %6947 = vmatmul.mubr.bf16.gmra.mxu0 %v6845
    %v6948 = vpop.f32.mrf.mxu0
    %v6949 = vadd.f32 0.0, %v6948
    %v6950 = vpop.f32.mrf.mxu0
    %v6951 = vpop.f32.mrf.mxu0
    %v6952 = vadd.f32 0.0, %v6951
    %v6953 = vpop.f32.mrf.mxu0
    %6954 = vmatprep.mubr.bf16.mxu0 0
    %6955 = vmatmul.mubr.bf16.gmra.mxu0 %v6848
    %v6956 = vpop.f32.mrf.mxu0
    %v6957 = vadd.f32 0.0, %v6956
    %v6958 = vpop.f32.mrf.mxu0
    %v6959 = vpop.f32.mrf.mxu0
    %v6960 = vadd.f32 0.0, %v6959
    %v6961 = vpop.f32.mrf.mxu0
    %6962 = vdwg.mxu0
    %v6963 = vadd.f32 %v6761, %v6885
    %v6964 = vadd.f32 %v6762, %v6888
    %v6965 = vadd.f32 %v6763, %v6893
    %v6966 = vadd.f32 %v6764, %v6896
    %v6967 = vadd.f32 %v6765, %v6901
    %v6968 = vadd.f32 %v6766, %v6904
    %v6969 = vadd.f32 %v6767, %v6909
    %v6970 = vadd.f32 %v6768, %v6912
    %v6971 = vadd.f32 %v6769, %v6917
    %v6972 = vadd.f32 %v6770, %v6920
    %v6973 = vadd.f32 %v6771, %v6925
    %v6974 = vadd.f32 %v6772, %v6928
    %v6975 = vadd.f32 %v6773, %v6933
    %v6976 = vadd.f32 %v6774, %v6936
    %v6977 = vadd.f32 %v6775, %v6941
    %v6978 = vadd.f32 %v6776, %v6944
    %v6979 = vadd.f32 %v6777, %v6949
    %v6980 = vadd.f32 %v6778, %v6952
    %v6981 = vadd.f32 %v6779, %v6957
    %v6982 = vadd.f32 %v6780, %v6960
    %v6983 = vld [vmem:[#allocation2 + $0xc] sm:$0xff]
    %v6984 = vld [vmem:[#allocation2 + $0x14] sm:$0xff]
    %v6985 = vld [vmem:[#allocation2 + $0x1c] sm:$0xff]
    %v6986 = vld [vmem:[#allocation2 + $0x24] sm:$0xff]
    %v6987 = vld [vmem:[#allocation2 + $0x2c] sm:$0xff]
    %v6988 = vld [vmem:[#allocation2 + $0x34] sm:$0xff]
    %v6989 = vld [vmem:[#allocation2 + $0x3c] sm:$0xff]
    %v6990 = vld [vmem:[#allocation2 + $0x44] sm:$0xff]
    %v6991 = vld [vmem:[#allocation2 + $0x4c] sm:$0xff]
    %v6992 = vld [vmem:[#allocation2 + $0x54] sm:$0xff]
    %v6993 = vld [vmem:[#allocation2 + $0x74] sm:$0xff]
    %v6994 = vld [vmem:[#allocation2 + $0x7c] sm:$0xff]
    %v6995 = vld [vmem:[#allocation2 + $0x84] sm:$0xff]
    %v6996 = vld [vmem:[#allocation2 + $0x8c] sm:$0xff]
    %v6997 = vld [vmem:[#allocation2 + $0x94] sm:$0xff]
    %v6998 = vld [vmem:[#allocation2 + $0x9c] sm:$0xff]
    %v6999 = vld [vmem:[#allocation2 + $0xa4] sm:$0xff]
    %v7000 = vld [vmem:[#allocation2 + $0xac] sm:$0xff]
    %v7001 = vld [vmem:[#allocation2 + $0xb4] sm:$0xff]
    %v7002 = vld [vmem:[#allocation2 + $0xbc] sm:$0xff]
    %v7003 = vpack.c.bf16 %v6984, %v6983
    %v7004 = vpack.c.bf16 %v6986, %v6985
    %v7005 = vpack.c.bf16 %v6988, %v6987
    %v7006 = vpack.c.bf16 %v6990, %v6989
    %v7007 = vpack.c.bf16 %v6992, %v6991
    %v7008 = vpack.c.bf16 %v6994, %v6993
    %v7009 = vpack.c.bf16 %v6996, %v6995
    %v7010 = vpack.c.bf16 %v6998, %v6997
    %v7011 = vpack.c.bf16 %v7000, %v6999
    %v7012 = vpack.c.bf16 %v7002, %v7001
    %s7013 = scalar_lea.vmem %s1, 112
    %v7014 = vld [vmem:[%s7013] sm:$0xf]
    %v7015 = vld [vmem:[%s7013 + $0x4] sm:$0xf]
    %v7018 = vunpack.c.l.b16 %v7014
    %v7019 = vunpack.c.l.b16 %v7015
    %v7020 = vpack.c.b16 %v7019, %v7018
    %v7023 = vsel %vm16, %v7003, 0
    %v7026 = vsel %vm16, %v7004, 0
    %v7029 = vsel %vm16, %v7005, 0
    %v7032 = vsel %vm16, %v7006, 0
    %v7035 = vsel %vm16, %v7007, 0
    %v7038 = vsel %vm16, %v7008, 0
    %v7041 = vsel %vm16, %v7009, 0
    %v7044 = vsel %vm16, %v7010, 0
    %v7047 = vsel %vm16, %v7011, 0
    %v7050 = vsel %vm16, %v7012, 0
    %7052 = vmatprep.subr.bf16.mxu0 0
    %7053 = vmatpush1.bf16.msra.mxu0 0
    %7054 = vmatprep.subr.bf16.mxu0 0
    %7055 = vmatpush1.bf16.msra.mxu0 0
    %7056 = vmatprep.subr.bf16.mxu0 0
    %7057 = vmatpush1.bf16.msra.mxu0 0
    %7058 = vmatprep.subr.bf16.mxu0 0
    %7059 = vmatpush1.bf16.msra.mxu0 0
    %7060 = vmatprep.subr.bf16.mxu0 0
    %7061 = vmatpush1.bf16.msra.mxu0 0
    %7062 = vmatprep.subr.bf16.mxu0 0
    %7063 = vmatpush1.bf16.msra.mxu0 0
    %7064 = vmatprep.subr.bf16.mxu0 0
    %7065 = vmatpush1.bf16.msra.mxu0 0
    %7066 = vmatprep.subr.bf16.mxu0 0
    %7067 = vmatpush1.bf16.msra.mxu0 %v7020
    %7068 = vmatprep.subr.bf16.mxu0 0
    %7069 = vmatpush2.bf16.msra.mxu0 0
    %7070 = vmatprep.subr.bf16.mxu0 0
    %7071 = vmatpush2.bf16.msra.mxu0 0
    %7072 = vmatprep.subr.bf16.mxu0 0
    %7073 = vmatpush2.bf16.msra.mxu0 0
    %7074 = vmatprep.subr.bf16.mxu0 0
    %7075 = vmatpush2.bf16.msra.mxu0 0
    %7076 = vmatprep.subr.bf16.mxu0 0
    %7077 = vmatpush2.bf16.msra.mxu0 0
    %7078 = vmatprep.subr.bf16.mxu0 0
    %7079 = vmatpush2.bf16.msra.mxu0 0
    %7080 = vmatprep.subr.bf16.mxu0 0
    %7081 = vmatpush2.bf16.msra.mxu0 0
    %7082 = vmatprep.subr.bf16.mxu0 0
    %7083 = vmatpush2.bf16.msra.mxu0 0
    %7084 = vmatprep.mubr.bf16.mxu0 0
    %7085 = vmatmul.mubr.bf16.gmra.mxu0 %v7023
    %v7086 = vpop.f32.mrf.mxu0
    %v7087 = vadd.f32 0.0, %v7086
    %v7088 = vpop.f32.mrf.mxu0
    %v7089 = vpop.f32.mrf.mxu0
    %v7090 = vadd.f32 0.0, %v7089
    %v7091 = vpop.f32.mrf.mxu0
    %7092 = vmatprep.mubr.bf16.mxu0 0
    %7093 = vmatmul.mubr.bf16.gmra.mxu0 %v7026
    %v7094 = vpop.f32.mrf.mxu0
    %v7095 = vadd.f32 0.0, %v7094
    %v7096 = vpop.f32.mrf.mxu0
    %v7097 = vpop.f32.mrf.mxu0
    %v7098 = vadd.f32 0.0, %v7097
    %v7099 = vpop.f32.mrf.mxu0
    %7100 = vmatprep.mubr.bf16.mxu0 0
    %7101 = vmatmul.mubr.bf16.gmra.mxu0 %v7029
    %v7102 = vpop.f32.mrf.mxu0
    %v7103 = vadd.f32 0.0, %v7102
    %v7104 = vpop.f32.mrf.mxu0
    %v7105 = vpop.f32.mrf.mxu0
    %v7106 = vadd.f32 0.0, %v7105
    %v7107 = vpop.f32.mrf.mxu0
    %7108 = vmatprep.mubr.bf16.mxu0 0
    %7109 = vmatmul.mubr.bf16.gmra.mxu0 %v7032
    %v7110 = vpop.f32.mrf.mxu0
    %v7111 = vadd.f32 0.0, %v7110
    %v7112 = vpop.f32.mrf.mxu0
    %v7113 = vpop.f32.mrf.mxu0
    %v7114 = vadd.f32 0.0, %v7113
    %v7115 = vpop.f32.mrf.mxu0
    %7116 = vmatprep.mubr.bf16.mxu0 0
    %7117 = vmatmul.mubr.bf16.gmra.mxu0 %v7035
    %v7118 = vpop.f32.mrf.mxu0
    %v7119 = vadd.f32 0.0, %v7118
    %v7120 = vpop.f32.mrf.mxu0
    %v7121 = vpop.f32.mrf.mxu0
    %v7122 = vadd.f32 0.0, %v7121
    %v7123 = vpop.f32.mrf.mxu0
    %7124 = vmatprep.mubr.bf16.mxu0 0
    %7125 = vmatmul.mubr.bf16.gmra.mxu0 %v7038
    %v7126 = vpop.f32.mrf.mxu0
    %v7127 = vadd.f32 0.0, %v7126
    %v7128 = vpop.f32.mrf.mxu0
    %v7129 = vpop.f32.mrf.mxu0
    %v7130 = vadd.f32 0.0, %v7129
    %v7131 = vpop.f32.mrf.mxu0
    %7132 = vmatprep.mubr.bf16.mxu0 0
    %7133 = vmatmul.mubr.bf16.gmra.mxu0 %v7041
    %v7134 = vpop.f32.mrf.mxu0
    %v7135 = vadd.f32 0.0, %v7134
    %v7136 = vpop.f32.mrf.mxu0
    %v7137 = vpop.f32.mrf.mxu0
    %v7138 = vadd.f32 0.0, %v7137
    %v7139 = vpop.f32.mrf.mxu0
    %7140 = vmatprep.mubr.bf16.mxu0 0
    %7141 = vmatmul.mubr.bf16.gmra.mxu0 %v7044
    %v7142 = vpop.f32.mrf.mxu0
    %v7143 = vadd.f32 0.0, %v7142
    %v7144 = vpop.f32.mrf.mxu0
    %v7145 = vpop.f32.mrf.mxu0
    %v7146 = vadd.f32 0.0, %v7145
    %v7147 = vpop.f32.mrf.mxu0
    %7148 = vmatprep.mubr.bf16.mxu0 0
    %7149 = vmatmul.mubr.bf16.gmra.mxu0 %v7047
    %v7150 = vpop.f32.mrf.mxu0
    %v7151 = vadd.f32 0.0, %v7150
    %v7152 = vpop.f32.mrf.mxu0
    %v7153 = vpop.f32.mrf.mxu0
    %v7154 = vadd.f32 0.0, %v7153
    %v7155 = vpop.f32.mrf.mxu0
    %7156 = vmatprep.mubr.bf16.mxu0 0
    %7157 = vmatmul.mubr.bf16.gmra.mxu0 %v7050
    %v7158 = vpop.f32.mrf.mxu0
    %v7159 = vadd.f32 0.0, %v7158
    %v7160 = vpop.f32.mrf.mxu0
    %v7161 = vpop.f32.mrf.mxu0
    %v7162 = vadd.f32 0.0, %v7161
    %v7163 = vpop.f32.mrf.mxu0
    %7164 = vdwg.mxu0
    %v7165 = vadd.f32 %v6963, %v7087
    %v7166 = vadd.f32 %v6964, %v7090
    %v7167 = vadd.f32 %v6965, %v7095
    %v7168 = vadd.f32 %v6966, %v7098
    %v7169 = vadd.f32 %v6967, %v7103
    %v7170 = vadd.f32 %v6968, %v7106
    %v7171 = vadd.f32 %v6969, %v7111
    %v7172 = vadd.f32 %v6970, %v7114
    %v7173 = vadd.f32 %v6971, %v7119
    %v7174 = vadd.f32 %v6972, %v7122
    %v7175 = vadd.f32 %v6973, %v7127
    %v7176 = vadd.f32 %v6974, %v7130
    %v7177 = vadd.f32 %v6975, %v7135
    %v7178 = vadd.f32 %v6976, %v7138
    %v7179 = vadd.f32 %v6977, %v7143
    %v7180 = vadd.f32 %v6978, %v7146
    %v7181 = vadd.f32 %v6979, %v7151
    %v7182 = vadd.f32 %v6980, %v7154
    %v7183 = vadd.f32 %v6981, %v7159
    %v7184 = vadd.f32 %v6982, %v7162
    %v7185 = vld [vmem:[#allocation2 + $0x14] sm:$0xff]
    %v7186 = vld [vmem:[#allocation2 + $0x1c] sm:$0xff]
    %v7187 = vld [vmem:[#allocation2 + $0x24] sm:$0xff]
    %v7188 = vld [vmem:[#allocation2 + $0x2c] sm:$0xff]
    %v7189 = vld [vmem:[#allocation2 + $0x34] sm:$0xff]
    %v7190 = vld [vmem:[#allocation2 + $0x3c] sm:$0xff]
    %v7191 = vld [vmem:[#allocation2 + $0x44] sm:$0xff]
    %v7192 = vld [vmem:[#allocation2 + $0x4c] sm:$0xff]
    %v7193 = vld [vmem:[#allocation2 + $0x54] sm:$0xff]
    %v7194 = vld [vmem:[#allocation2 + $0x5c] sm:$0xff]
    %v7195 = vld [vmem:[#allocation2 + $0x7c] sm:$0xff]
    %v7196 = vld [vmem:[#allocation2 + $0x84] sm:$0xff]
    %v7197 = vld [vmem:[#allocation2 + $0x8c] sm:$0xff]
    %v7198 = vld [vmem:[#allocation2 + $0x94] sm:$0xff]
    %v7199 = vld [vmem:[#allocation2 + $0x9c] sm:$0xff]
    %v7200 = vld [vmem:[#allocation2 + $0xa4] sm:$0xff]
    %v7201 = vld [vmem:[#allocation2 + $0xac] sm:$0xff]
    %v7202 = vld [vmem:[#allocation2 + $0xb4] sm:$0xff]
    %v7203 = vld [vmem:[#allocation2 + $0xbc] sm:$0xff]
    %v7204 = vld [vmem:[#allocation2 + $0xc4] sm:$0xff]
    %v7205 = vpack.c.bf16 %v7186, %v7185
    %v7206 = vpack.c.bf16 %v7188, %v7187
    %v7207 = vpack.c.bf16 %v7190, %v7189
    %v7208 = vpack.c.bf16 %v7192, %v7191
    %v7209 = vpack.c.bf16 %v7194, %v7193
    %v7210 = vpack.c.bf16 %v7196, %v7195
    %v7211 = vpack.c.bf16 %v7198, %v7197
    %v7212 = vpack.c.bf16 %v7200, %v7199
    %v7213 = vpack.c.bf16 %v7202, %v7201
    %v7214 = vpack.c.bf16 %v7204, %v7203
    %s7215 = scalar_lea.vmem %s1, 120
    %v7216 = vld [vmem:[%s7215] sm:$0xf]
    %v7217 = vld [vmem:[%s7215 + $0x4] sm:$0xf]
    %v7220 = vunpack.c.l.b16 %v7216
    %v7221 = vunpack.c.l.b16 %v7217
    %v7222 = vpack.c.b16 %v7221, %v7220
    %v7225 = vsel %vm16, %v7205, 0
    %v7228 = vsel %vm16, %v7206, 0
    %v7231 = vsel %vm16, %v7207, 0
    %v7234 = vsel %vm16, %v7208, 0
    %v7237 = vsel %vm16, %v7209, 0
    %v7240 = vsel %vm16, %v7210, 0
    %v7243 = vsel %vm16, %v7211, 0
    %v7246 = vsel %vm16, %v7212, 0
    %v7249 = vsel %vm16, %v7213, 0
    %v7252 = vsel %vm16, %v7214, 0
    %7254 = vmatprep.subr.bf16.mxu0 0
    %7255 = vmatpush1.bf16.msra.mxu0 0
    %7256 = vmatprep.subr.bf16.mxu0 0
    %7257 = vmatpush1.bf16.msra.mxu0 0
    %7258 = vmatprep.subr.bf16.mxu0 0
    %7259 = vmatpush1.bf16.msra.mxu0 0
    %7260 = vmatprep.subr.bf16.mxu0 0
    %7261 = vmatpush1.bf16.msra.mxu0 0
    %7262 = vmatprep.subr.bf16.mxu0 0
    %7263 = vmatpush1.bf16.msra.mxu0 0
    %7264 = vmatprep.subr.bf16.mxu0 0
    %7265 = vmatpush1.bf16.msra.mxu0 0
    %7266 = vmatprep.subr.bf16.mxu0 0
    %7267 = vmatpush1.bf16.msra.mxu0 0
    %7268 = vmatprep.subr.bf16.mxu0 0
    %7269 = vmatpush1.bf16.msra.mxu0 %v7222
    %7270 = vmatprep.subr.bf16.mxu0 0
    %7271 = vmatpush2.bf16.msra.mxu0 0
    %7272 = vmatprep.subr.bf16.mxu0 0
    %7273 = vmatpush2.bf16.msra.mxu0 0
    %7274 = vmatprep.subr.bf16.mxu0 0
    %7275 = vmatpush2.bf16.msra.mxu0 0
    %7276 = vmatprep.subr.bf16.mxu0 0
    %7277 = vmatpush2.bf16.msra.mxu0 0
    %7278 = vmatprep.subr.bf16.mxu0 0
    %7279 = vmatpush2.bf16.msra.mxu0 0
    %7280 = vmatprep.subr.bf16.mxu0 0
    %7281 = vmatpush2.bf16.msra.mxu0 0
    %7282 = vmatprep.subr.bf16.mxu0 0
    %7283 = vmatpush2.bf16.msra.mxu0 0
    %7284 = vmatprep.subr.bf16.mxu0 0
    %7285 = vmatpush2.bf16.msra.mxu0 0
    %7286 = vmatprep.mubr.bf16.mxu0 0
    %7287 = vmatmul.mubr.bf16.gmra.mxu0 %v7225
    %v7288 = vpop.f32.mrf.mxu0
    %v7289 = vadd.f32 0.0, %v7288
    %v7290 = vpop.f32.mrf.mxu0
    %v7291 = vpop.f32.mrf.mxu0
    %v7292 = vadd.f32 0.0, %v7291
    %v7293 = vpop.f32.mrf.mxu0
    %7294 = vmatprep.mubr.bf16.mxu0 0
    %7295 = vmatmul.mubr.bf16.gmra.mxu0 %v7228
    %v7296 = vpop.f32.mrf.mxu0
    %v7297 = vadd.f32 0.0, %v7296
    %v7298 = vpop.f32.mrf.mxu0
    %v7299 = vpop.f32.mrf.mxu0
    %v7300 = vadd.f32 0.0, %v7299
    %v7301 = vpop.f32.mrf.mxu0
    %7302 = vmatprep.mubr.bf16.mxu0 0
    %7303 = vmatmul.mubr.bf16.gmra.mxu0 %v7231
    %v7304 = vpop.f32.mrf.mxu0
    %v7305 = vadd.f32 0.0, %v7304
    %v7306 = vpop.f32.mrf.mxu0
    %v7307 = vpop.f32.mrf.mxu0
    %v7308 = vadd.f32 0.0, %v7307
    %v7309 = vpop.f32.mrf.mxu0
    %7310 = vmatprep.mubr.bf16.mxu0 0
    %7311 = vmatmul.mubr.bf16.gmra.mxu0 %v7234
    %v7312 = vpop.f32.mrf.mxu0
    %v7313 = vadd.f32 0.0, %v7312
    %v7314 = vpop.f32.mrf.mxu0
    %v7315 = vpop.f32.mrf.mxu0
    %v7316 = vadd.f32 0.0, %v7315
    %v7317 = vpop.f32.mrf.mxu0
    %7318 = vmatprep.mubr.bf16.mxu0 0
    %7319 = vmatmul.mubr.bf16.gmra.mxu0 %v7237
    %v7320 = vpop.f32.mrf.mxu0
    %v7321 = vadd.f32 0.0, %v7320
    %v7322 = vpop.f32.mrf.mxu0
    %v7323 = vpop.f32.mrf.mxu0
    %v7324 = vadd.f32 0.0, %v7323
    %v7325 = vpop.f32.mrf.mxu0
    %7326 = vmatprep.mubr.bf16.mxu0 0
    %7327 = vmatmul.mubr.bf16.gmra.mxu0 %v7240
    %v7328 = vpop.f32.mrf.mxu0
    %v7329 = vadd.f32 0.0, %v7328
    %v7330 = vpop.f32.mrf.mxu0
    %v7331 = vpop.f32.mrf.mxu0
    %v7332 = vadd.f32 0.0, %v7331
    %v7333 = vpop.f32.mrf.mxu0
    %7334 = vmatprep.mubr.bf16.mxu0 0
    %7335 = vmatmul.mubr.bf16.gmra.mxu0 %v7243
    %v7336 = vpop.f32.mrf.mxu0
    %v7337 = vadd.f32 0.0, %v7336
    %v7338 = vpop.f32.mrf.mxu0
    %v7339 = vpop.f32.mrf.mxu0
    %v7340 = vadd.f32 0.0, %v7339
    %v7341 = vpop.f32.mrf.mxu0
    %7342 = vmatprep.mubr.bf16.mxu0 0
    %7343 = vmatmul.mubr.bf16.gmra.mxu0 %v7246
    %v7344 = vpop.f32.mrf.mxu0
    %v7345 = vadd.f32 0.0, %v7344
    %v7346 = vpop.f32.mrf.mxu0
    %v7347 = vpop.f32.mrf.mxu0
    %v7348 = vadd.f32 0.0, %v7347
    %v7349 = vpop.f32.mrf.mxu0
    %7350 = vmatprep.mubr.bf16.mxu0 0
    %7351 = vmatmul.mubr.bf16.gmra.mxu0 %v7249
    %v7352 = vpop.f32.mrf.mxu0
    %v7353 = vadd.f32 0.0, %v7352
    %v7354 = vpop.f32.mrf.mxu0
    %v7355 = vpop.f32.mrf.mxu0
    %v7356 = vadd.f32 0.0, %v7355
    %v7357 = vpop.f32.mrf.mxu0
    %7358 = vmatprep.mubr.bf16.mxu0 0
    %7359 = vmatmul.mubr.bf16.gmra.mxu0 %v7252
    %v7360 = vpop.f32.mrf.mxu0
    %v7361 = vadd.f32 0.0, %v7360
    %v7362 = vpop.f32.mrf.mxu0
    %v7363 = vpop.f32.mrf.mxu0
    %v7364 = vadd.f32 0.0, %v7363
    %v7365 = vpop.f32.mrf.mxu0
    %7366 = vdwg.mxu0
    %v7367 = vadd.f32 %v7165, %v7289
    %v7368 = vadd.f32 %v7166, %v7292
    %v7369 = vadd.f32 %v7167, %v7297
    %v7370 = vadd.f32 %v7168, %v7300
    %v7371 = vadd.f32 %v7169, %v7305
    %v7372 = vadd.f32 %v7170, %v7308
    %v7373 = vadd.f32 %v7171, %v7313
    %v7374 = vadd.f32 %v7172, %v7316
    %v7375 = vadd.f32 %v7173, %v7321
    %v7376 = vadd.f32 %v7174, %v7324
    %v7377 = vadd.f32 %v7175, %v7329
    %v7378 = vadd.f32 %v7176, %v7332
    %v7379 = vadd.f32 %v7177, %v7337
    %v7380 = vadd.f32 %v7178, %v7340
    %v7381 = vadd.f32 %v7179, %v7345
    %v7382 = vadd.f32 %v7180, %v7348
    %v7383 = vadd.f32 %v7181, %v7353
    %v7384 = vadd.f32 %v7182, %v7356
    %v7385 = vadd.f32 %v7183, %v7361
    %v7386 = vadd.f32 %v7184, %v7364
    %v7387 = vld [vmem:[#allocation2 + $0x15] sm:$0xff]
    %v7388 = vld [vmem:[#allocation2 + $0x1d] sm:$0xff]
    %v7389 = vld [vmem:[#allocation2 + $0x25] sm:$0xff]
    %v7390 = vld [vmem:[#allocation2 + $0x2d] sm:$0xff]
    %v7391 = vld [vmem:[#allocation2 + $0x35] sm:$0xff]
    %v7392 = vld [vmem:[#allocation2 + $0x3d] sm:$0xff]
    %v7393 = vld [vmem:[#allocation2 + $0x45] sm:$0xff]
    %v7394 = vld [vmem:[#allocation2 + $0x4d] sm:$0xff]
    %v7395 = vld [vmem:[#allocation2 + $0x55] sm:$0xff]
    %v7396 = vld [vmem:[#allocation2 + $0x5d] sm:$0xff]
    %v7397 = vld [vmem:[#allocation2 + $0x7d] sm:$0xff]
    %v7398 = vld [vmem:[#allocation2 + $0x85] sm:$0xff]
    %v7399 = vld [vmem:[#allocation2 + $0x8d] sm:$0xff]
    %v7400 = vld [vmem:[#allocation2 + $0x95] sm:$0xff]
    %v7401 = vld [vmem:[#allocation2 + $0x9d] sm:$0xff]
    %v7402 = vld [vmem:[#allocation2 + $0xa5] sm:$0xff]
    %v7403 = vld [vmem:[#allocation2 + $0xad] sm:$0xff]
    %v7404 = vld [vmem:[#allocation2 + $0xb5] sm:$0xff]
    %v7405 = vld [vmem:[#allocation2 + $0xbd] sm:$0xff]
    %v7406 = vld [vmem:[#allocation2 + $0xc5] sm:$0xff]
    %v7407 = vpack.c.bf16 %v7388, %v7387
    %v7408 = vpack.c.bf16 %v7390, %v7389
    %v7409 = vpack.c.bf16 %v7392, %v7391
    %v7410 = vpack.c.bf16 %v7394, %v7393
    %v7411 = vpack.c.bf16 %v7396, %v7395
    %v7412 = vpack.c.bf16 %v7398, %v7397
    %v7413 = vpack.c.bf16 %v7400, %v7399
    %v7414 = vpack.c.bf16 %v7402, %v7401
    %v7415 = vpack.c.bf16 %v7404, %v7403
    %v7416 = vpack.c.bf16 %v7406, %v7405
    %s7417 = scalar_lea.vmem %s1, 128
    %v7418 = vld [vmem:[%s7417] sm:$0xf]
    %v7419 = vld [vmem:[%s7417 + $0x4] sm:$0xf]
    %v7422 = vunpack.c.l.b16 %v7418
    %v7423 = vunpack.c.l.b16 %v7419
    %v7424 = vpack.c.b16 %v7423, %v7422
    %v7427 = vsel %vm16, %v7407, 0
    %v7430 = vsel %vm16, %v7408, 0
    %v7433 = vsel %vm16, %v7409, 0
    %v7436 = vsel %vm16, %v7410, 0
    %v7439 = vsel %vm16, %v7411, 0
    %v7442 = vsel %vm16, %v7412, 0
    %v7445 = vsel %vm16, %v7413, 0
    %v7448 = vsel %vm16, %v7414, 0
    %v7451 = vsel %vm16, %v7415, 0
    %v7454 = vsel %vm16, %v7416, 0
    %7456 = vmatprep.subr.bf16.mxu0 0
    %7457 = vmatpush1.bf16.msra.mxu0 0
    %7458 = vmatprep.subr.bf16.mxu0 0
    %7459 = vmatpush1.bf16.msra.mxu0 0
    %7460 = vmatprep.subr.bf16.mxu0 0
    %7461 = vmatpush1.bf16.msra.mxu0 0
    %7462 = vmatprep.subr.bf16.mxu0 0
    %7463 = vmatpush1.bf16.msra.mxu0 0
    %7464 = vmatprep.subr.bf16.mxu0 0
    %7465 = vmatpush1.bf16.msra.mxu0 0
    %7466 = vmatprep.subr.bf16.mxu0 0
    %7467 = vmatpush1.bf16.msra.mxu0 0
    %7468 = vmatprep.subr.bf16.mxu0 0
    %7469 = vmatpush1.bf16.msra.mxu0 0
    %7470 = vmatprep.subr.bf16.mxu0 0
    %7471 = vmatpush1.bf16.msra.mxu0 %v7424
    %7472 = vmatprep.subr.bf16.mxu0 0
    %7473 = vmatpush2.bf16.msra.mxu0 0
    %7474 = vmatprep.subr.bf16.mxu0 0
    %7475 = vmatpush2.bf16.msra.mxu0 0
    %7476 = vmatprep.subr.bf16.mxu0 0
    %7477 = vmatpush2.bf16.msra.mxu0 0
    %7478 = vmatprep.subr.bf16.mxu0 0
    %7479 = vmatpush2.bf16.msra.mxu0 0
    %7480 = vmatprep.subr.bf16.mxu0 0
    %7481 = vmatpush2.bf16.msra.mxu0 0
    %7482 = vmatprep.subr.bf16.mxu0 0
    %7483 = vmatpush2.bf16.msra.mxu0 0
    %7484 = vmatprep.subr.bf16.mxu0 0
    %7485 = vmatpush2.bf16.msra.mxu0 0
    %7486 = vmatprep.subr.bf16.mxu0 0
    %7487 = vmatpush2.bf16.msra.mxu0 0
    %7488 = vmatprep.mubr.bf16.mxu0 0
    %7489 = vmatmul.mubr.bf16.gmra.mxu0 %v7427
    %v7490 = vpop.f32.mrf.mxu0
    %v7491 = vadd.f32 0.0, %v7490
    %v7492 = vpop.f32.mrf.mxu0
    %v7493 = vpop.f32.mrf.mxu0
    %v7494 = vadd.f32 0.0, %v7493
    %v7495 = vpop.f32.mrf.mxu0
    %7496 = vmatprep.mubr.bf16.mxu0 0
    %7497 = vmatmul.mubr.bf16.gmra.mxu0 %v7430
    %v7498 = vpop.f32.mrf.mxu0
    %v7499 = vadd.f32 0.0, %v7498
    %v7500 = vpop.f32.mrf.mxu0
    %v7501 = vpop.f32.mrf.mxu0
    %v7502 = vadd.f32 0.0, %v7501
    %v7503 = vpop.f32.mrf.mxu0
    %7504 = vmatprep.mubr.bf16.mxu0 0
    %7505 = vmatmul.mubr.bf16.gmra.mxu0 %v7433
    %v7506 = vpop.f32.mrf.mxu0
    %v7507 = vadd.f32 0.0, %v7506
    %v7508 = vpop.f32.mrf.mxu0
    %v7509 = vpop.f32.mrf.mxu0
    %v7510 = vadd.f32 0.0, %v7509
    %v7511 = vpop.f32.mrf.mxu0
    %7512 = vmatprep.mubr.bf16.mxu0 0
    %7513 = vmatmul.mubr.bf16.gmra.mxu0 %v7436
    %v7514 = vpop.f32.mrf.mxu0
    %v7515 = vadd.f32 0.0, %v7514
    %v7516 = vpop.f32.mrf.mxu0
    %v7517 = vpop.f32.mrf.mxu0
    %v7518 = vadd.f32 0.0, %v7517
    %v7519 = vpop.f32.mrf.mxu0
    %7520 = vmatprep.mubr.bf16.mxu0 0
    %7521 = vmatmul.mubr.bf16.gmra.mxu0 %v7439
    %v7522 = vpop.f32.mrf.mxu0
    %v7523 = vadd.f32 0.0, %v7522
    %v7524 = vpop.f32.mrf.mxu0
    %v7525 = vpop.f32.mrf.mxu0
    %v7526 = vadd.f32 0.0, %v7525
    %v7527 = vpop.f32.mrf.mxu0
    %7528 = vmatprep.mubr.bf16.mxu0 0
    %7529 = vmatmul.mubr.bf16.gmra.mxu0 %v7442
    %v7530 = vpop.f32.mrf.mxu0
    %v7531 = vadd.f32 0.0, %v7530
    %v7532 = vpop.f32.mrf.mxu0
    %v7533 = vpop.f32.mrf.mxu0
    %v7534 = vadd.f32 0.0, %v7533
    %v7535 = vpop.f32.mrf.mxu0
    %7536 = vmatprep.mubr.bf16.mxu0 0
    %7537 = vmatmul.mubr.bf16.gmra.mxu0 %v7445
    %v7538 = vpop.f32.mrf.mxu0
    %v7539 = vadd.f32 0.0, %v7538
    %v7540 = vpop.f32.mrf.mxu0
    %v7541 = vpop.f32.mrf.mxu0
    %v7542 = vadd.f32 0.0, %v7541
    %v7543 = vpop.f32.mrf.mxu0
    %7544 = vmatprep.mubr.bf16.mxu0 0
    %7545 = vmatmul.mubr.bf16.gmra.mxu0 %v7448
    %v7546 = vpop.f32.mrf.mxu0
    %v7547 = vadd.f32 0.0, %v7546
    %v7548 = vpop.f32.mrf.mxu0
    %v7549 = vpop.f32.mrf.mxu0
    %v7550 = vadd.f32 0.0, %v7549
    %v7551 = vpop.f32.mrf.mxu0
    %7552 = vmatprep.mubr.bf16.mxu0 0
    %7553 = vmatmul.mubr.bf16.gmra.mxu0 %v7451
    %v7554 = vpop.f32.mrf.mxu0
    %v7555 = vadd.f32 0.0, %v7554
    %v7556 = vpop.f32.mrf.mxu0
    %v7557 = vpop.f32.mrf.mxu0
    %v7558 = vadd.f32 0.0, %v7557
    %v7559 = vpop.f32.mrf.mxu0
    %7560 = vmatprep.mubr.bf16.mxu0 0
    %7561 = vmatmul.mubr.bf16.gmra.mxu0 %v7454
    %v7562 = vpop.f32.mrf.mxu0
    %v7563 = vadd.f32 0.0, %v7562
    %v7564 = vpop.f32.mrf.mxu0
    %v7565 = vpop.f32.mrf.mxu0
    %v7566 = vadd.f32 0.0, %v7565
    %v7567 = vpop.f32.mrf.mxu0
    %7568 = vdwg.mxu0
    %v7569 = vadd.f32 %v7367, %v7491
    %v7570 = vadd.f32 %v7368, %v7494
    %v7571 = vadd.f32 %v7369, %v7499
    %v7572 = vadd.f32 %v7370, %v7502
    %v7573 = vadd.f32 %v7371, %v7507
    %v7574 = vadd.f32 %v7372, %v7510
    %v7575 = vadd.f32 %v7373, %v7515
    %v7576 = vadd.f32 %v7374, %v7518
    %v7577 = vadd.f32 %v7375, %v7523
    %v7578 = vadd.f32 %v7376, %v7526
    %v7579 = vadd.f32 %v7377, %v7531
    %v7580 = vadd.f32 %v7378, %v7534
    %v7581 = vadd.f32 %v7379, %v7539
    %v7582 = vadd.f32 %v7380, %v7542
    %v7583 = vadd.f32 %v7381, %v7547
    %v7584 = vadd.f32 %v7382, %v7550
    %v7585 = vadd.f32 %v7383, %v7555
    %v7586 = vadd.f32 %v7384, %v7558
    %v7587 = vadd.f32 %v7385, %v7563
    %v7588 = vadd.f32 %v7386, %v7566
    %v7589 = vld [vmem:[#allocation2 + $0x16] sm:$0xff]
    %v7590 = vld [vmem:[#allocation2 + $0x1e] sm:$0xff]
    %v7591 = vld [vmem:[#allocation2 + $0x26] sm:$0xff]
    %v7592 = vld [vmem:[#allocation2 + $0x2e] sm:$0xff]
    %v7593 = vld [vmem:[#allocation2 + $0x36] sm:$0xff]
    %v7594 = vld [vmem:[#allocation2 + $0x3e] sm:$0xff]
    %v7595 = vld [vmem:[#allocation2 + $0x46] sm:$0xff]
    %v7596 = vld [vmem:[#allocation2 + $0x4e] sm:$0xff]
    %v7597 = vld [vmem:[#allocation2 + $0x56] sm:$0xff]
    %v7598 = vld [vmem:[#allocation2 + $0x5e] sm:$0xff]
    %v7599 = vld [vmem:[#allocation2 + $0x7e] sm:$0xff]
    %v7600 = vld [vmem:[#allocation2 + $0x86] sm:$0xff]
    %v7601 = vld [vmem:[#allocation2 + $0x8e] sm:$0xff]
    %v7602 = vld [vmem:[#allocation2 + $0x96] sm:$0xff]
    %v7603 = vld [vmem:[#allocation2 + $0x9e] sm:$0xff]
    %v7604 = vld [vmem:[#allocation2 + $0xa6] sm:$0xff]
    %v7605 = vld [vmem:[#allocation2 + $0xae] sm:$0xff]
    %v7606 = vld [vmem:[#allocation2 + $0xb6] sm:$0xff]
    %v7607 = vld [vmem:[#allocation2 + $0xbe] sm:$0xff]
    %v7608 = vld [vmem:[#allocation2 + $0xc6] sm:$0xff]
    %v7609 = vpack.c.bf16 %v7590, %v7589
    %v7610 = vpack.c.bf16 %v7592, %v7591
    %v7611 = vpack.c.bf16 %v7594, %v7593
    %v7612 = vpack.c.bf16 %v7596, %v7595
    %v7613 = vpack.c.bf16 %v7598, %v7597
    %v7614 = vpack.c.bf16 %v7600, %v7599
    %v7615 = vpack.c.bf16 %v7602, %v7601
    %v7616 = vpack.c.bf16 %v7604, %v7603
    %v7617 = vpack.c.bf16 %v7606, %v7605
    %v7618 = vpack.c.bf16 %v7608, %v7607
    %s7619 = scalar_lea.vmem %s1, 136
    %v7620 = vld [vmem:[%s7619] sm:$0xf]
    %v7621 = vld [vmem:[%s7619 + $0x4] sm:$0xf]
    %v7624 = vunpack.c.l.b16 %v7620
    %v7625 = vunpack.c.l.b16 %v7621
    %v7626 = vpack.c.b16 %v7625, %v7624
    %v7629 = vsel %vm16, %v7609, 0
    %v7632 = vsel %vm16, %v7610, 0
    %v7635 = vsel %vm16, %v7611, 0
    %v7638 = vsel %vm16, %v7612, 0
    %v7641 = vsel %vm16, %v7613, 0
    %v7644 = vsel %vm16, %v7614, 0
    %v7647 = vsel %vm16, %v7615, 0
    %v7650 = vsel %vm16, %v7616, 0
    %v7653 = vsel %vm16, %v7617, 0
    %v7656 = vsel %vm16, %v7618, 0
    %7658 = vmatprep.subr.bf16.mxu0 0
    %7659 = vmatpush1.bf16.msra.mxu0 0
    %7660 = vmatprep.subr.bf16.mxu0 0
    %7661 = vmatpush1.bf16.msra.mxu0 0
    %7662 = vmatprep.subr.bf16.mxu0 0
    %7663 = vmatpush1.bf16.msra.mxu0 0
    %7664 = vmatprep.subr.bf16.mxu0 0
    %7665 = vmatpush1.bf16.msra.mxu0 0
    %7666 = vmatprep.subr.bf16.mxu0 0
    %7667 = vmatpush1.bf16.msra.mxu0 0
    %7668 = vmatprep.subr.bf16.mxu0 0
    %7669 = vmatpush1.bf16.msra.mxu0 0
    %7670 = vmatprep.subr.bf16.mxu0 0
    %7671 = vmatpush1.bf16.msra.mxu0 0
    %7672 = vmatprep.subr.bf16.mxu0 0
    %7673 = vmatpush1.bf16.msra.mxu0 %v7626
    %7674 = vmatprep.subr.bf16.mxu0 0
    %7675 = vmatpush2.bf16.msra.mxu0 0
    %7676 = vmatprep.subr.bf16.mxu0 0
    %7677 = vmatpush2.bf16.msra.mxu0 0
    %7678 = vmatprep.subr.bf16.mxu0 0
    %7679 = vmatpush2.bf16.msra.mxu0 0
    %7680 = vmatprep.subr.bf16.mxu0 0
    %7681 = vmatpush2.bf16.msra.mxu0 0
    %7682 = vmatprep.subr.bf16.mxu0 0
    %7683 = vmatpush2.bf16.msra.mxu0 0
    %7684 = vmatprep.subr.bf16.mxu0 0
    %7685 = vmatpush2.bf16.msra.mxu0 0
    %7686 = vmatprep.subr.bf16.mxu0 0
    %7687 = vmatpush2.bf16.msra.mxu0 0
    %7688 = vmatprep.subr.bf16.mxu0 0
    %7689 = vmatpush2.bf16.msra.mxu0 0
    %7690 = vmatprep.mubr.bf16.mxu0 0
    %7691 = vmatmul.mubr.bf16.gmra.mxu0 %v7629
    %v7692 = vpop.f32.mrf.mxu0
    %v7693 = vadd.f32 0.0, %v7692
    %v7694 = vpop.f32.mrf.mxu0
    %v7695 = vpop.f32.mrf.mxu0
    %v7696 = vadd.f32 0.0, %v7695
    %v7697 = vpop.f32.mrf.mxu0
    %7698 = vmatprep.mubr.bf16.mxu0 0
    %7699 = vmatmul.mubr.bf16.gmra.mxu0 %v7632
    %v7700 = vpop.f32.mrf.mxu0
    %v7701 = vadd.f32 0.0, %v7700
    %v7702 = vpop.f32.mrf.mxu0
    %v7703 = vpop.f32.mrf.mxu0
    %v7704 = vadd.f32 0.0, %v7703
    %v7705 = vpop.f32.mrf.mxu0
    %7706 = vmatprep.mubr.bf16.mxu0 0
    %7707 = vmatmul.mubr.bf16.gmra.mxu0 %v7635
    %v7708 = vpop.f32.mrf.mxu0
    %v7709 = vadd.f32 0.0, %v7708
    %v7710 = vpop.f32.mrf.mxu0
    %v7711 = vpop.f32.mrf.mxu0
    %v7712 = vadd.f32 0.0, %v7711
    %v7713 = vpop.f32.mrf.mxu0
    %7714 = vmatprep.mubr.bf16.mxu0 0
    %7715 = vmatmul.mubr.bf16.gmra.mxu0 %v7638
    %v7716 = vpop.f32.mrf.mxu0
    %v7717 = vadd.f32 0.0, %v7716
    %v7718 = vpop.f32.mrf.mxu0
    %v7719 = vpop.f32.mrf.mxu0
    %v7720 = vadd.f32 0.0, %v7719
    %v7721 = vpop.f32.mrf.mxu0
    %7722 = vmatprep.mubr.bf16.mxu0 0
    %7723 = vmatmul.mubr.bf16.gmra.mxu0 %v7641
    %v7724 = vpop.f32.mrf.mxu0
    %v7725 = vadd.f32 0.0, %v7724
    %v7726 = vpop.f32.mrf.mxu0
    %v7727 = vpop.f32.mrf.mxu0
    %v7728 = vadd.f32 0.0, %v7727
    %v7729 = vpop.f32.mrf.mxu0
    %7730 = vmatprep.mubr.bf16.mxu0 0
    %7731 = vmatmul.mubr.bf16.gmra.mxu0 %v7644
    %v7732 = vpop.f32.mrf.mxu0
    %v7733 = vadd.f32 0.0, %v7732
    %v7734 = vpop.f32.mrf.mxu0
    %v7735 = vpop.f32.mrf.mxu0
    %v7736 = vadd.f32 0.0, %v7735
    %v7737 = vpop.f32.mrf.mxu0
    %7738 = vmatprep.mubr.bf16.mxu0 0
    %7739 = vmatmul.mubr.bf16.gmra.mxu0 %v7647
    %v7740 = vpop.f32.mrf.mxu0
    %v7741 = vadd.f32 0.0, %v7740
    %v7742 = vpop.f32.mrf.mxu0
    %v7743 = vpop.f32.mrf.mxu0
    %v7744 = vadd.f32 0.0, %v7743
    %v7745 = vpop.f32.mrf.mxu0
    %7746 = vmatprep.mubr.bf16.mxu0 0
    %7747 = vmatmul.mubr.bf16.gmra.mxu0 %v7650
    %v7748 = vpop.f32.mrf.mxu0
    %v7749 = vadd.f32 0.0, %v7748
    %v7750 = vpop.f32.mrf.mxu0
    %v7751 = vpop.f32.mrf.mxu0
    %v7752 = vadd.f32 0.0, %v7751
    %v7753 = vpop.f32.mrf.mxu0
    %7754 = vmatprep.mubr.bf16.mxu0 0
    %7755 = vmatmul.mubr.bf16.gmra.mxu0 %v7653
    %v7756 = vpop.f32.mrf.mxu0
    %v7757 = vadd.f32 0.0, %v7756
    %v7758 = vpop.f32.mrf.mxu0
    %v7759 = vpop.f32.mrf.mxu0
    %v7760 = vadd.f32 0.0, %v7759
    %v7761 = vpop.f32.mrf.mxu0
    %7762 = vmatprep.mubr.bf16.mxu0 0
    %7763 = vmatmul.mubr.bf16.gmra.mxu0 %v7656
    %v7764 = vpop.f32.mrf.mxu0
    %v7765 = vadd.f32 0.0, %v7764
    %v7766 = vpop.f32.mrf.mxu0
    %v7767 = vpop.f32.mrf.mxu0
    %v7768 = vadd.f32 0.0, %v7767
    %v7769 = vpop.f32.mrf.mxu0
    %7770 = vdwg.mxu0
    %v7771 = vadd.f32 %v7569, %v7693
    %v7772 = vadd.f32 %v7570, %v7696
    %v7773 = vadd.f32 %v7571, %v7701
    %v7774 = vadd.f32 %v7572, %v7704
    %v7775 = vadd.f32 %v7573, %v7709
    %v7776 = vadd.f32 %v7574, %v7712
    %v7777 = vadd.f32 %v7575, %v7717
    %v7778 = vadd.f32 %v7576, %v7720
    %v7779 = vadd.f32 %v7577, %v7725
    %v7780 = vadd.f32 %v7578, %v7728
    %v7781 = vadd.f32 %v7579, %v7733
    %v7782 = vadd.f32 %v7580, %v7736
    %v7783 = vadd.f32 %v7581, %v7741
    %v7784 = vadd.f32 %v7582, %v7744
    %v7785 = vadd.f32 %v7583, %v7749
    %v7786 = vadd.f32 %v7584, %v7752
    %v7787 = vadd.f32 %v7585, %v7757
    %v7788 = vadd.f32 %v7586, %v7760
    %v7789 = vadd.f32 %v7587, %v7765
    %v7790 = vadd.f32 %v7588, %v7768
    %v7791 = vmax.f32 %v7771, 0.0
    %v7792 = vmax.f32 %v7772, 0.0
    %v7793 = vmax.f32 %v7773, 0.0
    %v7794 = vmax.f32 %v7774, 0.0
    %v7795 = vmax.f32 %v7775, 0.0
    %v7796 = vmax.f32 %v7776, 0.0
    %v7797 = vmax.f32 %v7777, 0.0
    %v7798 = vmax.f32 %v7778, 0.0
    %v7799 = vmax.f32 %v7779, 0.0
    %v7800 = vmax.f32 %v7780, 0.0
    %v7801 = vmax.f32 %v7781, 0.0
    %v7802 = vmax.f32 %v7782, 0.0
    %v7803 = vmax.f32 %v7783, 0.0
    %v7804 = vmax.f32 %v7784, 0.0
    %v7805 = vmax.f32 %v7785, 0.0
    %v7806 = vmax.f32 %v7786, 0.0
    %v7807 = vmax.f32 %v7787, 0.0
    %v7808 = vmax.f32 %v7788, 0.0
    %v7809 = vmax.f32 %v7789, 0.0
    %v7810 = vmax.f32 %v7790, 0.0
    %7811 = vst.msk [vmem:[#allocation5] sm:$0xff] %vm16, %v7791
    %7812 = vst.msk [vmem:[#allocation5 + $0x8] sm:$0xff] %vm16, %v7792
    %7813 = vst.msk [vmem:[#allocation5 + $0x10] sm:$0xff] %vm16, %v7793
    %7814 = vst.msk [vmem:[#allocation5 + $0x18] sm:$0xff] %vm16, %v7794
    %7815 = vst.msk [vmem:[#allocation5 + $0x20] sm:$0xff] %vm16, %v7795
    %7816 = vst.msk [vmem:[#allocation5 + $0x28] sm:$0xff] %vm16, %v7796
    %7817 = vst.msk [vmem:[#allocation5 + $0x30] sm:$0xff] %vm16, %v7797
    %7818 = vst.msk [vmem:[#allocation5 + $0x38] sm:$0xff] %vm16, %v7798
    %7819 = vst.msk [vmem:[#allocation5 + $0x40] sm:$0xff] %vm16, %v7799
    %7820 = vst.msk [vmem:[#allocation5 + $0x48] sm:$0xff] %vm16, %v7800
    %7821 = vst.msk [vmem:[#allocation5 + $0x50] sm:$0xff] %vm16, %v7801
    %7822 = vst.msk [vmem:[#allocation5 + $0x58] sm:$0xff] %vm16, %v7802
    %7823 = vst.msk [vmem:[#allocation5 + $0x60] sm:$0xff] %vm16, %v7803
    %7824 = vst.msk [vmem:[#allocation5 + $0x68] sm:$0xff] %vm16, %v7804
    %7825 = vst.msk [vmem:[#allocation5 + $0x70] sm:$0xff] %vm16, %v7805
    %7826 = vst.msk [vmem:[#allocation5 + $0x78] sm:$0xff] %vm16, %v7806
    %7827 = vst.msk [vmem:[#allocation5 + $0x80] sm:$0xff] %vm16, %v7807
    %7828 = vst.msk [vmem:[#allocation5 + $0x88] sm:$0xff] %vm16, %v7808
    %7829 = vst.msk [vmem:[#allocation5 + $0x90] sm:$0xff] %vm16, %v7809
    %7830 = vst.msk [vmem:[#allocation5 + $0x98] sm:$0xff] %vm16, %v7810
    %v7831 = vld [vmem:[#allocation5] ss:$2 sm:$0xf]
    %v7832 = vld [vmem:[%s5774] ss:$2 sm:$0xf]
    %s7833 = scalar_lea.vmem [#allocation5], 10
    %v7834 = vld [vmem:[%s7833] ss:$2 sm:$0xf]
    %s7835 = scalar_lea.vmem [#allocation5], 11
    %v7836 = vld [vmem:[%s7835] ss:$2 sm:$0xf]
    %v7837 = vmax.f32 %v7831, %v7832
    %v7838 = vmax.f32 %v7834, %v7836
    %v7839 = vmax.f32 %v7837, %v7838
    %vm7840 = vcmask 125952
    %7841 = vst.msk [vmem:[#allocation3 + $0x7] sm:$0xf] %vm7840, %v7839
    %s7842 = scalar_lea.vmem [#allocation5], 20
    %v7843 = vld [vmem:[%s7842] ss:$2 sm:$0xf]
    %s7844 = scalar_lea.vmem [#allocation5], 21
    %v7845 = vld [vmem:[%s7844] ss:$2 sm:$0xf]
    %s7846 = scalar_lea.vmem [#allocation5], 30
    %v7847 = vld [vmem:[%s7846] ss:$2 sm:$0xf]
    %s7848 = scalar_lea.vmem [#allocation5], 31
    %v7849 = vld [vmem:[%s7848] ss:$2 sm:$0xf]
    %v7850 = vmax.f32 %v7843, %v7845
    %v7851 = vmax.f32 %v7847, %v7849
    %v7852 = vmax.f32 %v7850, %v7851
    %7853 = vst.msk [vmem:[#allocation3 + $0xd] sm:$0xf] %vm7840, %v7852
    %s7854 = scalar_lea.vmem [#allocation5], 40
    %v7855 = vld [vmem:[%s7854] ss:$2 sm:$0xf]
    %s7856 = scalar_lea.vmem [#allocation5], 41
    %v7857 = vld [vmem:[%s7856] ss:$2 sm:$0xf]
    %s7858 = scalar_lea.vmem [#allocation5], 50
    %v7859 = vld [vmem:[%s7858] ss:$2 sm:$0xf]
    %s7860 = scalar_lea.vmem [#allocation5], 51
    %v7861 = vld [vmem:[%s7860] ss:$2 sm:$0xf]
    %v7862 = vmax.f32 %v7855, %v7857
    %v7863 = vmax.f32 %v7859, %v7861
    %v7864 = vmax.f32 %v7862, %v7863
    %7865 = vst.msk [vmem:[#allocation3 + $0x13] sm:$0xf] %vm7840, %v7864
    %s7866 = scalar_lea.vmem [#allocation5], 60
    %v7867 = vld [vmem:[%s7866] ss:$2 sm:$0xf]
    %s7868 = scalar_lea.vmem [#allocation5], 61
    %v7869 = vld [vmem:[%s7868] ss:$2 sm:$0xf]
    %s7870 = scalar_lea.vmem [#allocation5], 70
    %v7871 = vld [vmem:[%s7870] ss:$2 sm:$0xf]
    %s7872 = scalar_lea.vmem [#allocation5], 71
    %v7873 = vld [vmem:[%s7872] ss:$2 sm:$0xf]
    %v7874 = vmax.f32 %v7867, %v7869
    %v7875 = vmax.f32 %v7871, %v7873
    %v7876 = vmax.f32 %v7874, %v7875
    %7877 = vst.msk [vmem:[#allocation3 + $0x19] sm:$0xf] %vm7840, %v7876
    %s7878 = scalar_lea.vmem [#allocation5], 80
    %v7879 = vld [vmem:[%s7878] ss:$2 sm:$0xf]
    %s7880 = scalar_lea.vmem [#allocation5], 81
    %v7881 = vld [vmem:[%s7880] ss:$2 sm:$0xf]
    %v7882 = vld [vmem:[%s5800] ss:$2 sm:$0xf]
    %v7883 = vld [vmem:[%s5802] ss:$2 sm:$0xf]
    %v7884 = vmax.f32 %v7879, %v7881
    %v7885 = vmax.f32 %v7882, %v7883
    %v7886 = vmax.f32 %v7884, %v7885
    %s7887 = scalar_lea.vmem [#allocation3], 40
    %7888 = vst.msk [vmem:[%s7887 + $0x7] sm:$0xf] %vm7840, %v7886
    %s7889 = scalar_lea.vmem [#allocation5], 100
    %v7890 = vld [vmem:[%s7889] ss:$2 sm:$0xf]
    %s7891 = scalar_lea.vmem [#allocation5], 101
    %v7892 = vld [vmem:[%s7891] ss:$2 sm:$0xf]
    %s7893 = scalar_lea.vmem [#allocation5], 110
    %v7894 = vld [vmem:[%s7893] ss:$2 sm:$0xf]
    %s7895 = scalar_lea.vmem [#allocation5], 111
    %v7896 = vld [vmem:[%s7895] ss:$2 sm:$0xf]
    %v7897 = vmax.f32 %v7890, %v7892
    %v7898 = vmax.f32 %v7894, %v7896
    %v7899 = vmax.f32 %v7897, %v7898
    %7900 = vst.msk [vmem:[%s7887 + $0xd] sm:$0xf] %vm7840, %v7899
    %s7901 = scalar_lea.vmem [#allocation5], 120
    %v7902 = vld [vmem:[%s7901] ss:$2 sm:$0xf]
    %s7903 = scalar_lea.vmem [#allocation5], 121
    %v7904 = vld [vmem:[%s7903] ss:$2 sm:$0xf]
    %s7905 = scalar_lea.vmem [#allocation5], 130
    %v7906 = vld [vmem:[%s7905] ss:$2 sm:$0xf]
    %s7907 = scalar_lea.vmem [#allocation5], 131
    %v7908 = vld [vmem:[%s7907] ss:$2 sm:$0xf]
    %v7909 = vmax.f32 %v7902, %v7904
    %v7910 = vmax.f32 %v7906, %v7908
    %v7911 = vmax.f32 %v7909, %v7910
    %7912 = vst.msk [vmem:[%s7887 + $0x13] sm:$0xf] %vm7840, %v7911
    %s7913 = scalar_lea.vmem [#allocation5], 140
    %v7914 = vld [vmem:[%s7913] ss:$2 sm:$0xf]
    %s7915 = scalar_lea.vmem [#allocation5], 141
    %v7916 = vld [vmem:[%s7915] ss:$2 sm:$0xf]
    %s7917 = scalar_lea.vmem [#allocation5], 150
    %v7918 = vld [vmem:[%s7917] ss:$2 sm:$0xf]
    %s7919 = scalar_lea.vmem [#allocation5], 151
    %v7920 = vld [vmem:[%s7919] ss:$2 sm:$0xf]
    %v7921 = vmax.f32 %v7914, %v7916
    %v7922 = vmax.f32 %v7918, %v7920
    %v7923 = vmax.f32 %v7921, %v7922
    %7924 = vst.msk [vmem:[%s7887 + $0x19] sm:$0xf] %vm7840, %v7923
    %s7925 = scalar_lea.vmem %s2, 2
    %v7926 = vld [vmem:[%s7925] sm:$0x1]
    %v7928 = vlaneseq
    %v7929 = vshrl.u32 %v7928, 7
    %v7930 = vsub.s32 0, %v7929
    %v7931 = vrot.slane %v7926, %v7930
    %v7933 = vld [vmem:[#allocation3] sm:$0xff]
    %v7934 = vld [vmem:[#allocation3 + $0x8] sm:$0xff]
    %v7935 = vld [vmem:[#allocation3 + $0x10] sm:$0xff]
    %v7936 = vld [vmem:[#allocation3 + $0x28] sm:$0xff]
    %v7937 = vld [vmem:[#allocation3 + $0x30] sm:$0xff]
    %v7938 = vld [vmem:[#allocation3 + $0x38] sm:$0xff]
    %v7939 = vpack.c.bf16 %v7934, %v7933
    %v7940 = vpack.c.bf16 %v7936, %v7935
    %v7941 = vpack.c.bf16 %v7938, %v7937
    %s7942 = scalar_lea.vmem %s1, 144
    %v7943 = vld [vmem:[%s7942] sm:$0xf]
    %v7944 = vld [vmem:[%s7942 + $0x4] sm:$0xf]
    %v7947 = vunpack.c.l.b16 %v7943
    %v7948 = vunpack.c.l.b16 %v7944
    %v7949 = vpack.c.b16 %v7948, %v7947
    %v7952 = vsel %vm16, %v7939, 0
    %v7955 = vsel %vm16, %v7940, 0
    %v7958 = vsel %vm16, %v7941, 0
    %7960 = vmatprep.subr.bf16.mxu0 0
    %7961 = vmatpush1.bf16.msra.mxu0 0
    %7962 = vmatprep.subr.bf16.mxu0 0
    %7963 = vmatpush1.bf16.msra.mxu0 0
    %7964 = vmatprep.subr.bf16.mxu0 0
    %7965 = vmatpush1.bf16.msra.mxu0 0
    %7966 = vmatprep.subr.bf16.mxu0 0
    %7967 = vmatpush1.bf16.msra.mxu0 0
    %7968 = vmatprep.subr.bf16.mxu0 0
    %7969 = vmatpush1.bf16.msra.mxu0 0
    %7970 = vmatprep.subr.bf16.mxu0 0
    %7971 = vmatpush1.bf16.msra.mxu0 0
    %7972 = vmatprep.subr.bf16.mxu0 0
    %7973 = vmatpush1.bf16.msra.mxu0 0
    %7974 = vmatprep.subr.bf16.mxu0 0
    %7975 = vmatpush1.bf16.msra.mxu0 %v7949
    %7976 = vmatprep.subr.bf16.mxu0 0
    %7977 = vmatpush2.bf16.msra.mxu0 0
    %7978 = vmatprep.subr.bf16.mxu0 0
    %7979 = vmatpush2.bf16.msra.mxu0 0
    %7980 = vmatprep.subr.bf16.mxu0 0
    %7981 = vmatpush2.bf16.msra.mxu0 0
    %7982 = vmatprep.subr.bf16.mxu0 0
    %7983 = vmatpush2.bf16.msra.mxu0 0
    %7984 = vmatprep.subr.bf16.mxu0 0
    %7985 = vmatpush2.bf16.msra.mxu0 0
    %7986 = vmatprep.subr.bf16.mxu0 0
    %7987 = vmatpush2.bf16.msra.mxu0 0
    %7988 = vmatprep.subr.bf16.mxu0 0
    %7989 = vmatpush2.bf16.msra.mxu0 0
    %7990 = vmatprep.subr.bf16.mxu0 0
    %7991 = vmatpush2.bf16.msra.mxu0 0
    %7992 = vmatprep.mubr.bf16.mxu0 0
    %7993 = vmatmul.mubr.bf16.gmra.mxu0 %v7952
    %v7994 = vpop.f32.mrf.mxu0
    %v7995 = vadd.f32 0.0, %v7994
    %v7996 = vpop.f32.mrf.mxu0
    %v7997 = vpop.f32.mrf.mxu0
    %v7998 = vadd.f32 0.0, %v7997
    %v7999 = vpop.f32.mrf.mxu0
    %8000 = vmatprep.mubr.bf16.mxu0 0
    %8001 = vmatmul.mubr.bf16.gmra.mxu0 %v7955
    %v8002 = vpop.f32.mrf.mxu0
    %v8003 = vadd.f32 0.0, %v8002
    %v8004 = vpop.f32.mrf.mxu0
    %v8005 = vpop.f32.mrf.mxu0
    %v8006 = vadd.f32 0.0, %v8005
    %v8007 = vpop.f32.mrf.mxu0
    %8008 = vmatprep.mubr.bf16.mxu0 0
    %8009 = vmatmul.mubr.bf16.gmra.mxu0 %v7958
    %v8010 = vpop.f32.mrf.mxu0
    %v8011 = vadd.f32 0.0, %v8010
    %v8012 = vpop.f32.mrf.mxu0
    %v8013 = vpop.f32.mrf.mxu0
    %v8014 = vadd.f32 0.0, %v8013
    %v8015 = vpop.f32.mrf.mxu0
    %8016 = vdwg.mxu0
    %v8017 = vadd.f32 %v7931, %v7995
    %v8018 = vadd.f32 %v7931, %v7998
    %v8019 = vadd.f32 %v7931, %v8003
    %v8020 = vadd.f32 %v7931, %v8006
    %v8021 = vadd.f32 %v7931, %v8011
    %v8022 = vadd.f32 %v7931, %v8014
    %v8023 = vld [vmem:[#allocation3 + $0x1] sm:$0xff]
    %v8024 = vld [vmem:[#allocation3 + $0x9] sm:$0xff]
    %v8025 = vld [vmem:[#allocation3 + $0x11] sm:$0xff]
    %v8026 = vld [vmem:[#allocation3 + $0x29] sm:$0xff]
    %v8027 = vld [vmem:[#allocation3 + $0x31] sm:$0xff]
    %v8028 = vld [vmem:[#allocation3 + $0x39] sm:$0xff]
    %v8029 = vpack.c.bf16 %v8024, %v8023
    %v8030 = vpack.c.bf16 %v8026, %v8025
    %v8031 = vpack.c.bf16 %v8028, %v8027
    %s8032 = scalar_lea.vmem %s1, 152
    %v8033 = vld [vmem:[%s8032] sm:$0xf]
    %v8034 = vld [vmem:[%s8032 + $0x4] sm:$0xf]
    %v8037 = vunpack.c.l.b16 %v8033
    %v8038 = vunpack.c.l.b16 %v8034
    %v8039 = vpack.c.b16 %v8038, %v8037
    %v8042 = vsel %vm16, %v8029, 0
    %v8045 = vsel %vm16, %v8030, 0
    %v8048 = vsel %vm16, %v8031, 0
    %8050 = vmatprep.subr.bf16.mxu0 0
    %8051 = vmatpush1.bf16.msra.mxu0 0
    %8052 = vmatprep.subr.bf16.mxu0 0
    %8053 = vmatpush1.bf16.msra.mxu0 0
    %8054 = vmatprep.subr.bf16.mxu0 0
    %8055 = vmatpush1.bf16.msra.mxu0 0
    %8056 = vmatprep.subr.bf16.mxu0 0
    %8057 = vmatpush1.bf16.msra.mxu0 0
    %8058 = vmatprep.subr.bf16.mxu0 0
    %8059 = vmatpush1.bf16.msra.mxu0 0
    %8060 = vmatprep.subr.bf16.mxu0 0
    %8061 = vmatpush1.bf16.msra.mxu0 0
    %8062 = vmatprep.subr.bf16.mxu0 0
    %8063 = vmatpush1.bf16.msra.mxu0 0
    %8064 = vmatprep.subr.bf16.mxu0 0
    %8065 = vmatpush1.bf16.msra.mxu0 %v8039
    %8066 = vmatprep.subr.bf16.mxu0 0
    %8067 = vmatpush2.bf16.msra.mxu0 0
    %8068 = vmatprep.subr.bf16.mxu0 0
    %8069 = vmatpush2.bf16.msra.mxu0 0
    %8070 = vmatprep.subr.bf16.mxu0 0
    %8071 = vmatpush2.bf16.msra.mxu0 0
    %8072 = vmatprep.subr.bf16.mxu0 0
    %8073 = vmatpush2.bf16.msra.mxu0 0
    %8074 = vmatprep.subr.bf16.mxu0 0
    %8075 = vmatpush2.bf16.msra.mxu0 0
    %8076 = vmatprep.subr.bf16.mxu0 0
    %8077 = vmatpush2.bf16.msra.mxu0 0
    %8078 = vmatprep.subr.bf16.mxu0 0
    %8079 = vmatpush2.bf16.msra.mxu0 0
    %8080 = vmatprep.subr.bf16.mxu0 0
    %8081 = vmatpush2.bf16.msra.mxu0 0
    %8082 = vmatprep.mubr.bf16.mxu0 0
    %8083 = vmatmul.mubr.bf16.gmra.mxu0 %v8042
    %v8084 = vpop.f32.mrf.mxu0
    %v8085 = vadd.f32 0.0, %v8084
    %v8086 = vpop.f32.mrf.mxu0
    %v8087 = vpop.f32.mrf.mxu0
    %v8088 = vadd.f32 0.0, %v8087
    %v8089 = vpop.f32.mrf.mxu0
    %8090 = vmatprep.mubr.bf16.mxu0 0
    %8091 = vmatmul.mubr.bf16.gmra.mxu0 %v8045
    %v8092 = vpop.f32.mrf.mxu0
    %v8093 = vadd.f32 0.0, %v8092
    %v8094 = vpop.f32.mrf.mxu0
    %v8095 = vpop.f32.mrf.mxu0
    %v8096 = vadd.f32 0.0, %v8095
    %v8097 = vpop.f32.mrf.mxu0
    %8098 = vmatprep.mubr.bf16.mxu0 0
    %8099 = vmatmul.mubr.bf16.gmra.mxu0 %v8048
    %v8100 = vpop.f32.mrf.mxu0
    %v8101 = vadd.f32 0.0, %v8100
    %v8102 = vpop.f32.mrf.mxu0
    %v8103 = vpop.f32.mrf.mxu0
    %v8104 = vadd.f32 0.0, %v8103
    %v8105 = vpop.f32.mrf.mxu0
    %8106 = vdwg.mxu0
    %v8107 = vadd.f32 %v8017, %v8085
    %v8108 = vadd.f32 %v8018, %v8088
    %v8109 = vadd.f32 %v8019, %v8093
    %v8110 = vadd.f32 %v8020, %v8096
    %v8111 = vadd.f32 %v8021, %v8101
    %v8112 = vadd.f32 %v8022, %v8104
    %v8113 = vld [vmem:[#allocation3 + $0x2] sm:$0xff]
    %v8114 = vld [vmem:[#allocation3 + $0xa] sm:$0xff]
    %v8115 = vld [vmem:[#allocation3 + $0x12] sm:$0xff]
    %v8116 = vld [vmem:[#allocation3 + $0x2a] sm:$0xff]
    %v8117 = vld [vmem:[#allocation3 + $0x32] sm:$0xff]
    %v8118 = vld [vmem:[#allocation3 + $0x3a] sm:$0xff]
    %v8119 = vpack.c.bf16 %v8114, %v8113
    %v8120 = vpack.c.bf16 %v8116, %v8115
    %v8121 = vpack.c.bf16 %v8118, %v8117
    %s8122 = scalar_lea.vmem %s1, 160
    %v8123 = vld [vmem:[%s8122] sm:$0xf]
    %v8124 = vld [vmem:[%s8122 + $0x4] sm:$0xf]
    %v8127 = vunpack.c.l.b16 %v8123
    %v8128 = vunpack.c.l.b16 %v8124
    %v8129 = vpack.c.b16 %v8128, %v8127
    %v8132 = vsel %vm16, %v8119, 0
    %v8135 = vsel %vm16, %v8120, 0
    %v8138 = vsel %vm16, %v8121, 0
    %8140 = vmatprep.subr.bf16.mxu0 0
    %8141 = vmatpush1.bf16.msra.mxu0 0
    %8142 = vmatprep.subr.bf16.mxu0 0
    %8143 = vmatpush1.bf16.msra.mxu0 0
    %8144 = vmatprep.subr.bf16.mxu0 0
    %8145 = vmatpush1.bf16.msra.mxu0 0
    %8146 = vmatprep.subr.bf16.mxu0 0
    %8147 = vmatpush1.bf16.msra.mxu0 0
    %8148 = vmatprep.subr.bf16.mxu0 0
    %8149 = vmatpush1.bf16.msra.mxu0 0
    %8150 = vmatprep.subr.bf16.mxu0 0
    %8151 = vmatpush1.bf16.msra.mxu0 0
    %8152 = vmatprep.subr.bf16.mxu0 0
    %8153 = vmatpush1.bf16.msra.mxu0 0
    %8154 = vmatprep.subr.bf16.mxu0 0
    %8155 = vmatpush1.bf16.msra.mxu0 %v8129
    %8156 = vmatprep.subr.bf16.mxu0 0
    %8157 = vmatpush2.bf16.msra.mxu0 0
    %8158 = vmatprep.subr.bf16.mxu0 0
    %8159 = vmatpush2.bf16.msra.mxu0 0
    %8160 = vmatprep.subr.bf16.mxu0 0
    %8161 = vmatpush2.bf16.msra.mxu0 0
    %8162 = vmatprep.subr.bf16.mxu0 0
    %8163 = vmatpush2.bf16.msra.mxu0 0
    %8164 = vmatprep.subr.bf16.mxu0 0
    %8165 = vmatpush2.bf16.msra.mxu0 0
    %8166 = vmatprep.subr.bf16.mxu0 0
    %8167 = vmatpush2.bf16.msra.mxu0 0
    %8168 = vmatprep.subr.bf16.mxu0 0
    %8169 = vmatpush2.bf16.msra.mxu0 0
    %8170 = vmatprep.subr.bf16.mxu0 0
    %8171 = vmatpush2.bf16.msra.mxu0 0
    %8172 = vmatprep.mubr.bf16.mxu0 0
    %8173 = vmatmul.mubr.bf16.gmra.mxu0 %v8132
    %v8174 = vpop.f32.mrf.mxu0
    %v8175 = vadd.f32 0.0, %v8174
    %v8176 = vpop.f32.mrf.mxu0
    %v8177 = vpop.f32.mrf.mxu0
    %v8178 = vadd.f32 0.0, %v8177
    %v8179 = vpop.f32.mrf.mxu0
    %8180 = vmatprep.mubr.bf16.mxu0 0
    %8181 = vmatmul.mubr.bf16.gmra.mxu0 %v8135
    %v8182 = vpop.f32.mrf.mxu0
    %v8183 = vadd.f32 0.0, %v8182
    %v8184 = vpop.f32.mrf.mxu0
    %v8185 = vpop.f32.mrf.mxu0
    %v8186 = vadd.f32 0.0, %v8185
    %v8187 = vpop.f32.mrf.mxu0
    %8188 = vmatprep.mubr.bf16.mxu0 0
    %8189 = vmatmul.mubr.bf16.gmra.mxu0 %v8138
    %v8190 = vpop.f32.mrf.mxu0
    %v8191 = vadd.f32 0.0, %v8190
    %v8192 = vpop.f32.mrf.mxu0
    %v8193 = vpop.f32.mrf.mxu0
    %v8194 = vadd.f32 0.0, %v8193
    %v8195 = vpop.f32.mrf.mxu0
    %8196 = vdwg.mxu0
    %v8197 = vadd.f32 %v8107, %v8175
    %v8198 = vadd.f32 %v8108, %v8178
    %v8199 = vadd.f32 %v8109, %v8183
    %v8200 = vadd.f32 %v8110, %v8186
    %v8201 = vadd.f32 %v8111, %v8191
    %v8202 = vadd.f32 %v8112, %v8194
    %v8203 = vld [vmem:[#allocation3 + $0x6] sm:$0xff]
    %v8204 = vld [vmem:[#allocation3 + $0xe] sm:$0xff]
    %v8205 = vld [vmem:[#allocation3 + $0x16] sm:$0xff]
    %v8206 = vld [vmem:[#allocation3 + $0x2e] sm:$0xff]
    %v8207 = vld [vmem:[#allocation3 + $0x36] sm:$0xff]
    %v8208 = vld [vmem:[#allocation3 + $0x3e] sm:$0xff]
    %v8209 = vpack.c.bf16 %v8204, %v8203
    %v8210 = vpack.c.bf16 %v8206, %v8205
    %v8211 = vpack.c.bf16 %v8208, %v8207
    %s8212 = scalar_lea.vmem %s1, 168
    %v8213 = vld [vmem:[%s8212] sm:$0xf]
    %v8214 = vld [vmem:[%s8212 + $0x4] sm:$0xf]
    %v8217 = vunpack.c.l.b16 %v8213
    %v8218 = vunpack.c.l.b16 %v8214
    %v8219 = vpack.c.b16 %v8218, %v8217
    %v8222 = vsel %vm16, %v8209, 0
    %v8225 = vsel %vm16, %v8210, 0
    %v8228 = vsel %vm16, %v8211, 0
    %8230 = vmatprep.subr.bf16.mxu0 0
    %8231 = vmatpush1.bf16.msra.mxu0 0
    %8232 = vmatprep.subr.bf16.mxu0 0
    %8233 = vmatpush1.bf16.msra.mxu0 0
    %8234 = vmatprep.subr.bf16.mxu0 0
    %8235 = vmatpush1.bf16.msra.mxu0 0
    %8236 = vmatprep.subr.bf16.mxu0 0
    %8237 = vmatpush1.bf16.msra.mxu0 0
    %8238 = vmatprep.subr.bf16.mxu0 0
    %8239 = vmatpush1.bf16.msra.mxu0 0
    %8240 = vmatprep.subr.bf16.mxu0 0
    %8241 = vmatpush1.bf16.msra.mxu0 0
    %8242 = vmatprep.subr.bf16.mxu0 0
    %8243 = vmatpush1.bf16.msra.mxu0 0
    %8244 = vmatprep.subr.bf16.mxu0 0
    %8245 = vmatpush1.bf16.msra.mxu0 %v8219
    %8246 = vmatprep.subr.bf16.mxu0 0
    %8247 = vmatpush2.bf16.msra.mxu0 0
    %8248 = vmatprep.subr.bf16.mxu0 0
    %8249 = vmatpush2.bf16.msra.mxu0 0
    %8250 = vmatprep.subr.bf16.mxu0 0
    %8251 = vmatpush2.bf16.msra.mxu0 0
    %8252 = vmatprep.subr.bf16.mxu0 0
    %8253 = vmatpush2.bf16.msra.mxu0 0
    %8254 = vmatprep.subr.bf16.mxu0 0
    %8255 = vmatpush2.bf16.msra.mxu0 0
    %8256 = vmatprep.subr.bf16.mxu0 0
    %8257 = vmatpush2.bf16.msra.mxu0 0
    %8258 = vmatprep.subr.bf16.mxu0 0
    %8259 = vmatpush2.bf16.msra.mxu0 0
    %8260 = vmatprep.subr.bf16.mxu0 0
    %8261 = vmatpush2.bf16.msra.mxu0 0
    %8262 = vmatprep.mubr.bf16.mxu0 0
    %8263 = vmatmul.mubr.bf16.gmra.mxu0 %v8222
    %v8264 = vpop.f32.mrf.mxu0
    %v8265 = vadd.f32 0.0, %v8264
    %v8266 = vpop.f32.mrf.mxu0
    %v8267 = vpop.f32.mrf.mxu0
    %v8268 = vadd.f32 0.0, %v8267
    %v8269 = vpop.f32.mrf.mxu0
    %8270 = vmatprep.mubr.bf16.mxu0 0
    %8271 = vmatmul.mubr.bf16.gmra.mxu0 %v8225
    %v8272 = vpop.f32.mrf.mxu0
    %v8273 = vadd.f32 0.0, %v8272
    %v8274 = vpop.f32.mrf.mxu0
    %v8275 = vpop.f32.mrf.mxu0
    %v8276 = vadd.f32 0.0, %v8275
    %v8277 = vpop.f32.mrf.mxu0
    %8278 = vmatprep.mubr.bf16.mxu0 0
    %8279 = vmatmul.mubr.bf16.gmra.mxu0 %v8228
    %v8280 = vpop.f32.mrf.mxu0
    %v8281 = vadd.f32 0.0, %v8280
    %v8282 = vpop.f32.mrf.mxu0
    %v8283 = vpop.f32.mrf.mxu0
    %v8284 = vadd.f32 0.0, %v8283
    %v8285 = vpop.f32.mrf.mxu0
    %8286 = vdwg.mxu0
    %v8287 = vadd.f32 %v8197, %v8265
    %v8288 = vadd.f32 %v8198, %v8268
    %v8289 = vadd.f32 %v8199, %v8273
    %v8290 = vadd.f32 %v8200, %v8276
    %v8291 = vadd.f32 %v8201, %v8281
    %v8292 = vadd.f32 %v8202, %v8284
    %v8293 = vld [vmem:[#allocation3 + $0x7] sm:$0xff]
    %v8294 = vld [vmem:[#allocation3 + $0xf] sm:$0xff]
    %v8295 = vld [vmem:[#allocation3 + $0x17] sm:$0xff]
    %v8296 = vld [vmem:[#allocation3 + $0x2f] sm:$0xff]
    %v8297 = vld [vmem:[#allocation3 + $0x37] sm:$0xff]
    %v8298 = vld [vmem:[#allocation3 + $0x3f] sm:$0xff]
    %v8299 = vpack.c.bf16 %v8294, %v8293
    %v8300 = vpack.c.bf16 %v8296, %v8295
    %v8301 = vpack.c.bf16 %v8298, %v8297
    %s8302 = scalar_lea.vmem %s1, 176
    %v8303 = vld [vmem:[%s8302] sm:$0xf]
    %v8304 = vld [vmem:[%s8302 + $0x4] sm:$0xf]
    %v8307 = vunpack.c.l.b16 %v8303
    %v8308 = vunpack.c.l.b16 %v8304
    %v8309 = vpack.c.b16 %v8308, %v8307
    %v8312 = vsel %vm16, %v8299, 0
    %v8315 = vsel %vm16, %v8300, 0
    %v8318 = vsel %vm16, %v8301, 0
    %8320 = vmatprep.subr.bf16.mxu0 0
    %8321 = vmatpush1.bf16.msra.mxu0 0
    %8322 = vmatprep.subr.bf16.mxu0 0
    %8323 = vmatpush1.bf16.msra.mxu0 0
    %8324 = vmatprep.subr.bf16.mxu0 0
    %8325 = vmatpush1.bf16.msra.mxu0 0
    %8326 = vmatprep.subr.bf16.mxu0 0
    %8327 = vmatpush1.bf16.msra.mxu0 0
    %8328 = vmatprep.subr.bf16.mxu0 0
    %8329 = vmatpush1.bf16.msra.mxu0 0
    %8330 = vmatprep.subr.bf16.mxu0 0
    %8331 = vmatpush1.bf16.msra.mxu0 0
    %8332 = vmatprep.subr.bf16.mxu0 0
    %8333 = vmatpush1.bf16.msra.mxu0 0
    %8334 = vmatprep.subr.bf16.mxu0 0
    %8335 = vmatpush1.bf16.msra.mxu0 %v8309
    %8336 = vmatprep.subr.bf16.mxu0 0
    %8337 = vmatpush2.bf16.msra.mxu0 0
    %8338 = vmatprep.subr.bf16.mxu0 0
    %8339 = vmatpush2.bf16.msra.mxu0 0
    %8340 = vmatprep.subr.bf16.mxu0 0
    %8341 = vmatpush2.bf16.msra.mxu0 0
    %8342 = vmatprep.subr.bf16.mxu0 0
    %8343 = vmatpush2.bf16.msra.mxu0 0
    %8344 = vmatprep.subr.bf16.mxu0 0
    %8345 = vmatpush2.bf16.msra.mxu0 0
    %8346 = vmatprep.subr.bf16.mxu0 0
    %8347 = vmatpush2.bf16.msra.mxu0 0
    %8348 = vmatprep.subr.bf16.mxu0 0
    %8349 = vmatpush2.bf16.msra.mxu0 0
    %8350 = vmatprep.subr.bf16.mxu0 0
    %8351 = vmatpush2.bf16.msra.mxu0 0
    %8352 = vmatprep.mubr.bf16.mxu0 0
    %8353 = vmatmul.mubr.bf16.gmra.mxu0 %v8312
    %v8354 = vpop.f32.mrf.mxu0
    %v8355 = vadd.f32 0.0, %v8354
    %v8356 = vpop.f32.mrf.mxu0
    %v8357 = vpop.f32.mrf.mxu0
    %v8358 = vadd.f32 0.0, %v8357
    %v8359 = vpop.f32.mrf.mxu0
    %8360 = vmatprep.mubr.bf16.mxu0 0
    %8361 = vmatmul.mubr.bf16.gmra.mxu0 %v8315
    %v8362 = vpop.f32.mrf.mxu0
    %v8363 = vadd.f32 0.0, %v8362
    %v8364 = vpop.f32.mrf.mxu0
    %v8365 = vpop.f32.mrf.mxu0
    %v8366 = vadd.f32 0.0, %v8365
    %v8367 = vpop.f32.mrf.mxu0
    %8368 = vmatprep.mubr.bf16.mxu0 0
    %8369 = vmatmul.mubr.bf16.gmra.mxu0 %v8318
    %v8370 = vpop.f32.mrf.mxu0
    %v8371 = vadd.f32 0.0, %v8370
    %v8372 = vpop.f32.mrf.mxu0
    %v8373 = vpop.f32.mrf.mxu0
    %v8374 = vadd.f32 0.0, %v8373
    %v8375 = vpop.f32.mrf.mxu0
    %8376 = vdwg.mxu0
    %v8377 = vadd.f32 %v8287, %v8355
    %v8378 = vadd.f32 %v8288, %v8358
    %v8379 = vadd.f32 %v8289, %v8363
    %v8380 = vadd.f32 %v8290, %v8366
    %v8381 = vadd.f32 %v8291, %v8371
    %v8382 = vadd.f32 %v8292, %v8374
    %v8383 = vld [vmem:[#allocation3 + $0x8] sm:$0xff]
    %v8384 = vld [vmem:[#allocation3 + $0x10] sm:$0xff]
    %v8385 = vld [vmem:[#allocation3 + $0x18] sm:$0xff]
    %v8386 = vld [vmem:[#allocation3 + $0x30] sm:$0xff]
    %v8387 = vld [vmem:[#allocation3 + $0x38] sm:$0xff]
    %v8388 = vld [vmem:[#allocation3 + $0x40] sm:$0xff]
    %v8389 = vpack.c.bf16 %v8384, %v8383
    %v8390 = vpack.c.bf16 %v8386, %v8385
    %v8391 = vpack.c.bf16 %v8388, %v8387
    %s8392 = scalar_lea.vmem %s1, 184
    %v8393 = vld [vmem:[%s8392] sm:$0xf]
    %v8394 = vld [vmem:[%s8392 + $0x4] sm:$0xf]
    %v8397 = vunpack.c.l.b16 %v8393
    %v8398 = vunpack.c.l.b16 %v8394
    %v8399 = vpack.c.b16 %v8398, %v8397
    %v8402 = vsel %vm16, %v8389, 0
    %v8405 = vsel %vm16, %v8390, 0
    %v8408 = vsel %vm16, %v8391, 0
    %8410 = vmatprep.subr.bf16.mxu0 0
    %8411 = vmatpush1.bf16.msra.mxu0 0
    %8412 = vmatprep.subr.bf16.mxu0 0
    %8413 = vmatpush1.bf16.msra.mxu0 0
    %8414 = vmatprep.subr.bf16.mxu0 0
    %8415 = vmatpush1.bf16.msra.mxu0 0
    %8416 = vmatprep.subr.bf16.mxu0 0
    %8417 = vmatpush1.bf16.msra.mxu0 0
    %8418 = vmatprep.subr.bf16.mxu0 0
    %8419 = vmatpush1.bf16.msra.mxu0 0
    %8420 = vmatprep.subr.bf16.mxu0 0
    %8421 = vmatpush1.bf16.msra.mxu0 0
    %8422 = vmatprep.subr.bf16.mxu0 0
    %8423 = vmatpush1.bf16.msra.mxu0 0
    %8424 = vmatprep.subr.bf16.mxu0 0
    %8425 = vmatpush1.bf16.msra.mxu0 %v8399
    %8426 = vmatprep.subr.bf16.mxu0 0
    %8427 = vmatpush2.bf16.msra.mxu0 0
    %8428 = vmatprep.subr.bf16.mxu0 0
    %8429 = vmatpush2.bf16.msra.mxu0 0
    %8430 = vmatprep.subr.bf16.mxu0 0
    %8431 = vmatpush2.bf16.msra.mxu0 0
    %8432 = vmatprep.subr.bf16.mxu0 0
    %8433 = vmatpush2.bf16.msra.mxu0 0
    %8434 = vmatprep.subr.bf16.mxu0 0
    %8435 = vmatpush2.bf16.msra.mxu0 0
    %8436 = vmatprep.subr.bf16.mxu0 0
    %8437 = vmatpush2.bf16.msra.mxu0 0
    %8438 = vmatprep.subr.bf16.mxu0 0
    %8439 = vmatpush2.bf16.msra.mxu0 0
    %8440 = vmatprep.subr.bf16.mxu0 0
    %8441 = vmatpush2.bf16.msra.mxu0 0
    %8442 = vmatprep.mubr.bf16.mxu0 0
    %8443 = vmatmul.mubr.bf16.gmra.mxu0 %v8402
    %v8444 = vpop.f32.mrf.mxu0
    %v8445 = vadd.f32 0.0, %v8444
    %v8446 = vpop.f32.mrf.mxu0
    %v8447 = vpop.f32.mrf.mxu0
    %v8448 = vadd.f32 0.0, %v8447
    %v8449 = vpop.f32.mrf.mxu0
    %8450 = vmatprep.mubr.bf16.mxu0 0
    %8451 = vmatmul.mubr.bf16.gmra.mxu0 %v8405
    %v8452 = vpop.f32.mrf.mxu0
    %v8453 = vadd.f32 0.0, %v8452
    %v8454 = vpop.f32.mrf.mxu0
    %v8455 = vpop.f32.mrf.mxu0
    %v8456 = vadd.f32 0.0, %v8455
    %v8457 = vpop.f32.mrf.mxu0
    %8458 = vmatprep.mubr.bf16.mxu0 0
    %8459 = vmatmul.mubr.bf16.gmra.mxu0 %v8408
    %v8460 = vpop.f32.mrf.mxu0
    %v8461 = vadd.f32 0.0, %v8460
    %v8462 = vpop.f32.mrf.mxu0
    %v8463 = vpop.f32.mrf.mxu0
    %v8464 = vadd.f32 0.0, %v8463
    %v8465 = vpop.f32.mrf.mxu0
    %8466 = vdwg.mxu0
    %v8467 = vadd.f32 %v8377, %v8445
    %v8468 = vadd.f32 %v8378, %v8448
    %v8469 = vadd.f32 %v8379, %v8453
    %v8470 = vadd.f32 %v8380, %v8456
    %v8471 = vadd.f32 %v8381, %v8461
    %v8472 = vadd.f32 %v8382, %v8464
    %v8473 = vld [vmem:[#allocation3 + $0xc] sm:$0xff]
    %v8474 = vld [vmem:[#allocation3 + $0x14] sm:$0xff]
    %v8475 = vld [vmem:[#allocation3 + $0x1c] sm:$0xff]
    %v8476 = vld [vmem:[#allocation3 + $0x34] sm:$0xff]
    %v8477 = vld [vmem:[#allocation3 + $0x3c] sm:$0xff]
    %v8478 = vld [vmem:[#allocation3 + $0x44] sm:$0xff]
    %v8479 = vpack.c.bf16 %v8474, %v8473
    %v8480 = vpack.c.bf16 %v8476, %v8475
    %v8481 = vpack.c.bf16 %v8478, %v8477
    %s8482 = scalar_lea.vmem %s1, 192
    %v8483 = vld [vmem:[%s8482] sm:$0xf]
    %v8484 = vld [vmem:[%s8482 + $0x4] sm:$0xf]
    %v8487 = vunpack.c.l.b16 %v8483
    %v8488 = vunpack.c.l.b16 %v8484
    %v8489 = vpack.c.b16 %v8488, %v8487
    %v8492 = vsel %vm16, %v8479, 0
    %v8495 = vsel %vm16, %v8480, 0
    %v8498 = vsel %vm16, %v8481, 0
    %8500 = vmatprep.subr.bf16.mxu0 0
    %8501 = vmatpush1.bf16.msra.mxu0 0
    %8502 = vmatprep.subr.bf16.mxu0 0
    %8503 = vmatpush1.bf16.msra.mxu0 0
    %8504 = vmatprep.subr.bf16.mxu0 0
    %8505 = vmatpush1.bf16.msra.mxu0 0
    %8506 = vmatprep.subr.bf16.mxu0 0
    %8507 = vmatpush1.bf16.msra.mxu0 0
    %8508 = vmatprep.subr.bf16.mxu0 0
    %8509 = vmatpush1.bf16.msra.mxu0 0
    %8510 = vmatprep.subr.bf16.mxu0 0
    %8511 = vmatpush1.bf16.msra.mxu0 0
    %8512 = vmatprep.subr.bf16.mxu0 0
    %8513 = vmatpush1.bf16.msra.mxu0 0
    %8514 = vmatprep.subr.bf16.mxu0 0
    %8515 = vmatpush1.bf16.msra.mxu0 %v8489
    %8516 = vmatprep.subr.bf16.mxu0 0
    %8517 = vmatpush2.bf16.msra.mxu0 0
    %8518 = vmatprep.subr.bf16.mxu0 0
    %8519 = vmatpush2.bf16.msra.mxu0 0
    %8520 = vmatprep.subr.bf16.mxu0 0
    %8521 = vmatpush2.bf16.msra.mxu0 0
    %8522 = vmatprep.subr.bf16.mxu0 0
    %8523 = vmatpush2.bf16.msra.mxu0 0
    %8524 = vmatprep.subr.bf16.mxu0 0
    %8525 = vmatpush2.bf16.msra.mxu0 0
    %8526 = vmatprep.subr.bf16.mxu0 0
    %8527 = vmatpush2.bf16.msra.mxu0 0
    %8528 = vmatprep.subr.bf16.mxu0 0
    %8529 = vmatpush2.bf16.msra.mxu0 0
    %8530 = vmatprep.subr.bf16.mxu0 0
    %8531 = vmatpush2.bf16.msra.mxu0 0
    %8532 = vmatprep.mubr.bf16.mxu0 0
    %8533 = vmatmul.mubr.bf16.gmra.mxu0 %v8492
    %v8534 = vpop.f32.mrf.mxu0
    %v8535 = vadd.f32 0.0, %v8534
    %v8536 = vpop.f32.mrf.mxu0
    %v8537 = vpop.f32.mrf.mxu0
    %v8538 = vadd.f32 0.0, %v8537
    %v8539 = vpop.f32.mrf.mxu0
    %8540 = vmatprep.mubr.bf16.mxu0 0
    %8541 = vmatmul.mubr.bf16.gmra.mxu0 %v8495
    %v8542 = vpop.f32.mrf.mxu0
    %v8543 = vadd.f32 0.0, %v8542
    %v8544 = vpop.f32.mrf.mxu0
    %v8545 = vpop.f32.mrf.mxu0
    %v8546 = vadd.f32 0.0, %v8545
    %v8547 = vpop.f32.mrf.mxu0
    %8548 = vmatprep.mubr.bf16.mxu0 0
    %8549 = vmatmul.mubr.bf16.gmra.mxu0 %v8498
    %v8550 = vpop.f32.mrf.mxu0
    %v8551 = vadd.f32 0.0, %v8550
    %v8552 = vpop.f32.mrf.mxu0
    %v8553 = vpop.f32.mrf.mxu0
    %v8554 = vadd.f32 0.0, %v8553
    %v8555 = vpop.f32.mrf.mxu0
    %8556 = vdwg.mxu0
    %v8557 = vadd.f32 %v8467, %v8535
    %v8558 = vadd.f32 %v8468, %v8538
    %v8559 = vadd.f32 %v8469, %v8543
    %v8560 = vadd.f32 %v8470, %v8546
    %v8561 = vadd.f32 %v8471, %v8551
    %v8562 = vadd.f32 %v8472, %v8554
    %v8563 = vld [vmem:[#allocation3 + $0xd] sm:$0xff]
    %v8564 = vld [vmem:[#allocation3 + $0x15] sm:$0xff]
    %v8565 = vld [vmem:[#allocation3 + $0x1d] sm:$0xff]
    %v8566 = vld [vmem:[#allocation3 + $0x35] sm:$0xff]
    %v8567 = vld [vmem:[#allocation3 + $0x3d] sm:$0xff]
    %v8568 = vld [vmem:[#allocation3 + $0x45] sm:$0xff]
    %v8569 = vpack.c.bf16 %v8564, %v8563
    %v8570 = vpack.c.bf16 %v8566, %v8565
    %v8571 = vpack.c.bf16 %v8568, %v8567
    %s8572 = scalar_lea.vmem %s1, 200
    %v8573 = vld [vmem:[%s8572] sm:$0xf]
    %v8574 = vld [vmem:[%s8572 + $0x4] sm:$0xf]
    %v8577 = vunpack.c.l.b16 %v8573
    %v8578 = vunpack.c.l.b16 %v8574
    %v8579 = vpack.c.b16 %v8578, %v8577
    %v8582 = vsel %vm16, %v8569, 0
    %v8585 = vsel %vm16, %v8570, 0
    %v8588 = vsel %vm16, %v8571, 0
    %8590 = vmatprep.subr.bf16.mxu0 0
    %8591 = vmatpush1.bf16.msra.mxu0 0
    %8592 = vmatprep.subr.bf16.mxu0 0
    %8593 = vmatpush1.bf16.msra.mxu0 0
    %8594 = vmatprep.subr.bf16.mxu0 0
    %8595 = vmatpush1.bf16.msra.mxu0 0
    %8596 = vmatprep.subr.bf16.mxu0 0
    %8597 = vmatpush1.bf16.msra.mxu0 0
    %8598 = vmatprep.subr.bf16.mxu0 0
    %8599 = vmatpush1.bf16.msra.mxu0 0
    %8600 = vmatprep.subr.bf16.mxu0 0
    %8601 = vmatpush1.bf16.msra.mxu0 0
    %8602 = vmatprep.subr.bf16.mxu0 0
    %8603 = vmatpush1.bf16.msra.mxu0 0
    %8604 = vmatprep.subr.bf16.mxu0 0
    %8605 = vmatpush1.bf16.msra.mxu0 %v8579
    %8606 = vmatprep.subr.bf16.mxu0 0
    %8607 = vmatpush2.bf16.msra.mxu0 0
    %8608 = vmatprep.subr.bf16.mxu0 0
    %8609 = vmatpush2.bf16.msra.mxu0 0
    %8610 = vmatprep.subr.bf16.mxu0 0
    %8611 = vmatpush2.bf16.msra.mxu0 0
    %8612 = vmatprep.subr.bf16.mxu0 0
    %8613 = vmatpush2.bf16.msra.mxu0 0
    %8614 = vmatprep.subr.bf16.mxu0 0
    %8615 = vmatpush2.bf16.msra.mxu0 0
    %8616 = vmatprep.subr.bf16.mxu0 0
    %8617 = vmatpush2.bf16.msra.mxu0 0
    %8618 = vmatprep.subr.bf16.mxu0 0
    %8619 = vmatpush2.bf16.msra.mxu0 0
    %8620 = vmatprep.subr.bf16.mxu0 0
    %8621 = vmatpush2.bf16.msra.mxu0 0
    %8622 = vmatprep.mubr.bf16.mxu0 0
    %8623 = vmatmul.mubr.bf16.gmra.mxu0 %v8582
    %v8624 = vpop.f32.mrf.mxu0
    %v8625 = vadd.f32 0.0, %v8624
    %v8626 = vpop.f32.mrf.mxu0
    %v8627 = vpop.f32.mrf.mxu0
    %v8628 = vadd.f32 0.0, %v8627
    %v8629 = vpop.f32.mrf.mxu0
    %8630 = vmatprep.mubr.bf16.mxu0 0
    %8631 = vmatmul.mubr.bf16.gmra.mxu0 %v8585
    %v8632 = vpop.f32.mrf.mxu0
    %v8633 = vadd.f32 0.0, %v8632
    %v8634 = vpop.f32.mrf.mxu0
    %v8635 = vpop.f32.mrf.mxu0
    %v8636 = vadd.f32 0.0, %v8635
    %v8637 = vpop.f32.mrf.mxu0
    %8638 = vmatprep.mubr.bf16.mxu0 0
    %8639 = vmatmul.mubr.bf16.gmra.mxu0 %v8588
    %v8640 = vpop.f32.mrf.mxu0
    %v8641 = vadd.f32 0.0, %v8640
    %v8642 = vpop.f32.mrf.mxu0
    %v8643 = vpop.f32.mrf.mxu0
    %v8644 = vadd.f32 0.0, %v8643
    %v8645 = vpop.f32.mrf.mxu0
    %8646 = vdwg.mxu0
    %v8647 = vadd.f32 %v8557, %v8625
    %v8648 = vadd.f32 %v8558, %v8628
    %v8649 = vadd.f32 %v8559, %v8633
    %v8650 = vadd.f32 %v8560, %v8636
    %v8651 = vadd.f32 %v8561, %v8641
    %v8652 = vadd.f32 %v8562, %v8644
    %v8653 = vld [vmem:[#allocation3 + $0xe] sm:$0xff]
    %v8654 = vld [vmem:[#allocation3 + $0x16] sm:$0xff]
    %v8655 = vld [vmem:[#allocation3 + $0x1e] sm:$0xff]
    %v8656 = vld [vmem:[#allocation3 + $0x36] sm:$0xff]
    %v8657 = vld [vmem:[#allocation3 + $0x3e] sm:$0xff]
    %v8658 = vld [vmem:[#allocation3 + $0x46] sm:$0xff]
    %v8659 = vpack.c.bf16 %v8654, %v8653
    %v8660 = vpack.c.bf16 %v8656, %v8655
    %v8661 = vpack.c.bf16 %v8658, %v8657
    %s8662 = scalar_lea.vmem %s1, 208
    %v8663 = vld [vmem:[%s8662] sm:$0xf]
    %v8664 = vld [vmem:[%s8662 + $0x4] sm:$0xf]
    %v8667 = vunpack.c.l.b16 %v8663
    %v8668 = vunpack.c.l.b16 %v8664
    %v8669 = vpack.c.b16 %v8668, %v8667
    %v8672 = vsel %vm16, %v8659, 0
    %v8675 = vsel %vm16, %v8660, 0
    %v8678 = vsel %vm16, %v8661, 0
    %8680 = vmatprep.subr.bf16.mxu0 0
    %8681 = vmatpush1.bf16.msra.mxu0 0
    %8682 = vmatprep.subr.bf16.mxu0 0
    %8683 = vmatpush1.bf16.msra.mxu0 0
    %8684 = vmatprep.subr.bf16.mxu0 0
    %8685 = vmatpush1.bf16.msra.mxu0 0
    %8686 = vmatprep.subr.bf16.mxu0 0
    %8687 = vmatpush1.bf16.msra.mxu0 0
    %8688 = vmatprep.subr.bf16.mxu0 0
    %8689 = vmatpush1.bf16.msra.mxu0 0
    %8690 = vmatprep.subr.bf16.mxu0 0
    %8691 = vmatpush1.bf16.msra.mxu0 0
    %8692 = vmatprep.subr.bf16.mxu0 0
    %8693 = vmatpush1.bf16.msra.mxu0 0
    %8694 = vmatprep.subr.bf16.mxu0 0
    %8695 = vmatpush1.bf16.msra.mxu0 %v8669
    %8696 = vmatprep.subr.bf16.mxu0 0
    %8697 = vmatpush2.bf16.msra.mxu0 0
    %8698 = vmatprep.subr.bf16.mxu0 0
    %8699 = vmatpush2.bf16.msra.mxu0 0
    %8700 = vmatprep.subr.bf16.mxu0 0
    %8701 = vmatpush2.bf16.msra.mxu0 0
    %8702 = vmatprep.subr.bf16.mxu0 0
    %8703 = vmatpush2.bf16.msra.mxu0 0
    %8704 = vmatprep.subr.bf16.mxu0 0
    %8705 = vmatpush2.bf16.msra.mxu0 0
    %8706 = vmatprep.subr.bf16.mxu0 0
    %8707 = vmatpush2.bf16.msra.mxu0 0
    %8708 = vmatprep.subr.bf16.mxu0 0
    %8709 = vmatpush2.bf16.msra.mxu0 0
    %8710 = vmatprep.subr.bf16.mxu0 0
    %8711 = vmatpush2.bf16.msra.mxu0 0
    %8712 = vmatprep.mubr.bf16.mxu0 0
    %8713 = vmatmul.mubr.bf16.gmra.mxu0 %v8672
    %v8714 = vpop.f32.mrf.mxu0
    %v8715 = vadd.f32 0.0, %v8714
    %v8716 = vpop.f32.mrf.mxu0
    %v8717 = vpop.f32.mrf.mxu0
    %v8718 = vadd.f32 0.0, %v8717
    %v8719 = vpop.f32.mrf.mxu0
    %8720 = vmatprep.mubr.bf16.mxu0 0
    %8721 = vmatmul.mubr.bf16.gmra.mxu0 %v8675
    %v8722 = vpop.f32.mrf.mxu0
    %v8723 = vadd.f32 0.0, %v8722
    %v8724 = vpop.f32.mrf.mxu0
    %v8725 = vpop.f32.mrf.mxu0
    %v8726 = vadd.f32 0.0, %v8725
    %v8727 = vpop.f32.mrf.mxu0
    %8728 = vmatprep.mubr.bf16.mxu0 0
    %8729 = vmatmul.mubr.bf16.gmra.mxu0 %v8678
    %v8730 = vpop.f32.mrf.mxu0
    %v8731 = vadd.f32 0.0, %v8730
    %v8732 = vpop.f32.mrf.mxu0
    %v8733 = vpop.f32.mrf.mxu0
    %v8734 = vadd.f32 0.0, %v8733
    %v8735 = vpop.f32.mrf.mxu0
    %8736 = vdwg.mxu0
    %v8737 = vadd.f32 %v8647, %v8715
    %v8738 = vadd.f32 %v8648, %v8718
    %v8739 = vadd.f32 %v8649, %v8723
    %v8740 = vadd.f32 %v8650, %v8726
    %v8741 = vadd.f32 %v8651, %v8731
    %v8742 = vadd.f32 %v8652, %v8734
    %v8743 = vmax.f32 %v8737, 0.0
    %v8744 = vmax.f32 %v8738, 0.0
    %v8745 = vmax.f32 %v8739, 0.0
    %v8746 = vmax.f32 %v8740, 0.0
    %v8747 = vmax.f32 %v8741, 0.0
    %v8748 = vmax.f32 %v8742, 0.0
    %8749 = vst.msk [vmem:[#allocation5] sm:$0xff] %vm16, %v8743
    %8750 = vst.msk [vmem:[#allocation5 + $0x8] sm:$0xff] %vm16, %v8744
    %8751 = vst.msk [vmem:[#allocation5 + $0x10] sm:$0xff] %vm16, %v8745
    %8752 = vst.msk [vmem:[#allocation5 + $0x18] sm:$0xff] %vm16, %v8746
    %8753 = vst.msk [vmem:[#allocation5 + $0x20] sm:$0xff] %vm16, %v8747
    %8754 = vst.msk [vmem:[#allocation5 + $0x28] sm:$0xff] %vm16, %v8748
    %v8755 = vld [vmem:[#allocation5] ss:$2 sm:$0x3]
    %v8756 = vld [vmem:[%s5774] ss:$2 sm:$0x3]
    %s8757 = scalar_lea.vmem [#allocation5], 6
    %v8758 = vld [vmem:[%s8757] ss:$2 sm:$0x3]
    %s8759 = scalar_lea.vmem [#allocation5], 7
    %v8760 = vld [vmem:[%s8759] ss:$2 sm:$0x3]
    %v8761 = vmax.f32 %v8755, %v8756
    %v8762 = vmax.f32 %v8758, %v8760
    %v8763 = vmax.f32 %v8761, %v8762
    %8764 = vst.msk [vmem:[#allocation4 + $0x5] sm:$0x3] %vm56, %v8763
    %s8765 = scalar_lea.vmem [#allocation5], 12
    %v8766 = vld [vmem:[%s8765] ss:$2 sm:$0x3]
    %s8767 = scalar_lea.vmem [#allocation5], 13
    %v8768 = vld [vmem:[%s8767] ss:$2 sm:$0x3]
    %v8769 = vld [vmem:[%s5776] ss:$2 sm:$0x3]
    %v8770 = vld [vmem:[%s5778] ss:$2 sm:$0x3]
    %v8771 = vmax.f32 %v8766, %v8768
    %v8772 = vmax.f32 %v8769, %v8770
    %v8773 = vmax.f32 %v8771, %v8772
    %8774 = vst.msk [vmem:[#allocation4 + $0x9] sm:$0x3] %vm56, %v8773
    %s8775 = scalar_lea.vmem [#allocation5], 24
    %v8776 = vld [vmem:[%s8775] ss:$2 sm:$0x3]
    %s8777 = scalar_lea.vmem [#allocation5], 25
    %v8778 = vld [vmem:[%s8777] ss:$2 sm:$0x3]
    %v8779 = vld [vmem:[%s7846] ss:$2 sm:$0x3]
    %v8780 = vld [vmem:[%s7848] ss:$2 sm:$0x3]
    %v8781 = vmax.f32 %v8776, %v8778
    %v8782 = vmax.f32 %v8779, %v8780
    %v8783 = vmax.f32 %v8781, %v8782
    %s8784 = scalar_lea.vmem [#allocation4], 24
    %8785 = vst.msk [vmem:[%s8784 + $0x5] sm:$0x3] %vm56, %v8783
    %v8786 = vld [vmem:[%s5784] ss:$2 sm:$0x3]
    %v8787 = vld [vmem:[%s5786] ss:$2 sm:$0x3]
    %s8788 = scalar_lea.vmem [#allocation5], 42
    %v8789 = vld [vmem:[%s8788] ss:$2 sm:$0x3]
    %s8790 = scalar_lea.vmem [#allocation5], 43
    %v8791 = vld [vmem:[%s8790] ss:$2 sm:$0x3]
    %v8792 = vmax.f32 %v8786, %v8787
    %v8793 = vmax.f32 %v8789, %v8791
    %v8794 = vmax.f32 %v8792, %v8793
    %8795 = vst.msk [vmem:[%s8784 + $0x9] sm:$0x3] %vm56, %v8794
    %s8796 = scalar_lea.vmem %s2, 3
    %v8797 = vld [vmem:[%s8796] sm:$0x1]
    %v8799 = vlaneseq
    %v8800 = vshrl.u32 %v8799, 7
    %v8801 = vsub.s32 0, %v8800
    %v8802 = vrot.slane %v8797, %v8801
    %v8804 = vld [vmem:[#allocation4] sm:$0xff]
    %v8805 = vld [vmem:[#allocation4 + $0x18] sm:$0xff]
    %v8806 = vpack.c.bf16 %v8805, %v8804
    %s8807 = scalar_lea.vmem %s1, 216
    %v8808 = vld [vmem:[%s8807] sm:$0xf]
    %v8809 = vld [vmem:[%s8807 + $0x4] sm:$0xf]
    %v8812 = vunpack.c.l.b16 %v8808
    %v8813 = vunpack.c.l.b16 %v8809
    %v8814 = vpack.c.b16 %v8813, %v8812
    %v8817 = vsel %vm16, %v8806, 0
    %8819 = vmatprep.subr.bf16.mxu0 0
    %8820 = vmatpush1.bf16.msra.mxu0 0
    %8821 = vmatprep.subr.bf16.mxu0 0
    %8822 = vmatpush1.bf16.msra.mxu0 0
    %8823 = vmatprep.subr.bf16.mxu0 0
    %8824 = vmatpush1.bf16.msra.mxu0 0
    %8825 = vmatprep.subr.bf16.mxu0 0
    %8826 = vmatpush1.bf16.msra.mxu0 0
    %8827 = vmatprep.subr.bf16.mxu0 0
    %8828 = vmatpush1.bf16.msra.mxu0 0
    %8829 = vmatprep.subr.bf16.mxu0 0
    %8830 = vmatpush1.bf16.msra.mxu0 0
    %8831 = vmatprep.subr.bf16.mxu0 0
    %8832 = vmatpush1.bf16.msra.mxu0 0
    %8833 = vmatprep.subr.bf16.mxu0 0
    %8834 = vmatpush1.bf16.msra.mxu0 %v8814
    %8835 = vmatprep.subr.bf16.mxu0 0
    %8836 = vmatpush2.bf16.msra.mxu0 0
    %8837 = vmatprep.subr.bf16.mxu0 0
    %8838 = vmatpush2.bf16.msra.mxu0 0
    %8839 = vmatprep.subr.bf16.mxu0 0
    %8840 = vmatpush2.bf16.msra.mxu0 0
    %8841 = vmatprep.subr.bf16.mxu0 0
    %8842 = vmatpush2.bf16.msra.mxu0 0
    %8843 = vmatprep.subr.bf16.mxu0 0
    %8844 = vmatpush2.bf16.msra.mxu0 0
    %8845 = vmatprep.subr.bf16.mxu0 0
    %8846 = vmatpush2.bf16.msra.mxu0 0
    %8847 = vmatprep.subr.bf16.mxu0 0
    %8848 = vmatpush2.bf16.msra.mxu0 0
    %8849 = vmatprep.subr.bf16.mxu0 0
    %8850 = vmatpush2.bf16.msra.mxu0 0
    %8851 = vmatprep.mubr.bf16.mxu0 0
    %8852 = vmatmul.mubr.bf16.gmra.mxu0 %v8817
    %v8853 = vpop.f32.mrf.mxu0
    %v8854 = vadd.f32 0.0, %v8853
    %v8855 = vpop.f32.mrf.mxu0
    %v8856 = vpop.f32.mrf.mxu0
    %v8857 = vadd.f32 0.0, %v8856
    %v8858 = vpop.f32.mrf.mxu0
    %8859 = vdwg.mxu0
    %v8860 = vadd.f32 %v8802, %v8854
    %v8861 = vadd.f32 %v8802, %v8857
    %v8862 = vld [vmem:[#allocation4 + $0x1] sm:$0xff]
    %v8863 = vld [vmem:[#allocation4 + $0x19] sm:$0xff]
    %v8864 = vpack.c.bf16 %v8863, %v8862
    %s8865 = scalar_lea.vmem %s1, 224
    %v8866 = vld [vmem:[%s8865] sm:$0xf]
    %v8867 = vld [vmem:[%s8865 + $0x4] sm:$0xf]
    %v8870 = vunpack.c.l.b16 %v8866
    %v8871 = vunpack.c.l.b16 %v8867
    %v8872 = vpack.c.b16 %v8871, %v8870
    %v8875 = vsel %vm16, %v8864, 0
    %8877 = vmatprep.subr.bf16.mxu0 0
    %8878 = vmatpush1.bf16.msra.mxu0 0
    %8879 = vmatprep.subr.bf16.mxu0 0
    %8880 = vmatpush1.bf16.msra.mxu0 0
    %8881 = vmatprep.subr.bf16.mxu0 0
    %8882 = vmatpush1.bf16.msra.mxu0 0
    %8883 = vmatprep.subr.bf16.mxu0 0
    %8884 = vmatpush1.bf16.msra.mxu0 0
    %8885 = vmatprep.subr.bf16.mxu0 0
    %8886 = vmatpush1.bf16.msra.mxu0 0
    %8887 = vmatprep.subr.bf16.mxu0 0
    %8888 = vmatpush1.bf16.msra.mxu0 0
    %8889 = vmatprep.subr.bf16.mxu0 0
    %8890 = vmatpush1.bf16.msra.mxu0 0
    %8891 = vmatprep.subr.bf16.mxu0 0
    %8892 = vmatpush1.bf16.msra.mxu0 %v8872
    %8893 = vmatprep.subr.bf16.mxu0 0
    %8894 = vmatpush2.bf16.msra.mxu0 0
    %8895 = vmatprep.subr.bf16.mxu0 0
    %8896 = vmatpush2.bf16.msra.mxu0 0
    %8897 = vmatprep.subr.bf16.mxu0 0
    %8898 = vmatpush2.bf16.msra.mxu0 0
    %8899 = vmatprep.subr.bf16.mxu0 0
    %8900 = vmatpush2.bf16.msra.mxu0 0
    %8901 = vmatprep.subr.bf16.mxu0 0
    %8902 = vmatpush2.bf16.msra.mxu0 0
    %8903 = vmatprep.subr.bf16.mxu0 0
    %8904 = vmatpush2.bf16.msra.mxu0 0
    %8905 = vmatprep.subr.bf16.mxu0 0
    %8906 = vmatpush2.bf16.msra.mxu0 0
    %8907 = vmatprep.subr.bf16.mxu0 0
    %8908 = vmatpush2.bf16.msra.mxu0 0
    %8909 = vmatprep.mubr.bf16.mxu0 0
    %8910 = vmatmul.mubr.bf16.gmra.mxu0 %v8875
    %v8911 = vpop.f32.mrf.mxu0
    %v8912 = vadd.f32 0.0, %v8911
    %v8913 = vpop.f32.mrf.mxu0
    %v8914 = vpop.f32.mrf.mxu0
    %v8915 = vadd.f32 0.0, %v8914
    %v8916 = vpop.f32.mrf.mxu0
    %8917 = vdwg.mxu0
    %v8918 = vadd.f32 %v8860, %v8912
    %v8919 = vadd.f32 %v8861, %v8915
    %v8920 = vld [vmem:[#allocation4 + $0x2] sm:$0xff]
    %v8921 = vld [vmem:[#allocation4 + $0x1a] sm:$0xff]
    %v8922 = vpack.c.bf16 %v8921, %v8920
    %s8923 = scalar_lea.vmem %s1, 232
    %v8924 = vld [vmem:[%s8923] sm:$0xf]
    %v8925 = vld [vmem:[%s8923 + $0x4] sm:$0xf]
    %v8928 = vunpack.c.l.b16 %v8924
    %v8929 = vunpack.c.l.b16 %v8925
    %v8930 = vpack.c.b16 %v8929, %v8928
    %v8933 = vsel %vm16, %v8922, 0
    %8935 = vmatprep.subr.bf16.mxu0 0
    %8936 = vmatpush1.bf16.msra.mxu0 0
    %8937 = vmatprep.subr.bf16.mxu0 0
    %8938 = vmatpush1.bf16.msra.mxu0 0
    %8939 = vmatprep.subr.bf16.mxu0 0
    %8940 = vmatpush1.bf16.msra.mxu0 0
    %8941 = vmatprep.subr.bf16.mxu0 0
    %8942 = vmatpush1.bf16.msra.mxu0 0
    %8943 = vmatprep.subr.bf16.mxu0 0
    %8944 = vmatpush1.bf16.msra.mxu0 0
    %8945 = vmatprep.subr.bf16.mxu0 0
    %8946 = vmatpush1.bf16.msra.mxu0 0
    %8947 = vmatprep.subr.bf16.mxu0 0
    %8948 = vmatpush1.bf16.msra.mxu0 0
    %8949 = vmatprep.subr.bf16.mxu0 0
    %8950 = vmatpush1.bf16.msra.mxu0 %v8930
    %8951 = vmatprep.subr.bf16.mxu0 0
    %8952 = vmatpush2.bf16.msra.mxu0 0
    %8953 = vmatprep.subr.bf16.mxu0 0
    %8954 = vmatpush2.bf16.msra.mxu0 0
    %8955 = vmatprep.subr.bf16.mxu0 0
    %8956 = vmatpush2.bf16.msra.mxu0 0
    %8957 = vmatprep.subr.bf16.mxu0 0
    %8958 = vmatpush2.bf16.msra.mxu0 0
    %8959 = vmatprep.subr.bf16.mxu0 0
    %8960 = vmatpush2.bf16.msra.mxu0 0
    %8961 = vmatprep.subr.bf16.mxu0 0
    %8962 = vmatpush2.bf16.msra.mxu0 0
    %8963 = vmatprep.subr.bf16.mxu0 0
    %8964 = vmatpush2.bf16.msra.mxu0 0
    %8965 = vmatprep.subr.bf16.mxu0 0
    %8966 = vmatpush2.bf16.msra.mxu0 0
    %8967 = vmatprep.mubr.bf16.mxu0 0
    %8968 = vmatmul.mubr.bf16.gmra.mxu0 %v8933
    %v8969 = vpop.f32.mrf.mxu0
    %v8970 = vadd.f32 0.0, %v8969
    %v8971 = vpop.f32.mrf.mxu0
    %v8972 = vpop.f32.mrf.mxu0
    %v8973 = vadd.f32 0.0, %v8972
    %v8974 = vpop.f32.mrf.mxu0
    %8975 = vdwg.mxu0
    %v8976 = vadd.f32 %v8918, %v8970
    %v8977 = vadd.f32 %v8919, %v8973
    %v8978 = vld [vmem:[#allocation4 + $0x4] sm:$0xff]
    %v8979 = vld [vmem:[#allocation4 + $0x1c] sm:$0xff]
    %v8980 = vpack.c.bf16 %v8979, %v8978
    %s8981 = scalar_lea.vmem %s1, 240
    %v8982 = vld [vmem:[%s8981] sm:$0xf]
    %v8983 = vld [vmem:[%s8981 + $0x4] sm:$0xf]
    %v8986 = vunpack.c.l.b16 %v8982
    %v8987 = vunpack.c.l.b16 %v8983
    %v8988 = vpack.c.b16 %v8987, %v8986
    %v8991 = vsel %vm16, %v8980, 0
    %8993 = vmatprep.subr.bf16.mxu0 0
    %8994 = vmatpush1.bf16.msra.mxu0 0
    %8995 = vmatprep.subr.bf16.mxu0 0
    %8996 = vmatpush1.bf16.msra.mxu0 0
    %8997 = vmatprep.subr.bf16.mxu0 0
    %8998 = vmatpush1.bf16.msra.mxu0 0
    %8999 = vmatprep.subr.bf16.mxu0 0
    %9000 = vmatpush1.bf16.msra.mxu0 0
    %9001 = vmatprep.subr.bf16.mxu0 0
    %9002 = vmatpush1.bf16.msra.mxu0 0
    %9003 = vmatprep.subr.bf16.mxu0 0
    %9004 = vmatpush1.bf16.msra.mxu0 0
    %9005 = vmatprep.subr.bf16.mxu0 0
    %9006 = vmatpush1.bf16.msra.mxu0 0
    %9007 = vmatprep.subr.bf16.mxu0 0
    %9008 = vmatpush1.bf16.msra.mxu0 %v8988
    %9009 = vmatprep.subr.bf16.mxu0 0
    %9010 = vmatpush2.bf16.msra.mxu0 0
    %9011 = vmatprep.subr.bf16.mxu0 0
    %9012 = vmatpush2.bf16.msra.mxu0 0
    %9013 = vmatprep.subr.bf16.mxu0 0
    %9014 = vmatpush2.bf16.msra.mxu0 0
    %9015 = vmatprep.subr.bf16.mxu0 0
    %9016 = vmatpush2.bf16.msra.mxu0 0
    %9017 = vmatprep.subr.bf16.mxu0 0
    %9018 = vmatpush2.bf16.msra.mxu0 0
    %9019 = vmatprep.subr.bf16.mxu0 0
    %9020 = vmatpush2.bf16.msra.mxu0 0
    %9021 = vmatprep.subr.bf16.mxu0 0
    %9022 = vmatpush2.bf16.msra.mxu0 0
    %9023 = vmatprep.subr.bf16.mxu0 0
    %9024 = vmatpush2.bf16.msra.mxu0 0
    %9025 = vmatprep.mubr.bf16.mxu0 0
    %9026 = vmatmul.mubr.bf16.gmra.mxu0 %v8991
    %v9027 = vpop.f32.mrf.mxu0
    %v9028 = vadd.f32 0.0, %v9027
    %v9029 = vpop.f32.mrf.mxu0
    %v9030 = vpop.f32.mrf.mxu0
    %v9031 = vadd.f32 0.0, %v9030
    %v9032 = vpop.f32.mrf.mxu0
    %9033 = vdwg.mxu0
    %v9034 = vadd.f32 %v8976, %v9028
    %v9035 = vadd.f32 %v8977, %v9031
    %v9036 = vld [vmem:[#allocation4 + $0x5] sm:$0xff]
    %v9037 = vld [vmem:[#allocation4 + $0x1d] sm:$0xff]
    %v9038 = vpack.c.bf16 %v9037, %v9036
    %s9039 = scalar_lea.vmem %s1, 248
    %v9040 = vld [vmem:[%s9039] sm:$0xf]
    %v9041 = vld [vmem:[%s9039 + $0x4] sm:$0xf]
    %v9044 = vunpack.c.l.b16 %v9040
    %v9045 = vunpack.c.l.b16 %v9041
    %v9046 = vpack.c.b16 %v9045, %v9044
    %v9049 = vsel %vm16, %v9038, 0
    %9051 = vmatprep.subr.bf16.mxu0 0
    %9052 = vmatpush1.bf16.msra.mxu0 0
    %9053 = vmatprep.subr.bf16.mxu0 0
    %9054 = vmatpush1.bf16.msra.mxu0 0
    %9055 = vmatprep.subr.bf16.mxu0 0
    %9056 = vmatpush1.bf16.msra.mxu0 0
    %9057 = vmatprep.subr.bf16.mxu0 0
    %9058 = vmatpush1.bf16.msra.mxu0 0
    %9059 = vmatprep.subr.bf16.mxu0 0
    %9060 = vmatpush1.bf16.msra.mxu0 0
    %9061 = vmatprep.subr.bf16.mxu0 0
    %9062 = vmatpush1.bf16.msra.mxu0 0
    %9063 = vmatprep.subr.bf16.mxu0 0
    %9064 = vmatpush1.bf16.msra.mxu0 0
    %9065 = vmatprep.subr.bf16.mxu0 0
    %9066 = vmatpush1.bf16.msra.mxu0 %v9046
    %9067 = vmatprep.subr.bf16.mxu0 0
    %9068 = vmatpush2.bf16.msra.mxu0 0
    %9069 = vmatprep.subr.bf16.mxu0 0
    %9070 = vmatpush2.bf16.msra.mxu0 0
    %9071 = vmatprep.subr.bf16.mxu0 0
    %9072 = vmatpush2.bf16.msra.mxu0 0
    %9073 = vmatprep.subr.bf16.mxu0 0
    %9074 = vmatpush2.bf16.msra.mxu0 0
    %9075 = vmatprep.subr.bf16.mxu0 0
    %9076 = vmatpush2.bf16.msra.mxu0 0
    %9077 = vmatprep.subr.bf16.mxu0 0
    %9078 = vmatpush2.bf16.msra.mxu0 0
    %9079 = vmatprep.subr.bf16.mxu0 0
    %9080 = vmatpush2.bf16.msra.mxu0 0
    %9081 = vmatprep.subr.bf16.mxu0 0
    %9082 = vmatpush2.bf16.msra.mxu0 0
    %9083 = vmatprep.mubr.bf16.mxu0 0
    %9084 = vmatmul.mubr.bf16.gmra.mxu0 %v9049
    %v9085 = vpop.f32.mrf.mxu0
    %v9086 = vadd.f32 0.0, %v9085
    %v9087 = vpop.f32.mrf.mxu0
    %v9088 = vpop.f32.mrf.mxu0
    %v9089 = vadd.f32 0.0, %v9088
    %v9090 = vpop.f32.mrf.mxu0
    %9091 = vdwg.mxu0
    %v9092 = vadd.f32 %v9034, %v9086
    %v9093 = vadd.f32 %v9035, %v9089
    %v9094 = vld [vmem:[#allocation4 + $0x6] sm:$0xff]
    %v9095 = vld [vmem:[#allocation4 + $0x1e] sm:$0xff]
    %v9096 = vpack.c.bf16 %v9095, %v9094
    %s9097 = scalar_lea.vmem %s1, 256
    %v9098 = vld [vmem:[%s9097] sm:$0xf]
    %v9099 = vld [vmem:[%s9097 + $0x4] sm:$0xf]
    %v9102 = vunpack.c.l.b16 %v9098
    %v9103 = vunpack.c.l.b16 %v9099
    %v9104 = vpack.c.b16 %v9103, %v9102
    %v9107 = vsel %vm16, %v9096, 0
    %9109 = vmatprep.subr.bf16.mxu0 0
    %9110 = vmatpush1.bf16.msra.mxu0 0
    %9111 = vmatprep.subr.bf16.mxu0 0
    %9112 = vmatpush1.bf16.msra.mxu0 0
    %9113 = vmatprep.subr.bf16.mxu0 0
    %9114 = vmatpush1.bf16.msra.mxu0 0
    %9115 = vmatprep.subr.bf16.mxu0 0
    %9116 = vmatpush1.bf16.msra.mxu0 0
    %9117 = vmatprep.subr.bf16.mxu0 0
    %9118 = vmatpush1.bf16.msra.mxu0 0
    %9119 = vmatprep.subr.bf16.mxu0 0
    %9120 = vmatpush1.bf16.msra.mxu0 0
    %9121 = vmatprep.subr.bf16.mxu0 0
    %9122 = vmatpush1.bf16.msra.mxu0 0
    %9123 = vmatprep.subr.bf16.mxu0 0
    %9124 = vmatpush1.bf16.msra.mxu0 %v9104
    %9125 = vmatprep.subr.bf16.mxu0 0
    %9126 = vmatpush2.bf16.msra.mxu0 0
    %9127 = vmatprep.subr.bf16.mxu0 0
    %9128 = vmatpush2.bf16.msra.mxu0 0
    %9129 = vmatprep.subr.bf16.mxu0 0
    %9130 = vmatpush2.bf16.msra.mxu0 0
    %9131 = vmatprep.subr.bf16.mxu0 0
    %9132 = vmatpush2.bf16.msra.mxu0 0
    %9133 = vmatprep.subr.bf16.mxu0 0
    %9134 = vmatpush2.bf16.msra.mxu0 0
    %9135 = vmatprep.subr.bf16.mxu0 0
    %9136 = vmatpush2.bf16.msra.mxu0 0
    %9137 = vmatprep.subr.bf16.mxu0 0
    %9138 = vmatpush2.bf16.msra.mxu0 0
    %9139 = vmatprep.subr.bf16.mxu0 0
    %9140 = vmatpush2.bf16.msra.mxu0 0
    %9141 = vmatprep.mubr.bf16.mxu0 0
    %9142 = vmatmul.mubr.bf16.gmra.mxu0 %v9107
    %v9143 = vpop.f32.mrf.mxu0
    %v9144 = vadd.f32 0.0, %v9143
    %v9145 = vpop.f32.mrf.mxu0
    %v9146 = vpop.f32.mrf.mxu0
    %v9147 = vadd.f32 0.0, %v9146
    %v9148 = vpop.f32.mrf.mxu0
    %9149 = vdwg.mxu0
    %v9150 = vadd.f32 %v9092, %v9144
    %v9151 = vadd.f32 %v9093, %v9147
    %v9152 = vld [vmem:[#allocation4 + $0x8] sm:$0xff]
    %v9153 = vld [vmem:[#allocation4 + $0x20] sm:$0xff]
    %v9154 = vpack.c.bf16 %v9153, %v9152
    %s9155 = scalar_lea.vmem %s1, 264
    %v9156 = vld [vmem:[%s9155] sm:$0xf]
    %v9157 = vld [vmem:[%s9155 + $0x4] sm:$0xf]
    %v9160 = vunpack.c.l.b16 %v9156
    %v9161 = vunpack.c.l.b16 %v9157
    %v9162 = vpack.c.b16 %v9161, %v9160
    %v9165 = vsel %vm16, %v9154, 0
    %9167 = vmatprep.subr.bf16.mxu0 0
    %9168 = vmatpush1.bf16.msra.mxu0 0
    %9169 = vmatprep.subr.bf16.mxu0 0
    %9170 = vmatpush1.bf16.msra.mxu0 0
    %9171 = vmatprep.subr.bf16.mxu0 0
    %9172 = vmatpush1.bf16.msra.mxu0 0
    %9173 = vmatprep.subr.bf16.mxu0 0
    %9174 = vmatpush1.bf16.msra.mxu0 0
    %9175 = vmatprep.subr.bf16.mxu0 0
    %9176 = vmatpush1.bf16.msra.mxu0 0
    %9177 = vmatprep.subr.bf16.mxu0 0
    %9178 = vmatpush1.bf16.msra.mxu0 0
    %9179 = vmatprep.subr.bf16.mxu0 0
    %9180 = vmatpush1.bf16.msra.mxu0 0
    %9181 = vmatprep.subr.bf16.mxu0 0
    %9182 = vmatpush1.bf16.msra.mxu0 %v9162
    %9183 = vmatprep.subr.bf16.mxu0 0
    %9184 = vmatpush2.bf16.msra.mxu0 0
    %9185 = vmatprep.subr.bf16.mxu0 0
    %9186 = vmatpush2.bf16.msra.mxu0 0
    %9187 = vmatprep.subr.bf16.mxu0 0
    %9188 = vmatpush2.bf16.msra.mxu0 0
    %9189 = vmatprep.subr.bf16.mxu0 0
    %9190 = vmatpush2.bf16.msra.mxu0 0
    %9191 = vmatprep.subr.bf16.mxu0 0
    %9192 = vmatpush2.bf16.msra.mxu0 0
    %9193 = vmatprep.subr.bf16.mxu0 0
    %9194 = vmatpush2.bf16.msra.mxu0 0
    %9195 = vmatprep.subr.bf16.mxu0 0
    %9196 = vmatpush2.bf16.msra.mxu0 0
    %9197 = vmatprep.subr.bf16.mxu0 0
    %9198 = vmatpush2.bf16.msra.mxu0 0
    %9199 = vmatprep.mubr.bf16.mxu0 0
    %9200 = vmatmul.mubr.bf16.gmra.mxu0 %v9165
    %v9201 = vpop.f32.mrf.mxu0
    %v9202 = vadd.f32 0.0, %v9201
    %v9203 = vpop.f32.mrf.mxu0
    %v9204 = vpop.f32.mrf.mxu0
    %v9205 = vadd.f32 0.0, %v9204
    %v9206 = vpop.f32.mrf.mxu0
    %9207 = vdwg.mxu0
    %v9208 = vadd.f32 %v9150, %v9202
    %v9209 = vadd.f32 %v9151, %v9205
    %v9210 = vld [vmem:[#allocation4 + $0x9] sm:$0xff]
    %v9211 = vld [vmem:[#allocation4 + $0x21] sm:$0xff]
    %v9212 = vpack.c.bf16 %v9211, %v9210
    %s9213 = scalar_lea.vmem %s1, 272
    %v9214 = vld [vmem:[%s9213] sm:$0xf]
    %v9215 = vld [vmem:[%s9213 + $0x4] sm:$0xf]
    %v9218 = vunpack.c.l.b16 %v9214
    %v9219 = vunpack.c.l.b16 %v9215
    %v9220 = vpack.c.b16 %v9219, %v9218
    %v9223 = vsel %vm16, %v9212, 0
    %9225 = vmatprep.subr.bf16.mxu0 0
    %9226 = vmatpush1.bf16.msra.mxu0 0
    %9227 = vmatprep.subr.bf16.mxu0 0
    %9228 = vmatpush1.bf16.msra.mxu0 0
    %9229 = vmatprep.subr.bf16.mxu0 0
    %9230 = vmatpush1.bf16.msra.mxu0 0
    %9231 = vmatprep.subr.bf16.mxu0 0
    %9232 = vmatpush1.bf16.msra.mxu0 0
    %9233 = vmatprep.subr.bf16.mxu0 0
    %9234 = vmatpush1.bf16.msra.mxu0 0
    %9235 = vmatprep.subr.bf16.mxu0 0
    %9236 = vmatpush1.bf16.msra.mxu0 0
    %9237 = vmatprep.subr.bf16.mxu0 0
    %9238 = vmatpush1.bf16.msra.mxu0 0
    %9239 = vmatprep.subr.bf16.mxu0 0
    %9240 = vmatpush1.bf16.msra.mxu0 %v9220
    %9241 = vmatprep.subr.bf16.mxu0 0
    %9242 = vmatpush2.bf16.msra.mxu0 0
    %9243 = vmatprep.subr.bf16.mxu0 0
    %9244 = vmatpush2.bf16.msra.mxu0 0
    %9245 = vmatprep.subr.bf16.mxu0 0
    %9246 = vmatpush2.bf16.msra.mxu0 0
    %9247 = vmatprep.subr.bf16.mxu0 0
    %9248 = vmatpush2.bf16.msra.mxu0 0
    %9249 = vmatprep.subr.bf16.mxu0 0
    %9250 = vmatpush2.bf16.msra.mxu0 0
    %9251 = vmatprep.subr.bf16.mxu0 0
    %9252 = vmatpush2.bf16.msra.mxu0 0
    %9253 = vmatprep.subr.bf16.mxu0 0
    %9254 = vmatpush2.bf16.msra.mxu0 0
    %9255 = vmatprep.subr.bf16.mxu0 0
    %9256 = vmatpush2.bf16.msra.mxu0 0
    %9257 = vmatprep.mubr.bf16.mxu0 0
    %9258 = vmatmul.mubr.bf16.gmra.mxu0 %v9223
    %v9259 = vpop.f32.mrf.mxu0
    %v9260 = vadd.f32 0.0, %v9259
    %v9261 = vpop.f32.mrf.mxu0
    %v9262 = vpop.f32.mrf.mxu0
    %v9263 = vadd.f32 0.0, %v9262
    %v9264 = vpop.f32.mrf.mxu0
    %9265 = vdwg.mxu0
    %v9266 = vadd.f32 %v9208, %v9260
    %v9267 = vadd.f32 %v9209, %v9263
    %v9268 = vld [vmem:[#allocation4 + $0xa] sm:$0xff]
    %v9269 = vld [vmem:[#allocation4 + $0x22] sm:$0xff]
    %v9270 = vpack.c.bf16 %v9269, %v9268
    %s9271 = scalar_lea.vmem %s1, 280
    %v9272 = vld [vmem:[%s9271] sm:$0xf]
    %v9273 = vld [vmem:[%s9271 + $0x4] sm:$0xf]
    %v9276 = vunpack.c.l.b16 %v9272
    %v9277 = vunpack.c.l.b16 %v9273
    %v9278 = vpack.c.b16 %v9277, %v9276
    %v9281 = vsel %vm16, %v9270, 0
    %9283 = vmatprep.subr.bf16.mxu0 0
    %9284 = vmatpush1.bf16.msra.mxu0 0
    %9285 = vmatprep.subr.bf16.mxu0 0
    %9286 = vmatpush1.bf16.msra.mxu0 0
    %9287 = vmatprep.subr.bf16.mxu0 0
    %9288 = vmatpush1.bf16.msra.mxu0 0
    %9289 = vmatprep.subr.bf16.mxu0 0
    %9290 = vmatpush1.bf16.msra.mxu0 0
    %9291 = vmatprep.subr.bf16.mxu0 0
    %9292 = vmatpush1.bf16.msra.mxu0 0
    %9293 = vmatprep.subr.bf16.mxu0 0
    %9294 = vmatpush1.bf16.msra.mxu0 0
    %9295 = vmatprep.subr.bf16.mxu0 0
    %9296 = vmatpush1.bf16.msra.mxu0 0
    %9297 = vmatprep.subr.bf16.mxu0 0
    %9298 = vmatpush1.bf16.msra.mxu0 %v9278
    %9299 = vmatprep.subr.bf16.mxu0 0
    %9300 = vmatpush2.bf16.msra.mxu0 0
    %9301 = vmatprep.subr.bf16.mxu0 0
    %9302 = vmatpush2.bf16.msra.mxu0 0
    %9303 = vmatprep.subr.bf16.mxu0 0
    %9304 = vmatpush2.bf16.msra.mxu0 0
    %9305 = vmatprep.subr.bf16.mxu0 0
    %9306 = vmatpush2.bf16.msra.mxu0 0
    %9307 = vmatprep.subr.bf16.mxu0 0
    %9308 = vmatpush2.bf16.msra.mxu0 0
    %9309 = vmatprep.subr.bf16.mxu0 0
    %9310 = vmatpush2.bf16.msra.mxu0 0
    %9311 = vmatprep.subr.bf16.mxu0 0
    %9312 = vmatpush2.bf16.msra.mxu0 0
    %9313 = vmatprep.subr.bf16.mxu0 0
    %9314 = vmatpush2.bf16.msra.mxu0 0
    %9315 = vmatprep.mubr.bf16.mxu0 0
    %9316 = vmatmul.mubr.bf16.gmra.mxu0 %v9281
    %v9317 = vpop.f32.mrf.mxu0
    %v9318 = vadd.f32 0.0, %v9317
    %v9319 = vpop.f32.mrf.mxu0
    %v9320 = vpop.f32.mrf.mxu0
    %v9321 = vadd.f32 0.0, %v9320
    %v9322 = vpop.f32.mrf.mxu0
    %9323 = vdwg.mxu0
    %v9324 = vadd.f32 %v9266, %v9318
    %v9325 = vadd.f32 %v9267, %v9321
    %v9326 = vmax.f32 %v9324, 0.0
    %v9327 = vmax.f32 %v9325, 0.0
    %9328 = vst.msk [vmem:[#allocation5] sm:$0xff] %vm16, %v9326
    %9329 = vst.msk [vmem:[#allocation5 + $0x8] sm:$0xff] %vm16, %v9327
    %v9330 = vld [vmem:[#allocation5] sm:$0x1]
    %v9331 = vld [vmem:[#allocation5 + $0x1] sm:$0x1]
    %v9332 = vld [vmem:[#allocation5 + $0x4] sm:$0x1]
    %v9333 = vld [vmem:[#allocation5 + $0x5] sm:$0x1]
    %v9334 = vmax.f32 %v9330, %v9331
    %v9335 = vmax.f32 %v9332, %v9333
    %v9336 = vmax.f32 %v9334, %v9335
    %vm9337 = vcmask 122880
    %9338 = vst.msk [vmem:[#allocation6] sm:$0x1] %vm9337, %v9336
    %v9339 = vld [vmem:[#allocation5 + $0x8] sm:$0x1]
    %v9340 = vld [vmem:[#allocation5 + $0x9] sm:$0x1]
    %v9341 = vld [vmem:[#allocation5 + $0xc] sm:$0x1]
    %v9342 = vld [vmem:[#allocation5 + $0xd] sm:$0x1]
    %v9343 = vmax.f32 %v9339, %v9340
    %v9344 = vmax.f32 %v9341, %v9342
    %v9345 = vmax.f32 %v9343, %v9344
    %9346 = vst.msk [vmem:[#allocation6 + $0x1] sm:$0x1] %vm9337, %v9345
    // Predicated region
    $region14: #{tpu_custom_call.1} parent=1 // pred_check
      _
    $region15: #{tpu_custom_call.1} parent=1 // pred_check_branch
      %9348 = sbr.rel (0) target = $region17
    $region16: #{tpu_custom_call.1} parent=1 // pred_region
      %s9350 = ssub.s32 32, 32
      %9351 = vsyncadd [#allocation7], %s9350
      %s9353 = sshll.u32 [#allocation6], 4
      %s9354 = int_to_ptr.vmem [resolvable:$true] %s9353
      %9356 = dma.vmem_to_hbm [thread:$0]  %s9354, 32, %s3, [#allocation7]
    $region17: #{tpu_custom_call.1} parent=1 // pred_fallthru
      _
    // Predicated region
    $region18: #{tpu_custom_call.1} parent=1 // pred_check
      _
    $region19: #{tpu_custom_call.1} parent=1 // pred_check_branch
      %9358 = sbr.rel (0) target = $region21
    $region20: #{tpu_custom_call.1} parent=1 // pred_region
      %9359 = dma.done [#allocation7], 32
    $region21: #{tpu_custom_call.1} parent=1 // pred_fallthru
      _
    %9360 = vsyncpa [#allocation7], 1

</llo_original>
